<compile_context>
chip_gen: v6e
topology: v6e:2x2x1
jax: 0.10.0
libtpu: 0.0.40
codegen_flags: <defaults>
</compile_context>

<pallas_src>
import functools

import jax
import jax.numpy as jnp
from jax.experimental import pallas as pl
from jax.experimental.pallas import tpu as pltpu


def _rup(n, m):
    return ((n + m - 1) // m) * m


def _pad2(a, rows, cols):
    return jnp.pad(a, ((0, rows - a.shape[0]), (0, cols - a.shape[1])))


def _offsets(widths):
    out, cur = [], 0
    for w in widths:
        out.append(cur)
        cur += w
    return tuple(out)


# -----------------------------------------------------------------------------
# Fused kernel: the whole BackBone3 forward (3 dual-blaze blocks) in one call.
# -----------------------------------------------------------------------------
def _backbone3_kernel(xph_ref, dwall_ref, pw1_ref, pw2_ref, ball_ref, o_ref,
                      h_ph, h_m1, h_y1, h_m2, h_y2, h_m3,
                      *, B, H, W, cin_p, meta):
    f32 = jnp.float32
    dw_off, dw_w, pw_row, pw_k, b_off, b_w, pw_is_first = meta
    M = B * H * W                                       # GEMM M (batch folded in)

    # ---- zero only the 1-px borders of the halo scratch (interiors are fully
    #      overwritten later; borders are never touched again) --------------------
    def zero_border(h):
        _, Hh, Wh, C = h.shape
        h[:, 0:1, :, :] = jnp.zeros((B, 1, Wh, C), f32)
        h[:, Hh - 1:Hh, :, :] = jnp.zeros((B, 1, Wh, C), f32)
        h[:, :, 0:1, :] = jnp.zeros((B, Hh, 1, C), f32)
        h[:, :, Wh - 1:Wh, :] = jnp.zeros((B, Hh, 1, C), f32)

    # h_ph only needs a zero bottom row / right column (TF-'SAME' right/bottom pad).
    _, Hp, Wp, Cp = h_ph.shape
    h_ph[:, Hp - 1:Hp, :, :] = jnp.zeros((B, 1, Wp, Cp), f32)
    h_ph[:, :, Wp - 1:Wp, :] = jnp.zeros((B, Hp, 1, Cp), f32)
    for h in (h_m1, h_y1, h_m2, h_y2, h_m3):
        zero_border(h)

    def dwk(s):                                         # (9, C) f32 slice of packed dw kernels
        return dwall_ref[:, dw_off[s]:dw_off[s] + dw_w[s]]

    def pw(acc, s):
        """Pointwise conv #s as one bf16 MXU matmul over M = B*H*W rows."""
        c = acc.shape[-1]
        a = acc.reshape(M, c)[:, 0:pw_k[s]].astype(jnp.bfloat16)
        wref = pw1_ref if pw_is_first[s] else pw2_ref
        wmat = wref[pw_row[s]:pw_row[s] + pw_k[s], :]   # (K, N) bf16
        bias = ball_ref[:, b_off[s]:b_off[s] + b_w[s]]  # (1, N) f32  (dw bias pre-folded)
        return jnp.dot(a, wmat, preferred_element_type=f32) + bias

    def dw_halo(h, s):
        """3x3 stride-1 depthwise from a zero-bordered (B,H+2,W+2,C) halo scratch."""
        k = dwk(s)
        C = dw_w[s]
        acc = h[:, 0:H, 0:W, :] * k[0].reshape(1, 1, 1, C)
        for t in range(1, 9):
            dh, dwi = divmod(t, 3)
            acc = acc + h[:, dh:dh + H, dwi:dwi + W, :] * k[t].reshape(1, 1, 1, C)
        return acc

    def interior(h):
        return h[:, 1:1 + H, 1:1 + W, :]

    # ======== block 1: DualBlazeBlock(128, 36, 144, k=3, stride=2) ====================
    p00 = xph_ref[0 * B:1 * B]                          # x[:, 0::2, 0::2, :]
    p01 = xph_ref[1 * B:2 * B]                          # x[:, 0::2, 1::2, :]
    p10 = xph_ref[2 * B:3 * B]                          # x[:, 1::2, 0::2, :]
    p11 = xph_ref[3 * B:4 * B]                          # x[:, 1::2, 1::2, :]
    k = dwk(0)

    def k1(t):
        return k[t].reshape(1, 1, 1, cin_p)

    # stride-2 3x3 depthwise (TF-'SAME' right/bottom pad) via space-to-depth phases:
    #   out[h,w] = sum_{dh,dw} x_pad[2h+dh, 2w+dw] * k[3*dh+dw]
    # Taps with a +2 offset read a phase shifted by one output pixel; those reads go
    # through the zero-bordered h_ph scratch (reused sequentially for p00/p01/p10).
    acc = p00 * k1(0) + p01 * k1(1) + p10 * k1(3) + p11 * k1(4)
    h_ph[:, 0:H, 0:W, :] = p00
    acc = acc + h_ph[:, 0:H, 1:1 + W, :] * k1(2)        # tap (0,2)
    acc = acc + h_ph[:, 1:1 + H, 0:W, :] * k1(6)        # tap (2,0)
    acc = acc + h_ph[:, 1:1 + H, 1:1 + W, :] * k1(8)    # tap (2,2)
    h_ph[:, 0:H, 0:W, :] = p01
    acc = acc + h_ph[:, 1:1 + H, 0:W, :] * k1(7)        # tap (2,1)
    h_ph[:, 0:H, 0:W, :] = p10
    acc = acc + h_ph[:, 0:H, 1:1 + W, :] * k1(5)        # tap (1,2)

    cm1, co1 = b_w[0], b_w[1]
    mid = jnp.maximum(pw(acc, 0), 0.0)
    h_m1[:, 1:1 + H, 1:1 + W, :] = mid.reshape(B, H, W, cm1)

    # residual: 2x2 max-pool of the (unpadded) block input, zero channel-pad to co1
    skip = jnp.maximum(jnp.maximum(p00, p01), jnp.maximum(p10, p11))
    y = pw(dw_halo(h_m1, 1), 1).reshape(B, H, W, co1)
    h_y1[:, 1:1 + H, 1:1 + W, 0:cin_p] = jnp.maximum(y[..., 0:cin_p] + skip, 0.0)
    if co1 > cin_p:
        h_y1[:, 1:1 + H, 1:1 + W, cin_p:co1] = jnp.maximum(y[..., cin_p:co1], 0.0)

    # ======== block 2: DualBlazeBlock(144, 48, 192, k=3) ==============================
    cm2, co2 = b_w[2], b_w[3]
    mid = jnp.maximum(pw(dw_halo(h_y1, 2), 2), 0.0)
    h_m2[:, 1:1 + H, 1:1 + W, :] = mid.reshape(B, H, W, cm2)
    y = pw(dw_halo(h_m2, 3), 3).reshape(B, H, W, co2)
    # residual re-read from the already-resident halo interior at the use site
    # (keeps it out of the register file across the block's dw + 2 matmuls).
    h_y2[:, 1:1 + H, 1:1 + W, :] = jnp.maximum(y + interior(h_y1), 0.0)

    # ======== block 3: DualBlazeBlock(192, 64, 256, k=3) ==============================
    cm3, co3 = b_w[4], b_w[5]
    mid = jnp.maximum(pw(dw_halo(h_y2, 4), 4), 0.0)
    h_m3[:, 1:1 + H, 1:1 + W, :] = mid.reshape(B, H, W, cm3)
    y = pw(dw_halo(h_m3, 5), 5).reshape(B, H, W, co3)
    o_ref[...] = jnp.maximum(y + interior(h_y2), 0.0)


# -----------------------------------------------------------------------------
# Weight prep: fold dw-bias into pw-bias, pad (K -> mult of 8, N -> mult of 128),
# cast pw weights to bf16, pack everything into 4 arrays + static meta.
# -----------------------------------------------------------------------------
def _prep_weights(params, cin):
    cin_p = _rup(cin, 128)
    dw_parts, pw1_parts, pw2_parts, b_parts = [], [], [], []
    dw_w, pw1_k, pw2_k, b_w = [], [], [], []
    c_prev, c_prev_p = cin, cin_p
    for blk in params:
        dwk1, dwb1, pwk1, pwb1, dwk2, dwb2, pwk2, pwb2 = [
            jnp.asarray(p, jnp.float32) for p in blk]
        cmid, cout = pwk1.shape[1], pwk2.shape[1]
        cmid_p, cout_p = _rup(cmid, 128), _rup(cout, 128)
        k1, k2 = _rup(c_prev, 8), _rup(cmid, 8)
        # pw conv is linear, so the depthwise bias folds into the pointwise bias exactly
        b1 = dwb1 @ pwk1 + pwb1
        b2 = dwb2 @ pwk2 + pwb2
        dw_parts += [_pad2(dwk1, 9, c_prev_p), _pad2(dwk2, 9, cmid_p)]
        dw_w += [c_prev_p, cmid_p]
        pw1_parts.append(_pad2(pwk1, k1, cmid_p).astype(jnp.bfloat16))
        pw2_parts.append(_pad2(pwk2, k2, cout_p).astype(jnp.bfloat16))
        pw1_k.append(k1)
        pw2_k.append(k2)
        b_parts += [_pad2(b1, 1, cmid_p), _pad2(b2, 1, cout_p)]
        b_w += [cmid_p, cout_p]
        c_prev, c_prev_p = cout, cout_p

    # this module has uniform padded mid (128) and out (256) widths; the single-array
    # packing below (and the in-kernel residual adds) rely on that.
    assert all(p.shape[1] == pw1_parts[0].shape[1] for p in pw1_parts)
    assert all(p.shape[1] == pw2_parts[0].shape[1] for p in pw2_parts)

    dwall = jnp.concatenate(dw_parts, axis=1)           # (9, sum C)    f32
    pw1all = jnp.concatenate(pw1_parts, axis=0)         # (sum K1, 128) bf16
    pw2all = jnp.concatenate(pw2_parts, axis=0)         # (sum K2, 256) bf16
    ball = jnp.concatenate(b_parts, axis=1)             # (1, sum N)    f32

    pw1_off, pw2_off = _offsets(pw1_k), _offsets(pw2_k)
    pw_is_first = tuple(s % 2 == 0 for s in range(6))
    pw_row = tuple(pw1_off[s // 2] if s % 2 == 0 else pw2_off[s // 2] for s in range(6))
    pw_kk = tuple(pw1_k[s // 2] if s % 2 == 0 else pw2_k[s // 2] for s in range(6))
    meta = (_offsets(dw_w), tuple(dw_w), pw_row, pw_kk,
            _offsets(b_w), tuple(b_w), pw_is_first)
    return (dwall, pw1all, pw2all, ball), meta, cin_p, c_prev   # c_prev == real cout


# -----------------------------------------------------------------------------
# Public wrappers
# -----------------------------------------------------------------------------
def backbone3_nhwc(x, params):
    """BackBone3 forward, NHWC in / NHWC out. x: (B, H, W, 128) float32."""
    B, Hin, Win, cin = x.shape
    assert Hin % 2 == 0 and Win % 2 == 0
    H, W = Hin // 2, Win // 2
    x = x.astype(jnp.float32)

    packed, meta, cin_p, cout_real = _prep_weights(params, cin)
    dwall, pw1all, pw2all, ball = packed
    cm1, co1, cm2, co2, cm3, co3 = meta[5]
    assert co1 == co2 == co3        # residual adds in the kernel assume matching widths

    if cin_p != cin:
        x = jnp.pad(x, ((0, 0), (0, 0), (0, 0), (0, cin_p - cin)))

    # Stride-2 space-to-depth: ONE XLA transpose; the 4 phases are stacked along the
    # leading axis of a single kernel input (no host pad, no per-phase HBM arrays).
    # TODO(synk): this transpose stays as thin XLA layout glue at the module boundary.
    xph = x.reshape(B, H, 2, W, 2, cin_p).transpose(2, 4, 0, 1, 3, 5)
    xph = xph.reshape(4 * B, H, W, cin_p)

    kern = functools.partial(_backbone3_kernel, B=B, H=H, W=W, cin_p=cin_p, meta=meta)
    out = pl.pallas_call(
        kern,
        out_shape=jax.ShapeDtypeStruct((B, H, W, co3), jnp.float32),
        scratch_shapes=[
            pltpu.VMEM((B, H + 1, W + 1, cin_p), jnp.float32),  # block-1 shifted-phase scratch
            pltpu.VMEM((B, H + 2, W + 2, cm1), jnp.float32),    # block-1 mid halo
            pltpu.VMEM((B, H + 2, W + 2, co1), jnp.float32),    # block-1 out (residual for blk 2)
            pltpu.VMEM((B, H + 2, W + 2, cm2), jnp.float32),    # block-2 mid halo
            pltpu.VMEM((B, H + 2, W + 2, co2), jnp.float32),    # block-2 out (residual for blk 3)
            pltpu.VMEM((B, H + 2, W + 2, cm3), jnp.float32),    # block-3 mid halo
        ],
        compiler_params=pltpu.CompilerParams(vmem_limit_bytes=32 * 1024 * 1024),
    )(xph, dwall, pw1all, pw2all, ball)

    if co3 != cout_real:
        out = out[..., :cout_real]
    return out


def backbone3(x_nchw, params):
    """BackBone3.forward — NCHW in / NCHW out, like the PyTorch module."""
    x = jnp.transpose(x_nchw, (0, 2, 3, 1))          # -> NHWC (channels on lanes)
    y = backbone3_nhwc(x, params)
    return jnp.transpose(y, (0, 3, 1, 2))            # -> NCHW


# -----------------------------------------------------------------------------
# Pure-JAX reference (independent of the kernel) for a correctness self-check.
# -----------------------------------------------------------------------------
def _ref_dual_block(x, params, stride):
    dwk1, dwb1, pwk1, pwb1, dwk2, dwb2, pwk2, pwb2 = params
    cout = pwk2.shape[1]

    def dw3x3(z, k, b, s):
        Bz, Hz, Wz, C = z.shape
        if s == 2:
            zp = jnp.pad(z, ((0, 0), (0, 2), (0, 2), (0, 0)))
            Ho, Wo = Hz // 2, Wz // 2
        else:
            zp = jnp.pad(z, ((0, 0), (1, 1), (1, 1), (0, 0)))
            Ho, Wo = Hz, Wz
        acc = jnp.zeros((Bz, Ho, Wo, C), jnp.float32)
        for dh in range(3):
            for dwi in range(3):
                acc = acc + zp[:, dh:dh + s * Ho:s, dwi:dwi + s * Wo:s, :] \
                    * k[dh * 3 + dwi].reshape(1, 1, 1, C)
        return acc + b.reshape(1, 1, 1, C)

    def pw(z, k, b):
        return jnp.einsum("bhwc,cd->bhwd", z, k) + b.reshape(1, 1, 1, -1)

    mid = jax.nn.relu(pw(dw3x3(x, dwk1, dwb1, stride), pwk1, pwb1))
    conv = pw(dw3x3(mid, dwk2, dwb2, 1), pwk2, pwb2)
    if stride == 2:
        skip = jnp.maximum(jnp.maximum(x[:, 0::2, 0::2, :], x[:, 0::2, 1::2, :]),
                           jnp.maximum(x[:, 1::2, 0::2, :], x[:, 1::2, 1::2, :]))
    else:
        skip = x
    skip = jnp.pad(skip, ((0, 0), (0, 0), (0, 0), (0, cout - skip.shape[-1])))
    return jax.nn.relu(conv + skip)


def backbone3_ref(x_nchw, params):
    x = jnp.transpose(x_nchw, (0, 2, 3, 1)).astype(jnp.float32)
    y = _ref_dual_block(x, params[0], 2)
    y = _ref_dual_block(y, params[1], 1)
    y = _ref_dual_block(y, params[2], 1)
    return jnp.transpose(y, (0, 3, 1, 2))


# -----------------------------------------------------------------------------
# Deterministic parameter init (same format as before)
# -----------------------------------------------------------------------------
def init_dual_block(key, cin, cmid, cout, scale=0.05):
    ks = jax.random.split(key, 8)
    f32 = jnp.float32
    dwk1 = jax.random.normal(ks[0], (9, cin), f32) * scale      # dw3x3 weights, tap-major
    dwb1 = jax.random.normal(ks[1], (1, cin), f32) * scale
    pwk1 = jax.random.normal(ks[2], (cin, cmid), f32) * scale   # pw1x1 (Cin -> Cmid)
    pwb1 = jax.random.normal(ks[3], (1, cmid), f32) * scale
    dwk2 = jax.random.normal(ks[4], (9, cmid), f32) * scale
    dwb2 = jax.random.normal(ks[5], (1, cmid), f32) * scale
    pwk2 = jax.random.normal(ks[6], (cmid, cout), f32) * scale  # pw1x1 (Cmid -> Cout)
    pwb2 = jax.random.normal(ks[7], (1, cout), f32) * scale
    return (dwk1, dwb1, pwk1, pwb1, dwk2, dwb2, pwk2, pwb2)


if __name__ == "__main__":
    key = jax.random.PRNGKey(0)
    kx, k1, k2, k3 = jax.random.split(key, 4)

    # NCHW input, Cin = 128 as required by the first DualBlazeBlock.
    x = jax.random.normal(kx, (2, 128, 16, 16), jnp.float32)

    params = (init_dual_block(k1, 128, 36, 144),
              init_dual_block(k2, 144, 48, 192),
              init_dual_block(k3, 192, 64, 256))

    y = jax.jit(backbone3)(x, params)
    y = jax.block_until_ready(y)

    assert y.shape == (2, 256, 8, 8), y.shape
    assert y.dtype == jnp.float32
    assert bool(jnp.all(y >= 0.0))                 # trailing ReLU

    # correctness self-check against an independent pure-JAX (f32) reference;
    # the tolerance accounts for bf16 pointwise-matmul operands (f32 accumulation).
    y_ref = jax.block_until_ready(jax.jit(backbone3_ref)(x, params))
    err = float(jnp.max(jnp.abs(y - y_ref)))
    assert err < 2e-2, f"max abs err vs reference: {err}"

    print("KERNEL_OK")
</pallas_src>

<mosaic_0001>
module attributes {stable_mosaic.version = 11 : i64} {
  func.func @_backbone3_kernel(%arg0: memref<8x8x8x128xf32, #tpu.memory_space<vmem>>, %arg1: memref<9x1024xf32, #tpu.memory_space<vmem>>, %arg2: memref<464x128xbf16, #tpu.memory_space<vmem>>, %arg3: memref<152x256xbf16, #tpu.memory_space<vmem>>, %arg4: memref<1x1152xf32, #tpu.memory_space<vmem>>, %arg5: memref<2x8x8x256xf32, #tpu.memory_space<vmem>>, %arg6: memref<2x9x9x128xf32, #tpu.memory_space<vmem>>, %arg7: memref<2x10x10x128xf32, #tpu.memory_space<vmem>>, %arg8: memref<2x10x10x256xf32, #tpu.memory_space<vmem>>, %arg9: memref<2x10x10x128xf32, #tpu.memory_space<vmem>>, %arg10: memref<2x10x10x256xf32, #tpu.memory_space<vmem>>, %arg11: memref<2x10x10x128xf32, #tpu.memory_space<vmem>>) attributes {dimension_semantics = [], scalar_prefetch = 0 : i64, scratch_operands = 6 : i64, tpu.core_type = #tpu.core_type<tc>} {
    %cst = arith.constant 0.000000e+00 : f32
    %0 = vector.broadcast %cst : f32 to vector<2x1x9x128xf32>
    %c0 = arith.constant 0 : index
    %c8 = arith.constant 8 : index
    %c0_0 = arith.constant 0 : index
    %c0_1 = arith.constant 0 : index
    %1 = vector.load %arg6[%c0, %c8, %c0_0, %c0_1] : memref<2x9x9x128xf32, #tpu.memory_space<vmem>>, vector<2x1x9x128xf32>
    tpu.vector_store %arg6[%c0, %c8, %c0_0, %c0_1], %0 {strides = array<i32>} : memref<2x9x9x128xf32, #tpu.memory_space<vmem>>, vector<2x1x9x128xf32>,
    %cst_2 = arith.constant 0.000000e+00 : f32
    %2 = vector.broadcast %cst_2 : f32 to vector<2x9x1x128xf32>
    %c0_3 = arith.constant 0 : index
    %c0_4 = arith.constant 0 : index
    %c8_5 = arith.constant 8 : index
    %c0_6 = arith.constant 0 : index
    %3 = vector.load %arg6[%c0_3, %c0_4, %c8_5, %c0_6] : memref<2x9x9x128xf32, #tpu.memory_space<vmem>>, vector<2x9x1x128xf32>
    tpu.vector_store %arg6[%c0_3, %c0_4, %c8_5, %c0_6], %2 {strides = array<i32>} : memref<2x9x9x128xf32, #tpu.memory_space<vmem>>, vector<2x9x1x128xf32>,
    %cst_7 = arith.constant 0.000000e+00 : f32
    %4 = vector.broadcast %cst_7 : f32 to vector<2x1x10x128xf32>
    %c0_8 = arith.constant 0 : index
    %c0_9 = arith.constant 0 : index
    %c0_10 = arith.constant 0 : index
    %c0_11 = arith.constant 0 : index
    %5 = vector.load %arg7[%c0_8, %c0_9, %c0_10, %c0_11] : memref<2x10x10x128xf32, #tpu.memory_space<vmem>>, vector<2x1x10x128xf32>
    tpu.vector_store %arg7[%c0_8, %c0_9, %c0_10, %c0_11], %4 {strides = array<i32>} : memref<2x10x10x128xf32, #tpu.memory_space<vmem>>, vector<2x1x10x128xf32>,
    %cst_12 = arith.constant 0.000000e+00 : f32
    %6 = vector.broadcast %cst_12 : f32 to vector<2x1x10x128xf32>
    %c0_13 = arith.constant 0 : index
    %c9 = arith.constant 9 : index
    %c0_14 = arith.constant 0 : index
    %c0_15 = arith.constant 0 : index
    %7 = vector.load %arg7[%c0_13, %c9, %c0_14, %c0_15] : memref<2x10x10x128xf32, #tpu.memory_space<vmem>>, vector<2x1x10x128xf32>
    tpu.vector_store %arg7[%c0_13, %c9, %c0_14, %c0_15], %6 {strides = array<i32>} : memref<2x10x10x128xf32, #tpu.memory_space<vmem>>, vector<2x1x10x128xf32>,
    %cst_16 = arith.constant 0.000000e+00 : f32
    %8 = vector.broadcast %cst_16 : f32 to vector<2x10x1x128xf32>
    %c0_17 = arith.constant 0 : index
    %c0_18 = arith.constant 0 : index
    %c0_19 = arith.constant 0 : index
    %c0_20 = arith.constant 0 : index
    %9 = vector.load %arg7[%c0_17, %c0_18, %c0_19, %c0_20] : memref<2x10x10x128xf32, #tpu.memory_space<vmem>>, vector<2x10x1x128xf32>
    tpu.vector_store %arg7[%c0_17, %c0_18, %c0_19, %c0_20], %8 {strides = array<i32>} : memref<2x10x10x128xf32, #tpu.memory_space<vmem>>, vector<2x10x1x128xf32>,
    %cst_21 = arith.constant 0.000000e+00 : f32
    %10 = vector.broadcast %cst_21 : f32 to vector<2x10x1x128xf32>
    %c0_22 = arith.constant 0 : index
    %c0_23 = arith.constant 0 : index
    %c9_24 = arith.constant 9 : index
    %c0_25 = arith.constant 0 : index
    %11 = vector.load %arg7[%c0_22, %c0_23, %c9_24, %c0_25] : memref<2x10x10x128xf32, #tpu.memory_space<vmem>>, vector<2x10x1x128xf32>
    tpu.vector_store %arg7[%c0_22, %c0_23, %c9_24, %c0_25], %10 {strides = array<i32>} : memref<2x10x10x128xf32, #tpu.memory_space<vmem>>, vector<2x10x1x128xf32>,
    %cst_26 = arith.constant 0.000000e+00 : f32
    %12 = vector.broadcast %cst_26 : f32 to vector<2x1x10x256xf32>
    %c0_27 = arith.constant 0 : index
    %c0_28 = arith.constant 0 : index
    %c0_29 = arith.constant 0 : index
    %c0_30 = arith.constant 0 : index
    %13 = vector.load %arg8[%c0_27, %c0_28, %c0_29, %c0_30] : memref<2x10x10x256xf32, #tpu.memory_space<vmem>>, vector<2x1x10x256xf32>
    tpu.vector_store %arg8[%c0_27, %c0_28, %c0_29, %c0_30], %12 {strides = array<i32>} : memref<2x10x10x256xf32, #tpu.memory_space<vmem>>, vector<2x1x10x256xf32>,
    %cst_31 = arith.constant 0.000000e+00 : f32
    %14 = vector.broadcast %cst_31 : f32 to vector<2x1x10x256xf32>
    %c0_32 = arith.constant 0 : index
    %c9_33 = arith.constant 9 : index
    %c0_34 = arith.constant 0 : index
    %c0_35 = arith.constant 0 : index
    %15 = vector.load %arg8[%c0_32, %c9_33, %c0_34, %c0_35] : memref<2x10x10x256xf32, #tpu.memory_space<vmem>>, vector<2x1x10x256xf32>
    tpu.vector_store %arg8[%c0_32, %c9_33, %c0_34, %c0_35], %14 {strides = array<i32>} : memref<2x10x10x256xf32, #tpu.memory_space<vmem>>, vector<2x1x10x256xf32>,
    %cst_36 = arith.constant 0.000000e+00 : f32
    %16 = vector.broadcast %cst_36 : f32 to vector<2x10x1x256xf32>
    %c0_37 = arith.constant 0 : index
    %c0_38 = arith.constant 0 : index
    %c0_39 = arith.constant 0 : index
    %c0_40 = arith.constant 0 : index
    %17 = vector.load %arg8[%c0_37, %c0_38, %c0_39, %c0_40] : memref<2x10x10x256xf32, #tpu.memory_space<vmem>>, vector<2x10x1x256xf32>
    tpu.vector_store %arg8[%c0_37, %c0_38, %c0_39, %c0_40], %16 {strides = array<i32>} : memref<2x10x10x256xf32, #tpu.memory_space<vmem>>, vector<2x10x1x256xf32>,
    %cst_41 = arith.constant 0.000000e+00 : f32
    %18 = vector.broadcast %cst_41 : f32 to vector<2x10x1x256xf32>
    %c0_42 = arith.constant 0 : index
    %c0_43 = arith.constant 0 : index
    %c9_44 = arith.constant 9 : index
    %c0_45 = arith.constant 0 : index
    %19 = vector.load %arg8[%c0_42, %c0_43, %c9_44, %c0_45] : memref<2x10x10x256xf32, #tpu.memory_space<vmem>>, vector<2x10x1x256xf32>
    tpu.vector_store %arg8[%c0_42, %c0_43, %c9_44, %c0_45], %18 {strides = array<i32>} : memref<2x10x10x256xf32, #tpu.memory_space<vmem>>, vector<2x10x1x256xf32>,
    %cst_46 = arith.constant 0.000000e+00 : f32
    %20 = vector.broadcast %cst_46 : f32 to vector<2x1x10x128xf32>
    %c0_47 = arith.constant 0 : index
    %c0_48 = arith.constant 0 : index
    %c0_49 = arith.constant 0 : index
    %c0_50 = arith.constant 0 : index
    %21 = vector.load %arg9[%c0_47, %c0_48, %c0_49, %c0_50] : memref<2x10x10x128xf32, #tpu.memory_space<vmem>>, vector<2x1x10x128xf32>
    tpu.vector_store %arg9[%c0_47, %c0_48, %c0_49, %c0_50], %20 {strides = array<i32>} : memref<2x10x10x128xf32, #tpu.memory_space<vmem>>, vector<2x1x10x128xf32>,
    %cst_51 = arith.constant 0.000000e+00 : f32
    %22 = vector.broadcast %cst_51 : f32 to vector<2x1x10x128xf32>
    %c0_52 = arith.constant 0 : index
    %c9_53 = arith.constant 9 : index
    %c0_54 = arith.constant 0 : index
    %c0_55 = arith.constant 0 : index
    %23 = vector.load %arg9[%c0_52, %c9_53, %c0_54, %c0_55] : memref<2x10x10x128xf32, #tpu.memory_space<vmem>>, vector<2x1x10x128xf32>
    tpu.vector_store %arg9[%c0_52, %c9_53, %c0_54, %c0_55], %22 {strides = array<i32>} : memref<2x10x10x128xf32, #tpu.memory_space<vmem>>, vector<2x1x10x128xf32>,
    %cst_56 = arith.constant 0.000000e+00 : f32
    %24 = vector.broadcast %cst_56 : f32 to vector<2x10x1x128xf32>
    %c0_57 = arith.constant 0 : index
    %c0_58 = arith.constant 0 : index
    %c0_59 = arith.constant 0 : index
    %c0_60 = arith.constant 0 : index
    %25 = vector.load %arg9[%c0_57, %c0_58, %c0_59, %c0_60] : memref<2x10x10x128xf32, #tpu.memory_space<vmem>>, vector<2x10x1x128xf32>
    tpu.vector_store %arg9[%c0_57, %c0_58, %c0_59, %c0_60], %24 {strides = array<i32>} : memref<2x10x10x128xf32, #tpu.memory_space<vmem>>, vector<2x10x1x128xf32>,
    %cst_61 = arith.constant 0.000000e+00 : f32
    %26 = vector.broadcast %cst_61 : f32 to vector<2x10x1x128xf32>
    %c0_62 = arith.constant 0 : index
    %c0_63 = arith.constant 0 : index
    %c9_64 = arith.constant 9 : index
    %c0_65 = arith.constant 0 : index
    %27 = vector.load %arg9[%c0_62, %c0_63, %c9_64, %c0_65] : memref<2x10x10x128xf32, #tpu.memory_space<vmem>>, vector<2x10x1x128xf32>
    tpu.vector_store %arg9[%c0_62, %c0_63, %c9_64, %c0_65], %26 {strides = array<i32>} : memref<2x10x10x128xf32, #tpu.memory_space<vmem>>, vector<2x10x1x128xf32>,
    %cst_66 = arith.constant 0.000000e+00 : f32
    %28 = vector.broadcast %cst_66 : f32 to vector<2x1x10x256xf32>
    %c0_67 = arith.constant 0 : index
    %c0_68 = arith.constant 0 : index
    %c0_69 = arith.constant 0 : index
    %c0_70 = arith.constant 0 : index
    %29 = vector.load %arg10[%c0_67, %c0_68, %c0_69, %c0_70] : memref<2x10x10x256xf32, #tpu.memory_space<vmem>>, vector<2x1x10x256xf32>
    tpu.vector_store %arg10[%c0_67, %c0_68, %c0_69, %c0_70], %28 {strides = array<i32>} : memref<2x10x10x256xf32, #tpu.memory_space<vmem>>, vector<2x1x10x256xf32>,
    %cst_71 = arith.constant 0.000000e+00 : f32
    %30 = vector.broadcast %cst_71 : f32 to vector<2x1x10x256xf32>
    %c0_72 = arith.constant 0 : index
    %c9_73 = arith.constant 9 : index
    %c0_74 = arith.constant 0 : index
    %c0_75 = arith.constant 0 : index
    %31 = vector.load %arg10[%c0_72, %c9_73, %c0_74, %c0_75] : memref<2x10x10x256xf32, #tpu.memory_space<vmem>>, vector<2x1x10x256xf32>
    tpu.vector_store %arg10[%c0_72, %c9_73, %c0_74, %c0_75], %30 {strides = array<i32>} : memref<2x10x10x256xf32, #tpu.memory_space<vmem>>, vector<2x1x10x256xf32>,
    %cst_76 = arith.constant 0.000000e+00 : f32
    %32 = vector.broadcast %cst_76 : f32 to vector<2x10x1x256xf32>
    %c0_77 = arith.constant 0 : index
    %c0_78 = arith.constant 0 : index
    %c0_79 = arith.constant 0 : index
    %c0_80 = arith.constant 0 : index
    %33 = vector.load %arg10[%c0_77, %c0_78, %c0_79, %c0_80] : memref<2x10x10x256xf32, #tpu.memory_space<vmem>>, vector<2x10x1x256xf32>
    tpu.vector_store %arg10[%c0_77, %c0_78, %c0_79, %c0_80], %32 {strides = array<i32>} : memref<2x10x10x256xf32, #tpu.memory_space<vmem>>, vector<2x10x1x256xf32>,
    %cst_81 = arith.constant 0.000000e+00 : f32
    %34 = vector.broadcast %cst_81 : f32 to vector<2x10x1x256xf32>
    %c0_82 = arith.constant 0 : index
    %c0_83 = arith.constant 0 : index
    %c9_84 = arith.constant 9 : index
    %c0_85 = arith.constant 0 : index
    %35 = vector.load %arg10[%c0_82, %c0_83, %c9_84, %c0_85] : memref<2x10x10x256xf32, #tpu.memory_space<vmem>>, vector<2x10x1x256xf32>
    tpu.vector_store %arg10[%c0_82, %c0_83, %c9_84, %c0_85], %34 {strides = array<i32>} : memref<2x10x10x256xf32, #tpu.memory_space<vmem>>, vector<2x10x1x256xf32>,
    %cst_86 = arith.constant 0.000000e+00 : f32
    %36 = vector.broadcast %cst_86 : f32 to vector<2x1x10x128xf32>
    %c0_87 = arith.constant 0 : index
    %c0_88 = arith.constant 0 : index
    %c0_89 = arith.constant 0 : index
    %c0_90 = arith.constant 0 : index
    %37 = vector.load %arg11[%c0_87, %c0_88, %c0_89, %c0_90] : memref<2x10x10x128xf32, #tpu.memory_space<vmem>>, vector<2x1x10x128xf32>
    tpu.vector_store %arg11[%c0_87, %c0_88, %c0_89, %c0_90], %36 {strides = array<i32>} : memref<2x10x10x128xf32, #tpu.memory_space<vmem>>, vector<2x1x10x128xf32>,
    %cst_91 = arith.constant 0.000000e+00 : f32
    %38 = vector.broadcast %cst_91 : f32 to vector<2x1x10x128xf32>
    %c0_92 = arith.constant 0 : index
    %c9_93 = arith.constant 9 : index
    %c0_94 = arith.constant 0 : index
    %c0_95 = arith.constant 0 : index
    %39 = vector.load %arg11[%c0_92, %c9_93, %c0_94, %c0_95] : memref<2x10x10x128xf32, #tpu.memory_space<vmem>>, vector<2x1x10x128xf32>
    tpu.vector_store %arg11[%c0_92, %c9_93, %c0_94, %c0_95], %38 {strides = array<i32>} : memref<2x10x10x128xf32, #tpu.memory_space<vmem>>, vector<2x1x10x128xf32>,
    %cst_96 = arith.constant 0.000000e+00 : f32
    %40 = vector.broadcast %cst_96 : f32 to vector<2x10x1x128xf32>
    %c0_97 = arith.constant 0 : index
    %c0_98 = arith.constant 0 : index
    %c0_99 = arith.constant 0 : index
    %c0_100 = arith.constant 0 : index
    %41 = vector.load %arg11[%c0_97, %c0_98, %c0_99, %c0_100] : memref<2x10x10x128xf32, #tpu.memory_space<vmem>>, vector<2x10x1x128xf32>
    tpu.vector_store %arg11[%c0_97, %c0_98, %c0_99, %c0_100], %40 {strides = array<i32>} : memref<2x10x10x128xf32, #tpu.memory_space<vmem>>, vector<2x10x1x128xf32>,
    %cst_101 = arith.constant 0.000000e+00 : f32
    %42 = vector.broadcast %cst_101 : f32 to vector<2x10x1x128xf32>
    %c0_102 = arith.constant 0 : index
    %c0_103 = arith.constant 0 : index
    %c9_104 = arith.constant 9 : index
    %c0_105 = arith.constant 0 : index
    %43 = vector.load %arg11[%c0_102, %c0_103, %c9_104, %c0_105] : memref<2x10x10x128xf32, #tpu.memory_space<vmem>>, vector<2x10x1x128xf32>
    tpu.vector_store %arg11[%c0_102, %c0_103, %c9_104, %c0_105], %42 {strides = array<i32>} : memref<2x10x10x128xf32, #tpu.memory_space<vmem>>, vector<2x10x1x128xf32>,
    %c0_106 = arith.constant 0 : index
    %c0_107 = arith.constant 0 : index
    %c0_108 = arith.constant 0 : index
    %c0_109 = arith.constant 0 : index
    %44 = vector.load %arg0[%c0_106, %c0_107, %c0_108, %c0_109] : memref<8x8x8x128xf32, #tpu.memory_space<vmem>>, vector<2x8x8x128xf32>
    %c2 = arith.constant 2 : index
    %c0_110 = arith.constant 0 : index
    %c0_111 = arith.constant 0 : index
    %c0_112 = arith.constant 0 : index
    %45 = vector.load %arg0[%c2, %c0_110, %c0_111, %c0_112] : memref<8x8x8x128xf32, #tpu.memory_space<vmem>>, vector<2x8x8x128xf32>
    %c4 = arith.constant 4 : index
    %c0_113 = arith.constant 0 : index
    %c0_114 = arith.constant 0 : index
    %c0_115 = arith.constant 0 : index
    %46 = vector.load %arg0[%c4, %c0_113, %c0_114, %c0_115] : memref<8x8x8x128xf32, #tpu.memory_space<vmem>>, vector<2x8x8x128xf32>
    %c6 = arith.constant 6 : index
    %c0_116 = arith.constant 0 : index
    %c0_117 = arith.constant 0 : index
    %c0_118 = arith.constant 0 : index
    %47 = vector.load %arg0[%c6, %c0_116, %c0_117, %c0_118] : memref<8x8x8x128xf32, #tpu.memory_space<vmem>>, vector<2x8x8x128xf32>
    %c0_119 = arith.constant 0 : index
    %c0_120 = arith.constant 0 : index
    %48 = vector.load %arg1[%c0_119, %c0_120] : memref<9x1024xf32, #tpu.memory_space<vmem>>, vector<9x128xf32>
    %49 = vector.extract_strided_slice %48 {offsets = [0, 0], sizes = [1, 128], strides = [1, 1]} : vector<9x128xf32> to vector<1x128xf32>
    %50 = vector.shape_cast %49 : vector<1x128xf32> to vector<128xf32>
    %51 = vector.shape_cast %50 : vector<128xf32> to vector<1x1x1x128xf32>
    %52 = vector.broadcast %51 : vector<1x1x1x128xf32> to vector<2x8x8x128xf32>
    %53 = arith.mulf %44, %52 : vector<2x8x8x128xf32>
    %54 = vector.extract_strided_slice %48 {offsets = [1, 0], sizes = [1, 128], strides = [1, 1]} : vector<9x128xf32> to vector<1x128xf32>
    %55 = vector.shape_cast %54 : vector<1x128xf32> to vector<128xf32>
    %56 = vector.shape_cast %55 : vector<128xf32> to vector<1x1x1x128xf32>
    %57 = vector.broadcast %56 : vector<1x1x1x128xf32> to vector<2x8x8x128xf32>
    %58 = arith.mulf %45, %57 : vector<2x8x8x128xf32>
    %59 = arith.addf %53, %58 : vector<2x8x8x128xf32>
    %60 = vector.extract_strided_slice %48 {offsets = [3, 0], sizes = [1, 128], strides = [1, 1]} : vector<9x128xf32> to vector<1x128xf32>
    %61 = vector.shape_cast %60 : vector<1x128xf32> to vector<128xf32>
    %62 = vector.shape_cast %61 : vector<128xf32> to vector<1x1x1x128xf32>
    %63 = vector.broadcast %62 : vector<1x1x1x128xf32> to vector<2x8x8x128xf32>
    %64 = arith.mulf %46, %63 : vector<2x8x8x128xf32>
    %65 = arith.addf %59, %64 : vector<2x8x8x128xf32>
    %66 = vector.extract_strided_slice %48 {offsets = [4, 0], sizes = [1, 128], strides = [1, 1]} : vector<9x128xf32> to vector<1x128xf32>
    %67 = vector.shape_cast %66 : vector<1x128xf32> to vector<128xf32>
    %68 = vector.shape_cast %67 : vector<128xf32> to vector<1x1x1x128xf32>
    %69 = vector.broadcast %68 : vector<1x1x1x128xf32> to vector<2x8x8x128xf32>
    %70 = arith.mulf %47, %69 : vector<2x8x8x128xf32>
    %71 = arith.addf %65, %70 : vector<2x8x8x128xf32>
    %c0_121 = arith.constant 0 : index
    %c0_122 = arith.constant 0 : index
    %c0_123 = arith.constant 0 : index
    %c0_124 = arith.constant 0 : index
    %72 = vector.load %arg6[%c0_121, %c0_122, %c0_123, %c0_124] : memref<2x9x9x128xf32, #tpu.memory_space<vmem>>, vector<2x8x8x128xf32>
    tpu.vector_store %arg6[%c0_121, %c0_122, %c0_123, %c0_124], %44 {strides = array<i32>} : memref<2x9x9x128xf32, #tpu.memory_space<vmem>>, vector<2x8x8x128xf32>,
    %c0_125 = arith.constant 0 : index
    %c0_126 = arith.constant 0 : index
    %c1 = arith.constant 1 : index
    %c0_127 = arith.constant 0 : index
    %73 = vector.load %arg6[%c0_125, %c0_126, %c1, %c0_127] : memref<2x9x9x128xf32, #tpu.memory_space<vmem>>, vector<2x8x8x128xf32>
    %74 = vector.extract_strided_slice %48 {offsets = [2, 0], sizes = [1, 128], strides = [1, 1]} : vector<9x128xf32> to vector<1x128xf32>
    %75 = vector.shape_cast %74 : vector<1x128xf32> to vector<128xf32>
    %76 = vector.shape_cast %75 : vector<128xf32> to vector<1x1x1x128xf32>
    %77 = vector.broadcast %76 : vector<1x1x1x128xf32> to vector<2x8x8x128xf32>
    %78 = arith.mulf %73, %77 : vector<2x8x8x128xf32>
    %79 = arith.addf %71, %78 : vector<2x8x8x128xf32>
    %c0_128 = arith.constant 0 : index
    %c1_129 = arith.constant 1 : index
    %c0_130 = arith.constant 0 : index
    %c0_131 = arith.constant 0 : index
    %80 = vector.load %arg6[%c0_128, %c1_129, %c0_130, %c0_131] : memref<2x9x9x128xf32, #tpu.memory_space<vmem>>, vector<2x8x8x128xf32>
    %81 = vector.extract_strided_slice %48 {offsets = [6, 0], sizes = [1, 128], strides = [1, 1]} : vector<9x128xf32> to vector<1x128xf32>
    %82 = vector.shape_cast %81 : vector<1x128xf32> to vector<128xf32>
    %83 = vector.shape_cast %82 : vector<128xf32> to vector<1x1x1x128xf32>
    %84 = vector.broadcast %83 : vector<1x1x1x128xf32> to vector<2x8x8x128xf32>
    %85 = arith.mulf %80, %84 : vector<2x8x8x128xf32>
    %86 = arith.addf %79, %85 : vector<2x8x8x128xf32>
    %c0_132 = arith.constant 0 : index
    %c1_133 = arith.constant 1 : index
    %c1_134 = arith.constant 1 : index
    %c0_135 = arith.constant 0 : index
    %87 = vector.load %arg6[%c0_132, %c1_133, %c1_134, %c0_135] : memref<2x9x9x128xf32, #tpu.memory_space<vmem>>, vector<2x8x8x128xf32>
    %88 = vector.extract_strided_slice %48 {offsets = [8, 0], sizes = [1, 128], strides = [1, 1]} : vector<9x128xf32> to vector<1x128xf32>
    %89 = vector.shape_cast %88 : vector<1x128xf32> to vector<128xf32>
    %90 = vector.shape_cast %89 : vector<128xf32> to vector<1x1x1x128xf32>
    %91 = vector.broadcast %90 : vector<1x1x1x128xf32> to vector<2x8x8x128xf32>
    %92 = arith.mulf %87, %91 : vector<2x8x8x128xf32>
    %93 = arith.addf %86, %92 : vector<2x8x8x128xf32>
    %c0_136 = arith.constant 0 : index
    %c0_137 = arith.constant 0 : index
    %c0_138 = arith.constant 0 : index
    %c0_139 = arith.constant 0 : index
    %94 = vector.load %arg6[%c0_136, %c0_137, %c0_138, %c0_139] : memref<2x9x9x128xf32, #tpu.memory_space<vmem>>, vector<2x8x8x128xf32>
    tpu.vector_store %arg6[%c0_136, %c0_137, %c0_138, %c0_139], %45 {strides = array<i32>} : memref<2x9x9x128xf32, #tpu.memory_space<vmem>>, vector<2x8x8x128xf32>,
    %c0_140 = arith.constant 0 : index
    %c1_141 = arith.constant 1 : index
    %c0_142 = arith.constant 0 : index
    %c0_143 = arith.constant 0 : index
    %95 = vector.load %arg6[%c0_140, %c1_141, %c0_142, %c0_143] : memref<2x9x9x128xf32, #tpu.memory_space<vmem>>, vector<2x8x8x128xf32>
    %96 = vector.extract_strided_slice %48 {offsets = [7, 0], sizes = [1, 128], strides = [1, 1]} : vector<9x128xf32> to vector<1x128xf32>
    %97 = vector.shape_cast %96 : vector<1x128xf32> to vector<128xf32>
    %98 = vector.shape_cast %97 : vector<128xf32> to vector<1x1x1x128xf32>
    %99 = vector.broadcast %98 : vector<1x1x1x128xf32> to vector<2x8x8x128xf32>
    %100 = arith.mulf %95, %99 : vector<2x8x8x128xf32>
    %101 = arith.addf %93, %100 : vector<2x8x8x128xf32>
    %c0_144 = arith.constant 0 : index
    %c0_145 = arith.constant 0 : index
    %c0_146 = arith.constant 0 : index
    %c0_147 = arith.constant 0 : index
    %102 = vector.load %arg6[%c0_144, %c0_145, %c0_146, %c0_147] : memref<2x9x9x128xf32, #tpu.memory_space<vmem>>, vector<2x8x8x128xf32>
    tpu.vector_store %arg6[%c0_144, %c0_145, %c0_146, %c0_147], %46 {strides = array<i32>} : memref<2x9x9x128xf32, #tpu.memory_space<vmem>>, vector<2x8x8x128xf32>,
    %c0_148 = arith.constant 0 : index
    %c0_149 = arith.constant 0 : index
    %c1_150 = arith.constant 1 : index
    %c0_151 = arith.constant 0 : index
    %103 = vector.load %arg6[%c0_148, %c0_149, %c1_150, %c0_151] : memref<2x9x9x128xf32, #tpu.memory_space<vmem>>, vector<2x8x8x128xf32>
    %104 = vector.extract_strided_slice %48 {offsets = [5, 0], sizes = [1, 128], strides = [1, 1]} : vector<9x128xf32> to vector<1x128xf32>
    %105 = vector.shape_cast %104 : vector<1x128xf32> to vector<128xf32>
    %106 = vector.shape_cast %105 : vector<128xf32> to vector<1x1x1x128xf32>
    %107 = vector.broadcast %106 : vector<1x1x1x128xf32> to vector<2x8x8x128xf32>
    %108 = arith.mulf %103, %107 : vector<2x8x8x128xf32>
    %109 = arith.addf %101, %108 : vector<2x8x8x128xf32>
    %110 = vector.shape_cast %109 : vector<2x8x8x128xf32> to vector<128x128xf32>
    %111 = arith.truncf %110 : vector<128x128xf32> to vector<128x128xbf16>
    %c0_152 = arith.constant 0 : index
    %c0_153 = arith.constant 0 : index
    %112 = vector.load %arg2[%c0_152, %c0_153] : memref<464x128xbf16, #tpu.memory_space<vmem>>, vector<128x128xbf16>
    %c0_154 = arith.constant 0 : index
    %c0_155 = arith.constant 0 : index
    %113 = vector.load %arg4[%c0_154, %c0_155] : memref<1x1152xf32, #tpu.memory_space<vmem>>, vector<1x128xf32>
    %cst_156 = arith.constant dense<0.000000e+00> : vector<128x128xf32>
    %114 = tpu.matmul %111, %112, %cst_156 {dimension_numbers = #tpu.dot_dimension_numbers<[1], [0], [0], [1], [0, 0, 1, 1], [], []>} : vector<128x128xbf16>, vector<128x128xbf16>, vector<128x128xf32> -> vector<128x128xf32>
    %115 = vector.broadcast %113 : vector<1x128xf32> to vector<128x128xf32>
    %116 = arith.addf %114, %115 : vector<128x128xf32>
    %cst_157 = arith.constant 0.000000e+00 : f32
    %117 = vector.broadcast %cst_157 : f32 to vector<128x128xf32>
    %118 = arith.maximumf %116, %117 : vector<128x128xf32>
    %119 = vector.shape_cast %118 : vector<128x128xf32> to vector<2x8x8x128xf32>
    %c0_158 = arith.constant 0 : index
    %c1_159 = arith.constant 1 : index
    %c1_160 = arith.constant 1 : index
    %c0_161 = arith.constant 0 : index
    %120 = vector.load %arg7[%c0_158, %c1_159, %c1_160, %c0_161] : memref<2x10x10x128xf32, #tpu.memory_space<vmem>>, vector<2x8x8x128xf32>
    tpu.vector_store %arg7[%c0_158, %c1_159, %c1_160, %c0_161], %119 {strides = array<i32>} : memref<2x10x10x128xf32, #tpu.memory_space<vmem>>, vector<2x8x8x128xf32>,
    %121 = arith.maximumf %44, %45 : vector<2x8x8x128xf32>
    %122 = arith.maximumf %46, %47 : vector<2x8x8x128xf32>
    %123 = arith.maximumf %121, %122 : vector<2x8x8x128xf32>
    %c0_162 = arith.constant 0 : index
    %c128 = arith.constant 128 : index
    %124 = vector.load %arg1[%c0_162, %c128] : memref<9x1024xf32, #tpu.memory_space<vmem>>, vector<9x128xf32>
    %c0_163 = arith.constant 0 : index
    %c0_164 = arith.constant 0 : index
    %c0_165 = arith.constant 0 : index
    %c0_166 = arith.constant 0 : index
    %125 = vector.load %arg7[%c0_163, %c0_164, %c0_165, %c0_166] : memref<2x10x10x128xf32, #tpu.memory_space<vmem>>, vector<2x8x8x128xf32>
    %126 = vector.extract_strided_slice %124 {offsets = [0, 0], sizes = [1, 128], strides = [1, 1]} : vector<9x128xf32> to vector<1x128xf32>
    %127 = vector.shape_cast %126 : vector<1x128xf32> to vector<128xf32>
    %128 = vector.shape_cast %127 : vector<128xf32> to vector<1x1x1x128xf32>
    %129 = vector.broadcast %128 : vector<1x1x1x128xf32> to vector<2x8x8x128xf32>
    %130 = arith.mulf %125, %129 : vector<2x8x8x128xf32>
    %c0_167 = arith.constant 0 : index
    %c0_168 = arith.constant 0 : index
    %c1_169 = arith.constant 1 : index
    %c0_170 = arith.constant 0 : index
    %131 = vector.load %arg7[%c0_167, %c0_168, %c1_169, %c0_170] : memref<2x10x10x128xf32, #tpu.memory_space<vmem>>, vector<2x8x8x128xf32>
    %132 = vector.extract_strided_slice %124 {offsets = [1, 0], sizes = [1, 128], strides = [1, 1]} : vector<9x128xf32> to vector<1x128xf32>
    %133 = vector.shape_cast %132 : vector<1x128xf32> to vector<128xf32>
    %134 = vector.shape_cast %133 : vector<128xf32> to vector<1x1x1x128xf32>
    %135 = vector.broadcast %134 : vector<1x1x1x128xf32> to vector<2x8x8x128xf32>
    %136 = arith.mulf %131, %135 : vector<2x8x8x128xf32>
    %137 = arith.addf %130, %136 : vector<2x8x8x128xf32>
    %c0_171 = arith.constant 0 : index
    %c0_172 = arith.constant 0 : index
    %c2_173 = arith.constant 2 : index
    %c0_174 = arith.constant 0 : index
    %138 = vector.load %arg7[%c0_171, %c0_172, %c2_173, %c0_174] : memref<2x10x10x128xf32, #tpu.memory_space<vmem>>, vector<2x8x8x128xf32>
    %139 = vector.extract_strided_slice %124 {offsets = [2, 0], sizes = [1, 128], strides = [1, 1]} : vector<9x128xf32> to vector<1x128xf32>
    %140 = vector.shape_cast %139 : vector<1x128xf32> to vector<128xf32>
    %141 = vector.shape_cast %140 : vector<128xf32> to vector<1x1x1x128xf32>
    %142 = vector.broadcast %141 : vector<1x1x1x128xf32> to vector<2x8x8x128xf32>
    %143 = arith.mulf %138, %142 : vector<2x8x8x128xf32>
    %144 = arith.addf %137, %143 : vector<2x8x8x128xf32>
    %c0_175 = arith.constant 0 : index
    %c1_176 = arith.constant 1 : index
    %c0_177 = arith.constant 0 : index
    %c0_178 = arith.constant 0 : index
    %145 = vector.load %arg7[%c0_175, %c1_176, %c0_177, %c0_178] : memref<2x10x10x128xf32, #tpu.memory_space<vmem>>, vector<2x8x8x128xf32>
    %146 = vector.extract_strided_slice %124 {offsets = [3, 0], sizes = [1, 128], strides = [1, 1]} : vector<9x128xf32> to vector<1x128xf32>
    %147 = vector.shape_cast %146 : vector<1x128xf32> to vector<128xf32>
    %148 = vector.shape_cast %147 : vector<128xf32> to vector<1x1x1x128xf32>
    %149 = vector.broadcast %148 : vector<1x1x1x128xf32> to vector<2x8x8x128xf32>
    %150 = arith.mulf %145, %149 : vector<2x8x8x128xf32>
    %151 = arith.addf %144, %150 : vector<2x8x8x128xf32>
    %c0_179 = arith.constant 0 : index
    %c1_180 = arith.constant 1 : index
    %c1_181 = arith.constant 1 : index
    %c0_182 = arith.constant 0 : index
    %152 = vector.load %arg7[%c0_179, %c1_180, %c1_181, %c0_182] : memref<2x10x10x128xf32, #tpu.memory_space<vmem>>, vector<2x8x8x128xf32>
    %153 = vector.extract_strided_slice %124 {offsets = [4, 0], sizes = [1, 128], strides = [1, 1]} : vector<9x128xf32> to vector<1x128xf32>
    %154 = vector.shape_cast %153 : vector<1x128xf32> to vector<128xf32>
    %155 = vector.shape_cast %154 : vector<128xf32> to vector<1x1x1x128xf32>
    %156 = vector.broadcast %155 : vector<1x1x1x128xf32> to vector<2x8x8x128xf32>
    %157 = arith.mulf %152, %156 : vector<2x8x8x128xf32>
    %158 = arith.addf %151, %157 : vector<2x8x8x128xf32>
    %c0_183 = arith.constant 0 : index
    %c1_184 = arith.constant 1 : index
    %c2_185 = arith.constant 2 : index
    %c0_186 = arith.constant 0 : index
    %159 = vector.load %arg7[%c0_183, %c1_184, %c2_185, %c0_186] : memref<2x10x10x128xf32, #tpu.memory_space<vmem>>, vector<2x8x8x128xf32>
    %160 = vector.extract_strided_slice %124 {offsets = [5, 0], sizes = [1, 128], strides = [1, 1]} : vector<9x128xf32> to vector<1x128xf32>
    %161 = vector.shape_cast %160 : vector<1x128xf32> to vector<128xf32>
    %162 = vector.shape_cast %161 : vector<128xf32> to vector<1x1x1x128xf32>
    %163 = vector.broadcast %162 : vector<1x1x1x128xf32> to vector<2x8x8x128xf32>
    %164 = arith.mulf %159, %163 : vector<2x8x8x128xf32>
    %165 = arith.addf %158, %164 : vector<2x8x8x128xf32>
    %c0_187 = arith.constant 0 : index
    %c2_188 = arith.constant 2 : index
    %c0_189 = arith.constant 0 : index
    %c0_190 = arith.constant 0 : index
    %166 = vector.load %arg7[%c0_187, %c2_188, %c0_189, %c0_190] : memref<2x10x10x128xf32, #tpu.memory_space<vmem>>, vector<2x8x8x128xf32>
    %167 = vector.extract_strided_slice %124 {offsets = [6, 0], sizes = [1, 128], strides = [1, 1]} : vector<9x128xf32> to vector<1x128xf32>
    %168 = vector.shape_cast %167 : vector<1x128xf32> to vector<128xf32>
    %169 = vector.shape_cast %168 : vector<128xf32> to vector<1x1x1x128xf32>
    %170 = vector.broadcast %169 : vector<1x1x1x128xf32> to vector<2x8x8x128xf32>
    %171 = arith.mulf %166, %170 : vector<2x8x8x128xf32>
    %172 = arith.addf %165, %171 : vector<2x8x8x128xf32>
    %c0_191 = arith.constant 0 : index
    %c2_192 = arith.constant 2 : index
    %c1_193 = arith.constant 1 : index
    %c0_194 = arith.constant 0 : index
    %173 = vector.load %arg7[%c0_191, %c2_192, %c1_193, %c0_194] : memref<2x10x10x128xf32, #tpu.memory_space<vmem>>, vector<2x8x8x128xf32>
    %174 = vector.extract_strided_slice %124 {offsets = [7, 0], sizes = [1, 128], strides = [1, 1]} : vector<9x128xf32> to vector<1x128xf32>
    %175 = vector.shape_cast %174 : vector<1x128xf32> to vector<128xf32>
    %176 = vector.shape_cast %175 : vector<128xf32> to vector<1x1x1x128xf32>
    %177 = vector.broadcast %176 : vector<1x1x1x128xf32> to vector<2x8x8x128xf32>
    %178 = arith.mulf %173, %177 : vector<2x8x8x128xf32>
    %179 = arith.addf %172, %178 : vector<2x8x8x128xf32>
    %c0_195 = arith.constant 0 : index
    %c2_196 = arith.constant 2 : index
    %c2_197 = arith.constant 2 : index
    %c0_198 = arith.constant 0 : index
    %180 = vector.load %arg7[%c0_195, %c2_196, %c2_197, %c0_198] : memref<2x10x10x128xf32, #tpu.memory_space<vmem>>, vector<2x8x8x128xf32>
    %181 = vector.extract_strided_slice %124 {offsets = [8, 0], sizes = [1, 128], strides = [1, 1]} : vector<9x128xf32> to vector<1x128xf32>
    %182 = vector.shape_cast %181 : vector<1x128xf32> to vector<128xf32>
    %183 = vector.shape_cast %182 : vector<128xf32> to vector<1x1x1x128xf32>
    %184 = vector.broadcast %183 : vector<1x1x1x128xf32> to vector<2x8x8x128xf32>
    %185 = arith.mulf %180, %184 : vector<2x8x8x128xf32>
    %186 = arith.addf %179, %185 : vector<2x8x8x128xf32>
    %187 = vector.shape_cast %186 : vector<2x8x8x128xf32> to vector<128x128xf32>
    %188 = vector.extract_strided_slice %187 {offsets = [0, 0], sizes = [128, 40], strides = [1, 1]} : vector<128x128xf32> to vector<128x40xf32>
    %189 = arith.truncf %188 : vector<128x40xf32> to vector<128x40xbf16>
    %c0_199 = arith.constant 0 : index
    %c0_200 = arith.constant 0 : index
    %190 = vector.load %arg3[%c0_199, %c0_200] : memref<152x256xbf16, #tpu.memory_space<vmem>>, vector<40x256xbf16>
    %c0_201 = arith.constant 0 : index
    %c128_202 = arith.constant 128 : index
    %191 = vector.load %arg4[%c0_201, %c128_202] : memref<1x1152xf32, #tpu.memory_space<vmem>>, vector<1x256xf32>
    %cst_203 = arith.constant dense<0.000000e+00> : vector<128x256xf32>
    %192 = tpu.matmul %189, %190, %cst_203 {dimension_numbers = #tpu.dot_dimension_numbers<[1], [0], [0], [1], [0, 0, 1, 1], [], []>} : vector<128x40xbf16>, vector<40x256xbf16>, vector<128x256xf32> -> vector<128x256xf32>
    %193 = vector.broadcast %191 : vector<1x256xf32> to vector<128x256xf32>
    %194 = arith.addf %192, %193 : vector<128x256xf32>
    %195 = vector.shape_cast %194 : vector<128x256xf32> to vector<2x8x8x256xf32>
    %196 = vector.extract_strided_slice %195 {offsets = [0, 0, 0, 0], sizes = [2, 8, 8, 128], strides = [1, 1, 1, 1]} : vector<2x8x8x256xf32> to vector<2x8x8x128xf32>
    %197 = arith.addf %196, %123 : vector<2x8x8x128xf32>
    %cst_204 = arith.constant 0.000000e+00 : f32
    %198 = vector.broadcast %cst_204 : f32 to vector<2x8x8x128xf32>
    %199 = arith.maximumf %197, %198 : vector<2x8x8x128xf32>
    %c0_205 = arith.constant 0 : index
    %c1_206 = arith.constant 1 : index
    %c1_207 = arith.constant 1 : index
    %c0_208 = arith.constant 0 : index
    %200 = vector.load %arg8[%c0_205, %c1_206, %c1_207, %c0_208] : memref<2x10x10x256xf32, #tpu.memory_space<vmem>>, vector<2x8x8x128xf32>
    tpu.vector_store %arg8[%c0_205, %c1_206, %c1_207, %c0_208], %199 {strides = array<i32>} : memref<2x10x10x256xf32, #tpu.memory_space<vmem>>, vector<2x8x8x128xf32>,
    %201 = vector.extract_strided_slice %195 {offsets = [0, 0, 0, 128], sizes = [2, 8, 8, 128], strides = [1, 1, 1, 1]} : vector<2x8x8x256xf32> to vector<2x8x8x128xf32>
    %cst_209 = arith.constant 0.000000e+00 : f32
    %202 = vector.broadcast %cst_209 : f32 to vector<2x8x8x128xf32>
    %203 = arith.maximumf %201, %202 : vector<2x8x8x128xf32>
    %c0_210 = arith.constant 0 : index
    %c1_211 = arith.constant 1 : index
    %c1_212 = arith.constant 1 : index
    %c128_213 = arith.constant 128 : index
    %204 = vector.load %arg8[%c0_210, %c1_211, %c1_212, %c128_213] : memref<2x10x10x256xf32, #tpu.memory_space<vmem>>, vector<2x8x8x128xf32>
    tpu.vector_store %arg8[%c0_210, %c1_211, %c1_212, %c128_213], %203 {strides = array<i32>} : memref<2x10x10x256xf32, #tpu.memory_space<vmem>>, vector<2x8x8x128xf32>,
    %c0_214 = arith.constant 0 : index
    %c256 = arith.constant 256 : index
    %205 = vector.load %arg1[%c0_214, %c256] : memref<9x1024xf32, #tpu.memory_space<vmem>>, vector<9x256xf32>
    %c0_215 = arith.constant 0 : index
    %c0_216 = arith.constant 0 : index
    %c0_217 = arith.constant 0 : index
    %c0_218 = arith.constant 0 : index
    %206 = vector.load %arg8[%c0_215, %c0_216, %c0_217, %c0_218] : memref<2x10x10x256xf32, #tpu.memory_space<vmem>>, vector<2x8x8x256xf32>
    %207 = vector.extract_strided_slice %205 {offsets = [0, 0], sizes = [1, 256], strides = [1, 1]} : vector<9x256xf32> to vector<1x256xf32>
    %208 = vector.shape_cast %207 : vector<1x256xf32> to vector<256xf32>
    %209 = vector.shape_cast %208 : vector<256xf32> to vector<1x1x1x256xf32>
    %210 = vector.broadcast %209 : vector<1x1x1x256xf32> to vector<2x8x8x256xf32>
    %211 = arith.mulf %206, %210 : vector<2x8x8x256xf32>
    %c0_219 = arith.constant 0 : index
    %c0_220 = arith.constant 0 : index
    %c1_221 = arith.constant 1 : index
    %c0_222 = arith.constant 0 : index
    %212 = vector.load %arg8[%c0_219, %c0_220, %c1_221, %c0_222] : memref<2x10x10x256xf32, #tpu.memory_space<vmem>>, vector<2x8x8x256xf32>
    %213 = vector.extract_strided_slice %205 {offsets = [1, 0], sizes = [1, 256], strides = [1, 1]} : vector<9x256xf32> to vector<1x256xf32>
    %214 = vector.shape_cast %213 : vector<1x256xf32> to vector<256xf32>
    %215 = vector.shape_cast %214 : vector<256xf32> to vector<1x1x1x256xf32>
    %216 = vector.broadcast %215 : vector<1x1x1x256xf32> to vector<2x8x8x256xf32>
    %217 = arith.mulf %212, %216 : vector<2x8x8x256xf32>
    %218 = arith.addf %211, %217 : vector<2x8x8x256xf32>
    %c0_223 = arith.constant 0 : index
    %c0_224 = arith.constant 0 : index
    %c2_225 = arith.constant 2 : index
    %c0_226 = arith.constant 0 : index
    %219 = vector.load %arg8[%c0_223, %c0_224, %c2_225, %c0_226] : memref<2x10x10x256xf32, #tpu.memory_space<vmem>>, vector<2x8x8x256xf32>
    %220 = vector.extract_strided_slice %205 {offsets = [2, 0], sizes = [1, 256], strides = [1, 1]} : vector<9x256xf32> to vector<1x256xf32>
    %221 = vector.shape_cast %220 : vector<1x256xf32> to vector<256xf32>
    %222 = vector.shape_cast %221 : vector<256xf32> to vector<1x1x1x256xf32>
    %223 = vector.broadcast %222 : vector<1x1x1x256xf32> to vector<2x8x8x256xf32>
    %224 = arith.mulf %219, %223 : vector<2x8x8x256xf32>
    %225 = arith.addf %218, %224 : vector<2x8x8x256xf32>
    %c0_227 = arith.constant 0 : index
    %c1_228 = arith.constant 1 : index
    %c0_229 = arith.constant 0 : index
    %c0_230 = arith.constant 0 : index
    %226 = vector.load %arg8[%c0_227, %c1_228, %c0_229, %c0_230] : memref<2x10x10x256xf32, #tpu.memory_space<vmem>>, vector<2x8x8x256xf32>
    %227 = vector.extract_strided_slice %205 {offsets = [3, 0], sizes = [1, 256], strides = [1, 1]} : vector<9x256xf32> to vector<1x256xf32>
    %228 = vector.shape_cast %227 : vector<1x256xf32> to vector<256xf32>
    %229 = vector.shape_cast %228 : vector<256xf32> to vector<1x1x1x256xf32>
    %230 = vector.broadcast %229 : vector<1x1x1x256xf32> to vector<2x8x8x256xf32>
    %231 = arith.mulf %226, %230 : vector<2x8x8x256xf32>
    %232 = arith.addf %225, %231 : vector<2x8x8x256xf32>
    %c0_231 = arith.constant 0 : index
    %c1_232 = arith.constant 1 : index
    %c1_233 = arith.constant 1 : index
    %c0_234 = arith.constant 0 : index
    %233 = vector.load %arg8[%c0_231, %c1_232, %c1_233, %c0_234] : memref<2x10x10x256xf32, #tpu.memory_space<vmem>>, vector<2x8x8x256xf32>
    %234 = vector.extract_strided_slice %205 {offsets = [4, 0], sizes = [1, 256], strides = [1, 1]} : vector<9x256xf32> to vector<1x256xf32>
    %235 = vector.shape_cast %234 : vector<1x256xf32> to vector<256xf32>
    %236 = vector.shape_cast %235 : vector<256xf32> to vector<1x1x1x256xf32>
    %237 = vector.broadcast %236 : vector<1x1x1x256xf32> to vector<2x8x8x256xf32>
    %238 = arith.mulf %233, %237 : vector<2x8x8x256xf32>
    %239 = arith.addf %232, %238 : vector<2x8x8x256xf32>
    %c0_235 = arith.constant 0 : index
    %c1_236 = arith.constant 1 : index
    %c2_237 = arith.constant 2 : index
    %c0_238 = arith.constant 0 : index
    %240 = vector.load %arg8[%c0_235, %c1_236, %c2_237, %c0_238] : memref<2x10x10x256xf32, #tpu.memory_space<vmem>>, vector<2x8x8x256xf32>
    %241 = vector.extract_strided_slice %205 {offsets = [5, 0], sizes = [1, 256], strides = [1, 1]} : vector<9x256xf32> to vector<1x256xf32>
    %242 = vector.shape_cast %241 : vector<1x256xf32> to vector<256xf32>
    %243 = vector.shape_cast %242 : vector<256xf32> to vector<1x1x1x256xf32>
    %244 = vector.broadcast %243 : vector<1x1x1x256xf32> to vector<2x8x8x256xf32>
    %245 = arith.mulf %240, %244 : vector<2x8x8x256xf32>
    %246 = arith.addf %239, %245 : vector<2x8x8x256xf32>
    %c0_239 = arith.constant 0 : index
    %c2_240 = arith.constant 2 : index
    %c0_241 = arith.constant 0 : index
    %c0_242 = arith.constant 0 : index
    %247 = vector.load %arg8[%c0_239, %c2_240, %c0_241, %c0_242] : memref<2x10x10x256xf32, #tpu.memory_space<vmem>>, vector<2x8x8x256xf32>
    %248 = vector.extract_strided_slice %205 {offsets = [6, 0], sizes = [1, 256], strides = [1, 1]} : vector<9x256xf32> to vector<1x256xf32>
    %249 = vector.shape_cast %248 : vector<1x256xf32> to vector<256xf32>
    %250 = vector.shape_cast %249 : vector<256xf32> to vector<1x1x1x256xf32>
    %251 = vector.broadcast %250 : vector<1x1x1x256xf32> to vector<2x8x8x256xf32>
    %252 = arith.mulf %247, %251 : vector<2x8x8x256xf32>
    %253 = arith.addf %246, %252 : vector<2x8x8x256xf32>
    %c0_243 = arith.constant 0 : index
    %c2_244 = arith.constant 2 : index
    %c1_245 = arith.constant 1 : index
    %c0_246 = arith.constant 0 : index
    %254 = vector.load %arg8[%c0_243, %c2_244, %c1_245, %c0_246] : memref<2x10x10x256xf32, #tpu.memory_space<vmem>>, vector<2x8x8x256xf32>
    %255 = vector.extract_strided_slice %205 {offsets = [7, 0], sizes = [1, 256], strides = [1, 1]} : vector<9x256xf32> to vector<1x256xf32>
    %256 = vector.shape_cast %255 : vector<1x256xf32> to vector<256xf32>
    %257 = vector.shape_cast %256 : vector<256xf32> to vector<1x1x1x256xf32>
    %258 = vector.broadcast %257 : vector<1x1x1x256xf32> to vector<2x8x8x256xf32>
    %259 = arith.mulf %254, %258 : vector<2x8x8x256xf32>
    %260 = arith.addf %253, %259 : vector<2x8x8x256xf32>
    %c0_247 = arith.constant 0 : index
    %c2_248 = arith.constant 2 : index
    %c2_249 = arith.constant 2 : index
    %c0_250 = arith.constant 0 : index
    %261 = vector.load %arg8[%c0_247, %c2_248, %c2_249, %c0_250] : memref<2x10x10x256xf32, #tpu.memory_space<vmem>>, vector<2x8x8x256xf32>
    %262 = vector.extract_strided_slice %205 {offsets = [8, 0], sizes = [1, 256], strides = [1, 1]} : vector<9x256xf32> to vector<1x256xf32>
    %263 = vector.shape_cast %262 : vector<1x256xf32> to vector<256xf32>
    %264 = vector.shape_cast %263 : vector<256xf32> to vector<1x1x1x256xf32>
    %265 = vector.broadcast %264 : vector<1x1x1x256xf32> to vector<2x8x8x256xf32>
    %266 = arith.mulf %261, %265 : vector<2x8x8x256xf32>
    %267 = arith.addf %260, %266 : vector<2x8x8x256xf32>
    %268 = vector.shape_cast %267 : vector<2x8x8x256xf32> to vector<128x256xf32>
    %269 = vector.extract_strided_slice %268 {offsets = [0, 0], sizes = [128, 144], strides = [1, 1]} : vector<128x256xf32> to vector<128x144xf32>
    %270 = arith.truncf %269 : vector<128x144xf32> to vector<128x144xbf16>
    %c128_251 = arith.constant 128 : index
    %c0_252 = arith.constant 0 : index
    %271 = vector.load %arg2[%c128_251, %c0_252] : memref<464x128xbf16, #tpu.memory_space<vmem>>, vector<144x128xbf16>
    %c0_253 = arith.constant 0 : index
    %c384 = arith.constant 384 : index
    %272 = vector.load %arg4[%c0_253, %c384] : memref<1x1152xf32, #tpu.memory_space<vmem>>, vector<1x128xf32>
    %cst_254 = arith.constant dense<0.000000e+00> : vector<128x128xf32>
    %273 = tpu.matmul %270, %271, %cst_254 {dimension_numbers = #tpu.dot_dimension_numbers<[1], [0], [0], [1], [0, 0, 1, 1], [], []>} : vector<128x144xbf16>, vector<144x128xbf16>, vector<128x128xf32> -> vector<128x128xf32>
    %274 = vector.broadcast %272 : vector<1x128xf32> to vector<128x128xf32>
    %275 = arith.addf %273, %274 : vector<128x128xf32>
    %cst_255 = arith.constant 0.000000e+00 : f32
    %276 = vector.broadcast %cst_255 : f32 to vector<128x128xf32>
    %277 = arith.maximumf %275, %276 : vector<128x128xf32>
    %278 = vector.shape_cast %277 : vector<128x128xf32> to vector<2x8x8x128xf32>
    %c0_256 = arith.constant 0 : index
    %c1_257 = arith.constant 1 : index
    %c1_258 = arith.constant 1 : index
    %c0_259 = arith.constant 0 : index
    %279 = vector.load %arg9[%c0_256, %c1_257, %c1_258, %c0_259] : memref<2x10x10x128xf32, #tpu.memory_space<vmem>>, vector<2x8x8x128xf32>
    tpu.vector_store %arg9[%c0_256, %c1_257, %c1_258, %c0_259], %278 {strides = array<i32>} : memref<2x10x10x128xf32, #tpu.memory_space<vmem>>, vector<2x8x8x128xf32>,
    %c0_260 = arith.constant 0 : index
    %c512 = arith.constant 512 : index
    %280 = vector.load %arg1[%c0_260, %c512] : memref<9x1024xf32, #tpu.memory_space<vmem>>, vector<9x128xf32>
    %c0_261 = arith.constant 0 : index
    %c0_262 = arith.constant 0 : index
    %c0_263 = arith.constant 0 : index
    %c0_264 = arith.constant 0 : index
    %281 = vector.load %arg9[%c0_261, %c0_262, %c0_263, %c0_264] : memref<2x10x10x128xf32, #tpu.memory_space<vmem>>, vector<2x8x8x128xf32>
    %282 = vector.extract_strided_slice %280 {offsets = [0, 0], sizes = [1, 128], strides = [1, 1]} : vector<9x128xf32> to vector<1x128xf32>
    %283 = vector.shape_cast %282 : vector<1x128xf32> to vector<128xf32>
    %284 = vector.shape_cast %283 : vector<128xf32> to vector<1x1x1x128xf32>
    %285 = vector.broadcast %284 : vector<1x1x1x128xf32> to vector<2x8x8x128xf32>
    %286 = arith.mulf %281, %285 : vector<2x8x8x128xf32>
    %c0_265 = arith.constant 0 : index
    %c0_266 = arith.constant 0 : index
    %c1_267 = arith.constant 1 : index
    %c0_268 = arith.constant 0 : index
    %287 = vector.load %arg9[%c0_265, %c0_266, %c1_267, %c0_268] : memref<2x10x10x128xf32, #tpu.memory_space<vmem>>, vector<2x8x8x128xf32>
    %288 = vector.extract_strided_slice %280 {offsets = [1, 0], sizes = [1, 128], strides = [1, 1]} : vector<9x128xf32> to vector<1x128xf32>
    %289 = vector.shape_cast %288 : vector<1x128xf32> to vector<128xf32>
    %290 = vector.shape_cast %289 : vector<128xf32> to vector<1x1x1x128xf32>
    %291 = vector.broadcast %290 : vector<1x1x1x128xf32> to vector<2x8x8x128xf32>
    %292 = arith.mulf %287, %291 : vector<2x8x8x128xf32>
    %293 = arith.addf %286, %292 : vector<2x8x8x128xf32>
    %c0_269 = arith.constant 0 : index
    %c0_270 = arith.constant 0 : index
    %c2_271 = arith.constant 2 : index
    %c0_272 = arith.constant 0 : index
    %294 = vector.load %arg9[%c0_269, %c0_270, %c2_271, %c0_272] : memref<2x10x10x128xf32, #tpu.memory_space<vmem>>, vector<2x8x8x128xf32>
    %295 = vector.extract_strided_slice %280 {offsets = [2, 0], sizes = [1, 128], strides = [1, 1]} : vector<9x128xf32> to vector<1x128xf32>
    %296 = vector.shape_cast %295 : vector<1x128xf32> to vector<128xf32>
    %297 = vector.shape_cast %296 : vector<128xf32> to vector<1x1x1x128xf32>
    %298 = vector.broadcast %297 : vector<1x1x1x128xf32> to vector<2x8x8x128xf32>
    %299 = arith.mulf %294, %298 : vector<2x8x8x128xf32>
    %300 = arith.addf %293, %299 : vector<2x8x8x128xf32>
    %c0_273 = arith.constant 0 : index
    %c1_274 = arith.constant 1 : index
    %c0_275 = arith.constant 0 : index
    %c0_276 = arith.constant 0 : index
    %301 = vector.load %arg9[%c0_273, %c1_274, %c0_275, %c0_276] : memref<2x10x10x128xf32, #tpu.memory_space<vmem>>, vector<2x8x8x128xf32>
    %302 = vector.extract_strided_slice %280 {offsets = [3, 0], sizes = [1, 128], strides = [1, 1]} : vector<9x128xf32> to vector<1x128xf32>
    %303 = vector.shape_cast %302 : vector<1x128xf32> to vector<128xf32>
    %304 = vector.shape_cast %303 : vector<128xf32> to vector<1x1x1x128xf32>
    %305 = vector.broadcast %304 : vector<1x1x1x128xf32> to vector<2x8x8x128xf32>
    %306 = arith.mulf %301, %305 : vector<2x8x8x128xf32>
    %307 = arith.addf %300, %306 : vector<2x8x8x128xf32>
    %c0_277 = arith.constant 0 : index
    %c1_278 = arith.constant 1 : index
    %c1_279 = arith.constant 1 : index
    %c0_280 = arith.constant 0 : index
    %308 = vector.load %arg9[%c0_277, %c1_278, %c1_279, %c0_280] : memref<2x10x10x128xf32, #tpu.memory_space<vmem>>, vector<2x8x8x128xf32>
    %309 = vector.extract_strided_slice %280 {offsets = [4, 0], sizes = [1, 128], strides = [1, 1]} : vector<9x128xf32> to vector<1x128xf32>
    %310 = vector.shape_cast %309 : vector<1x128xf32> to vector<128xf32>
    %311 = vector.shape_cast %310 : vector<128xf32> to vector<1x1x1x128xf32>
    %312 = vector.broadcast %311 : vector<1x1x1x128xf32> to vector<2x8x8x128xf32>
    %313 = arith.mulf %308, %312 : vector<2x8x8x128xf32>
    %314 = arith.addf %307, %313 : vector<2x8x8x128xf32>
    %c0_281 = arith.constant 0 : index
    %c1_282 = arith.constant 1 : index
    %c2_283 = arith.constant 2 : index
    %c0_284 = arith.constant 0 : index
    %315 = vector.load %arg9[%c0_281, %c1_282, %c2_283, %c0_284] : memref<2x10x10x128xf32, #tpu.memory_space<vmem>>, vector<2x8x8x128xf32>
    %316 = vector.extract_strided_slice %280 {offsets = [5, 0], sizes = [1, 128], strides = [1, 1]} : vector<9x128xf32> to vector<1x128xf32>
    %317 = vector.shape_cast %316 : vector<1x128xf32> to vector<128xf32>
    %318 = vector.shape_cast %317 : vector<128xf32> to vector<1x1x1x128xf32>
    %319 = vector.broadcast %318 : vector<1x1x1x128xf32> to vector<2x8x8x128xf32>
    %320 = arith.mulf %315, %319 : vector<2x8x8x128xf32>
    %321 = arith.addf %314, %320 : vector<2x8x8x128xf32>
    %c0_285 = arith.constant 0 : index
    %c2_286 = arith.constant 2 : index
    %c0_287 = arith.constant 0 : index
    %c0_288 = arith.constant 0 : index
    %322 = vector.load %arg9[%c0_285, %c2_286, %c0_287, %c0_288] : memref<2x10x10x128xf32, #tpu.memory_space<vmem>>, vector<2x8x8x128xf32>
    %323 = vector.extract_strided_slice %280 {offsets = [6, 0], sizes = [1, 128], strides = [1, 1]} : vector<9x128xf32> to vector<1x128xf32>
    %324 = vector.shape_cast %323 : vector<1x128xf32> to vector<128xf32>
    %325 = vector.shape_cast %324 : vector<128xf32> to vector<1x1x1x128xf32>
    %326 = vector.broadcast %325 : vector<1x1x1x128xf32> to vector<2x8x8x128xf32>
    %327 = arith.mulf %322, %326 : vector<2x8x8x128xf32>
    %328 = arith.addf %321, %327 : vector<2x8x8x128xf32>
    %c0_289 = arith.constant 0 : index
    %c2_290 = arith.constant 2 : index
    %c1_291 = arith.constant 1 : index
    %c0_292 = arith.constant 0 : index
    %329 = vector.load %arg9[%c0_289, %c2_290, %c1_291, %c0_292] : memref<2x10x10x128xf32, #tpu.memory_space<vmem>>, vector<2x8x8x128xf32>
    %330 = vector.extract_strided_slice %280 {offsets = [7, 0], sizes = [1, 128], strides = [1, 1]} : vector<9x128xf32> to vector<1x128xf32>
    %331 = vector.shape_cast %330 : vector<1x128xf32> to vector<128xf32>
    %332 = vector.shape_cast %331 : vector<128xf32> to vector<1x1x1x128xf32>
    %333 = vector.broadcast %332 : vector<1x1x1x128xf32> to vector<2x8x8x128xf32>
    %334 = arith.mulf %329, %333 : vector<2x8x8x128xf32>
    %335 = arith.addf %328, %334 : vector<2x8x8x128xf32>
    %c0_293 = arith.constant 0 : index
    %c2_294 = arith.constant 2 : index
    %c2_295 = arith.constant 2 : index
    %c0_296 = arith.constant 0 : index
    %336 = vector.load %arg9[%c0_293, %c2_294, %c2_295, %c0_296] : memref<2x10x10x128xf32, #tpu.memory_space<vmem>>, vector<2x8x8x128xf32>
    %337 = vector.extract_strided_slice %280 {offsets = [8, 0], sizes = [1, 128], strides = [1, 1]} : vector<9x128xf32> to vector<1x128xf32>
    %338 = vector.shape_cast %337 : vector<1x128xf32> to vector<128xf32>
    %339 = vector.shape_cast %338 : vector<128xf32> to vector<1x1x1x128xf32>
    %340 = vector.broadcast %339 : vector<1x1x1x128xf32> to vector<2x8x8x128xf32>
    %341 = arith.mulf %336, %340 : vector<2x8x8x128xf32>
    %342 = arith.addf %335, %341 : vector<2x8x8x128xf32>
    %343 = vector.shape_cast %342 : vector<2x8x8x128xf32> to vector<128x128xf32>
    %344 = vector.extract_strided_slice %343 {offsets = [0, 0], sizes = [128, 48], strides = [1, 1]} : vector<128x128xf32> to vector<128x48xf32>
    %345 = arith.truncf %344 : vector<128x48xf32> to vector<128x48xbf16>
    %c40 = arith.constant 40 : index
    %c0_297 = arith.constant 0 : index
    %346 = vector.load %arg3[%c40, %c0_297] : memref<152x256xbf16, #tpu.memory_space<vmem>>, vector<48x256xbf16>
    %c0_298 = arith.constant 0 : index
    %c512_299 = arith.constant 512 : index
    %347 = vector.load %arg4[%c0_298, %c512_299] : memref<1x1152xf32, #tpu.memory_space<vmem>>, vector<1x256xf32>
    %cst_300 = arith.constant dense<0.000000e+00> : vector<128x256xf32>
    %348 = tpu.matmul %345, %346, %cst_300 {dimension_numbers = #tpu.dot_dimension_numbers<[1], [0], [0], [1], [0, 0, 1, 1], [], []>} : vector<128x48xbf16>, vector<48x256xbf16>, vector<128x256xf32> -> vector<128x256xf32>
    %349 = vector.broadcast %347 : vector<1x256xf32> to vector<128x256xf32>
    %350 = arith.addf %348, %349 : vector<128x256xf32>
    %351 = vector.shape_cast %350 : vector<128x256xf32> to vector<2x8x8x256xf32>
    %c0_301 = arith.constant 0 : index
    %c1_302 = arith.constant 1 : index
    %c1_303 = arith.constant 1 : index
    %c0_304 = arith.constant 0 : index
    %352 = vector.load %arg8[%c0_301, %c1_302, %c1_303, %c0_304] : memref<2x10x10x256xf32, #tpu.memory_space<vmem>>, vector<2x8x8x256xf32>
    %353 = arith.addf %351, %352 : vector<2x8x8x256xf32>
    %cst_305 = arith.constant 0.000000e+00 : f32
    %354 = vector.broadcast %cst_305 : f32 to vector<2x8x8x256xf32>
    %355 = arith.maximumf %353, %354 : vector<2x8x8x256xf32>
    %c0_306 = arith.constant 0 : index
    %c1_307 = arith.constant 1 : index
    %c1_308 = arith.constant 1 : index
    %c0_309 = arith.constant 0 : index
    %356 = vector.load %arg10[%c0_306, %c1_307, %c1_308, %c0_309] : memref<2x10x10x256xf32, #tpu.memory_space<vmem>>, vector<2x8x8x256xf32>
    tpu.vector_store %arg10[%c0_306, %c1_307, %c1_308, %c0_309], %355 {strides = array<i32>} : memref<2x10x10x256xf32, #tpu.memory_space<vmem>>, vector<2x8x8x256xf32>,
    %c0_310 = arith.constant 0 : index
    %c640 = arith.constant 640 : index
    %357 = vector.load %arg1[%c0_310, %c640] : memref<9x1024xf32, #tpu.memory_space<vmem>>, vector<9x256xf32>
    %c0_311 = arith.constant 0 : index
    %c0_312 = arith.constant 0 : index
    %c0_313 = arith.constant 0 : index
    %c0_314 = arith.constant 0 : index
    %358 = vector.load %arg10[%c0_311, %c0_312, %c0_313, %c0_314] : memref<2x10x10x256xf32, #tpu.memory_space<vmem>>, vector<2x8x8x256xf32>
    %359 = vector.extract_strided_slice %357 {offsets = [0, 0], sizes = [1, 256], strides = [1, 1]} : vector<9x256xf32> to vector<1x256xf32>
    %360 = vector.shape_cast %359 : vector<1x256xf32> to vector<256xf32>
    %361 = vector.shape_cast %360 : vector<256xf32> to vector<1x1x1x256xf32>
    %362 = vector.broadcast %361 : vector<1x1x1x256xf32> to vector<2x8x8x256xf32>
    %363 = arith.mulf %358, %362 : vector<2x8x8x256xf32>
    %c0_315 = arith.constant 0 : index
    %c0_316 = arith.constant 0 : index
    %c1_317 = arith.constant 1 : index
    %c0_318 = arith.constant 0 : index
    %364 = vector.load %arg10[%c0_315, %c0_316, %c1_317, %c0_318] : memref<2x10x10x256xf32, #tpu.memory_space<vmem>>, vector<2x8x8x256xf32>
    %365 = vector.extract_strided_slice %357 {offsets = [1, 0], sizes = [1, 256], strides = [1, 1]} : vector<9x256xf32> to vector<1x256xf32>
    %366 = vector.shape_cast %365 : vector<1x256xf32> to vector<256xf32>
    %367 = vector.shape_cast %366 : vector<256xf32> to vector<1x1x1x256xf32>
    %368 = vector.broadcast %367 : vector<1x1x1x256xf32> to vector<2x8x8x256xf32>
    %369 = arith.mulf %364, %368 : vector<2x8x8x256xf32>
    %370 = arith.addf %363, %369 : vector<2x8x8x256xf32>
    %c0_319 = arith.constant 0 : index
    %c0_320 = arith.constant 0 : index
    %c2_321 = arith.constant 2 : index
    %c0_322 = arith.constant 0 : index
    %371 = vector.load %arg10[%c0_319, %c0_320, %c2_321, %c0_322] : memref<2x10x10x256xf32, #tpu.memory_space<vmem>>, vector<2x8x8x256xf32>
    %372 = vector.extract_strided_slice %357 {offsets = [2, 0], sizes = [1, 256], strides = [1, 1]} : vector<9x256xf32> to vector<1x256xf32>
    %373 = vector.shape_cast %372 : vector<1x256xf32> to vector<256xf32>
    %374 = vector.shape_cast %373 : vector<256xf32> to vector<1x1x1x256xf32>
    %375 = vector.broadcast %374 : vector<1x1x1x256xf32> to vector<2x8x8x256xf32>
    %376 = arith.mulf %371, %375 : vector<2x8x8x256xf32>
    %377 = arith.addf %370, %376 : vector<2x8x8x256xf32>
    %c0_323 = arith.constant 0 : index
    %c1_324 = arith.constant 1 : index
    %c0_325 = arith.constant 0 : index
    %c0_326 = arith.constant 0 : index
    %378 = vector.load %arg10[%c0_323, %c1_324, %c0_325, %c0_326] : memref<2x10x10x256xf32, #tpu.memory_space<vmem>>, vector<2x8x8x256xf32>
    %379 = vector.extract_strided_slice %357 {offsets = [3, 0], sizes = [1, 256], strides = [1, 1]} : vector<9x256xf32> to vector<1x256xf32>
    %380 = vector.shape_cast %379 : vector<1x256xf32> to vector<256xf32>
    %381 = vector.shape_cast %380 : vector<256xf32> to vector<1x1x1x256xf32>
    %382 = vector.broadcast %381 : vector<1x1x1x256xf32> to vector<2x8x8x256xf32>
    %383 = arith.mulf %378, %382 : vector<2x8x8x256xf32>
    %384 = arith.addf %377, %383 : vector<2x8x8x256xf32>
    %c0_327 = arith.constant 0 : index
    %c1_328 = arith.constant 1 : index
    %c1_329 = arith.constant 1 : index
    %c0_330 = arith.constant 0 : index
    %385 = vector.load %arg10[%c0_327, %c1_328, %c1_329, %c0_330] : memref<2x10x10x256xf32, #tpu.memory_space<vmem>>, vector<2x8x8x256xf32>
    %386 = vector.extract_strided_slice %357 {offsets = [4, 0], sizes = [1, 256], strides = [1, 1]} : vector<9x256xf32> to vector<1x256xf32>
    %387 = vector.shape_cast %386 : vector<1x256xf32> to vector<256xf32>
    %388 = vector.shape_cast %387 : vector<256xf32> to vector<1x1x1x256xf32>
    %389 = vector.broadcast %388 : vector<1x1x1x256xf32> to vector<2x8x8x256xf32>
    %390 = arith.mulf %385, %389 : vector<2x8x8x256xf32>
    %391 = arith.addf %384, %390 : vector<2x8x8x256xf32>
    %c0_331 = arith.constant 0 : index
    %c1_332 = arith.constant 1 : index
    %c2_333 = arith.constant 2 : index
    %c0_334 = arith.constant 0 : index
    %392 = vector.load %arg10[%c0_331, %c1_332, %c2_333, %c0_334] : memref<2x10x10x256xf32, #tpu.memory_space<vmem>>, vector<2x8x8x256xf32>
    %393 = vector.extract_strided_slice %357 {offsets = [5, 0], sizes = [1, 256], strides = [1, 1]} : vector<9x256xf32> to vector<1x256xf32>
    %394 = vector.shape_cast %393 : vector<1x256xf32> to vector<256xf32>
    %395 = vector.shape_cast %394 : vector<256xf32> to vector<1x1x1x256xf32>
    %396 = vector.broadcast %395 : vector<1x1x1x256xf32> to vector<2x8x8x256xf32>
    %397 = arith.mulf %392, %396 : vector<2x8x8x256xf32>
    %398 = arith.addf %391, %397 : vector<2x8x8x256xf32>
    %c0_335 = arith.constant 0 : index
    %c2_336 = arith.constant 2 : index
    %c0_337 = arith.constant 0 : index
    %c0_338 = arith.constant 0 : index
    %399 = vector.load %arg10[%c0_335, %c2_336, %c0_337, %c0_338] : memref<2x10x10x256xf32, #tpu.memory_space<vmem>>, vector<2x8x8x256xf32>
    %400 = vector.extract_strided_slice %357 {offsets = [6, 0], sizes = [1, 256], strides = [1, 1]} : vector<9x256xf32> to vector<1x256xf32>
    %401 = vector.shape_cast %400 : vector<1x256xf32> to vector<256xf32>
    %402 = vector.shape_cast %401 : vector<256xf32> to vector<1x1x1x256xf32>
    %403 = vector.broadcast %402 : vector<1x1x1x256xf32> to vector<2x8x8x256xf32>
    %404 = arith.mulf %399, %403 : vector<2x8x8x256xf32>
    %405 = arith.addf %398, %404 : vector<2x8x8x256xf32>
    %c0_339 = arith.constant 0 : index
    %c2_340 = arith.constant 2 : index
    %c1_341 = arith.constant 1 : index
    %c0_342 = arith.constant 0 : index
    %406 = vector.load %arg10[%c0_339, %c2_340, %c1_341, %c0_342] : memref<2x10x10x256xf32, #tpu.memory_space<vmem>>, vector<2x8x8x256xf32>
    %407 = vector.extract_strided_slice %357 {offsets = [7, 0], sizes = [1, 256], strides = [1, 1]} : vector<9x256xf32> to vector<1x256xf32>
    %408 = vector.shape_cast %407 : vector<1x256xf32> to vector<256xf32>
    %409 = vector.shape_cast %408 : vector<256xf32> to vector<1x1x1x256xf32>
    %410 = vector.broadcast %409 : vector<1x1x1x256xf32> to vector<2x8x8x256xf32>
    %411 = arith.mulf %406, %410 : vector<2x8x8x256xf32>
    %412 = arith.addf %405, %411 : vector<2x8x8x256xf32>
    %c0_343 = arith.constant 0 : index
    %c2_344 = arith.constant 2 : index
    %c2_345 = arith.constant 2 : index
    %c0_346 = arith.constant 0 : index
    %413 = vector.load %arg10[%c0_343, %c2_344, %c2_345, %c0_346] : memref<2x10x10x256xf32, #tpu.memory_space<vmem>>, vector<2x8x8x256xf32>
    %414 = vector.extract_strided_slice %357 {offsets = [8, 0], sizes = [1, 256], strides = [1, 1]} : vector<9x256xf32> to vector<1x256xf32>
    %415 = vector.shape_cast %414 : vector<1x256xf32> to vector<256xf32>
    %416 = vector.shape_cast %415 : vector<256xf32> to vector<1x1x1x256xf32>
    %417 = vector.broadcast %416 : vector<1x1x1x256xf32> to vector<2x8x8x256xf32>
    %418 = arith.mulf %413, %417 : vector<2x8x8x256xf32>
    %419 = arith.addf %412, %418 : vector<2x8x8x256xf32>
    %420 = vector.shape_cast %419 : vector<2x8x8x256xf32> to vector<128x256xf32>
    %421 = vector.extract_strided_slice %420 {offsets = [0, 0], sizes = [128, 192], strides = [1, 1]} : vector<128x256xf32> to vector<128x192xf32>
    %422 = arith.truncf %421 : vector<128x192xf32> to vector<128x192xbf16>
    %c272 = arith.constant 272 : index
    %c0_347 = arith.constant 0 : index
    %423 = vector.load %arg2[%c272, %c0_347] : memref<464x128xbf16, #tpu.memory_space<vmem>>, vector<192x128xbf16>
    %c0_348 = arith.constant 0 : index
    %c768 = arith.constant 768 : index
    %424 = vector.load %arg4[%c0_348, %c768] : memref<1x1152xf32, #tpu.memory_space<vmem>>, vector<1x128xf32>
    %cst_349 = arith.constant dense<0.000000e+00> : vector<128x128xf32>
    %425 = tpu.matmul %422, %423, %cst_349 {dimension_numbers = #tpu.dot_dimension_numbers<[1], [0], [0], [1], [0, 0, 1, 1], [], []>} : vector<128x192xbf16>, vector<192x128xbf16>, vector<128x128xf32> -> vector<128x128xf32>
    %426 = vector.broadcast %424 : vector<1x128xf32> to vector<128x128xf32>
    %427 = arith.addf %425, %426 : vector<128x128xf32>
    %cst_350 = arith.constant 0.000000e+00 : f32
    %428 = vector.broadcast %cst_350 : f32 to vector<128x128xf32>
    %429 = arith.maximumf %427, %428 : vector<128x128xf32>
    %430 = vector.shape_cast %429 : vector<128x128xf32> to vector<2x8x8x128xf32>
    %c0_351 = arith.constant 0 : index
    %c1_352 = arith.constant 1 : index
    %c1_353 = arith.constant 1 : index
    %c0_354 = arith.constant 0 : index
    %431 = vector.load %arg11[%c0_351, %c1_352, %c1_353, %c0_354] : memref<2x10x10x128xf32, #tpu.memory_space<vmem>>, vector<2x8x8x128xf32>
    tpu.vector_store %arg11[%c0_351, %c1_352, %c1_353, %c0_354], %430 {strides = array<i32>} : memref<2x10x10x128xf32, #tpu.memory_space<vmem>>, vector<2x8x8x128xf32>,
    %c0_355 = arith.constant 0 : index
    %c896 = arith.constant 896 : index
    %432 = vector.load %arg1[%c0_355, %c896] : memref<9x1024xf32, #tpu.memory_space<vmem>>, vector<9x128xf32>
    %c0_356 = arith.constant 0 : index
    %c0_357 = arith.constant 0 : index
    %c0_358 = arith.constant 0 : index
    %c0_359 = arith.constant 0 : index
    %433 = vector.load %arg11[%c0_356, %c0_357, %c0_358, %c0_359] : memref<2x10x10x128xf32, #tpu.memory_space<vmem>>, vector<2x8x8x128xf32>
    %434 = vector.extract_strided_slice %432 {offsets = [0, 0], sizes = [1, 128], strides = [1, 1]} : vector<9x128xf32> to vector<1x128xf32>
    %435 = vector.shape_cast %434 : vector<1x128xf32> to vector<128xf32>
    %436 = vector.shape_cast %435 : vector<128xf32> to vector<1x1x1x128xf32>
    %437 = vector.broadcast %436 : vector<1x1x1x128xf32> to vector<2x8x8x128xf32>
    %438 = arith.mulf %433, %437 : vector<2x8x8x128xf32>
    %c0_360 = arith.constant 0 : index
    %c0_361 = arith.constant 0 : index
    %c1_362 = arith.constant 1 : index
    %c0_363 = arith.constant 0 : index
    %439 = vector.load %arg11[%c0_360, %c0_361, %c1_362, %c0_363] : memref<2x10x10x128xf32, #tpu.memory_space<vmem>>, vector<2x8x8x128xf32>
    %440 = vector.extract_strided_slice %432 {offsets = [1, 0], sizes = [1, 128], strides = [1, 1]} : vector<9x128xf32> to vector<1x128xf32>
    %441 = vector.shape_cast %440 : vector<1x128xf32> to vector<128xf32>
    %442 = vector.shape_cast %441 : vector<128xf32> to vector<1x1x1x128xf32>
    %443 = vector.broadcast %442 : vector<1x1x1x128xf32> to vector<2x8x8x128xf32>
    %444 = arith.mulf %439, %443 : vector<2x8x8x128xf32>
    %445 = arith.addf %438, %444 : vector<2x8x8x128xf32>
    %c0_364 = arith.constant 0 : index
    %c0_365 = arith.constant 0 : index
    %c2_366 = arith.constant 2 : index
    %c0_367 = arith.constant 0 : index
    %446 = vector.load %arg11[%c0_364, %c0_365, %c2_366, %c0_367] : memref<2x10x10x128xf32, #tpu.memory_space<vmem>>, vector<2x8x8x128xf32>
    %447 = vector.extract_strided_slice %432 {offsets = [2, 0], sizes = [1, 128], strides = [1, 1]} : vector<9x128xf32> to vector<1x128xf32>
    %448 = vector.shape_cast %447 : vector<1x128xf32> to vector<128xf32>
    %449 = vector.shape_cast %448 : vector<128xf32> to vector<1x1x1x128xf32>
    %450 = vector.broadcast %449 : vector<1x1x1x128xf32> to vector<2x8x8x128xf32>
    %451 = arith.mulf %446, %450 : vector<2x8x8x128xf32>
    %452 = arith.addf %445, %451 : vector<2x8x8x128xf32>
    %c0_368 = arith.constant 0 : index
    %c1_369 = arith.constant 1 : index
    %c0_370 = arith.constant 0 : index
    %c0_371 = arith.constant 0 : index
    %453 = vector.load %arg11[%c0_368, %c1_369, %c0_370, %c0_371] : memref<2x10x10x128xf32, #tpu.memory_space<vmem>>, vector<2x8x8x128xf32>
    %454 = vector.extract_strided_slice %432 {offsets = [3, 0], sizes = [1, 128], strides = [1, 1]} : vector<9x128xf32> to vector<1x128xf32>
    %455 = vector.shape_cast %454 : vector<1x128xf32> to vector<128xf32>
    %456 = vector.shape_cast %455 : vector<128xf32> to vector<1x1x1x128xf32>
    %457 = vector.broadcast %456 : vector<1x1x1x128xf32> to vector<2x8x8x128xf32>
    %458 = arith.mulf %453, %457 : vector<2x8x8x128xf32>
    %459 = arith.addf %452, %458 : vector<2x8x8x128xf32>
    %c0_372 = arith.constant 0 : index
    %c1_373 = arith.constant 1 : index
    %c1_374 = arith.constant 1 : index
    %c0_375 = arith.constant 0 : index
    %460 = vector.load %arg11[%c0_372, %c1_373, %c1_374, %c0_375] : memref<2x10x10x128xf32, #tpu.memory_space<vmem>>, vector<2x8x8x128xf32>
    %461 = vector.extract_strided_slice %432 {offsets = [4, 0], sizes = [1, 128], strides = [1, 1]} : vector<9x128xf32> to vector<1x128xf32>
    %462 = vector.shape_cast %461 : vector<1x128xf32> to vector<128xf32>
    %463 = vector.shape_cast %462 : vector<128xf32> to vector<1x1x1x128xf32>
    %464 = vector.broadcast %463 : vector<1x1x1x128xf32> to vector<2x8x8x128xf32>
    %465 = arith.mulf %460, %464 : vector<2x8x8x128xf32>
    %466 = arith.addf %459, %465 : vector<2x8x8x128xf32>
    %c0_376 = arith.constant 0 : index
    %c1_377 = arith.constant 1 : index
    %c2_378 = arith.constant 2 : index
    %c0_379 = arith.constant 0 : index
    %467 = vector.load %arg11[%c0_376, %c1_377, %c2_378, %c0_379] : memref<2x10x10x128xf32, #tpu.memory_space<vmem>>, vector<2x8x8x128xf32>
    %468 = vector.extract_strided_slice %432 {offsets = [5, 0], sizes = [1, 128], strides = [1, 1]} : vector<9x128xf32> to vector<1x128xf32>
    %469 = vector.shape_cast %468 : vector<1x128xf32> to vector<128xf32>
    %470 = vector.shape_cast %469 : vector<128xf32> to vector<1x1x1x128xf32>
    %471 = vector.broadcast %470 : vector<1x1x1x128xf32> to vector<2x8x8x128xf32>
    %472 = arith.mulf %467, %471 : vector<2x8x8x128xf32>
    %473 = arith.addf %466, %472 : vector<2x8x8x128xf32>
    %c0_380 = arith.constant 0 : index
    %c2_381 = arith.constant 2 : index
    %c0_382 = arith.constant 0 : index
    %c0_383 = arith.constant 0 : index
    %474 = vector.load %arg11[%c0_380, %c2_381, %c0_382, %c0_383] : memref<2x10x10x128xf32, #tpu.memory_space<vmem>>, vector<2x8x8x128xf32>
    %475 = vector.extract_strided_slice %432 {offsets = [6, 0], sizes = [1, 128], strides = [1, 1]} : vector<9x128xf32> to vector<1x128xf32>
    %476 = vector.shape_cast %475 : vector<1x128xf32> to vector<128xf32>
    %477 = vector.shape_cast %476 : vector<128xf32> to vector<1x1x1x128xf32>
    %478 = vector.broadcast %477 : vector<1x1x1x128xf32> to vector<2x8x8x128xf32>
    %479 = arith.mulf %474, %478 : vector<2x8x8x128xf32>
    %480 = arith.addf %473, %479 : vector<2x8x8x128xf32>
    %c0_384 = arith.constant 0 : index
    %c2_385 = arith.constant 2 : index
    %c1_386 = arith.constant 1 : index
    %c0_387 = arith.constant 0 : index
    %481 = vector.load %arg11[%c0_384, %c2_385, %c1_386, %c0_387] : memref<2x10x10x128xf32, #tpu.memory_space<vmem>>, vector<2x8x8x128xf32>
    %482 = vector.extract_strided_slice %432 {offsets = [7, 0], sizes = [1, 128], strides = [1, 1]} : vector<9x128xf32> to vector<1x128xf32>
    %483 = vector.shape_cast %482 : vector<1x128xf32> to vector<128xf32>
    %484 = vector.shape_cast %483 : vector<128xf32> to vector<1x1x1x128xf32>
    %485 = vector.broadcast %484 : vector<1x1x1x128xf32> to vector<2x8x8x128xf32>
    %486 = arith.mulf %481, %485 : vector<2x8x8x128xf32>
    %487 = arith.addf %480, %486 : vector<2x8x8x128xf32>
    %c0_388 = arith.constant 0 : index
    %c2_389 = arith.constant 2 : index
    %c2_390 = arith.constant 2 : index
    %c0_391 = arith.constant 0 : index
    %488 = vector.load %arg11[%c0_388, %c2_389, %c2_390, %c0_391] : memref<2x10x10x128xf32, #tpu.memory_space<vmem>>, vector<2x8x8x128xf32>
    %489 = vector.extract_strided_slice %432 {offsets = [8, 0], sizes = [1, 128], strides = [1, 1]} : vector<9x128xf32> to vector<1x128xf32>
    %490 = vector.shape_cast %489 : vector<1x128xf32> to vector<128xf32>
    %491 = vector.shape_cast %490 : vector<128xf32> to vector<1x1x1x128xf32>
    %492 = vector.broadcast %491 : vector<1x1x1x128xf32> to vector<2x8x8x128xf32>
    %493 = arith.mulf %488, %492 : vector<2x8x8x128xf32>
    %494 = arith.addf %487, %493 : vector<2x8x8x128xf32>
    %495 = vector.shape_cast %494 : vector<2x8x8x128xf32> to vector<128x128xf32>
    %496 = vector.extract_strided_slice %495 {offsets = [0, 0], sizes = [128, 64], strides = [1, 1]} : vector<128x128xf32> to vector<128x64xf32>
    %497 = arith.truncf %496 : vector<128x64xf32> to vector<128x64xbf16>
    %c88 = arith.constant 88 : index
    %c0_392 = arith.constant 0 : index
    %498 = vector.load %arg3[%c88, %c0_392] : memref<152x256xbf16, #tpu.memory_space<vmem>>, vector<64x256xbf16>
    %c0_393 = arith.constant 0 : index
    %c896_394 = arith.constant 896 : index
    %499 = vector.load %arg4[%c0_393, %c896_394] : memref<1x1152xf32, #tpu.memory_space<vmem>>, vector<1x256xf32>
    %cst_395 = arith.constant dense<0.000000e+00> : vector<128x256xf32>
    %500 = tpu.matmul %497, %498, %cst_395 {dimension_numbers = #tpu.dot_dimension_numbers<[1], [0], [0], [1], [0, 0, 1, 1], [], []>} : vector<128x64xbf16>, vector<64x256xbf16>, vector<128x256xf32> -> vector<128x256xf32>
    %501 = vector.broadcast %499 : vector<1x256xf32> to vector<128x256xf32>
    %502 = arith.addf %500, %501 : vector<128x256xf32>
    %503 = vector.shape_cast %502 : vector<128x256xf32> to vector<2x8x8x256xf32>
    %c0_396 = arith.constant 0 : index
    %c1_397 = arith.constant 1 : index
    %c1_398 = arith.constant 1 : index
    %c0_399 = arith.constant 0 : index
    %504 = vector.load %arg10[%c0_396, %c1_397, %c1_398, %c0_399] : memref<2x10x10x256xf32, #tpu.memory_space<vmem>>, vector<2x8x8x256xf32>
    %505 = arith.addf %503, %504 : vector<2x8x8x256xf32>
    %cst_400 = arith.constant 0.000000e+00 : f32
    %506 = vector.broadcast %cst_400 : f32 to vector<2x8x8x256xf32>
    %507 = arith.maximumf %505, %506 : vector<2x8x8x256xf32>
    %c0_401 = arith.constant 0 : index
    %c0_402 = arith.constant 0 : index
    %c0_403 = arith.constant 0 : index
    %c0_404 = arith.constant 0 : index
    %508 = vector.load %arg5[%c0_401, %c0_402, %c0_403, %c0_404] : memref<2x8x8x256xf32, #tpu.memory_space<vmem>>, vector<2x8x8x256xf32>
    tpu.vector_store %arg5[%c0_401, %c0_402, %c0_403, %c0_404], %507 {strides = array<i32>} : memref<2x8x8x256xf32, #tpu.memory_space<vmem>>, vector<2x8x8x256xf32>,
    return
  }
}

</mosaic_0001>

<llo_original>
// kernel: backbone3.1
$region0: #{backbone3.1}
  #allocation0 [shape = 'u32[]', space=smem, size = 0x4, offset = 0x4, fixed_abs, tag = 'smem constant byte address 0x4 - core index']
  #allocation1 [shape = 'u32[144,128]{1,0:T(1,128)}', space=vmem, size = 0x12000, scoped, tag = 'internal scratch']
  #allocation2 [shape = 'f32[2,9,9,128]{3,2,1,0:T(8,128)}', space=vmem, size = 0x24000, scoped, tag = 'scratch operand']
  #allocation3 [shape = 'f32[2,10,10,128]{3,2,1,0:T(8,128)}', space=vmem, size = 0x28000, scoped, tag = 'scratch operand']
  #allocation4 [shape = 'f32[2,10,10,256]{3,2,1,0:T(8,128)}', space=vmem, size = 0x50000, scoped, tag = 'scratch operand']
  #allocation5 [shape = 'f32[2,10,10,128]{3,2,1,0:T(8,128)}', space=vmem, size = 0x28000, scoped, tag = 'scratch operand']
  #allocation6 [shape = 'f32[2,10,10,256]{3,2,1,0:T(8,128)}', space=vmem, size = 0x50000, scoped, tag = 'scratch operand']
  #allocation7 [shape = 'f32[2,10,10,128]{3,2,1,0:T(8,128)}', space=vmem, size = 0x28000, scoped, tag = 'scratch operand']
  %s0 = inlined_call_operand.vmem [shape: f32[8,8,8,128], index: 0, kind: input, shape index: {}]
  %s1 = inlined_call_operand.vmem [shape: f32[9,1024], index: 1, kind: input, shape index: {}]
  %s2 = inlined_call_operand.vmem [shape: bf16[464,128], index: 2, kind: input, shape index: {}]
  %s3 = inlined_call_operand.vmem [shape: bf16[152,256], index: 3, kind: input, shape index: {}]
  %s4 = inlined_call_operand.vmem [shape: f32[1,1152], index: 4, kind: input, shape index: {}]
  %s5 = inlined_call_operand.hbm [shape: f32[2,8,8,256], index: 5, kind: output, shape index: {}]
  %s6 = sld [smem:[#allocation0]]
  $region30: #{backbone3.1} parent=0
    _
  %s8 = ssub.s32 1, %s6
  %s9 = scalar_select 0, %s8, %s6
  $region1: #{backbone3.1} parent=0
    #allocation8 [shape = 'u8[131072]{0}', space=vmem, size = 0x20000, scoped, tag = 'output window, operand 0, single buffered']
    #allocation9 [shape = 's32[1]{0}', space=sflag, size = 0x4, scoped, tag = 'scoped memory for backbone3.1']
    %10 = vsyncpa [#allocation9], 0
    // Predicated region
    $region2: #{backbone3.1} parent=1 // pred_check
      _
    $region3: #{backbone3.1} parent=1 // pred_check_branch
      %12 = sbr.rel (0) target = $region5
    $region4: #{backbone3.1} parent=1 // pred_region
      _
    $region5: #{backbone3.1} parent=1 // pred_fallthru
      _
    // Predicated region
    $region6: #{backbone3.1} parent=1 // pred_check
      _
    $region7: #{backbone3.1} parent=1 // pred_check_branch
      %14 = sbr.rel (0) target = $region9
    $region8: #{backbone3.1} parent=1 // pred_region
      _
    $region9: #{backbone3.1} parent=1 // pred_fallthru
      _
    // Predicated region
    $region10: #{backbone3.1} parent=1 // pred_check
      _
    $region11: #{backbone3.1} parent=1 // pred_check_branch
      %16 = sbr.rel (0) target = $region13
    $region12: #{backbone3.1} parent=1 // pred_region
      _
    $region13: #{backbone3.1} parent=1 // pred_fallthru
      _
    // Predicated region
    $region14: #{backbone3.1} parent=1 // pred_check
      _
    $region15: #{backbone3.1} parent=1 // pred_check_branch
      %18 = sbr.rel (0) target = $region17
    $region16: #{backbone3.1} parent=1 // pred_region
      _
    $region17: #{backbone3.1} parent=1 // pred_fallthru
      _
    // Predicated region
    $region18: #{backbone3.1} parent=1 // pred_check
      _
    $region19: #{backbone3.1} parent=1 // pred_check_branch
      %20 = sbr.rel (0) target = $region21
    $region20: #{backbone3.1} parent=1 // pred_region
      _
    $region21: #{backbone3.1} parent=1 // pred_fallthru
      _
    %s22 = scalar_lea.vmem [#allocation2], 128
    %23 = vst [vmem:[%s22] sm:$0xff] 0.0
    %24 = vst [vmem:[%s22 + $0x8] sm:$0x1] 0.0
    %25 = vst [vmem:[%s22 + $0x90] sm:$0xff] 0.0
    %26 = vst [vmem:[%s22 + $0x98] sm:$0x1] 0.0
    %27 = vst [vmem:[#allocation2 + $0x8] sm:$0x1] 0.0
    %28 = vst [vmem:[#allocation2 + $0x18] sm:$0x1] 0.0
    %29 = vst [vmem:[#allocation2 + $0x28] sm:$0x1] 0.0
    %30 = vst [vmem:[#allocation2 + $0x38] sm:$0x1] 0.0
    %31 = vst [vmem:[#allocation2 + $0x48] sm:$0x1] 0.0
    %32 = vst [vmem:[#allocation2 + $0x58] sm:$0x1] 0.0
    %33 = vst [vmem:[#allocation2 + $0x68] sm:$0x1] 0.0
    %34 = vst [vmem:[#allocation2 + $0x78] sm:$0x1] 0.0
    %35 = vst [vmem:[#allocation2 + $0x88] sm:$0x1] 0.0
    %36 = vst [vmem:[#allocation2 + $0x98] sm:$0x1] 0.0
    %37 = vst [vmem:[#allocation2 + $0xa8] sm:$0x1] 0.0
    %38 = vst [vmem:[#allocation2 + $0xb8] sm:$0x1] 0.0
    %39 = vst [vmem:[#allocation2 + $0xc8] sm:$0x1] 0.0
    %40 = vst [vmem:[#allocation2 + $0xd8] sm:$0x1] 0.0
    %41 = vst [vmem:[#allocation2 + $0xe8] sm:$0x1] 0.0
    %42 = vst [vmem:[#allocation2 + $0xf8] sm:$0x1] 0.0
    %43 = vst [vmem:[#allocation2 + $0x108] sm:$0x1] 0.0
    %44 = vst [vmem:[#allocation2 + $0x118] sm:$0x1] 0.0
    %45 = vst [vmem:[#allocation3] sm:$0xff] 0.0
    %46 = vst [vmem:[#allocation3 + $0x8] sm:$0x3] 0.0
    %47 = vst [vmem:[#allocation3 + $0xa0] sm:$0xff] 0.0
    %48 = vst [vmem:[#allocation3 + $0xa8] sm:$0x3] 0.0
    %s49 = scalar_lea.vmem [#allocation3], 144
    %50 = vst [vmem:[%s49] sm:$0xff] 0.0
    %51 = vst [vmem:[%s49 + $0x8] sm:$0x3] 0.0
    %52 = vst [vmem:[%s49 + $0xa0] sm:$0xff] 0.0
    %53 = vst [vmem:[%s49 + $0xa8] sm:$0x3] 0.0
    %54 = vst [vmem:[#allocation3] sm:$0x1] 0.0
    %55 = vst [vmem:[#allocation3 + $0x10] sm:$0x1] 0.0
    %56 = vst [vmem:[#allocation3 + $0x20] sm:$0x1] 0.0
    %57 = vst [vmem:[#allocation3 + $0x30] sm:$0x1] 0.0
    %58 = vst [vmem:[#allocation3 + $0x40] sm:$0x1] 0.0
    %59 = vst [vmem:[#allocation3 + $0x50] sm:$0x1] 0.0
    %60 = vst [vmem:[#allocation3 + $0x60] sm:$0x1] 0.0
    %61 = vst [vmem:[#allocation3 + $0x70] sm:$0x1] 0.0
    %62 = vst [vmem:[#allocation3 + $0x80] sm:$0x1] 0.0
    %63 = vst [vmem:[#allocation3 + $0x90] sm:$0x1] 0.0
    %64 = vst [vmem:[#allocation3 + $0xa0] sm:$0x1] 0.0
    %65 = vst [vmem:[#allocation3 + $0xb0] sm:$0x1] 0.0
    %66 = vst [vmem:[#allocation3 + $0xc0] sm:$0x1] 0.0
    %67 = vst [vmem:[#allocation3 + $0xd0] sm:$0x1] 0.0
    %68 = vst [vmem:[#allocation3 + $0xe0] sm:$0x1] 0.0
    %69 = vst [vmem:[#allocation3 + $0xf0] sm:$0x1] 0.0
    %70 = vst [vmem:[#allocation3 + $0x100] sm:$0x1] 0.0
    %71 = vst [vmem:[#allocation3 + $0x110] sm:$0x1] 0.0
    %72 = vst [vmem:[#allocation3 + $0x120] sm:$0x1] 0.0
    %73 = vst [vmem:[#allocation3 + $0x130] sm:$0x1] 0.0
    %74 = vst [vmem:[#allocation3 + $0x9] sm:$0x1] 0.0
    %75 = vst [vmem:[#allocation3 + $0x19] sm:$0x1] 0.0
    %76 = vst [vmem:[#allocation3 + $0x29] sm:$0x1] 0.0
    %77 = vst [vmem:[#allocation3 + $0x39] sm:$0x1] 0.0
    %78 = vst [vmem:[#allocation3 + $0x49] sm:$0x1] 0.0
    %79 = vst [vmem:[#allocation3 + $0x59] sm:$0x1] 0.0
    %80 = vst [vmem:[#allocation3 + $0x69] sm:$0x1] 0.0
    %81 = vst [vmem:[#allocation3 + $0x79] sm:$0x1] 0.0
    %82 = vst [vmem:[#allocation3 + $0x89] sm:$0x1] 0.0
    %83 = vst [vmem:[#allocation3 + $0x99] sm:$0x1] 0.0
    %84 = vst [vmem:[#allocation3 + $0xa9] sm:$0x1] 0.0
    %85 = vst [vmem:[#allocation3 + $0xb9] sm:$0x1] 0.0
    %86 = vst [vmem:[#allocation3 + $0xc9] sm:$0x1] 0.0
    %87 = vst [vmem:[#allocation3 + $0xd9] sm:$0x1] 0.0
    %88 = vst [vmem:[#allocation3 + $0xe9] sm:$0x1] 0.0
    %89 = vst [vmem:[#allocation3 + $0xf9] sm:$0x1] 0.0
    %90 = vst [vmem:[#allocation3 + $0x109] sm:$0x1] 0.0
    %91 = vst [vmem:[#allocation3 + $0x119] sm:$0x1] 0.0
    %92 = vst [vmem:[#allocation3 + $0x129] sm:$0x1] 0.0
    %93 = vst [vmem:[#allocation3 + $0x139] sm:$0x1] 0.0
    %94 = vst [vmem:[#allocation4] sm:$0xff] 0.0
    %95 = vst [vmem:[#allocation4 + $0x8] sm:$0xff] 0.0
    %96 = vst [vmem:[#allocation4 + $0x10] sm:$0x3] 0.0
    %97 = vst [vmem:[#allocation4 + $0x18] sm:$0x3] 0.0
    %98 = vst [vmem:[#allocation4 + $0x140] sm:$0xff] 0.0
    %99 = vst [vmem:[#allocation4 + $0x148] sm:$0xff] 0.0
    %100 = vst [vmem:[#allocation4 + $0x150] sm:$0x3] 0.0
    %101 = vst [vmem:[#allocation4 + $0x158] sm:$0x3] 0.0
    %s102 = scalar_lea.vmem [#allocation4], 288
    %103 = vst [vmem:[%s102] sm:$0xff] 0.0
    %104 = vst [vmem:[%s102 + $0x8] sm:$0xff] 0.0
    %105 = vst [vmem:[%s102 + $0x10] sm:$0x3] 0.0
    %106 = vst [vmem:[%s102 + $0x18] sm:$0x3] 0.0
    %107 = vst [vmem:[%s102 + $0x140] sm:$0xff] 0.0
    %108 = vst [vmem:[%s102 + $0x148] sm:$0xff] 0.0
    %109 = vst [vmem:[%s102 + $0x150] sm:$0x3] 0.0
    %110 = vst [vmem:[%s102 + $0x158] sm:$0x3] 0.0
    %v111 = vlaneseq
    %vm112 = vcmp.ge.s32.totalorder %v111, 0
    %vm113 = vcmp.lt.s32.totalorder %v111, 256
    %vm114 = vmand %vm112, %vm113
    %115 = vst.msk [vmem:[#allocation4] ss:$8 sm:$0x3] %vm114, 0.0
    %116 = vst.msk [vmem:[#allocation4] ss:$8 sm:$0x0] %vm114, 0.0
    %s117 = scalar_lea.vmem [#allocation4], 32
    %118 = vst.msk [vmem:[%s117] ss:$8 sm:$0x3] %vm114, 0.0
    %119 = vst.msk [vmem:[%s117] ss:$8 sm:$0x0] %vm114, 0.0
    %s120 = scalar_lea.vmem [#allocation4], 64
    %121 = vst.msk [vmem:[%s120] ss:$8 sm:$0x3] %vm114, 0.0
    %122 = vst.msk [vmem:[%s120] ss:$8 sm:$0x0] %vm114, 0.0
    %s123 = scalar_lea.vmem [#allocation4], 96
    %124 = vst.msk [vmem:[%s123] ss:$8 sm:$0x3] %vm114, 0.0
    %125 = vst.msk [vmem:[%s123] ss:$8 sm:$0x0] %vm114, 0.0
    %s126 = scalar_lea.vmem [#allocation4], 128
    %127 = vst.msk [vmem:[%s126] ss:$8 sm:$0x3] %vm114, 0.0
    %128 = vst.msk [vmem:[%s126] ss:$8 sm:$0x0] %vm114, 0.0
    %s129 = scalar_lea.vmem [#allocation4], 160
    %130 = vst.msk [vmem:[%s129] ss:$8 sm:$0x3] %vm114, 0.0
    %131 = vst.msk [vmem:[%s129] ss:$8 sm:$0x0] %vm114, 0.0
    %s132 = scalar_lea.vmem [#allocation4], 192
    %133 = vst.msk [vmem:[%s132] ss:$8 sm:$0x3] %vm114, 0.0
    %134 = vst.msk [vmem:[%s132] ss:$8 sm:$0x0] %vm114, 0.0
    %s135 = scalar_lea.vmem [#allocation4], 224
    %136 = vst.msk [vmem:[%s135] ss:$8 sm:$0x3] %vm114, 0.0
    %137 = vst.msk [vmem:[%s135] ss:$8 sm:$0x0] %vm114, 0.0
    %s138 = scalar_lea.vmem [#allocation4], 256
    %139 = vst.msk [vmem:[%s138] ss:$8 sm:$0x3] %vm114, 0.0
    %140 = vst.msk [vmem:[%s138] ss:$8 sm:$0x0] %vm114, 0.0
    %s141 = scalar_lea.vmem [#allocation4], 288
    %142 = vst.msk [vmem:[%s141] ss:$8 sm:$0x3] %vm114, 0.0
    %143 = vst.msk [vmem:[%s141] ss:$8 sm:$0x0] %vm114, 0.0
    %s144 = scalar_lea.vmem [#allocation4], 320
    %145 = vst.msk [vmem:[%s144] ss:$8 sm:$0x3] %vm114, 0.0
    %146 = vst.msk [vmem:[%s144] ss:$8 sm:$0x0] %vm114, 0.0
    %s147 = scalar_lea.vmem [#allocation4], 352
    %148 = vst.msk [vmem:[%s147] ss:$8 sm:$0x3] %vm114, 0.0
    %149 = vst.msk [vmem:[%s147] ss:$8 sm:$0x0] %vm114, 0.0
    %s150 = scalar_lea.vmem [#allocation4], 384
    %151 = vst.msk [vmem:[%s150] ss:$8 sm:$0x3] %vm114, 0.0
    %152 = vst.msk [vmem:[%s150] ss:$8 sm:$0x0] %vm114, 0.0
    %s153 = scalar_lea.vmem [#allocation4], 416
    %154 = vst.msk [vmem:[%s153] ss:$8 sm:$0x3] %vm114, 0.0
    %155 = vst.msk [vmem:[%s153] ss:$8 sm:$0x0] %vm114, 0.0
    %s156 = scalar_lea.vmem [#allocation4], 448
    %157 = vst.msk [vmem:[%s156] ss:$8 sm:$0x3] %vm114, 0.0
    %158 = vst.msk [vmem:[%s156] ss:$8 sm:$0x0] %vm114, 0.0
    %s159 = scalar_lea.vmem [#allocation4], 480
    %160 = vst.msk [vmem:[%s159] ss:$8 sm:$0x3] %vm114, 0.0
    %161 = vst.msk [vmem:[%s159] ss:$8 sm:$0x0] %vm114, 0.0
    %s162 = scalar_lea.vmem [#allocation4], 512
    %163 = vst.msk [vmem:[%s162] ss:$8 sm:$0x3] %vm114, 0.0
    %164 = vst.msk [vmem:[%s162] ss:$8 sm:$0x0] %vm114, 0.0
    %s165 = scalar_lea.vmem [#allocation4], 544
    %166 = vst.msk [vmem:[%s165] ss:$8 sm:$0x3] %vm114, 0.0
    %167 = vst.msk [vmem:[%s165] ss:$8 sm:$0x0] %vm114, 0.0
    %s168 = scalar_lea.vmem [#allocation4], 576
    %169 = vst.msk [vmem:[%s168] ss:$8 sm:$0x3] %vm114, 0.0
    %170 = vst.msk [vmem:[%s168] ss:$8 sm:$0x0] %vm114, 0.0
    %s171 = scalar_lea.vmem [#allocation4], 608
    %172 = vst.msk [vmem:[%s171] ss:$8 sm:$0x3] %vm114, 0.0
    %173 = vst.msk [vmem:[%s171] ss:$8 sm:$0x0] %vm114, 0.0
    %s174 = scalar_lea.vmem [#allocation4], 17
    %175 = vst.msk [vmem:[%s174] ss:$8 sm:$0x3] %vm114, 0.0
    %176 = vst.msk [vmem:[%s174] ss:$8 sm:$0x0] %vm114, 0.0
    %s177 = scalar_lea.vmem [#allocation4], 49
    %178 = vst.msk [vmem:[%s177] ss:$8 sm:$0x3] %vm114, 0.0
    %179 = vst.msk [vmem:[%s177] ss:$8 sm:$0x0] %vm114, 0.0
    %s180 = scalar_lea.vmem [#allocation4], 81
    %181 = vst.msk [vmem:[%s180] ss:$8 sm:$0x3] %vm114, 0.0
    %182 = vst.msk [vmem:[%s180] ss:$8 sm:$0x0] %vm114, 0.0
    %s183 = scalar_lea.vmem [#allocation4], 113
    %184 = vst.msk [vmem:[%s183] ss:$8 sm:$0x3] %vm114, 0.0
    %185 = vst.msk [vmem:[%s183] ss:$8 sm:$0x0] %vm114, 0.0
    %s186 = scalar_lea.vmem [#allocation4], 145
    %187 = vst.msk [vmem:[%s186] ss:$8 sm:$0x3] %vm114, 0.0
    %188 = vst.msk [vmem:[%s186] ss:$8 sm:$0x0] %vm114, 0.0
    %s189 = scalar_lea.vmem [#allocation4], 177
    %190 = vst.msk [vmem:[%s189] ss:$8 sm:$0x3] %vm114, 0.0
    %191 = vst.msk [vmem:[%s189] ss:$8 sm:$0x0] %vm114, 0.0
    %s192 = scalar_lea.vmem [#allocation4], 209
    %193 = vst.msk [vmem:[%s192] ss:$8 sm:$0x3] %vm114, 0.0
    %194 = vst.msk [vmem:[%s192] ss:$8 sm:$0x0] %vm114, 0.0
    %s195 = scalar_lea.vmem [#allocation4], 241
    %196 = vst.msk [vmem:[%s195] ss:$8 sm:$0x3] %vm114, 0.0
    %197 = vst.msk [vmem:[%s195] ss:$8 sm:$0x0] %vm114, 0.0
    %s198 = scalar_lea.vmem [#allocation4], 273
    %199 = vst.msk [vmem:[%s198] ss:$8 sm:$0x3] %vm114, 0.0
    %200 = vst.msk [vmem:[%s198] ss:$8 sm:$0x0] %vm114, 0.0
    %s201 = scalar_lea.vmem [#allocation4], 305
    %202 = vst.msk [vmem:[%s201] ss:$8 sm:$0x3] %vm114, 0.0
    %203 = vst.msk [vmem:[%s201] ss:$8 sm:$0x0] %vm114, 0.0
    %s204 = scalar_lea.vmem [#allocation4], 337
    %205 = vst.msk [vmem:[%s204] ss:$8 sm:$0x3] %vm114, 0.0
    %206 = vst.msk [vmem:[%s204] ss:$8 sm:$0x0] %vm114, 0.0
    %s207 = scalar_lea.vmem [#allocation4], 369
    %208 = vst.msk [vmem:[%s207] ss:$8 sm:$0x3] %vm114, 0.0
    %209 = vst.msk [vmem:[%s207] ss:$8 sm:$0x0] %vm114, 0.0
    %s210 = scalar_lea.vmem [#allocation4], 401
    %211 = vst.msk [vmem:[%s210] ss:$8 sm:$0x3] %vm114, 0.0
    %212 = vst.msk [vmem:[%s210] ss:$8 sm:$0x0] %vm114, 0.0
    %s213 = scalar_lea.vmem [#allocation4], 433
    %214 = vst.msk [vmem:[%s213] ss:$8 sm:$0x3] %vm114, 0.0
    %215 = vst.msk [vmem:[%s213] ss:$8 sm:$0x0] %vm114, 0.0
    %s216 = scalar_lea.vmem [#allocation4], 465
    %217 = vst.msk [vmem:[%s216] ss:$8 sm:$0x3] %vm114, 0.0
    %218 = vst.msk [vmem:[%s216] ss:$8 sm:$0x0] %vm114, 0.0
    %s219 = scalar_lea.vmem [#allocation4], 497
    %220 = vst.msk [vmem:[%s219] ss:$8 sm:$0x3] %vm114, 0.0
    %221 = vst.msk [vmem:[%s219] ss:$8 sm:$0x0] %vm114, 0.0
    %s222 = scalar_lea.vmem [#allocation4], 529
    %223 = vst.msk [vmem:[%s222] ss:$8 sm:$0x3] %vm114, 0.0
    %224 = vst.msk [vmem:[%s222] ss:$8 sm:$0x0] %vm114, 0.0
    %s225 = scalar_lea.vmem [#allocation4], 561
    %226 = vst.msk [vmem:[%s225] ss:$8 sm:$0x3] %vm114, 0.0
    %227 = vst.msk [vmem:[%s225] ss:$8 sm:$0x0] %vm114, 0.0
    %s228 = scalar_lea.vmem [#allocation4], 593
    %229 = vst.msk [vmem:[%s228] ss:$8 sm:$0x3] %vm114, 0.0
    %230 = vst.msk [vmem:[%s228] ss:$8 sm:$0x0] %vm114, 0.0
    %s231 = scalar_lea.vmem [#allocation4], 625
    %232 = vst.msk [vmem:[%s231] ss:$8 sm:$0x3] %vm114, 0.0
    %233 = vst.msk [vmem:[%s231] ss:$8 sm:$0x0] %vm114, 0.0
    %234 = vst [vmem:[#allocation5] sm:$0xff] 0.0
    %235 = vst [vmem:[#allocation5 + $0x8] sm:$0x3] 0.0
    %236 = vst [vmem:[#allocation5 + $0xa0] sm:$0xff] 0.0
    %237 = vst [vmem:[#allocation5 + $0xa8] sm:$0x3] 0.0
    %s238 = scalar_lea.vmem [#allocation5], 144
    %239 = vst [vmem:[%s238] sm:$0xff] 0.0
    %240 = vst [vmem:[%s238 + $0x8] sm:$0x3] 0.0
    %241 = vst [vmem:[%s238 + $0xa0] sm:$0xff] 0.0
    %242 = vst [vmem:[%s238 + $0xa8] sm:$0x3] 0.0
    %243 = vst [vmem:[#allocation5] sm:$0x1] 0.0
    %244 = vst [vmem:[#allocation5 + $0x10] sm:$0x1] 0.0
    %245 = vst [vmem:[#allocation5 + $0x20] sm:$0x1] 0.0
    %246 = vst [vmem:[#allocation5 + $0x30] sm:$0x1] 0.0
    %247 = vst [vmem:[#allocation5 + $0x40] sm:$0x1] 0.0
    %248 = vst [vmem:[#allocation5 + $0x50] sm:$0x1] 0.0
    %249 = vst [vmem:[#allocation5 + $0x60] sm:$0x1] 0.0
    %250 = vst [vmem:[#allocation5 + $0x70] sm:$0x1] 0.0
    %251 = vst [vmem:[#allocation5 + $0x80] sm:$0x1] 0.0
    %252 = vst [vmem:[#allocation5 + $0x90] sm:$0x1] 0.0
    %253 = vst [vmem:[#allocation5 + $0xa0] sm:$0x1] 0.0
    %254 = vst [vmem:[#allocation5 + $0xb0] sm:$0x1] 0.0
    %255 = vst [vmem:[#allocation5 + $0xc0] sm:$0x1] 0.0
    %256 = vst [vmem:[#allocation5 + $0xd0] sm:$0x1] 0.0
    %257 = vst [vmem:[#allocation5 + $0xe0] sm:$0x1] 0.0
    %258 = vst [vmem:[#allocation5 + $0xf0] sm:$0x1] 0.0
    %259 = vst [vmem:[#allocation5 + $0x100] sm:$0x1] 0.0
    %260 = vst [vmem:[#allocation5 + $0x110] sm:$0x1] 0.0
    %261 = vst [vmem:[#allocation5 + $0x120] sm:$0x1] 0.0
    %262 = vst [vmem:[#allocation5 + $0x130] sm:$0x1] 0.0
    %263 = vst [vmem:[#allocation5 + $0x9] sm:$0x1] 0.0
    %264 = vst [vmem:[#allocation5 + $0x19] sm:$0x1] 0.0
    %265 = vst [vmem:[#allocation5 + $0x29] sm:$0x1] 0.0
    %266 = vst [vmem:[#allocation5 + $0x39] sm:$0x1] 0.0
    %267 = vst [vmem:[#allocation5 + $0x49] sm:$0x1] 0.0
    %268 = vst [vmem:[#allocation5 + $0x59] sm:$0x1] 0.0
    %269 = vst [vmem:[#allocation5 + $0x69] sm:$0x1] 0.0
    %270 = vst [vmem:[#allocation5 + $0x79] sm:$0x1] 0.0
    %271 = vst [vmem:[#allocation5 + $0x89] sm:$0x1] 0.0
    %272 = vst [vmem:[#allocation5 + $0x99] sm:$0x1] 0.0
    %273 = vst [vmem:[#allocation5 + $0xa9] sm:$0x1] 0.0
    %274 = vst [vmem:[#allocation5 + $0xb9] sm:$0x1] 0.0
    %275 = vst [vmem:[#allocation5 + $0xc9] sm:$0x1] 0.0
    %276 = vst [vmem:[#allocation5 + $0xd9] sm:$0x1] 0.0
    %277 = vst [vmem:[#allocation5 + $0xe9] sm:$0x1] 0.0
    %278 = vst [vmem:[#allocation5 + $0xf9] sm:$0x1] 0.0
    %279 = vst [vmem:[#allocation5 + $0x109] sm:$0x1] 0.0
    %280 = vst [vmem:[#allocation5 + $0x119] sm:$0x1] 0.0
    %281 = vst [vmem:[#allocation5 + $0x129] sm:$0x1] 0.0
    %282 = vst [vmem:[#allocation5 + $0x139] sm:$0x1] 0.0
    %283 = vst [vmem:[#allocation6] sm:$0xff] 0.0
    %284 = vst [vmem:[#allocation6 + $0x8] sm:$0xff] 0.0
    %285 = vst [vmem:[#allocation6 + $0x10] sm:$0x3] 0.0
    %286 = vst [vmem:[#allocation6 + $0x18] sm:$0x3] 0.0
    %287 = vst [vmem:[#allocation6 + $0x140] sm:$0xff] 0.0
    %288 = vst [vmem:[#allocation6 + $0x148] sm:$0xff] 0.0
    %289 = vst [vmem:[#allocation6 + $0x150] sm:$0x3] 0.0
    %290 = vst [vmem:[#allocation6 + $0x158] sm:$0x3] 0.0
    %s291 = scalar_lea.vmem [#allocation6], 288
    %292 = vst [vmem:[%s291] sm:$0xff] 0.0
    %293 = vst [vmem:[%s291 + $0x8] sm:$0xff] 0.0
    %294 = vst [vmem:[%s291 + $0x10] sm:$0x3] 0.0
    %295 = vst [vmem:[%s291 + $0x18] sm:$0x3] 0.0
    %296 = vst [vmem:[%s291 + $0x140] sm:$0xff] 0.0
    %297 = vst [vmem:[%s291 + $0x148] sm:$0xff] 0.0
    %298 = vst [vmem:[%s291 + $0x150] sm:$0x3] 0.0
    %299 = vst [vmem:[%s291 + $0x158] sm:$0x3] 0.0
    %300 = vst.msk [vmem:[#allocation6] ss:$8 sm:$0x3] %vm114, 0.0
    %301 = vst.msk [vmem:[#allocation6] ss:$8 sm:$0x0] %vm114, 0.0
    %s302 = scalar_lea.vmem [#allocation6], 32
    %303 = vst.msk [vmem:[%s302] ss:$8 sm:$0x3] %vm114, 0.0
    %304 = vst.msk [vmem:[%s302] ss:$8 sm:$0x0] %vm114, 0.0
    %s305 = scalar_lea.vmem [#allocation6], 64
    %306 = vst.msk [vmem:[%s305] ss:$8 sm:$0x3] %vm114, 0.0
    %307 = vst.msk [vmem:[%s305] ss:$8 sm:$0x0] %vm114, 0.0
    %s308 = scalar_lea.vmem [#allocation6], 96
    %309 = vst.msk [vmem:[%s308] ss:$8 sm:$0x3] %vm114, 0.0
    %310 = vst.msk [vmem:[%s308] ss:$8 sm:$0x0] %vm114, 0.0
    %s311 = scalar_lea.vmem [#allocation6], 128
    %312 = vst.msk [vmem:[%s311] ss:$8 sm:$0x3] %vm114, 0.0
    %313 = vst.msk [vmem:[%s311] ss:$8 sm:$0x0] %vm114, 0.0
    %s314 = scalar_lea.vmem [#allocation6], 160
    %315 = vst.msk [vmem:[%s314] ss:$8 sm:$0x3] %vm114, 0.0
    %316 = vst.msk [vmem:[%s314] ss:$8 sm:$0x0] %vm114, 0.0
    %s317 = scalar_lea.vmem [#allocation6], 192
    %318 = vst.msk [vmem:[%s317] ss:$8 sm:$0x3] %vm114, 0.0
    %319 = vst.msk [vmem:[%s317] ss:$8 sm:$0x0] %vm114, 0.0
    %s320 = scalar_lea.vmem [#allocation6], 224
    %321 = vst.msk [vmem:[%s320] ss:$8 sm:$0x3] %vm114, 0.0
    %322 = vst.msk [vmem:[%s320] ss:$8 sm:$0x0] %vm114, 0.0
    %s323 = scalar_lea.vmem [#allocation6], 256
    %324 = vst.msk [vmem:[%s323] ss:$8 sm:$0x3] %vm114, 0.0
    %325 = vst.msk [vmem:[%s323] ss:$8 sm:$0x0] %vm114, 0.0
    %s326 = scalar_lea.vmem [#allocation6], 288
    %327 = vst.msk [vmem:[%s326] ss:$8 sm:$0x3] %vm114, 0.0
    %328 = vst.msk [vmem:[%s326] ss:$8 sm:$0x0] %vm114, 0.0
    %s329 = scalar_lea.vmem [#allocation6], 320
    %330 = vst.msk [vmem:[%s329] ss:$8 sm:$0x3] %vm114, 0.0
    %331 = vst.msk [vmem:[%s329] ss:$8 sm:$0x0] %vm114, 0.0
    %s332 = scalar_lea.vmem [#allocation6], 352
    %333 = vst.msk [vmem:[%s332] ss:$8 sm:$0x3] %vm114, 0.0
    %334 = vst.msk [vmem:[%s332] ss:$8 sm:$0x0] %vm114, 0.0
    %s335 = scalar_lea.vmem [#allocation6], 384
    %336 = vst.msk [vmem:[%s335] ss:$8 sm:$0x3] %vm114, 0.0
    %337 = vst.msk [vmem:[%s335] ss:$8 sm:$0x0] %vm114, 0.0
    %s338 = scalar_lea.vmem [#allocation6], 416
    %339 = vst.msk [vmem:[%s338] ss:$8 sm:$0x3] %vm114, 0.0
    %340 = vst.msk [vmem:[%s338] ss:$8 sm:$0x0] %vm114, 0.0
    %s341 = scalar_lea.vmem [#allocation6], 448
    %342 = vst.msk [vmem:[%s341] ss:$8 sm:$0x3] %vm114, 0.0
    %343 = vst.msk [vmem:[%s341] ss:$8 sm:$0x0] %vm114, 0.0
    %s344 = scalar_lea.vmem [#allocation6], 480
    %345 = vst.msk [vmem:[%s344] ss:$8 sm:$0x3] %vm114, 0.0
    %346 = vst.msk [vmem:[%s344] ss:$8 sm:$0x0] %vm114, 0.0
    %s347 = scalar_lea.vmem [#allocation6], 512
    %348 = vst.msk [vmem:[%s347] ss:$8 sm:$0x3] %vm114, 0.0
    %349 = vst.msk [vmem:[%s347] ss:$8 sm:$0x0] %vm114, 0.0
    %s350 = scalar_lea.vmem [#allocation6], 544
    %351 = vst.msk [vmem:[%s350] ss:$8 sm:$0x3] %vm114, 0.0
    %352 = vst.msk [vmem:[%s350] ss:$8 sm:$0x0] %vm114, 0.0
    %s353 = scalar_lea.vmem [#allocation6], 576
    %354 = vst.msk [vmem:[%s353] ss:$8 sm:$0x3] %vm114, 0.0
    %355 = vst.msk [vmem:[%s353] ss:$8 sm:$0x0] %vm114, 0.0
    %s356 = scalar_lea.vmem [#allocation6], 608
    %357 = vst.msk [vmem:[%s356] ss:$8 sm:$0x3] %vm114, 0.0
    %358 = vst.msk [vmem:[%s356] ss:$8 sm:$0x0] %vm114, 0.0
    %s359 = scalar_lea.vmem [#allocation6], 17
    %360 = vst.msk [vmem:[%s359] ss:$8 sm:$0x3] %vm114, 0.0
    %361 = vst.msk [vmem:[%s359] ss:$8 sm:$0x0] %vm114, 0.0
    %s362 = scalar_lea.vmem [#allocation6], 49
    %363 = vst.msk [vmem:[%s362] ss:$8 sm:$0x3] %vm114, 0.0
    %364 = vst.msk [vmem:[%s362] ss:$8 sm:$0x0] %vm114, 0.0
    %s365 = scalar_lea.vmem [#allocation6], 81
    %366 = vst.msk [vmem:[%s365] ss:$8 sm:$0x3] %vm114, 0.0
    %367 = vst.msk [vmem:[%s365] ss:$8 sm:$0x0] %vm114, 0.0
    %s368 = scalar_lea.vmem [#allocation6], 113
    %369 = vst.msk [vmem:[%s368] ss:$8 sm:$0x3] %vm114, 0.0
    %370 = vst.msk [vmem:[%s368] ss:$8 sm:$0x0] %vm114, 0.0
    %s371 = scalar_lea.vmem [#allocation6], 145
    %372 = vst.msk [vmem:[%s371] ss:$8 sm:$0x3] %vm114, 0.0
    %373 = vst.msk [vmem:[%s371] ss:$8 sm:$0x0] %vm114, 0.0
    %s374 = scalar_lea.vmem [#allocation6], 177
    %375 = vst.msk [vmem:[%s374] ss:$8 sm:$0x3] %vm114, 0.0
    %376 = vst.msk [vmem:[%s374] ss:$8 sm:$0x0] %vm114, 0.0
    %s377 = scalar_lea.vmem [#allocation6], 209
    %378 = vst.msk [vmem:[%s377] ss:$8 sm:$0x3] %vm114, 0.0
    %379 = vst.msk [vmem:[%s377] ss:$8 sm:$0x0] %vm114, 0.0
    %s380 = scalar_lea.vmem [#allocation6], 241
    %381 = vst.msk [vmem:[%s380] ss:$8 sm:$0x3] %vm114, 0.0
    %382 = vst.msk [vmem:[%s380] ss:$8 sm:$0x0] %vm114, 0.0
    %s383 = scalar_lea.vmem [#allocation6], 273
    %384 = vst.msk [vmem:[%s383] ss:$8 sm:$0x3] %vm114, 0.0
    %385 = vst.msk [vmem:[%s383] ss:$8 sm:$0x0] %vm114, 0.0
    %s386 = scalar_lea.vmem [#allocation6], 305
    %387 = vst.msk [vmem:[%s386] ss:$8 sm:$0x3] %vm114, 0.0
    %388 = vst.msk [vmem:[%s386] ss:$8 sm:$0x0] %vm114, 0.0
    %s389 = scalar_lea.vmem [#allocation6], 337
    %390 = vst.msk [vmem:[%s389] ss:$8 sm:$0x3] %vm114, 0.0
    %391 = vst.msk [vmem:[%s389] ss:$8 sm:$0x0] %vm114, 0.0
    %s392 = scalar_lea.vmem [#allocation6], 369
    %393 = vst.msk [vmem:[%s392] ss:$8 sm:$0x3] %vm114, 0.0
    %394 = vst.msk [vmem:[%s392] ss:$8 sm:$0x0] %vm114, 0.0
    %s395 = scalar_lea.vmem [#allocation6], 401
    %396 = vst.msk [vmem:[%s395] ss:$8 sm:$0x3] %vm114, 0.0
    %397 = vst.msk [vmem:[%s395] ss:$8 sm:$0x0] %vm114, 0.0
    %s398 = scalar_lea.vmem [#allocation6], 433
    %399 = vst.msk [vmem:[%s398] ss:$8 sm:$0x3] %vm114, 0.0
    %400 = vst.msk [vmem:[%s398] ss:$8 sm:$0x0] %vm114, 0.0
    %s401 = scalar_lea.vmem [#allocation6], 465
    %402 = vst.msk [vmem:[%s401] ss:$8 sm:$0x3] %vm114, 0.0
    %403 = vst.msk [vmem:[%s401] ss:$8 sm:$0x0] %vm114, 0.0
    %s404 = scalar_lea.vmem [#allocation6], 497
    %405 = vst.msk [vmem:[%s404] ss:$8 sm:$0x3] %vm114, 0.0
    %406 = vst.msk [vmem:[%s404] ss:$8 sm:$0x0] %vm114, 0.0
    %s407 = scalar_lea.vmem [#allocation6], 529
    %408 = vst.msk [vmem:[%s407] ss:$8 sm:$0x3] %vm114, 0.0
    %409 = vst.msk [vmem:[%s407] ss:$8 sm:$0x0] %vm114, 0.0
    %s410 = scalar_lea.vmem [#allocation6], 561
    %411 = vst.msk [vmem:[%s410] ss:$8 sm:$0x3] %vm114, 0.0
    %412 = vst.msk [vmem:[%s410] ss:$8 sm:$0x0] %vm114, 0.0
    %s413 = scalar_lea.vmem [#allocation6], 593
    %414 = vst.msk [vmem:[%s413] ss:$8 sm:$0x3] %vm114, 0.0
    %415 = vst.msk [vmem:[%s413] ss:$8 sm:$0x0] %vm114, 0.0
    %s416 = scalar_lea.vmem [#allocation6], 625
    %417 = vst.msk [vmem:[%s416] ss:$8 sm:$0x3] %vm114, 0.0
    %418 = vst.msk [vmem:[%s416] ss:$8 sm:$0x0] %vm114, 0.0
    %419 = vst [vmem:[#allocation7] sm:$0xff] 0.0
    %420 = vst [vmem:[#allocation7 + $0x8] sm:$0x3] 0.0
    %421 = vst [vmem:[#allocation7 + $0xa0] sm:$0xff] 0.0
    %422 = vst [vmem:[#allocation7 + $0xa8] sm:$0x3] 0.0
    %s423 = scalar_lea.vmem [#allocation7], 144
    %424 = vst [vmem:[%s423] sm:$0xff] 0.0
    %425 = vst [vmem:[%s423 + $0x8] sm:$0x3] 0.0
    %426 = vst [vmem:[%s423 + $0xa0] sm:$0xff] 0.0
    %427 = vst [vmem:[%s423 + $0xa8] sm:$0x3] 0.0
    %428 = vst [vmem:[#allocation7] sm:$0x1] 0.0
    %429 = vst [vmem:[#allocation7 + $0x10] sm:$0x1] 0.0
    %430 = vst [vmem:[#allocation7 + $0x20] sm:$0x1] 0.0
    %431 = vst [vmem:[#allocation7 + $0x30] sm:$0x1] 0.0
    %432 = vst [vmem:[#allocation7 + $0x40] sm:$0x1] 0.0
    %433 = vst [vmem:[#allocation7 + $0x50] sm:$0x1] 0.0
    %434 = vst [vmem:[#allocation7 + $0x60] sm:$0x1] 0.0
    %435 = vst [vmem:[#allocation7 + $0x70] sm:$0x1] 0.0
    %436 = vst [vmem:[#allocation7 + $0x80] sm:$0x1] 0.0
    %437 = vst [vmem:[#allocation7 + $0x90] sm:$0x1] 0.0
    %438 = vst [vmem:[#allocation7 + $0xa0] sm:$0x1] 0.0
    %439 = vst [vmem:[#allocation7 + $0xb0] sm:$0x1] 0.0
    %440 = vst [vmem:[#allocation7 + $0xc0] sm:$0x1] 0.0
    %441 = vst [vmem:[#allocation7 + $0xd0] sm:$0x1] 0.0
    %442 = vst [vmem:[#allocation7 + $0xe0] sm:$0x1] 0.0
    %443 = vst [vmem:[#allocation7 + $0xf0] sm:$0x1] 0.0
    %444 = vst [vmem:[#allocation7 + $0x100] sm:$0x1] 0.0
    %445 = vst [vmem:[#allocation7 + $0x110] sm:$0x1] 0.0
    %446 = vst [vmem:[#allocation7 + $0x120] sm:$0x1] 0.0
    %447 = vst [vmem:[#allocation7 + $0x130] sm:$0x1] 0.0
    %448 = vst [vmem:[#allocation7 + $0x9] sm:$0x1] 0.0
    %449 = vst [vmem:[#allocation7 + $0x19] sm:$0x1] 0.0
    %450 = vst [vmem:[#allocation7 + $0x29] sm:$0x1] 0.0
    %451 = vst [vmem:[#allocation7 + $0x39] sm:$0x1] 0.0
    %452 = vst [vmem:[#allocation7 + $0x49] sm:$0x1] 0.0
    %453 = vst [vmem:[#allocation7 + $0x59] sm:$0x1] 0.0
    %454 = vst [vmem:[#allocation7 + $0x69] sm:$0x1] 0.0
    %455 = vst [vmem:[#allocation7 + $0x79] sm:$0x1] 0.0
    %456 = vst [vmem:[#allocation7 + $0x89] sm:$0x1] 0.0
    %457 = vst [vmem:[#allocation7 + $0x99] sm:$0x1] 0.0
    %458 = vst [vmem:[#allocation7 + $0xa9] sm:$0x1] 0.0
    %459 = vst [vmem:[#allocation7 + $0xb9] sm:$0x1] 0.0
    %460 = vst [vmem:[#allocation7 + $0xc9] sm:$0x1] 0.0
    %461 = vst [vmem:[#allocation7 + $0xd9] sm:$0x1] 0.0
    %462 = vst [vmem:[#allocation7 + $0xe9] sm:$0x1] 0.0
    %463 = vst [vmem:[#allocation7 + $0xf9] sm:$0x1] 0.0
    %464 = vst [vmem:[#allocation7 + $0x109] sm:$0x1] 0.0
    %465 = vst [vmem:[#allocation7 + $0x119] sm:$0x1] 0.0
    %466 = vst [vmem:[#allocation7 + $0x129] sm:$0x1] 0.0
    %467 = vst [vmem:[#allocation7 + $0x139] sm:$0x1] 0.0
    %v468 = vld [vmem:[%s0] sm:$0xff]
    %v469 = vld [vmem:[%s0 + $0x8] sm:$0xff]
    %v470 = vld [vmem:[%s0 + $0x10] sm:$0xff]
    %v471 = vld [vmem:[%s0 + $0x18] sm:$0xff]
    %v472 = vld [vmem:[%s0 + $0x20] sm:$0xff]
    %v473 = vld [vmem:[%s0 + $0x28] sm:$0xff]
    %v474 = vld [vmem:[%s0 + $0x30] sm:$0xff]
    %v475 = vld [vmem:[%s0 + $0x38] sm:$0xff]
    %v476 = vld [vmem:[%s0 + $0x40] sm:$0xff]
    %v477 = vld [vmem:[%s0 + $0x48] sm:$0xff]
    %v478 = vld [vmem:[%s0 + $0x50] sm:$0xff]
    %v479 = vld [vmem:[%s0 + $0x58] sm:$0xff]
    %v480 = vld [vmem:[%s0 + $0x60] sm:$0xff]
    %v481 = vld [vmem:[%s0 + $0x68] sm:$0xff]
    %v482 = vld [vmem:[%s0 + $0x70] sm:$0xff]
    %v483 = vld [vmem:[%s0 + $0x78] sm:$0xff]
    %s484 = scalar_lea.vmem %s0, 128
    %v485 = vld [vmem:[%s484] sm:$0xff]
    %v486 = vld [vmem:[%s484 + $0x8] sm:$0xff]
    %v487 = vld [vmem:[%s484 + $0x10] sm:$0xff]
    %v488 = vld [vmem:[%s484 + $0x18] sm:$0xff]
    %v489 = vld [vmem:[%s484 + $0x20] sm:$0xff]
    %v490 = vld [vmem:[%s484 + $0x28] sm:$0xff]
    %v491 = vld [vmem:[%s484 + $0x30] sm:$0xff]
    %v492 = vld [vmem:[%s484 + $0x38] sm:$0xff]
    %v493 = vld [vmem:[%s484 + $0x40] sm:$0xff]
    %v494 = vld [vmem:[%s484 + $0x48] sm:$0xff]
    %v495 = vld [vmem:[%s484 + $0x50] sm:$0xff]
    %v496 = vld [vmem:[%s484 + $0x58] sm:$0xff]
    %v497 = vld [vmem:[%s484 + $0x60] sm:$0xff]
    %v498 = vld [vmem:[%s484 + $0x68] sm:$0xff]
    %v499 = vld [vmem:[%s484 + $0x70] sm:$0xff]
    %v500 = vld [vmem:[%s484 + $0x78] sm:$0xff]
    %s501 = scalar_lea.vmem %s0, 256
    %v502 = vld [vmem:[%s501] sm:$0xff]
    %v503 = vld [vmem:[%s501 + $0x8] sm:$0xff]
    %v504 = vld [vmem:[%s501 + $0x10] sm:$0xff]
    %v505 = vld [vmem:[%s501 + $0x18] sm:$0xff]
    %v506 = vld [vmem:[%s501 + $0x20] sm:$0xff]
    %v507 = vld [vmem:[%s501 + $0x28] sm:$0xff]
    %v508 = vld [vmem:[%s501 + $0x30] sm:$0xff]
    %v509 = vld [vmem:[%s501 + $0x38] sm:$0xff]
    %v510 = vld [vmem:[%s501 + $0x40] sm:$0xff]
    %v511 = vld [vmem:[%s501 + $0x48] sm:$0xff]
    %v512 = vld [vmem:[%s501 + $0x50] sm:$0xff]
    %v513 = vld [vmem:[%s501 + $0x58] sm:$0xff]
    %v514 = vld [vmem:[%s501 + $0x60] sm:$0xff]
    %v515 = vld [vmem:[%s501 + $0x68] sm:$0xff]
    %v516 = vld [vmem:[%s501 + $0x70] sm:$0xff]
    %v517 = vld [vmem:[%s501 + $0x78] sm:$0xff]
    %s518 = scalar_lea.vmem %s0, 384
    %v519 = vld [vmem:[%s518] sm:$0xff]
    %v520 = vld [vmem:[%s518 + $0x8] sm:$0xff]
    %v521 = vld [vmem:[%s518 + $0x10] sm:$0xff]
    %v522 = vld [vmem:[%s518 + $0x18] sm:$0xff]
    %v523 = vld [vmem:[%s518 + $0x20] sm:$0xff]
    %v524 = vld [vmem:[%s518 + $0x28] sm:$0xff]
    %v525 = vld [vmem:[%s518 + $0x30] sm:$0xff]
    %v526 = vld [vmem:[%s518 + $0x38] sm:$0xff]
    %v527 = vld [vmem:[%s518 + $0x40] sm:$0xff]
    %v528 = vld [vmem:[%s518 + $0x48] sm:$0xff]
    %v529 = vld [vmem:[%s518 + $0x50] sm:$0xff]
    %v530 = vld [vmem:[%s518 + $0x58] sm:$0xff]
    %v531 = vld [vmem:[%s518 + $0x60] sm:$0xff]
    %v532 = vld [vmem:[%s518 + $0x68] sm:$0xff]
    %v533 = vld [vmem:[%s518 + $0x70] sm:$0xff]
    %v534 = vld [vmem:[%s518 + $0x78] sm:$0xff]
    %v535 = vld [vmem:[%s1] sm:$0xff]
    %v536 = vld [vmem:[%s1 + $0x40] sm:$0x1]
    %v537 = vlaneseq
    %v538 = vshrl.u32 %v537, 7
    %v539 = vsub.s32 0, %v538
    %v540 = vrot.slane %v535, %v539
    %v541 = vmul.f32 %v468, %v540
    %v542 = vmul.f32 %v469, %v540
    %v543 = vmul.f32 %v470, %v540
    %v544 = vmul.f32 %v471, %v540
    %v545 = vmul.f32 %v472, %v540
    %v546 = vmul.f32 %v473, %v540
    %v547 = vmul.f32 %v474, %v540
    %v548 = vmul.f32 %v475, %v540
    %v549 = vmul.f32 %v476, %v540
    %v550 = vmul.f32 %v477, %v540
    %v551 = vmul.f32 %v478, %v540
    %v552 = vmul.f32 %v479, %v540
    %v553 = vmul.f32 %v480, %v540
    %v554 = vmul.f32 %v481, %v540
    %v555 = vmul.f32 %v482, %v540
    %v556 = vmul.f32 %v483, %v540
    %v557 = vlaneseq
    %v558 = vshrl.u32 %v557, 7
    %v559 = vsub.s32 1, %v558
    %v560 = vrot.slane %v535, %v559
    %v561 = vmul.f32 %v485, %v560
    %v562 = vmul.f32 %v486, %v560
    %v563 = vmul.f32 %v487, %v560
    %v564 = vmul.f32 %v488, %v560
    %v565 = vmul.f32 %v489, %v560
    %v566 = vmul.f32 %v490, %v560
    %v567 = vmul.f32 %v491, %v560
    %v568 = vmul.f32 %v492, %v560
    %v569 = vmul.f32 %v493, %v560
    %v570 = vmul.f32 %v494, %v560
    %v571 = vmul.f32 %v495, %v560
    %v572 = vmul.f32 %v496, %v560
    %v573 = vmul.f32 %v497, %v560
    %v574 = vmul.f32 %v498, %v560
    %v575 = vmul.f32 %v499, %v560
    %v576 = vmul.f32 %v500, %v560
    %v577 = vadd.f32 %v541, %v561
    %v578 = vadd.f32 %v542, %v562
    %v579 = vadd.f32 %v543, %v563
    %v580 = vadd.f32 %v544, %v564
    %v581 = vadd.f32 %v545, %v565
    %v582 = vadd.f32 %v546, %v566
    %v583 = vadd.f32 %v547, %v567
    %v584 = vadd.f32 %v548, %v568
    %v585 = vadd.f32 %v549, %v569
    %v586 = vadd.f32 %v550, %v570
    %v587 = vadd.f32 %v551, %v571
    %v588 = vadd.f32 %v552, %v572
    %v589 = vadd.f32 %v553, %v573
    %v590 = vadd.f32 %v554, %v574
    %v591 = vadd.f32 %v555, %v575
    %v592 = vadd.f32 %v556, %v576
    %v593 = vlaneseq
    %v594 = vshrl.u32 %v593, 7
    %v595 = vsub.s32 3, %v594
    %v596 = vrot.slane %v535, %v595
    %v597 = vmul.f32 %v502, %v596
    %v598 = vmul.f32 %v503, %v596
    %v599 = vmul.f32 %v504, %v596
    %v600 = vmul.f32 %v505, %v596
    %v601 = vmul.f32 %v506, %v596
    %v602 = vmul.f32 %v507, %v596
    %v603 = vmul.f32 %v508, %v596
    %v604 = vmul.f32 %v509, %v596
    %v605 = vmul.f32 %v510, %v596
    %v606 = vmul.f32 %v511, %v596
    %v607 = vmul.f32 %v512, %v596
    %v608 = vmul.f32 %v513, %v596
    %v609 = vmul.f32 %v514, %v596
    %v610 = vmul.f32 %v515, %v596
    %v611 = vmul.f32 %v516, %v596
    %v612 = vmul.f32 %v517, %v596
    %v613 = vadd.f32 %v577, %v597
    %v614 = vadd.f32 %v578, %v598
    %v615 = vadd.f32 %v579, %v599
    %v616 = vadd.f32 %v580, %v600
    %v617 = vadd.f32 %v581, %v601
    %v618 = vadd.f32 %v582, %v602
    %v619 = vadd.f32 %v583, %v603
    %v620 = vadd.f32 %v584, %v604
    %v621 = vadd.f32 %v585, %v605
    %v622 = vadd.f32 %v586, %v606
    %v623 = vadd.f32 %v587, %v607
    %v624 = vadd.f32 %v588, %v608
    %v625 = vadd.f32 %v589, %v609
    %v626 = vadd.f32 %v590, %v610
    %v627 = vadd.f32 %v591, %v611
    %v628 = vadd.f32 %v592, %v612
    %v629 = vlaneseq
    %v630 = vshrl.u32 %v629, 7
    %v631 = vsub.s32 4, %v630
    %v632 = vrot.slane %v535, %v631
    %v633 = vmul.f32 %v519, %v632
    %v634 = vmul.f32 %v520, %v632
    %v635 = vmul.f32 %v521, %v632
    %v636 = vmul.f32 %v522, %v632
    %v637 = vmul.f32 %v523, %v632
    %v638 = vmul.f32 %v524, %v632
    %v639 = vmul.f32 %v525, %v632
    %v640 = vmul.f32 %v526, %v632
    %v641 = vmul.f32 %v527, %v632
    %v642 = vmul.f32 %v528, %v632
    %v643 = vmul.f32 %v529, %v632
    %v644 = vmul.f32 %v530, %v632
    %v645 = vmul.f32 %v531, %v632
    %v646 = vmul.f32 %v532, %v632
    %v647 = vmul.f32 %v533, %v632
    %v648 = vmul.f32 %v534, %v632
    %v649 = vadd.f32 %v613, %v633
    %v650 = vadd.f32 %v614, %v634
    %v651 = vadd.f32 %v615, %v635
    %v652 = vadd.f32 %v616, %v636
    %v653 = vadd.f32 %v617, %v637
    %v654 = vadd.f32 %v618, %v638
    %v655 = vadd.f32 %v619, %v639
    %v656 = vadd.f32 %v620, %v640
    %v657 = vadd.f32 %v621, %v641
    %v658 = vadd.f32 %v622, %v642
    %v659 = vadd.f32 %v623, %v643
    %v660 = vadd.f32 %v624, %v644
    %v661 = vadd.f32 %v625, %v645
    %v662 = vadd.f32 %v626, %v646
    %v663 = vadd.f32 %v627, %v647
    %v664 = vadd.f32 %v628, %v648
    %665 = vst [vmem:[#allocation2] sm:$0xff] %v468
    %666 = vst [vmem:[#allocation2 + $0x10] sm:$0xff] %v469
    %667 = vst [vmem:[#allocation2 + $0x20] sm:$0xff] %v470
    %668 = vst [vmem:[#allocation2 + $0x30] sm:$0xff] %v471
    %669 = vst [vmem:[#allocation2 + $0x40] sm:$0xff] %v472
    %670 = vst [vmem:[#allocation2 + $0x50] sm:$0xff] %v473
    %671 = vst [vmem:[#allocation2 + $0x60] sm:$0xff] %v474
    %672 = vst [vmem:[#allocation2 + $0x70] sm:$0xff] %v475
    %673 = vst [vmem:[#allocation2 + $0x90] sm:$0xff] %v476
    %674 = vst [vmem:[#allocation2 + $0xa0] sm:$0xff] %v477
    %675 = vst [vmem:[#allocation2 + $0xb0] sm:$0xff] %v478
    %676 = vst [vmem:[#allocation2 + $0xc0] sm:$0xff] %v479
    %677 = vst [vmem:[#allocation2 + $0xd0] sm:$0xff] %v480
    %678 = vst [vmem:[#allocation2 + $0xe0] sm:$0xff] %v481
    %679 = vst [vmem:[#allocation2 + $0xf0] sm:$0xff] %v482
    %680 = vst [vmem:[#allocation2 + $0x100] sm:$0xff] %v483
    %v681 = vld [vmem:[#allocation2 + $0x1] sm:$0xff]
    %v682 = vld [vmem:[#allocation2 + $0x11] sm:$0xff]
    %v683 = vld [vmem:[#allocation2 + $0x21] sm:$0xff]
    %v684 = vld [vmem:[#allocation2 + $0x31] sm:$0xff]
    %v685 = vld [vmem:[#allocation2 + $0x41] sm:$0xff]
    %v686 = vld [vmem:[#allocation2 + $0x51] sm:$0xff]
    %v687 = vld [vmem:[#allocation2 + $0x61] sm:$0xff]
    %v688 = vld [vmem:[#allocation2 + $0x71] sm:$0xff]
    %v689 = vld [vmem:[#allocation2 + $0x91] sm:$0xff]
    %v690 = vld [vmem:[#allocation2 + $0xa1] sm:$0xff]
    %v691 = vld [vmem:[#allocation2 + $0xb1] sm:$0xff]
    %v692 = vld [vmem:[#allocation2 + $0xc1] sm:$0xff]
    %v693 = vld [vmem:[#allocation2 + $0xd1] sm:$0xff]
    %v694 = vld [vmem:[#allocation2 + $0xe1] sm:$0xff]
    %v695 = vld [vmem:[#allocation2 + $0xf1] sm:$0xff]
    %v696 = vld [vmem:[#allocation2 + $0x101] sm:$0xff]
    %v697 = vlaneseq
    %v698 = vshrl.u32 %v697, 7
    %v699 = vsub.s32 2, %v698
    %v700 = vrot.slane %v535, %v699
    %v701 = vmul.f32 %v681, %v700
    %v702 = vmul.f32 %v682, %v700
    %v703 = vmul.f32 %v683, %v700
    %v704 = vmul.f32 %v684, %v700
    %v705 = vmul.f32 %v685, %v700
    %v706 = vmul.f32 %v686, %v700
    %v707 = vmul.f32 %v687, %v700
    %v708 = vmul.f32 %v688, %v700
    %v709 = vmul.f32 %v689, %v700
    %v710 = vmul.f32 %v690, %v700
    %v711 = vmul.f32 %v691, %v700
    %v712 = vmul.f32 %v692, %v700
    %v713 = vmul.f32 %v693, %v700
    %v714 = vmul.f32 %v694, %v700
    %v715 = vmul.f32 %v695, %v700
    %v716 = vmul.f32 %v696, %v700
    %v717 = vadd.f32 %v649, %v701
    %v718 = vadd.f32 %v650, %v702
    %v719 = vadd.f32 %v651, %v703
    %v720 = vadd.f32 %v652, %v704
    %v721 = vadd.f32 %v653, %v705
    %v722 = vadd.f32 %v654, %v706
    %v723 = vadd.f32 %v655, %v707
    %v724 = vadd.f32 %v656, %v708
    %v725 = vadd.f32 %v657, %v709
    %v726 = vadd.f32 %v658, %v710
    %v727 = vadd.f32 %v659, %v711
    %v728 = vadd.f32 %v660, %v712
    %v729 = vadd.f32 %v661, %v713
    %v730 = vadd.f32 %v662, %v714
    %v731 = vadd.f32 %v663, %v715
    %v732 = vadd.f32 %v664, %v716
    %s733 = scalar_lea.vmem [#allocation2], 16
    %v734 = vld [vmem:[%s733] sm:$0xff]
    %v735 = vld [vmem:[%s733 + $0x10] sm:$0xff]
    %v736 = vld [vmem:[%s733 + $0x20] sm:$0xff]
    %v737 = vld [vmem:[%s733 + $0x30] sm:$0xff]
    %v738 = vld [vmem:[%s733 + $0x40] sm:$0xff]
    %v739 = vld [vmem:[%s733 + $0x50] sm:$0xff]
    %v740 = vld [vmem:[%s733 + $0x60] sm:$0xff]
    %v741 = vld [vmem:[%s733 + $0x70] sm:$0xff]
    %v742 = vld [vmem:[%s733 + $0x90] sm:$0xff]
    %v743 = vld [vmem:[%s733 + $0xa0] sm:$0xff]
    %v744 = vld [vmem:[%s733 + $0xb0] sm:$0xff]
    %v745 = vld [vmem:[%s733 + $0xc0] sm:$0xff]
    %v746 = vld [vmem:[%s733 + $0xd0] sm:$0xff]
    %v747 = vld [vmem:[%s733 + $0xe0] sm:$0xff]
    %v748 = vld [vmem:[%s733 + $0xf0] sm:$0xff]
    %v749 = vld [vmem:[%s733 + $0x100] sm:$0xff]
    %v750 = vlaneseq
    %v751 = vshrl.u32 %v750, 7
    %v752 = vsub.s32 6, %v751
    %v753 = vrot.slane %v535, %v752
    %v754 = vmul.f32 %v734, %v753
    %v755 = vmul.f32 %v735, %v753
    %v756 = vmul.f32 %v736, %v753
    %v757 = vmul.f32 %v737, %v753
    %v758 = vmul.f32 %v738, %v753
    %v759 = vmul.f32 %v739, %v753
    %v760 = vmul.f32 %v740, %v753
    %v761 = vmul.f32 %v741, %v753
    %v762 = vmul.f32 %v742, %v753
    %v763 = vmul.f32 %v743, %v753
    %v764 = vmul.f32 %v744, %v753
    %v765 = vmul.f32 %v745, %v753
    %v766 = vmul.f32 %v746, %v753
    %v767 = vmul.f32 %v747, %v753
    %v768 = vmul.f32 %v748, %v753
    %v769 = vmul.f32 %v749, %v753
    %v770 = vadd.f32 %v717, %v754
    %v771 = vadd.f32 %v718, %v755
    %v772 = vadd.f32 %v719, %v756
    %v773 = vadd.f32 %v720, %v757
    %v774 = vadd.f32 %v721, %v758
    %v775 = vadd.f32 %v722, %v759
    %v776 = vadd.f32 %v723, %v760
    %v777 = vadd.f32 %v724, %v761
    %v778 = vadd.f32 %v725, %v762
    %v779 = vadd.f32 %v726, %v763
    %v780 = vadd.f32 %v727, %v764
    %v781 = vadd.f32 %v728, %v765
    %v782 = vadd.f32 %v729, %v766
    %v783 = vadd.f32 %v730, %v767
    %v784 = vadd.f32 %v731, %v768
    %v785 = vadd.f32 %v732, %v769
    %v786 = vld [vmem:[%s733 + $0x1] sm:$0xff]
    %v787 = vld [vmem:[%s733 + $0x11] sm:$0xff]
    %v788 = vld [vmem:[%s733 + $0x21] sm:$0xff]
    %v789 = vld [vmem:[%s733 + $0x31] sm:$0xff]
    %v790 = vld [vmem:[%s733 + $0x41] sm:$0xff]
    %v791 = vld [vmem:[%s733 + $0x51] sm:$0xff]
    %v792 = vld [vmem:[%s733 + $0x61] sm:$0xff]
    %v793 = vld [vmem:[%s733 + $0x71] sm:$0xff]
    %v794 = vld [vmem:[%s733 + $0x91] sm:$0xff]
    %v795 = vld [vmem:[%s733 + $0xa1] sm:$0xff]
    %v796 = vld [vmem:[%s733 + $0xb1] sm:$0xff]
    %v797 = vld [vmem:[%s733 + $0xc1] sm:$0xff]
    %v798 = vld [vmem:[%s733 + $0xd1] sm:$0xff]
    %v799 = vld [vmem:[%s733 + $0xe1] sm:$0xff]
    %v800 = vld [vmem:[%s733 + $0xf1] sm:$0xff]
    %v801 = vld [vmem:[%s733 + $0x101] sm:$0xff]
    %v802 = vlaneseq
    %v803 = vshrl.u32 %v802, 7
    %v804 = vsub.s32 0, %v803
    %v805 = vrot.slane %v536, %v804
    %v806 = vmul.f32 %v786, %v805
    %v807 = vmul.f32 %v787, %v805
    %v808 = vmul.f32 %v788, %v805
    %v809 = vmul.f32 %v789, %v805
    %v810 = vmul.f32 %v790, %v805
    %v811 = vmul.f32 %v791, %v805
    %v812 = vmul.f32 %v792, %v805
    %v813 = vmul.f32 %v793, %v805
    %v814 = vmul.f32 %v794, %v805
    %v815 = vmul.f32 %v795, %v805
    %v816 = vmul.f32 %v796, %v805
    %v817 = vmul.f32 %v797, %v805
    %v818 = vmul.f32 %v798, %v805
    %v819 = vmul.f32 %v799, %v805
    %v820 = vmul.f32 %v800, %v805
    %v821 = vmul.f32 %v801, %v805
    %v822 = vadd.f32 %v770, %v806
    %v823 = vadd.f32 %v771, %v807
    %v824 = vadd.f32 %v772, %v808
    %v825 = vadd.f32 %v773, %v809
    %v826 = vadd.f32 %v774, %v810
    %v827 = vadd.f32 %v775, %v811
    %v828 = vadd.f32 %v776, %v812
    %v829 = vadd.f32 %v777, %v813
    %v830 = vadd.f32 %v778, %v814
    %v831 = vadd.f32 %v779, %v815
    %v832 = vadd.f32 %v780, %v816
    %v833 = vadd.f32 %v781, %v817
    %v834 = vadd.f32 %v782, %v818
    %v835 = vadd.f32 %v783, %v819
    %v836 = vadd.f32 %v784, %v820
    %v837 = vadd.f32 %v785, %v821
    %838 = vst [vmem:[#allocation2] sm:$0xff] %v485
    %839 = vst [vmem:[#allocation2 + $0x10] sm:$0xff] %v486
    %840 = vst [vmem:[#allocation2 + $0x20] sm:$0xff] %v487
    %841 = vst [vmem:[#allocation2 + $0x30] sm:$0xff] %v488
    %842 = vst [vmem:[#allocation2 + $0x40] sm:$0xff] %v489
    %843 = vst [vmem:[#allocation2 + $0x50] sm:$0xff] %v490
    %844 = vst [vmem:[#allocation2 + $0x60] sm:$0xff] %v491
    %845 = vst [vmem:[#allocation2 + $0x70] sm:$0xff] %v492
    %846 = vst [vmem:[#allocation2 + $0x90] sm:$0xff] %v493
    %847 = vst [vmem:[#allocation2 + $0xa0] sm:$0xff] %v494
    %848 = vst [vmem:[#allocation2 + $0xb0] sm:$0xff] %v495
    %849 = vst [vmem:[#allocation2 + $0xc0] sm:$0xff] %v496
    %850 = vst [vmem:[#allocation2 + $0xd0] sm:$0xff] %v497
    %851 = vst [vmem:[#allocation2 + $0xe0] sm:$0xff] %v498
    %852 = vst [vmem:[#allocation2 + $0xf0] sm:$0xff] %v499
    %853 = vst [vmem:[#allocation2 + $0x100] sm:$0xff] %v500
    %v854 = vld [vmem:[%s733] sm:$0xff]
    %v855 = vld [vmem:[%s733 + $0x10] sm:$0xff]
    %v856 = vld [vmem:[%s733 + $0x20] sm:$0xff]
    %v857 = vld [vmem:[%s733 + $0x30] sm:$0xff]
    %v858 = vld [vmem:[%s733 + $0x40] sm:$0xff]
    %v859 = vld [vmem:[%s733 + $0x50] sm:$0xff]
    %v860 = vld [vmem:[%s733 + $0x60] sm:$0xff]
    %v861 = vld [vmem:[%s733 + $0x70] sm:$0xff]
    %v862 = vld [vmem:[%s733 + $0x90] sm:$0xff]
    %v863 = vld [vmem:[%s733 + $0xa0] sm:$0xff]
    %v864 = vld [vmem:[%s733 + $0xb0] sm:$0xff]
    %v865 = vld [vmem:[%s733 + $0xc0] sm:$0xff]
    %v866 = vld [vmem:[%s733 + $0xd0] sm:$0xff]
    %v867 = vld [vmem:[%s733 + $0xe0] sm:$0xff]
    %v868 = vld [vmem:[%s733 + $0xf0] sm:$0xff]
    %v869 = vld [vmem:[%s733 + $0x100] sm:$0xff]
    %v870 = vlaneseq
    %v871 = vshrl.u32 %v870, 7
    %v872 = vsub.s32 7, %v871
    %v873 = vrot.slane %v535, %v872
    %v874 = vmul.f32 %v854, %v873
    %v875 = vmul.f32 %v855, %v873
    %v876 = vmul.f32 %v856, %v873
    %v877 = vmul.f32 %v857, %v873
    %v878 = vmul.f32 %v858, %v873
    %v879 = vmul.f32 %v859, %v873
    %v880 = vmul.f32 %v860, %v873
    %v881 = vmul.f32 %v861, %v873
    %v882 = vmul.f32 %v862, %v873
    %v883 = vmul.f32 %v863, %v873
    %v884 = vmul.f32 %v864, %v873
    %v885 = vmul.f32 %v865, %v873
    %v886 = vmul.f32 %v866, %v873
    %v887 = vmul.f32 %v867, %v873
    %v888 = vmul.f32 %v868, %v873
    %v889 = vmul.f32 %v869, %v873
    %v890 = vadd.f32 %v822, %v874
    %v891 = vadd.f32 %v823, %v875
    %v892 = vadd.f32 %v824, %v876
    %v893 = vadd.f32 %v825, %v877
    %v894 = vadd.f32 %v826, %v878
    %v895 = vadd.f32 %v827, %v879
    %v896 = vadd.f32 %v828, %v880
    %v897 = vadd.f32 %v829, %v881
    %v898 = vadd.f32 %v830, %v882
    %v899 = vadd.f32 %v831, %v883
    %v900 = vadd.f32 %v832, %v884
    %v901 = vadd.f32 %v833, %v885
    %v902 = vadd.f32 %v834, %v886
    %v903 = vadd.f32 %v835, %v887
    %v904 = vadd.f32 %v836, %v888
    %v905 = vadd.f32 %v837, %v889
    %906 = vst [vmem:[#allocation2] sm:$0xff] %v502
    %907 = vst [vmem:[#allocation2 + $0x10] sm:$0xff] %v503
    %908 = vst [vmem:[#allocation2 + $0x20] sm:$0xff] %v504
    %909 = vst [vmem:[#allocation2 + $0x30] sm:$0xff] %v505
    %910 = vst [vmem:[#allocation2 + $0x40] sm:$0xff] %v506
    %911 = vst [vmem:[#allocation2 + $0x50] sm:$0xff] %v507
    %912 = vst [vmem:[#allocation2 + $0x60] sm:$0xff] %v508
    %913 = vst [vmem:[#allocation2 + $0x70] sm:$0xff] %v509
    %914 = vst [vmem:[#allocation2 + $0x90] sm:$0xff] %v510
    %915 = vst [vmem:[#allocation2 + $0xa0] sm:$0xff] %v511
    %916 = vst [vmem:[#allocation2 + $0xb0] sm:$0xff] %v512
    %917 = vst [vmem:[#allocation2 + $0xc0] sm:$0xff] %v513
    %918 = vst [vmem:[#allocation2 + $0xd0] sm:$0xff] %v514
    %919 = vst [vmem:[#allocation2 + $0xe0] sm:$0xff] %v515
    %920 = vst [vmem:[#allocation2 + $0xf0] sm:$0xff] %v516
    %921 = vst [vmem:[#allocation2 + $0x100] sm:$0xff] %v517
    %v922 = vld [vmem:[#allocation2 + $0x1] sm:$0xff]
    %v923 = vld [vmem:[#allocation2 + $0x11] sm:$0xff]
    %v924 = vld [vmem:[#allocation2 + $0x21] sm:$0xff]
    %v925 = vld [vmem:[#allocation2 + $0x31] sm:$0xff]
    %v926 = vld [vmem:[#allocation2 + $0x41] sm:$0xff]
    %v927 = vld [vmem:[#allocation2 + $0x51] sm:$0xff]
    %v928 = vld [vmem:[#allocation2 + $0x61] sm:$0xff]
    %v929 = vld [vmem:[#allocation2 + $0x71] sm:$0xff]
    %v930 = vld [vmem:[#allocation2 + $0x91] sm:$0xff]
    %v931 = vld [vmem:[#allocation2 + $0xa1] sm:$0xff]
    %v932 = vld [vmem:[#allocation2 + $0xb1] sm:$0xff]
    %v933 = vld [vmem:[#allocation2 + $0xc1] sm:$0xff]
    %v934 = vld [vmem:[#allocation2 + $0xd1] sm:$0xff]
    %v935 = vld [vmem:[#allocation2 + $0xe1] sm:$0xff]
    %v936 = vld [vmem:[#allocation2 + $0xf1] sm:$0xff]
    %v937 = vld [vmem:[#allocation2 + $0x101] sm:$0xff]
    %v938 = vlaneseq
    %v939 = vshrl.u32 %v938, 7
    %v940 = vsub.s32 5, %v939
    %v941 = vrot.slane %v535, %v940
    %v942 = vmul.f32 %v922, %v941
    %v943 = vmul.f32 %v923, %v941
    %v944 = vmul.f32 %v924, %v941
    %v945 = vmul.f32 %v925, %v941
    %v946 = vmul.f32 %v926, %v941
    %v947 = vmul.f32 %v927, %v941
    %v948 = vmul.f32 %v928, %v941
    %v949 = vmul.f32 %v929, %v941
    %v950 = vmul.f32 %v930, %v941
    %v951 = vmul.f32 %v931, %v941
    %v952 = vmul.f32 %v932, %v941
    %v953 = vmul.f32 %v933, %v941
    %v954 = vmul.f32 %v934, %v941
    %v955 = vmul.f32 %v935, %v941
    %v956 = vmul.f32 %v936, %v941
    %v957 = vmul.f32 %v937, %v941
    %v958 = vadd.f32 %v890, %v942
    %v959 = vadd.f32 %v891, %v943
    %v960 = vadd.f32 %v892, %v944
    %v961 = vadd.f32 %v893, %v945
    %v962 = vadd.f32 %v894, %v946
    %v963 = vadd.f32 %v895, %v947
    %v964 = vadd.f32 %v896, %v948
    %v965 = vadd.f32 %v897, %v949
    %v966 = vadd.f32 %v898, %v950
    %v967 = vadd.f32 %v899, %v951
    %v968 = vadd.f32 %v900, %v952
    %v969 = vadd.f32 %v901, %v953
    %v970 = vadd.f32 %v902, %v954
    %v971 = vadd.f32 %v903, %v955
    %v972 = vadd.f32 %v904, %v956
    %v973 = vadd.f32 %v905, %v957
    %v974 = vpack.c.bf16 %v959, %v958
    %v975 = vpack.c.bf16 %v961, %v960
    %v976 = vpack.c.bf16 %v963, %v962
    %v977 = vpack.c.bf16 %v965, %v964
    %v978 = vpack.c.bf16 %v967, %v966
    %v979 = vpack.c.bf16 %v969, %v968
    %v980 = vpack.c.bf16 %v971, %v970
    %v981 = vpack.c.bf16 %v973, %v972
    %v982 = vld [vmem:[%s2] sm:$0xf]
    %v983 = vld [vmem:[%s2 + $0x4] sm:$0xf]
    %v984 = vld [vmem:[%s2 + $0x8] sm:$0xf]
    %v985 = vld [vmem:[%s2 + $0xc] sm:$0xf]
    %v986 = vld [vmem:[%s2 + $0x10] sm:$0xf]
    %v987 = vld [vmem:[%s2 + $0x14] sm:$0xf]
    %v988 = vld [vmem:[%s2 + $0x18] sm:$0xf]
    %v989 = vld [vmem:[%s2 + $0x1c] sm:$0xf]
    %v990 = vld [vmem:[%s2 + $0x20] sm:$0xf]
    %v991 = vld [vmem:[%s2 + $0x24] sm:$0xf]
    %v992 = vld [vmem:[%s2 + $0x28] sm:$0xf]
    %v993 = vld [vmem:[%s2 + $0x2c] sm:$0xf]
    %v994 = vld [vmem:[%s2 + $0x30] sm:$0xf]
    %v995 = vld [vmem:[%s2 + $0x34] sm:$0xf]
    %v996 = vld [vmem:[%s2 + $0x38] sm:$0xf]
    %v997 = vld [vmem:[%s2 + $0x3c] sm:$0xf]
    %v998 = vld [vmem:[%s4] sm:$0x1]
    %v1000 = vlaneseq
    %v1001 = vshrl.u32 %v1000, 7
    %v1002 = vsub.s32 0, %v1001
    %v1003 = vrot.slane %v998, %v1002
    %v1021 = vunpack.c.l.b16 %v982
    %v1022 = vunpack.c.l.b16 %v983
    %v1023 = vunpack.c.l.b16 %v984
    %v1024 = vunpack.c.l.b16 %v985
    %v1025 = vunpack.c.l.b16 %v986
    %v1026 = vunpack.c.l.b16 %v987
    %v1027 = vunpack.c.l.b16 %v988
    %v1028 = vunpack.c.l.b16 %v989
    %v1029 = vunpack.c.l.b16 %v990
    %v1030 = vunpack.c.l.b16 %v991
    %v1031 = vunpack.c.l.b16 %v992
    %v1032 = vunpack.c.l.b16 %v993
    %v1033 = vunpack.c.l.b16 %v994
    %v1034 = vunpack.c.l.b16 %v995
    %v1035 = vunpack.c.l.b16 %v996
    %v1036 = vunpack.c.l.b16 %v997
    %v1037 = vpack.c.b16 %v1022, %v1021
    %v1038 = vpack.c.b16 %v1024, %v1023
    %v1039 = vpack.c.b16 %v1026, %v1025
    %v1040 = vpack.c.b16 %v1028, %v1027
    %v1041 = vpack.c.b16 %v1030, %v1029
    %v1042 = vpack.c.b16 %v1032, %v1031
    %v1043 = vpack.c.b16 %v1034, %v1033
    %v1044 = vpack.c.b16 %v1036, %v1035
    %1053 = vmatprep.subr.bf16.mxu0 0
    %1054 = vmatpush1.bf16.msra.mxu0 %v1044
    %1055 = vmatprep.subr.bf16.mxu0 0
    %1056 = vmatpush1.bf16.msra.mxu0 %v1043
    %1057 = vmatprep.subr.bf16.mxu0 0
    %1058 = vmatpush1.bf16.msra.mxu0 %v1042
    %1059 = vmatprep.subr.bf16.mxu0 0
    %1060 = vmatpush1.bf16.msra.mxu0 %v1041
    %1061 = vmatprep.subr.bf16.mxu0 0
    %1062 = vmatpush1.bf16.msra.mxu0 %v1040
    %1063 = vmatprep.subr.bf16.mxu0 0
    %1064 = vmatpush1.bf16.msra.mxu0 %v1039
    %1065 = vmatprep.subr.bf16.mxu0 0
    %1066 = vmatpush1.bf16.msra.mxu0 %v1038
    %1067 = vmatprep.subr.bf16.mxu0 0
    %1068 = vmatpush1.bf16.msra.mxu0 %v1037
    %1069 = vmatprep.subr.bf16.mxu0 0
    %1070 = vmatpush2.bf16.msra.mxu0 0
    %1071 = vmatprep.subr.bf16.mxu0 0
    %1072 = vmatpush2.bf16.msra.mxu0 0
    %1073 = vmatprep.subr.bf16.mxu0 0
    %1074 = vmatpush2.bf16.msra.mxu0 0
    %1075 = vmatprep.subr.bf16.mxu0 0
    %1076 = vmatpush2.bf16.msra.mxu0 0
    %1077 = vmatprep.subr.bf16.mxu0 0
    %1078 = vmatpush2.bf16.msra.mxu0 0
    %1079 = vmatprep.subr.bf16.mxu0 0
    %1080 = vmatpush2.bf16.msra.mxu0 0
    %1081 = vmatprep.subr.bf16.mxu0 0
    %1082 = vmatpush2.bf16.msra.mxu0 0
    %1083 = vmatprep.subr.bf16.mxu0 0
    %1084 = vmatpush2.bf16.msra.mxu0 0
    %1085 = vmatprep.mubr.bf16.mxu0 0
    %1086 = vmatmul.mubr.bf16.gmra.mxu0 %v974
    %v1087 = vpop.f32.mrf.mxu0
    %v1088 = vadd.f32 %v1003, %v1087
    %v1089 = vpop.f32.mrf.mxu0
    %v1090 = vpop.f32.mrf.mxu0
    %v1091 = vadd.f32 %v1003, %v1090
    %v1092 = vpop.f32.mrf.mxu0
    %1093 = vmatprep.mubr.bf16.mxu0 0
    %1094 = vmatmul.mubr.bf16.gmra.mxu0 %v975
    %v1095 = vpop.f32.mrf.mxu0
    %v1096 = vadd.f32 %v1003, %v1095
    %v1097 = vpop.f32.mrf.mxu0
    %v1098 = vpop.f32.mrf.mxu0
    %v1099 = vadd.f32 %v1003, %v1098
    %v1100 = vpop.f32.mrf.mxu0
    %1101 = vmatprep.mubr.bf16.mxu0 0
    %1102 = vmatmul.mubr.bf16.gmra.mxu0 %v976
    %v1103 = vpop.f32.mrf.mxu0
    %v1104 = vadd.f32 %v1003, %v1103
    %v1105 = vpop.f32.mrf.mxu0
    %v1106 = vpop.f32.mrf.mxu0
    %v1107 = vadd.f32 %v1003, %v1106
    %v1108 = vpop.f32.mrf.mxu0
    %1109 = vmatprep.mubr.bf16.mxu0 0
    %1110 = vmatmul.mubr.bf16.gmra.mxu0 %v977
    %v1111 = vpop.f32.mrf.mxu0
    %v1112 = vadd.f32 %v1003, %v1111
    %v1113 = vpop.f32.mrf.mxu0
    %v1114 = vpop.f32.mrf.mxu0
    %v1115 = vadd.f32 %v1003, %v1114
    %v1116 = vpop.f32.mrf.mxu0
    %1117 = vmatprep.mubr.bf16.mxu0 0
    %1118 = vmatmul.mubr.bf16.gmra.mxu0 %v978
    %v1119 = vpop.f32.mrf.mxu0
    %v1120 = vadd.f32 %v1003, %v1119
    %v1121 = vpop.f32.mrf.mxu0
    %v1122 = vpop.f32.mrf.mxu0
    %v1123 = vadd.f32 %v1003, %v1122
    %v1124 = vpop.f32.mrf.mxu0
    %1125 = vmatprep.mubr.bf16.mxu0 0
    %1126 = vmatmul.mubr.bf16.gmra.mxu0 %v979
    %v1127 = vpop.f32.mrf.mxu0
    %v1128 = vadd.f32 %v1003, %v1127
    %v1129 = vpop.f32.mrf.mxu0
    %v1130 = vpop.f32.mrf.mxu0
    %v1131 = vadd.f32 %v1003, %v1130
    %v1132 = vpop.f32.mrf.mxu0
    %1133 = vmatprep.mubr.bf16.mxu0 0
    %1134 = vmatmul.mubr.bf16.gmra.mxu0 %v980
    %v1135 = vpop.f32.mrf.mxu0
    %v1136 = vadd.f32 %v1003, %v1135
    %v1137 = vpop.f32.mrf.mxu0
    %v1138 = vpop.f32.mrf.mxu0
    %v1139 = vadd.f32 %v1003, %v1138
    %v1140 = vpop.f32.mrf.mxu0
    %1141 = vmatprep.mubr.bf16.mxu0 0
    %1142 = vmatmul.mubr.bf16.gmra.mxu0 %v981
    %v1143 = vpop.f32.mrf.mxu0
    %v1144 = vadd.f32 %v1003, %v1143
    %v1145 = vpop.f32.mrf.mxu0
    %v1146 = vpop.f32.mrf.mxu0
    %v1147 = vadd.f32 %v1003, %v1146
    %v1148 = vpop.f32.mrf.mxu0
    %1149 = vdwg.mxu0
    %v1150 = vmax.f32 %v1088, 0.0
    %v1151 = vmax.f32 %v1091, 0.0
    %v1152 = vmax.f32 %v1096, 0.0
    %v1153 = vmax.f32 %v1099, 0.0
    %v1154 = vmax.f32 %v1104, 0.0
    %v1155 = vmax.f32 %v1107, 0.0
    %v1156 = vmax.f32 %v1112, 0.0
    %v1157 = vmax.f32 %v1115, 0.0
    %v1158 = vmax.f32 %v1120, 0.0
    %v1159 = vmax.f32 %v1123, 0.0
    %v1160 = vmax.f32 %v1128, 0.0
    %v1161 = vmax.f32 %v1131, 0.0
    %v1162 = vmax.f32 %v1136, 0.0
    %v1163 = vmax.f32 %v1139, 0.0
    %v1164 = vmax.f32 %v1144, 0.0
    %v1165 = vmax.f32 %v1147, 0.0
    %s1166 = scalar_lea.vmem [#allocation3], 16
    %1167 = vst [vmem:[%s1166 + $0x1] sm:$0xff] %v1150
    %1168 = vst [vmem:[%s1166 + $0x11] sm:$0xff] %v1151
    %1169 = vst [vmem:[%s1166 + $0x21] sm:$0xff] %v1152
    %1170 = vst [vmem:[%s1166 + $0x31] sm:$0xff] %v1153
    %1171 = vst [vmem:[%s1166 + $0x41] sm:$0xff] %v1154
    %1172 = vst [vmem:[%s1166 + $0x51] sm:$0xff] %v1155
    %1173 = vst [vmem:[%s1166 + $0x61] sm:$0xff] %v1156
    %1174 = vst [vmem:[%s1166 + $0x71] sm:$0xff] %v1157
    %1175 = vst [vmem:[%s1166 + $0xa1] sm:$0xff] %v1158
    %1176 = vst [vmem:[%s1166 + $0xb1] sm:$0xff] %v1159
    %1177 = vst [vmem:[%s1166 + $0xc1] sm:$0xff] %v1160
    %1178 = vst [vmem:[%s1166 + $0xd1] sm:$0xff] %v1161
    %1179 = vst [vmem:[%s1166 + $0xe1] sm:$0xff] %v1162
    %1180 = vst [vmem:[%s1166 + $0xf1] sm:$0xff] %v1163
    %1181 = vst [vmem:[%s1166 + $0x101] sm:$0xff] %v1164
    %1182 = vst [vmem:[%s1166 + $0x111] sm:$0xff] %v1165
    %v1183 = vmax.f32 %v468, %v485
    %v1184 = vmax.f32 %v469, %v486
    %v1185 = vmax.f32 %v470, %v487
    %v1186 = vmax.f32 %v471, %v488
    %v1187 = vmax.f32 %v472, %v489
    %v1188 = vmax.f32 %v473, %v490
    %v1189 = vmax.f32 %v474, %v491
    %v1190 = vmax.f32 %v475, %v492
    %v1191 = vmax.f32 %v476, %v493
    %v1192 = vmax.f32 %v477, %v494
    %v1193 = vmax.f32 %v478, %v495
    %v1194 = vmax.f32 %v479, %v496
    %v1195 = vmax.f32 %v480, %v497
    %v1196 = vmax.f32 %v481, %v498
    %v1197 = vmax.f32 %v482, %v499
    %v1198 = vmax.f32 %v483, %v500
    %v1199 = vmax.f32 %v502, %v519
    %v1200 = vmax.f32 %v503, %v520
    %v1201 = vmax.f32 %v504, %v521
    %v1202 = vmax.f32 %v505, %v522
    %v1203 = vmax.f32 %v506, %v523
    %v1204 = vmax.f32 %v507, %v524
    %v1205 = vmax.f32 %v508, %v525
    %v1206 = vmax.f32 %v509, %v526
    %v1207 = vmax.f32 %v510, %v527
    %v1208 = vmax.f32 %v511, %v528
    %v1209 = vmax.f32 %v512, %v529
    %v1210 = vmax.f32 %v513, %v530
    %v1211 = vmax.f32 %v514, %v531
    %v1212 = vmax.f32 %v515, %v532
    %v1213 = vmax.f32 %v516, %v533
    %v1214 = vmax.f32 %v517, %v534
    %v1215 = vmax.f32 %v1183, %v1199
    %v1216 = vmax.f32 %v1184, %v1200
    %v1217 = vmax.f32 %v1185, %v1201
    %v1218 = vmax.f32 %v1186, %v1202
    %v1219 = vmax.f32 %v1187, %v1203
    %v1220 = vmax.f32 %v1188, %v1204
    %v1221 = vmax.f32 %v1189, %v1205
    %v1222 = vmax.f32 %v1190, %v1206
    %v1223 = vmax.f32 %v1191, %v1207
    %v1224 = vmax.f32 %v1192, %v1208
    %v1225 = vmax.f32 %v1193, %v1209
    %v1226 = vmax.f32 %v1194, %v1210
    %v1227 = vmax.f32 %v1195, %v1211
    %v1228 = vmax.f32 %v1196, %v1212
    %v1229 = vmax.f32 %v1197, %v1213
    %v1230 = vmax.f32 %v1198, %v1214
    %v1231 = vld [vmem:[%s1 + $0x8] sm:$0xff]
    %v1232 = vld [vmem:[%s1 + $0x48] sm:$0x1]
    %v1233 = vld [vmem:[#allocation3] sm:$0xff]
    %v1234 = vld [vmem:[#allocation3 + $0x10] sm:$0xff]
    %v1235 = vld [vmem:[#allocation3 + $0x20] sm:$0xff]
    %v1236 = vld [vmem:[#allocation3 + $0x30] sm:$0xff]
    %v1237 = vld [vmem:[#allocation3 + $0x40] sm:$0xff]
    %v1238 = vld [vmem:[#allocation3 + $0x50] sm:$0xff]
    %v1239 = vld [vmem:[#allocation3 + $0x60] sm:$0xff]
    %v1240 = vld [vmem:[#allocation3 + $0x70] sm:$0xff]
    %v1241 = vld [vmem:[#allocation3 + $0xa0] sm:$0xff]
    %v1242 = vld [vmem:[#allocation3 + $0xb0] sm:$0xff]
    %v1243 = vld [vmem:[#allocation3 + $0xc0] sm:$0xff]
    %v1244 = vld [vmem:[#allocation3 + $0xd0] sm:$0xff]
    %v1245 = vld [vmem:[#allocation3 + $0xe0] sm:$0xff]
    %v1246 = vld [vmem:[#allocation3 + $0xf0] sm:$0xff]
    %v1247 = vld [vmem:[#allocation3 + $0x100] sm:$0xff]
    %v1248 = vld [vmem:[#allocation3 + $0x110] sm:$0xff]
    %v1249 = vlaneseq
    %v1250 = vshrl.u32 %v1249, 7
    %v1251 = vsub.s32 0, %v1250
    %v1252 = vrot.slane %v1231, %v1251
    %v1253 = vmul.f32 %v1233, %v1252
    %v1254 = vmul.f32 %v1234, %v1252
    %v1255 = vmul.f32 %v1235, %v1252
    %v1256 = vmul.f32 %v1236, %v1252
    %v1257 = vmul.f32 %v1237, %v1252
    %v1258 = vmul.f32 %v1238, %v1252
    %v1259 = vmul.f32 %v1239, %v1252
    %v1260 = vmul.f32 %v1240, %v1252
    %v1261 = vmul.f32 %v1241, %v1252
    %v1262 = vmul.f32 %v1242, %v1252
    %v1263 = vmul.f32 %v1243, %v1252
    %v1264 = vmul.f32 %v1244, %v1252
    %v1265 = vmul.f32 %v1245, %v1252
    %v1266 = vmul.f32 %v1246, %v1252
    %v1267 = vmul.f32 %v1247, %v1252
    %v1268 = vmul.f32 %v1248, %v1252
    %v1269 = vld [vmem:[#allocation3 + $0x1] sm:$0xff]
    %v1270 = vld [vmem:[#allocation3 + $0x11] sm:$0xff]
    %v1271 = vld [vmem:[#allocation3 + $0x21] sm:$0xff]
    %v1272 = vld [vmem:[#allocation3 + $0x31] sm:$0xff]
    %v1273 = vld [vmem:[#allocation3 + $0x41] sm:$0xff]
    %v1274 = vld [vmem:[#allocation3 + $0x51] sm:$0xff]
    %v1275 = vld [vmem:[#allocation3 + $0x61] sm:$0xff]
    %v1276 = vld [vmem:[#allocation3 + $0x71] sm:$0xff]
    %v1277 = vld [vmem:[#allocation3 + $0xa1] sm:$0xff]
    %v1278 = vld [vmem:[#allocation3 + $0xb1] sm:$0xff]
    %v1279 = vld [vmem:[#allocation3 + $0xc1] sm:$0xff]
    %v1280 = vld [vmem:[#allocation3 + $0xd1] sm:$0xff]
    %v1281 = vld [vmem:[#allocation3 + $0xe1] sm:$0xff]
    %v1282 = vld [vmem:[#allocation3 + $0xf1] sm:$0xff]
    %v1283 = vld [vmem:[#allocation3 + $0x101] sm:$0xff]
    %v1284 = vld [vmem:[#allocation3 + $0x111] sm:$0xff]
    %v1285 = vlaneseq
    %v1286 = vshrl.u32 %v1285, 7
    %v1287 = vsub.s32 1, %v1286
    %v1288 = vrot.slane %v1231, %v1287
    %v1289 = vmul.f32 %v1269, %v1288
    %v1290 = vmul.f32 %v1270, %v1288
    %v1291 = vmul.f32 %v1271, %v1288
    %v1292 = vmul.f32 %v1272, %v1288
    %v1293 = vmul.f32 %v1273, %v1288
    %v1294 = vmul.f32 %v1274, %v1288
    %v1295 = vmul.f32 %v1275, %v1288
    %v1296 = vmul.f32 %v1276, %v1288
    %v1297 = vmul.f32 %v1277, %v1288
    %v1298 = vmul.f32 %v1278, %v1288
    %v1299 = vmul.f32 %v1279, %v1288
    %v1300 = vmul.f32 %v1280, %v1288
    %v1301 = vmul.f32 %v1281, %v1288
    %v1302 = vmul.f32 %v1282, %v1288
    %v1303 = vmul.f32 %v1283, %v1288
    %v1304 = vmul.f32 %v1284, %v1288
    %v1305 = vadd.f32 %v1253, %v1289
    %v1306 = vadd.f32 %v1254, %v1290
    %v1307 = vadd.f32 %v1255, %v1291
    %v1308 = vadd.f32 %v1256, %v1292
    %v1309 = vadd.f32 %v1257, %v1293
    %v1310 = vadd.f32 %v1258, %v1294
    %v1311 = vadd.f32 %v1259, %v1295
    %v1312 = vadd.f32 %v1260, %v1296
    %v1313 = vadd.f32 %v1261, %v1297
    %v1314 = vadd.f32 %v1262, %v1298
    %v1315 = vadd.f32 %v1263, %v1299
    %v1316 = vadd.f32 %v1264, %v1300
    %v1317 = vadd.f32 %v1265, %v1301
    %v1318 = vadd.f32 %v1266, %v1302
    %v1319 = vadd.f32 %v1267, %v1303
    %v1320 = vadd.f32 %v1268, %v1304
    %v1321 = vld [vmem:[#allocation3 + $0x2] sm:$0xff]
    %v1322 = vld [vmem:[#allocation3 + $0x12] sm:$0xff]
    %v1323 = vld [vmem:[#allocation3 + $0x22] sm:$0xff]
    %v1324 = vld [vmem:[#allocation3 + $0x32] sm:$0xff]
    %v1325 = vld [vmem:[#allocation3 + $0x42] sm:$0xff]
    %v1326 = vld [vmem:[#allocation3 + $0x52] sm:$0xff]
    %v1327 = vld [vmem:[#allocation3 + $0x62] sm:$0xff]
    %v1328 = vld [vmem:[#allocation3 + $0x72] sm:$0xff]
    %v1329 = vld [vmem:[#allocation3 + $0xa2] sm:$0xff]
    %v1330 = vld [vmem:[#allocation3 + $0xb2] sm:$0xff]
    %v1331 = vld [vmem:[#allocation3 + $0xc2] sm:$0xff]
    %v1332 = vld [vmem:[#allocation3 + $0xd2] sm:$0xff]
    %v1333 = vld [vmem:[#allocation3 + $0xe2] sm:$0xff]
    %v1334 = vld [vmem:[#allocation3 + $0xf2] sm:$0xff]
    %v1335 = vld [vmem:[#allocation3 + $0x102] sm:$0xff]
    %v1336 = vld [vmem:[#allocation3 + $0x112] sm:$0xff]
    %v1337 = vlaneseq
    %v1338 = vshrl.u32 %v1337, 7
    %v1339 = vsub.s32 2, %v1338
    %v1340 = vrot.slane %v1231, %v1339
    %v1341 = vmul.f32 %v1321, %v1340
    %v1342 = vmul.f32 %v1322, %v1340
    %v1343 = vmul.f32 %v1323, %v1340
    %v1344 = vmul.f32 %v1324, %v1340
    %v1345 = vmul.f32 %v1325, %v1340
    %v1346 = vmul.f32 %v1326, %v1340
    %v1347 = vmul.f32 %v1327, %v1340
    %v1348 = vmul.f32 %v1328, %v1340
    %v1349 = vmul.f32 %v1329, %v1340
    %v1350 = vmul.f32 %v1330, %v1340
    %v1351 = vmul.f32 %v1331, %v1340
    %v1352 = vmul.f32 %v1332, %v1340
    %v1353 = vmul.f32 %v1333, %v1340
    %v1354 = vmul.f32 %v1334, %v1340
    %v1355 = vmul.f32 %v1335, %v1340
    %v1356 = vmul.f32 %v1336, %v1340
    %v1357 = vadd.f32 %v1305, %v1341
    %v1358 = vadd.f32 %v1306, %v1342
    %v1359 = vadd.f32 %v1307, %v1343
    %v1360 = vadd.f32 %v1308, %v1344
    %v1361 = vadd.f32 %v1309, %v1345
    %v1362 = vadd.f32 %v1310, %v1346
    %v1363 = vadd.f32 %v1311, %v1347
    %v1364 = vadd.f32 %v1312, %v1348
    %v1365 = vadd.f32 %v1313, %v1349
    %v1366 = vadd.f32 %v1314, %v1350
    %v1367 = vadd.f32 %v1315, %v1351
    %v1368 = vadd.f32 %v1316, %v1352
    %v1369 = vadd.f32 %v1317, %v1353
    %v1370 = vadd.f32 %v1318, %v1354
    %v1371 = vadd.f32 %v1319, %v1355
    %v1372 = vadd.f32 %v1320, %v1356
    %v1373 = vld [vmem:[%s1166] sm:$0xff]
    %v1374 = vld [vmem:[%s1166 + $0x10] sm:$0xff]
    %v1375 = vld [vmem:[%s1166 + $0x20] sm:$0xff]
    %v1376 = vld [vmem:[%s1166 + $0x30] sm:$0xff]
    %v1377 = vld [vmem:[%s1166 + $0x40] sm:$0xff]
    %v1378 = vld [vmem:[%s1166 + $0x50] sm:$0xff]
    %v1379 = vld [vmem:[%s1166 + $0x60] sm:$0xff]
    %v1380 = vld [vmem:[%s1166 + $0x70] sm:$0xff]
    %v1381 = vld [vmem:[%s1166 + $0xa0] sm:$0xff]
    %v1382 = vld [vmem:[%s1166 + $0xb0] sm:$0xff]
    %v1383 = vld [vmem:[%s1166 + $0xc0] sm:$0xff]
    %v1384 = vld [vmem:[%s1166 + $0xd0] sm:$0xff]
    %v1385 = vld [vmem:[%s1166 + $0xe0] sm:$0xff]
    %v1386 = vld [vmem:[%s1166 + $0xf0] sm:$0xff]
    %v1387 = vld [vmem:[%s1166 + $0x100] sm:$0xff]
    %v1388 = vld [vmem:[%s1166 + $0x110] sm:$0xff]
    %v1389 = vlaneseq
    %v1390 = vshrl.u32 %v1389, 7
    %v1391 = vsub.s32 3, %v1390
    %v1392 = vrot.slane %v1231, %v1391
    %v1393 = vmul.f32 %v1373, %v1392
    %v1394 = vmul.f32 %v1374, %v1392
    %v1395 = vmul.f32 %v1375, %v1392
    %v1396 = vmul.f32 %v1376, %v1392
    %v1397 = vmul.f32 %v1377, %v1392
    %v1398 = vmul.f32 %v1378, %v1392
    %v1399 = vmul.f32 %v1379, %v1392
    %v1400 = vmul.f32 %v1380, %v1392
    %v1401 = vmul.f32 %v1381, %v1392
    %v1402 = vmul.f32 %v1382, %v1392
    %v1403 = vmul.f32 %v1383, %v1392
    %v1404 = vmul.f32 %v1384, %v1392
    %v1405 = vmul.f32 %v1385, %v1392
    %v1406 = vmul.f32 %v1386, %v1392
    %v1407 = vmul.f32 %v1387, %v1392
    %v1408 = vmul.f32 %v1388, %v1392
    %v1409 = vadd.f32 %v1357, %v1393
    %v1410 = vadd.f32 %v1358, %v1394
    %v1411 = vadd.f32 %v1359, %v1395
    %v1412 = vadd.f32 %v1360, %v1396
    %v1413 = vadd.f32 %v1361, %v1397
    %v1414 = vadd.f32 %v1362, %v1398
    %v1415 = vadd.f32 %v1363, %v1399
    %v1416 = vadd.f32 %v1364, %v1400
    %v1417 = vadd.f32 %v1365, %v1401
    %v1418 = vadd.f32 %v1366, %v1402
    %v1419 = vadd.f32 %v1367, %v1403
    %v1420 = vadd.f32 %v1368, %v1404
    %v1421 = vadd.f32 %v1369, %v1405
    %v1422 = vadd.f32 %v1370, %v1406
    %v1423 = vadd.f32 %v1371, %v1407
    %v1424 = vadd.f32 %v1372, %v1408
    %v1425 = vld [vmem:[%s1166 + $0x1] sm:$0xff]
    %v1426 = vld [vmem:[%s1166 + $0x11] sm:$0xff]
    %v1427 = vld [vmem:[%s1166 + $0x21] sm:$0xff]
    %v1428 = vld [vmem:[%s1166 + $0x31] sm:$0xff]
    %v1429 = vld [vmem:[%s1166 + $0x41] sm:$0xff]
    %v1430 = vld [vmem:[%s1166 + $0x51] sm:$0xff]
    %v1431 = vld [vmem:[%s1166 + $0x61] sm:$0xff]
    %v1432 = vld [vmem:[%s1166 + $0x71] sm:$0xff]
    %v1433 = vld [vmem:[%s1166 + $0xa1] sm:$0xff]
    %v1434 = vld [vmem:[%s1166 + $0xb1] sm:$0xff]
    %v1435 = vld [vmem:[%s1166 + $0xc1] sm:$0xff]
    %v1436 = vld [vmem:[%s1166 + $0xd1] sm:$0xff]
    %v1437 = vld [vmem:[%s1166 + $0xe1] sm:$0xff]
    %v1438 = vld [vmem:[%s1166 + $0xf1] sm:$0xff]
    %v1439 = vld [vmem:[%s1166 + $0x101] sm:$0xff]
    %v1440 = vld [vmem:[%s1166 + $0x111] sm:$0xff]
    %v1441 = vlaneseq
    %v1442 = vshrl.u32 %v1441, 7
    %v1443 = vsub.s32 4, %v1442
    %v1444 = vrot.slane %v1231, %v1443
    %v1445 = vmul.f32 %v1425, %v1444
    %v1446 = vmul.f32 %v1426, %v1444
    %v1447 = vmul.f32 %v1427, %v1444
    %v1448 = vmul.f32 %v1428, %v1444
    %v1449 = vmul.f32 %v1429, %v1444
    %v1450 = vmul.f32 %v1430, %v1444
    %v1451 = vmul.f32 %v1431, %v1444
    %v1452 = vmul.f32 %v1432, %v1444
    %v1453 = vmul.f32 %v1433, %v1444
    %v1454 = vmul.f32 %v1434, %v1444
    %v1455 = vmul.f32 %v1435, %v1444
    %v1456 = vmul.f32 %v1436, %v1444
    %v1457 = vmul.f32 %v1437, %v1444
    %v1458 = vmul.f32 %v1438, %v1444
    %v1459 = vmul.f32 %v1439, %v1444
    %v1460 = vmul.f32 %v1440, %v1444
    %v1461 = vadd.f32 %v1409, %v1445
    %v1462 = vadd.f32 %v1410, %v1446
    %v1463 = vadd.f32 %v1411, %v1447
    %v1464 = vadd.f32 %v1412, %v1448
    %v1465 = vadd.f32 %v1413, %v1449
    %v1466 = vadd.f32 %v1414, %v1450
    %v1467 = vadd.f32 %v1415, %v1451
    %v1468 = vadd.f32 %v1416, %v1452
    %v1469 = vadd.f32 %v1417, %v1453
    %v1470 = vadd.f32 %v1418, %v1454
    %v1471 = vadd.f32 %v1419, %v1455
    %v1472 = vadd.f32 %v1420, %v1456
    %v1473 = vadd.f32 %v1421, %v1457
    %v1474 = vadd.f32 %v1422, %v1458
    %v1475 = vadd.f32 %v1423, %v1459
    %v1476 = vadd.f32 %v1424, %v1460
    %v1477 = vld [vmem:[%s1166 + $0x2] sm:$0xff]
    %v1478 = vld [vmem:[%s1166 + $0x12] sm:$0xff]
    %v1479 = vld [vmem:[%s1166 + $0x22] sm:$0xff]
    %v1480 = vld [vmem:[%s1166 + $0x32] sm:$0xff]
    %v1481 = vld [vmem:[%s1166 + $0x42] sm:$0xff]
    %v1482 = vld [vmem:[%s1166 + $0x52] sm:$0xff]
    %v1483 = vld [vmem:[%s1166 + $0x62] sm:$0xff]
    %v1484 = vld [vmem:[%s1166 + $0x72] sm:$0xff]
    %v1485 = vld [vmem:[%s1166 + $0xa2] sm:$0xff]
    %v1486 = vld [vmem:[%s1166 + $0xb2] sm:$0xff]
    %v1487 = vld [vmem:[%s1166 + $0xc2] sm:$0xff]
    %v1488 = vld [vmem:[%s1166 + $0xd2] sm:$0xff]
    %v1489 = vld [vmem:[%s1166 + $0xe2] sm:$0xff]
    %v1490 = vld [vmem:[%s1166 + $0xf2] sm:$0xff]
    %v1491 = vld [vmem:[%s1166 + $0x102] sm:$0xff]
    %v1492 = vld [vmem:[%s1166 + $0x112] sm:$0xff]
    %v1493 = vlaneseq
    %v1494 = vshrl.u32 %v1493, 7
    %v1495 = vsub.s32 5, %v1494
    %v1496 = vrot.slane %v1231, %v1495
    %v1497 = vmul.f32 %v1477, %v1496
    %v1498 = vmul.f32 %v1478, %v1496
    %v1499 = vmul.f32 %v1479, %v1496
    %v1500 = vmul.f32 %v1480, %v1496
    %v1501 = vmul.f32 %v1481, %v1496
    %v1502 = vmul.f32 %v1482, %v1496
    %v1503 = vmul.f32 %v1483, %v1496
    %v1504 = vmul.f32 %v1484, %v1496
    %v1505 = vmul.f32 %v1485, %v1496
    %v1506 = vmul.f32 %v1486, %v1496
    %v1507 = vmul.f32 %v1487, %v1496
    %v1508 = vmul.f32 %v1488, %v1496
    %v1509 = vmul.f32 %v1489, %v1496
    %v1510 = vmul.f32 %v1490, %v1496
    %v1511 = vmul.f32 %v1491, %v1496
    %v1512 = vmul.f32 %v1492, %v1496
    %v1513 = vadd.f32 %v1461, %v1497
    %v1514 = vadd.f32 %v1462, %v1498
    %v1515 = vadd.f32 %v1463, %v1499
    %v1516 = vadd.f32 %v1464, %v1500
    %v1517 = vadd.f32 %v1465, %v1501
    %v1518 = vadd.f32 %v1466, %v1502
    %v1519 = vadd.f32 %v1467, %v1503
    %v1520 = vadd.f32 %v1468, %v1504
    %v1521 = vadd.f32 %v1469, %v1505
    %v1522 = vadd.f32 %v1470, %v1506
    %v1523 = vadd.f32 %v1471, %v1507
    %v1524 = vadd.f32 %v1472, %v1508
    %v1525 = vadd.f32 %v1473, %v1509
    %v1526 = vadd.f32 %v1474, %v1510
    %v1527 = vadd.f32 %v1475, %v1511
    %v1528 = vadd.f32 %v1476, %v1512
    %s1529 = scalar_lea.vmem [#allocation3], 32
    %v1530 = vld [vmem:[%s1529] sm:$0xff]
    %v1531 = vld [vmem:[%s1529 + $0x10] sm:$0xff]
    %v1532 = vld [vmem:[%s1529 + $0x20] sm:$0xff]
    %v1533 = vld [vmem:[%s1529 + $0x30] sm:$0xff]
    %v1534 = vld [vmem:[%s1529 + $0x40] sm:$0xff]
    %v1535 = vld [vmem:[%s1529 + $0x50] sm:$0xff]
    %v1536 = vld [vmem:[%s1529 + $0x60] sm:$0xff]
    %v1537 = vld [vmem:[%s1529 + $0x70] sm:$0xff]
    %v1538 = vld [vmem:[%s1529 + $0xa0] sm:$0xff]
    %v1539 = vld [vmem:[%s1529 + $0xb0] sm:$0xff]
    %v1540 = vld [vmem:[%s1529 + $0xc0] sm:$0xff]
    %v1541 = vld [vmem:[%s1529 + $0xd0] sm:$0xff]
    %v1542 = vld [vmem:[%s1529 + $0xe0] sm:$0xff]
    %v1543 = vld [vmem:[%s1529 + $0xf0] sm:$0xff]
    %v1544 = vld [vmem:[%s1529 + $0x100] sm:$0xff]
    %v1545 = vld [vmem:[%s1529 + $0x110] sm:$0xff]
    %v1546 = vlaneseq
    %v1547 = vshrl.u32 %v1546, 7
    %v1548 = vsub.s32 6, %v1547
    %v1549 = vrot.slane %v1231, %v1548
    %v1550 = vmul.f32 %v1530, %v1549
    %v1551 = vmul.f32 %v1531, %v1549
    %v1552 = vmul.f32 %v1532, %v1549
    %v1553 = vmul.f32 %v1533, %v1549
    %v1554 = vmul.f32 %v1534, %v1549
    %v1555 = vmul.f32 %v1535, %v1549
    %v1556 = vmul.f32 %v1536, %v1549
    %v1557 = vmul.f32 %v1537, %v1549
    %v1558 = vmul.f32 %v1538, %v1549
    %v1559 = vmul.f32 %v1539, %v1549
    %v1560 = vmul.f32 %v1540, %v1549
    %v1561 = vmul.f32 %v1541, %v1549
    %v1562 = vmul.f32 %v1542, %v1549
    %v1563 = vmul.f32 %v1543, %v1549
    %v1564 = vmul.f32 %v1544, %v1549
    %v1565 = vmul.f32 %v1545, %v1549
    %v1566 = vadd.f32 %v1513, %v1550
    %v1567 = vadd.f32 %v1514, %v1551
    %v1568 = vadd.f32 %v1515, %v1552
    %v1569 = vadd.f32 %v1516, %v1553
    %v1570 = vadd.f32 %v1517, %v1554
    %v1571 = vadd.f32 %v1518, %v1555
    %v1572 = vadd.f32 %v1519, %v1556
    %v1573 = vadd.f32 %v1520, %v1557
    %v1574 = vadd.f32 %v1521, %v1558
    %v1575 = vadd.f32 %v1522, %v1559
    %v1576 = vadd.f32 %v1523, %v1560
    %v1577 = vadd.f32 %v1524, %v1561
    %v1578 = vadd.f32 %v1525, %v1562
    %v1579 = vadd.f32 %v1526, %v1563
    %v1580 = vadd.f32 %v1527, %v1564
    %v1581 = vadd.f32 %v1528, %v1565
    %v1582 = vld [vmem:[%s1529 + $0x1] sm:$0xff]
    %v1583 = vld [vmem:[%s1529 + $0x11] sm:$0xff]
    %v1584 = vld [vmem:[%s1529 + $0x21] sm:$0xff]
    %v1585 = vld [vmem:[%s1529 + $0x31] sm:$0xff]
    %v1586 = vld [vmem:[%s1529 + $0x41] sm:$0xff]
    %v1587 = vld [vmem:[%s1529 + $0x51] sm:$0xff]
    %v1588 = vld [vmem:[%s1529 + $0x61] sm:$0xff]
    %v1589 = vld [vmem:[%s1529 + $0x71] sm:$0xff]
    %v1590 = vld [vmem:[%s1529 + $0xa1] sm:$0xff]
    %v1591 = vld [vmem:[%s1529 + $0xb1] sm:$0xff]
    %v1592 = vld [vmem:[%s1529 + $0xc1] sm:$0xff]
    %v1593 = vld [vmem:[%s1529 + $0xd1] sm:$0xff]
    %v1594 = vld [vmem:[%s1529 + $0xe1] sm:$0xff]
    %v1595 = vld [vmem:[%s1529 + $0xf1] sm:$0xff]
    %v1596 = vld [vmem:[%s1529 + $0x101] sm:$0xff]
    %v1597 = vld [vmem:[%s1529 + $0x111] sm:$0xff]
    %v1598 = vlaneseq
    %v1599 = vshrl.u32 %v1598, 7
    %v1600 = vsub.s32 7, %v1599
    %v1601 = vrot.slane %v1231, %v1600
    %v1602 = vmul.f32 %v1582, %v1601
    %v1603 = vmul.f32 %v1583, %v1601
    %v1604 = vmul.f32 %v1584, %v1601
    %v1605 = vmul.f32 %v1585, %v1601
    %v1606 = vmul.f32 %v1586, %v1601
    %v1607 = vmul.f32 %v1587, %v1601
    %v1608 = vmul.f32 %v1588, %v1601
    %v1609 = vmul.f32 %v1589, %v1601
    %v1610 = vmul.f32 %v1590, %v1601
    %v1611 = vmul.f32 %v1591, %v1601
    %v1612 = vmul.f32 %v1592, %v1601
    %v1613 = vmul.f32 %v1593, %v1601
    %v1614 = vmul.f32 %v1594, %v1601
    %v1615 = vmul.f32 %v1595, %v1601
    %v1616 = vmul.f32 %v1596, %v1601
    %v1617 = vmul.f32 %v1597, %v1601
    %v1618 = vadd.f32 %v1566, %v1602
    %v1619 = vadd.f32 %v1567, %v1603
    %v1620 = vadd.f32 %v1568, %v1604
    %v1621 = vadd.f32 %v1569, %v1605
    %v1622 = vadd.f32 %v1570, %v1606
    %v1623 = vadd.f32 %v1571, %v1607
    %v1624 = vadd.f32 %v1572, %v1608
    %v1625 = vadd.f32 %v1573, %v1609
    %v1626 = vadd.f32 %v1574, %v1610
    %v1627 = vadd.f32 %v1575, %v1611
    %v1628 = vadd.f32 %v1576, %v1612
    %v1629 = vadd.f32 %v1577, %v1613
    %v1630 = vadd.f32 %v1578, %v1614
    %v1631 = vadd.f32 %v1579, %v1615
    %v1632 = vadd.f32 %v1580, %v1616
    %v1633 = vadd.f32 %v1581, %v1617
    %v1634 = vld [vmem:[%s1529 + $0x2] sm:$0xff]
    %v1635 = vld [vmem:[%s1529 + $0x12] sm:$0xff]
    %v1636 = vld [vmem:[%s1529 + $0x22] sm:$0xff]
    %v1637 = vld [vmem:[%s1529 + $0x32] sm:$0xff]
    %v1638 = vld [vmem:[%s1529 + $0x42] sm:$0xff]
    %v1639 = vld [vmem:[%s1529 + $0x52] sm:$0xff]
    %v1640 = vld [vmem:[%s1529 + $0x62] sm:$0xff]
    %v1641 = vld [vmem:[%s1529 + $0x72] sm:$0xff]
    %v1642 = vld [vmem:[%s1529 + $0xa2] sm:$0xff]
    %v1643 = vld [vmem:[%s1529 + $0xb2] sm:$0xff]
    %v1644 = vld [vmem:[%s1529 + $0xc2] sm:$0xff]
    %v1645 = vld [vmem:[%s1529 + $0xd2] sm:$0xff]
    %v1646 = vld [vmem:[%s1529 + $0xe2] sm:$0xff]
    %v1647 = vld [vmem:[%s1529 + $0xf2] sm:$0xff]
    %v1648 = vld [vmem:[%s1529 + $0x102] sm:$0xff]
    %v1649 = vld [vmem:[%s1529 + $0x112] sm:$0xff]
    %v1650 = vlaneseq
    %v1651 = vshrl.u32 %v1650, 7
    %v1652 = vsub.s32 0, %v1651
    %v1653 = vrot.slane %v1232, %v1652
    %v1654 = vmul.f32 %v1634, %v1653
    %v1655 = vmul.f32 %v1635, %v1653
    %v1656 = vmul.f32 %v1636, %v1653
    %v1657 = vmul.f32 %v1637, %v1653
    %v1658 = vmul.f32 %v1638, %v1653
    %v1659 = vmul.f32 %v1639, %v1653
    %v1660 = vmul.f32 %v1640, %v1653
    %v1661 = vmul.f32 %v1641, %v1653
    %v1662 = vmul.f32 %v1642, %v1653
    %v1663 = vmul.f32 %v1643, %v1653
    %v1664 = vmul.f32 %v1644, %v1653
    %v1665 = vmul.f32 %v1645, %v1653
    %v1666 = vmul.f32 %v1646, %v1653
    %v1667 = vmul.f32 %v1647, %v1653
    %v1668 = vmul.f32 %v1648, %v1653
    %v1669 = vmul.f32 %v1649, %v1653
    %v1670 = vadd.f32 %v1618, %v1654
    %v1671 = vadd.f32 %v1619, %v1655
    %v1672 = vadd.f32 %v1620, %v1656
    %v1673 = vadd.f32 %v1621, %v1657
    %v1674 = vadd.f32 %v1622, %v1658
    %v1675 = vadd.f32 %v1623, %v1659
    %v1676 = vadd.f32 %v1624, %v1660
    %v1677 = vadd.f32 %v1625, %v1661
    %v1678 = vadd.f32 %v1626, %v1662
    %v1679 = vadd.f32 %v1627, %v1663
    %v1680 = vadd.f32 %v1628, %v1664
    %v1681 = vadd.f32 %v1629, %v1665
    %v1682 = vadd.f32 %v1630, %v1666
    %v1683 = vadd.f32 %v1631, %v1667
    %v1684 = vadd.f32 %v1632, %v1668
    %v1685 = vadd.f32 %v1633, %v1669
    %v1686 = vpack.c.bf16 %v1671, %v1670
    %v1687 = vpack.c.bf16 %v1673, %v1672
    %v1688 = vpack.c.bf16 %v1675, %v1674
    %v1689 = vpack.c.bf16 %v1677, %v1676
    %v1690 = vpack.c.bf16 %v1679, %v1678
    %v1691 = vpack.c.bf16 %v1681, %v1680
    %v1692 = vpack.c.bf16 %v1683, %v1682
    %v1693 = vpack.c.bf16 %v1685, %v1684
    %v1694 = vld [vmem:[%s3] sm:$0xff]
    %v1695 = vld [vmem:[%s3 + $0x8] sm:$0xff]
    %v1696 = vld [vmem:[%s3 + $0x10] sm:$0xff]
    %v1697 = vld [vmem:[%s3 + $0x18] sm:$0xff]
    %v1698 = vld [vmem:[%s3 + $0x20] sm:$0xff]
    %v1699 = vld [vmem:[%s4 + $0x1] sm:$0x3]
    %v1701 = vlaneseq
    %v1702 = vshrl.u32 %v1701, 7
    %v1703 = vsub.s32 0, %v1702
    %v1704 = vrot.slane %v1699, %v1703
    %v1705 = vlaneseq
    %v1706 = vshrl.u32 %v1705, 7
    %v1707 = vsub.s32 1, %v1706
    %v1708 = vrot.slane %v1699, %v1707
    %v1716 = vunpack.c.l.b16 %v1694
    %v1717 = vunpack.c.h.b16 %v1694
    %v1718 = vunpack.c.l.b16 %v1695
    %v1719 = vunpack.c.h.b16 %v1695
    %v1720 = vunpack.c.l.b16 %v1696
    %v1721 = vunpack.c.h.b16 %v1696
    %v1722 = vunpack.c.l.b16 %v1697
    %v1723 = vunpack.c.h.b16 %v1697
    %v1724 = vunpack.c.l.b16 %v1698
    %v1725 = vunpack.c.h.b16 %v1698
    %v1726 = vpack.c.b16 %v1718, %v1716
    %v1727 = vpack.c.b16 %v1719, %v1717
    %v1728 = vpack.c.b16 %v1722, %v1720
    %v1729 = vpack.c.b16 %v1723, %v1721
    %v1730 = vpack.c.b16 %v1724, %v1724
    %v1731 = vpack.c.b16 %v1725, %v1725
    %vm1736 = vcmask 326656
    %v1738 = vsel %vm1736, %v1686, 0
    %v1741 = vsel %vm1736, %v1687, 0
    %v1744 = vsel %vm1736, %v1688, 0
    %v1747 = vsel %vm1736, %v1689, 0
    %v1750 = vsel %vm1736, %v1690, 0
    %v1753 = vsel %vm1736, %v1691, 0
    %v1756 = vsel %vm1736, %v1692, 0
    %v1759 = vsel %vm1736, %v1693, 0
    %vm1761 = vcmask 1043456
    %v1763 = vsel %vm1761, %v1730, 0
    %v1766 = vsel %vm1761, %v1731, 0
    %1768 = vmatprep.subr.bf16.mxu0 0
    %1769 = vmatpush1.bf16.msra.mxu0 0
    %1770 = vmatprep.subr.bf16.mxu0 0
    %1771 = vmatpush1.bf16.msra.mxu0 0
    %1772 = vmatprep.subr.bf16.mxu0 0
    %1773 = vmatpush1.bf16.msra.mxu0 0
    %1774 = vmatprep.subr.bf16.mxu0 0
    %1775 = vmatpush1.bf16.msra.mxu0 0
    %1776 = vmatprep.subr.bf16.mxu0 0
    %1777 = vmatpush1.bf16.msra.mxu0 0
    %1778 = vmatprep.subr.bf16.mxu0 %v1766
    %1779 = vmatpush1.bf16.msra.mxu0 %v1763
    %1780 = vmatprep.subr.bf16.mxu0 %v1729
    %1781 = vmatpush1.bf16.msra.mxu0 %v1728
    %1782 = vmatprep.subr.bf16.mxu0 %v1727
    %1783 = vmatpush1.bf16.msra.mxu0 %v1726
    %1784 = vmatprep.subr.bf16.mxu0 0
    %1785 = vmatpush2.bf16.msra.mxu0 0
    %1786 = vmatprep.subr.bf16.mxu0 0
    %1787 = vmatpush2.bf16.msra.mxu0 0
    %1788 = vmatprep.subr.bf16.mxu0 0
    %1789 = vmatpush2.bf16.msra.mxu0 0
    %1790 = vmatprep.subr.bf16.mxu0 0
    %1791 = vmatpush2.bf16.msra.mxu0 0
    %1792 = vmatprep.subr.bf16.mxu0 0
    %1793 = vmatpush2.bf16.msra.mxu0 0
    %1794 = vmatprep.subr.bf16.mxu0 0
    %1795 = vmatpush2.bf16.msra.mxu0 0
    %1796 = vmatprep.subr.bf16.mxu0 0
    %1797 = vmatpush2.bf16.msra.mxu0 0
    %1798 = vmatprep.subr.bf16.mxu0 0
    %1799 = vmatpush2.bf16.msra.mxu0 0
    %1800 = vmatprep.mubr.bf16.mxu0 0
    %1801 = vmatmul.mubr.bf16.gmra.mxu0 %v1738
    %v1802 = vpop.f32.mrf.mxu0
    %v1803 = vadd.f32 %v1704, %v1802
    %v1804 = vpop.f32.mrf.mxu0
    %v1805 = vadd.f32 %v1708, %v1804
    %v1806 = vpop.f32.mrf.mxu0
    %v1807 = vadd.f32 %v1704, %v1806
    %v1808 = vpop.f32.mrf.mxu0
    %v1809 = vadd.f32 %v1708, %v1808
    %1810 = vmatprep.mubr.bf16.mxu0 0
    %1811 = vmatmul.mubr.bf16.gmra.mxu0 %v1741
    %v1812 = vpop.f32.mrf.mxu0
    %v1813 = vadd.f32 %v1704, %v1812
    %v1814 = vpop.f32.mrf.mxu0
    %v1815 = vadd.f32 %v1708, %v1814
    %v1816 = vpop.f32.mrf.mxu0
    %v1817 = vadd.f32 %v1704, %v1816
    %v1818 = vpop.f32.mrf.mxu0
    %v1819 = vadd.f32 %v1708, %v1818
    %1820 = vmatprep.mubr.bf16.mxu0 0
    %1821 = vmatmul.mubr.bf16.gmra.mxu0 %v1744
    %v1822 = vpop.f32.mrf.mxu0
    %v1823 = vadd.f32 %v1704, %v1822
    %v1824 = vpop.f32.mrf.mxu0
    %v1825 = vadd.f32 %v1708, %v1824
    %v1826 = vpop.f32.mrf.mxu0
    %v1827 = vadd.f32 %v1704, %v1826
    %v1828 = vpop.f32.mrf.mxu0
    %v1829 = vadd.f32 %v1708, %v1828
    %1830 = vmatprep.mubr.bf16.mxu0 0
    %1831 = vmatmul.mubr.bf16.gmra.mxu0 %v1747
    %v1832 = vpop.f32.mrf.mxu0
    %v1833 = vadd.f32 %v1704, %v1832
    %v1834 = vpop.f32.mrf.mxu0
    %v1835 = vadd.f32 %v1708, %v1834
    %v1836 = vpop.f32.mrf.mxu0
    %v1837 = vadd.f32 %v1704, %v1836
    %v1838 = vpop.f32.mrf.mxu0
    %v1839 = vadd.f32 %v1708, %v1838
    %1840 = vmatprep.mubr.bf16.mxu0 0
    %1841 = vmatmul.mubr.bf16.gmra.mxu0 %v1750
    %v1842 = vpop.f32.mrf.mxu0
    %v1843 = vadd.f32 %v1704, %v1842
    %v1844 = vpop.f32.mrf.mxu0
    %v1845 = vadd.f32 %v1708, %v1844
    %v1846 = vpop.f32.mrf.mxu0
    %v1847 = vadd.f32 %v1704, %v1846
    %v1848 = vpop.f32.mrf.mxu0
    %v1849 = vadd.f32 %v1708, %v1848
    %1850 = vmatprep.mubr.bf16.mxu0 0
    %1851 = vmatmul.mubr.bf16.gmra.mxu0 %v1753
    %v1852 = vpop.f32.mrf.mxu0
    %v1853 = vadd.f32 %v1704, %v1852
    %v1854 = vpop.f32.mrf.mxu0
    %v1855 = vadd.f32 %v1708, %v1854
    %v1856 = vpop.f32.mrf.mxu0
    %v1857 = vadd.f32 %v1704, %v1856
    %v1858 = vpop.f32.mrf.mxu0
    %v1859 = vadd.f32 %v1708, %v1858
    %1860 = vmatprep.mubr.bf16.mxu0 0
    %1861 = vmatmul.mubr.bf16.gmra.mxu0 %v1756
    %v1862 = vpop.f32.mrf.mxu0
    %v1863 = vadd.f32 %v1704, %v1862
    %v1864 = vpop.f32.mrf.mxu0
    %v1865 = vadd.f32 %v1708, %v1864
    %v1866 = vpop.f32.mrf.mxu0
    %v1867 = vadd.f32 %v1704, %v1866
    %v1868 = vpop.f32.mrf.mxu0
    %v1869 = vadd.f32 %v1708, %v1868
    %1870 = vmatprep.mubr.bf16.mxu0 0
    %1871 = vmatmul.mubr.bf16.gmra.mxu0 %v1759
    %v1872 = vpop.f32.mrf.mxu0
    %v1873 = vadd.f32 %v1704, %v1872
    %v1874 = vpop.f32.mrf.mxu0
    %v1875 = vadd.f32 %v1708, %v1874
    %v1876 = vpop.f32.mrf.mxu0
    %v1877 = vadd.f32 %v1704, %v1876
    %v1878 = vpop.f32.mrf.mxu0
    %v1879 = vadd.f32 %v1708, %v1878
    %1880 = vdwg.mxu0
    %v1881 = vadd.f32 %v1803, %v1215
    %v1882 = vadd.f32 %v1807, %v1216
    %v1883 = vadd.f32 %v1813, %v1217
    %v1884 = vadd.f32 %v1817, %v1218
    %v1885 = vadd.f32 %v1823, %v1219
    %v1886 = vadd.f32 %v1827, %v1220
    %v1887 = vadd.f32 %v1833, %v1221
    %v1888 = vadd.f32 %v1837, %v1222
    %v1889 = vadd.f32 %v1843, %v1223
    %v1890 = vadd.f32 %v1847, %v1224
    %v1891 = vadd.f32 %v1853, %v1225
    %v1892 = vadd.f32 %v1857, %v1226
    %v1893 = vadd.f32 %v1863, %v1227
    %v1894 = vadd.f32 %v1867, %v1228
    %v1895 = vadd.f32 %v1873, %v1229
    %v1896 = vadd.f32 %v1877, %v1230
    %v1897 = vmax.f32 %v1881, 0.0
    %v1898 = vmax.f32 %v1882, 0.0
    %v1899 = vmax.f32 %v1883, 0.0
    %v1900 = vmax.f32 %v1884, 0.0
    %v1901 = vmax.f32 %v1885, 0.0
    %v1902 = vmax.f32 %v1886, 0.0
    %v1903 = vmax.f32 %v1887, 0.0
    %v1904 = vmax.f32 %v1888, 0.0
    %v1905 = vmax.f32 %v1889, 0.0
    %v1906 = vmax.f32 %v1890, 0.0
    %v1907 = vmax.f32 %v1891, 0.0
    %v1908 = vmax.f32 %v1892, 0.0
    %v1909 = vmax.f32 %v1893, 0.0
    %v1910 = vmax.f32 %v1894, 0.0
    %v1911 = vmax.f32 %v1895, 0.0
    %v1912 = vmax.f32 %v1896, 0.0
    %v1929 = vrot.slane %v1897, 7
    %v1930 = vrot.slane %v1898, 7
    %v1931 = vrot.slane %v1899, 7
    %v1932 = vrot.slane %v1900, 7
    %v1933 = vrot.slane %v1901, 7
    %v1934 = vrot.slane %v1902, 7
    %v1935 = vrot.slane %v1903, 7
    %v1936 = vrot.slane %v1904, 7
    %v1937 = vrot.slane %v1905, 7
    %v1938 = vrot.slane %v1906, 7
    %v1939 = vrot.slane %v1907, 7
    %v1940 = vrot.slane %v1908, 7
    %v1941 = vrot.slane %v1909, 7
    %v1942 = vrot.slane %v1910, 7
    %v1943 = vrot.slane %v1911, 7
    %v1944 = vrot.slane %v1912, 7
    %s1961 = scalar_lea.vmem [#allocation4], 32
    %1962 = vst [vmem:[%s1961] sm:$0xfe] %v1929
    %1963 = vst [vmem:[%s1961 + $0x10] sm:$0x1] %v1929
    %1964 = vst [vmem:[%s1961 + $0x20] sm:$0xfe] %v1930
    %1965 = vst [vmem:[%s1961 + $0x30] sm:$0x1] %v1930
    %1966 = vst [vmem:[%s1961 + $0x40] sm:$0xfe] %v1931
    %1967 = vst [vmem:[%s1961 + $0x50] sm:$0x1] %v1931
    %1968 = vst [vmem:[%s1961 + $0x60] sm:$0xfe] %v1932
    %1969 = vst [vmem:[%s1961 + $0x70] sm:$0x1] %v1932
    %1970 = vst [vmem:[%s1961 + $0x80] sm:$0xfe] %v1933
    %1971 = vst [vmem:[%s1961 + $0x90] sm:$0x1] %v1933
    %1972 = vst [vmem:[%s1961 + $0xa0] sm:$0xfe] %v1934
    %1973 = vst [vmem:[%s1961 + $0xb0] sm:$0x1] %v1934
    %1974 = vst [vmem:[%s1961 + $0xc0] sm:$0xfe] %v1935
    %1975 = vst [vmem:[%s1961 + $0xd0] sm:$0x1] %v1935
    %1976 = vst [vmem:[%s1961 + $0xe0] sm:$0xfe] %v1936
    %1977 = vst [vmem:[%s1961 + $0xf0] sm:$0x1] %v1936
    %1978 = vst [vmem:[%s1961 + $0x140] sm:$0xfe] %v1937
    %1979 = vst [vmem:[%s1961 + $0x150] sm:$0x1] %v1937
    %1980 = vst [vmem:[%s1961 + $0x160] sm:$0xfe] %v1938
    %1981 = vst [vmem:[%s1961 + $0x170] sm:$0x1] %v1938
    %1982 = vst [vmem:[%s1961 + $0x180] sm:$0xfe] %v1939
    %1983 = vst [vmem:[%s1961 + $0x190] sm:$0x1] %v1939
    %1984 = vst [vmem:[%s1961 + $0x1a0] sm:$0xfe] %v1940
    %1985 = vst [vmem:[%s1961 + $0x1b0] sm:$0x1] %v1940
    %1986 = vst [vmem:[%s1961 + $0x1c0] sm:$0xfe] %v1941
    %1987 = vst [vmem:[%s1961 + $0x1d0] sm:$0x1] %v1941
    %1988 = vst [vmem:[%s1961 + $0x1e0] sm:$0xfe] %v1942
    %1989 = vst [vmem:[%s1961 + $0x1f0] sm:$0x1] %v1942
    %1990 = vst [vmem:[%s1961 + $0x200] sm:$0xfe] %v1943
    %1991 = vst [vmem:[%s1961 + $0x210] sm:$0x1] %v1943
    %1992 = vst [vmem:[%s1961 + $0x220] sm:$0xfe] %v1944
    %1993 = vst [vmem:[%s1961 + $0x230] sm:$0x1] %v1944
    %v1994 = vmax.f32 %v1805, 0.0
    %v1995 = vmax.f32 %v1809, 0.0
    %v1996 = vmax.f32 %v1815, 0.0
    %v1997 = vmax.f32 %v1819, 0.0
    %v1998 = vmax.f32 %v1825, 0.0
    %v1999 = vmax.f32 %v1829, 0.0
    %v2000 = vmax.f32 %v1835, 0.0
    %v2001 = vmax.f32 %v1839, 0.0
    %v2002 = vmax.f32 %v1845, 0.0
    %v2003 = vmax.f32 %v1849, 0.0
    %v2004 = vmax.f32 %v1855, 0.0
    %v2005 = vmax.f32 %v1859, 0.0
    %v2006 = vmax.f32 %v1865, 0.0
    %v2007 = vmax.f32 %v1869, 0.0
    %v2008 = vmax.f32 %v1875, 0.0
    %v2009 = vmax.f32 %v1879, 0.0
    %v2026 = vrot.slane %v1994, 7
    %v2027 = vrot.slane %v1995, 7
    %v2028 = vrot.slane %v1996, 7
    %v2029 = vrot.slane %v1997, 7
    %v2030 = vrot.slane %v1998, 7
    %v2031 = vrot.slane %v1999, 7
    %v2032 = vrot.slane %v2000, 7
    %v2033 = vrot.slane %v2001, 7
    %v2034 = vrot.slane %v2002, 7
    %v2035 = vrot.slane %v2003, 7
    %v2036 = vrot.slane %v2004, 7
    %v2037 = vrot.slane %v2005, 7
    %v2038 = vrot.slane %v2006, 7
    %v2039 = vrot.slane %v2007, 7
    %v2040 = vrot.slane %v2008, 7
    %v2041 = vrot.slane %v2009, 7
    %2058 = vst [vmem:[%s1961 + $0x8] sm:$0xfe] %v2026
    %2059 = vst [vmem:[%s1961 + $0x18] sm:$0x1] %v2026
    %2060 = vst [vmem:[%s1961 + $0x28] sm:$0xfe] %v2027
    %2061 = vst [vmem:[%s1961 + $0x38] sm:$0x1] %v2027
    %2062 = vst [vmem:[%s1961 + $0x48] sm:$0xfe] %v2028
    %2063 = vst [vmem:[%s1961 + $0x58] sm:$0x1] %v2028
    %2064 = vst [vmem:[%s1961 + $0x68] sm:$0xfe] %v2029
    %2065 = vst [vmem:[%s1961 + $0x78] sm:$0x1] %v2029
    %2066 = vst [vmem:[%s1961 + $0x88] sm:$0xfe] %v2030
    %2067 = vst [vmem:[%s1961 + $0x98] sm:$0x1] %v2030
    %2068 = vst [vmem:[%s1961 + $0xa8] sm:$0xfe] %v2031
    %2069 = vst [vmem:[%s1961 + $0xb8] sm:$0x1] %v2031
    %2070 = vst [vmem:[%s1961 + $0xc8] sm:$0xfe] %v2032
    %2071 = vst [vmem:[%s1961 + $0xd8] sm:$0x1] %v2032
    %2072 = vst [vmem:[%s1961 + $0xe8] sm:$0xfe] %v2033
    %2073 = vst [vmem:[%s1961 + $0xf8] sm:$0x1] %v2033
    %2074 = vst [vmem:[%s1961 + $0x148] sm:$0xfe] %v2034
    %2075 = vst [vmem:[%s1961 + $0x158] sm:$0x1] %v2034
    %2076 = vst [vmem:[%s1961 + $0x168] sm:$0xfe] %v2035
    %2077 = vst [vmem:[%s1961 + $0x178] sm:$0x1] %v2035
    %2078 = vst [vmem:[%s1961 + $0x188] sm:$0xfe] %v2036
    %2079 = vst [vmem:[%s1961 + $0x198] sm:$0x1] %v2036
    %2080 = vst [vmem:[%s1961 + $0x1a8] sm:$0xfe] %v2037
    %2081 = vst [vmem:[%s1961 + $0x1b8] sm:$0x1] %v2037
    %2082 = vst [vmem:[%s1961 + $0x1c8] sm:$0xfe] %v2038
    %2083 = vst [vmem:[%s1961 + $0x1d8] sm:$0x1] %v2038
    %2084 = vst [vmem:[%s1961 + $0x1e8] sm:$0xfe] %v2039
    %2085 = vst [vmem:[%s1961 + $0x1f8] sm:$0x1] %v2039
    %2086 = vst [vmem:[%s1961 + $0x208] sm:$0xfe] %v2040
    %2087 = vst [vmem:[%s1961 + $0x218] sm:$0x1] %v2040
    %2088 = vst [vmem:[%s1961 + $0x228] sm:$0xfe] %v2041
    %2089 = vst [vmem:[%s1961 + $0x238] sm:$0x1] %v2041
    %v2090 = vld [vmem:[%s1 + $0x10] sm:$0xff]
    %v2091 = vld [vmem:[%s1 + $0x18] sm:$0xff]
    %v2092 = vld [vmem:[%s1 + $0x50] sm:$0x1]
    %v2093 = vld [vmem:[%s1 + $0x58] sm:$0x1]
    %v2094 = vld [vmem:[#allocation4] sm:$0xff]
    %v2095 = vld [vmem:[#allocation4 + $0x8] sm:$0xff]
    %v2096 = vld [vmem:[#allocation4 + $0x20] sm:$0xff]
    %v2097 = vld [vmem:[#allocation4 + $0x28] sm:$0xff]
    %v2098 = vld [vmem:[#allocation4 + $0x40] sm:$0xff]
    %v2099 = vld [vmem:[#allocation4 + $0x48] sm:$0xff]
    %v2100 = vld [vmem:[#allocation4 + $0x60] sm:$0xff]
    %v2101 = vld [vmem:[#allocation4 + $0x68] sm:$0xff]
    %v2102 = vld [vmem:[#allocation4 + $0x80] sm:$0xff]
    %v2103 = vld [vmem:[#allocation4 + $0x88] sm:$0xff]
    %v2104 = vld [vmem:[#allocation4 + $0xa0] sm:$0xff]
    %v2105 = vld [vmem:[#allocation4 + $0xa8] sm:$0xff]
    %v2106 = vld [vmem:[#allocation4 + $0xc0] sm:$0xff]
    %v2107 = vld [vmem:[#allocation4 + $0xc8] sm:$0xff]
    %v2108 = vld [vmem:[#allocation4 + $0xe0] sm:$0xff]
    %v2109 = vld [vmem:[#allocation4 + $0xe8] sm:$0xff]
    %v2110 = vld [vmem:[#allocation4 + $0x140] sm:$0xff]
    %v2111 = vld [vmem:[#allocation4 + $0x148] sm:$0xff]
    %v2112 = vld [vmem:[#allocation4 + $0x160] sm:$0xff]
    %v2113 = vld [vmem:[#allocation4 + $0x168] sm:$0xff]
    %v2114 = vld [vmem:[#allocation4 + $0x180] sm:$0xff]
    %v2115 = vld [vmem:[#allocation4 + $0x188] sm:$0xff]
    %v2116 = vld [vmem:[#allocation4 + $0x1a0] sm:$0xff]
    %v2117 = vld [vmem:[#allocation4 + $0x1a8] sm:$0xff]
    %v2118 = vld [vmem:[#allocation4 + $0x1c0] sm:$0xff]
    %v2119 = vld [vmem:[#allocation4 + $0x1c8] sm:$0xff]
    %v2120 = vld [vmem:[#allocation4 + $0x1e0] sm:$0xff]
    %v2121 = vld [vmem:[#allocation4 + $0x1e8] sm:$0xff]
    %v2122 = vld [vmem:[#allocation4 + $0x200] sm:$0xff]
    %v2123 = vld [vmem:[#allocation4 + $0x208] sm:$0xff]
    %v2124 = vld [vmem:[#allocation4 + $0x220] sm:$0xff]
    %v2125 = vld [vmem:[#allocation4 + $0x228] sm:$0xff]
    %v2126 = vlaneseq
    %v2127 = vshrl.u32 %v2126, 7
    %v2128 = vsub.s32 0, %v2127
    %v2129 = vrot.slane %v2090, %v2128
    %v2130 = vlaneseq
    %v2131 = vshrl.u32 %v2130, 7
    %v2132 = vsub.s32 0, %v2131
    %v2133 = vrot.slane %v2091, %v2132
    %v2134 = vmul.f32 %v2094, %v2129
    %v2135 = vmul.f32 %v2095, %v2133
    %v2136 = vmul.f32 %v2096, %v2129
    %v2137 = vmul.f32 %v2097, %v2133
    %v2138 = vmul.f32 %v2098, %v2129
    %v2139 = vmul.f32 %v2099, %v2133
    %v2140 = vmul.f32 %v2100, %v2129
    %v2141 = vmul.f32 %v2101, %v2133
    %v2142 = vmul.f32 %v2102, %v2129
    %v2143 = vmul.f32 %v2103, %v2133
    %v2144 = vmul.f32 %v2104, %v2129
    %v2145 = vmul.f32 %v2105, %v2133
    %v2146 = vmul.f32 %v2106, %v2129
    %v2147 = vmul.f32 %v2107, %v2133
    %v2148 = vmul.f32 %v2108, %v2129
    %v2149 = vmul.f32 %v2109, %v2133
    %v2150 = vmul.f32 %v2110, %v2129
    %v2151 = vmul.f32 %v2111, %v2133
    %v2152 = vmul.f32 %v2112, %v2129
    %v2153 = vmul.f32 %v2113, %v2133
    %v2154 = vmul.f32 %v2114, %v2129
    %v2155 = vmul.f32 %v2115, %v2133
    %v2156 = vmul.f32 %v2116, %v2129
    %v2157 = vmul.f32 %v2117, %v2133
    %v2158 = vmul.f32 %v2118, %v2129
    %v2159 = vmul.f32 %v2119, %v2133
    %v2160 = vmul.f32 %v2120, %v2129
    %v2161 = vmul.f32 %v2121, %v2133
    %v2162 = vmul.f32 %v2122, %v2129
    %v2163 = vmul.f32 %v2123, %v2133
    %v2164 = vmul.f32 %v2124, %v2129
    %v2165 = vmul.f32 %v2125, %v2133
    %v2166 = vld [vmem:[#allocation4] sm:$0xfe]
    %v2167 = vld [vmem:[#allocation4 + $0x8] sm:$0xfe]
    %v2168 = vld [vmem:[#allocation4 + $0x10] sm:$0x1]
    %v2169 = vld [vmem:[#allocation4 + $0x18] sm:$0x1]
    %v2170 = vld [vmem:[#allocation4 + $0x20] sm:$0xfe]
    %v2171 = vld [vmem:[#allocation4 + $0x28] sm:$0xfe]
    %v2172 = vld [vmem:[#allocation4 + $0x30] sm:$0x1]
    %v2173 = vld [vmem:[#allocation4 + $0x38] sm:$0x1]
    %v2174 = vld [vmem:[#allocation4 + $0x40] sm:$0xfe]
    %v2175 = vld [vmem:[#allocation4 + $0x48] sm:$0xfe]
    %v2176 = vld [vmem:[#allocation4 + $0x50] sm:$0x1]
    %v2177 = vld [vmem:[#allocation4 + $0x58] sm:$0x1]
    %v2178 = vld [vmem:[#allocation4 + $0x60] sm:$0xfe]
    %v2179 = vld [vmem:[#allocation4 + $0x68] sm:$0xfe]
    %v2180 = vld [vmem:[#allocation4 + $0x70] sm:$0x1]
    %v2181 = vld [vmem:[#allocation4 + $0x78] sm:$0x1]
    %v2182 = vld [vmem:[#allocation4 + $0x80] sm:$0xfe]
    %v2183 = vld [vmem:[#allocation4 + $0x88] sm:$0xfe]
    %v2184 = vld [vmem:[#allocation4 + $0x90] sm:$0x1]
    %v2185 = vld [vmem:[#allocation4 + $0x98] sm:$0x1]
    %v2186 = vld [vmem:[#allocation4 + $0xa0] sm:$0xfe]
    %v2187 = vld [vmem:[#allocation4 + $0xa8] sm:$0xfe]
    %v2188 = vld [vmem:[#allocation4 + $0xb0] sm:$0x1]
    %v2189 = vld [vmem:[#allocation4 + $0xb8] sm:$0x1]
    %v2190 = vld [vmem:[#allocation4 + $0xc0] sm:$0xfe]
    %v2191 = vld [vmem:[#allocation4 + $0xc8] sm:$0xfe]
    %v2192 = vld [vmem:[#allocation4 + $0xd0] sm:$0x1]
    %v2193 = vld [vmem:[#allocation4 + $0xd8] sm:$0x1]
    %v2194 = vld [vmem:[#allocation4 + $0xe0] sm:$0xfe]
    %v2195 = vld [vmem:[#allocation4 + $0xe8] sm:$0xfe]
    %v2196 = vld [vmem:[#allocation4 + $0xf0] sm:$0x1]
    %v2197 = vld [vmem:[#allocation4 + $0xf8] sm:$0x1]
    %v2198 = vld [vmem:[#allocation4 + $0x140] sm:$0xfe]
    %v2199 = vld [vmem:[#allocation4 + $0x148] sm:$0xfe]
    %v2200 = vld [vmem:[#allocation4 + $0x150] sm:$0x1]
    %v2201 = vld [vmem:[#allocation4 + $0x158] sm:$0x1]
    %v2202 = vld [vmem:[#allocation4 + $0x160] sm:$0xfe]
    %v2203 = vld [vmem:[#allocation4 + $0x168] sm:$0xfe]
    %v2204 = vld [vmem:[#allocation4 + $0x170] sm:$0x1]
    %v2205 = vld [vmem:[#allocation4 + $0x178] sm:$0x1]
    %v2206 = vld [vmem:[#allocation4 + $0x180] sm:$0xfe]
    %v2207 = vld [vmem:[#allocation4 + $0x188] sm:$0xfe]
    %v2208 = vld [vmem:[#allocation4 + $0x190] sm:$0x1]
    %v2209 = vld [vmem:[#allocation4 + $0x198] sm:$0x1]
    %v2210 = vld [vmem:[#allocation4 + $0x1a0] sm:$0xfe]
    %v2211 = vld [vmem:[#allocation4 + $0x1a8] sm:$0xfe]
    %v2212 = vld [vmem:[#allocation4 + $0x1b0] sm:$0x1]
    %v2213 = vld [vmem:[#allocation4 + $0x1b8] sm:$0x1]
    %v2214 = vld [vmem:[#allocation4 + $0x1c0] sm:$0xfe]
    %v2215 = vld [vmem:[#allocation4 + $0x1c8] sm:$0xfe]
    %v2216 = vld [vmem:[#allocation4 + $0x1d0] sm:$0x1]
    %v2217 = vld [vmem:[#allocation4 + $0x1d8] sm:$0x1]
    %v2218 = vld [vmem:[#allocation4 + $0x1e0] sm:$0xfe]
    %v2219 = vld [vmem:[#allocation4 + $0x1e8] sm:$0xfe]
    %v2220 = vld [vmem:[#allocation4 + $0x1f0] sm:$0x1]
    %v2221 = vld [vmem:[#allocation4 + $0x1f8] sm:$0x1]
    %v2222 = vld [vmem:[#allocation4 + $0x200] sm:$0xfe]
    %v2223 = vld [vmem:[#allocation4 + $0x208] sm:$0xfe]
    %v2224 = vld [vmem:[#allocation4 + $0x210] sm:$0x1]
    %v2225 = vld [vmem:[#allocation4 + $0x218] sm:$0x1]
    %v2226 = vld [vmem:[#allocation4 + $0x220] sm:$0xfe]
    %v2227 = vld [vmem:[#allocation4 + $0x228] sm:$0xfe]
    %v2228 = vld [vmem:[#allocation4 + $0x230] sm:$0x1]
    %v2229 = vld [vmem:[#allocation4 + $0x238] sm:$0x1]
    %v2230 = vlaneseq
    %v2231 = vshrl.u32 %v2230, 7
    %v2232 = vsub.s32 1, %v2231
    %v2233 = vrot.slane %v2090, %v2232
    %v2234 = vlaneseq
    %v2235 = vshrl.u32 %v2234, 7
    %v2236 = vsub.s32 1, %v2235
    %v2237 = vrot.slane %v2091, %v2236
    %v2238 = vmul.f32 %v2166, %v2233
    %v2239 = vmul.f32 %v2167, %v2237
    %v2240 = vmul.f32 %v2168, %v2233
    %v2241 = vmul.f32 %v2169, %v2237
    %v2242 = vmul.f32 %v2170, %v2233
    %v2243 = vmul.f32 %v2171, %v2237
    %v2244 = vmul.f32 %v2172, %v2233
    %v2245 = vmul.f32 %v2173, %v2237
    %v2246 = vmul.f32 %v2174, %v2233
    %v2247 = vmul.f32 %v2175, %v2237
    %v2248 = vmul.f32 %v2176, %v2233
    %v2249 = vmul.f32 %v2177, %v2237
    %v2250 = vmul.f32 %v2178, %v2233
    %v2251 = vmul.f32 %v2179, %v2237
    %v2252 = vmul.f32 %v2180, %v2233
    %v2253 = vmul.f32 %v2181, %v2237
    %v2254 = vmul.f32 %v2182, %v2233
    %v2255 = vmul.f32 %v2183, %v2237
    %v2256 = vmul.f32 %v2184, %v2233
    %v2257 = vmul.f32 %v2185, %v2237
    %v2258 = vmul.f32 %v2186, %v2233
    %v2259 = vmul.f32 %v2187, %v2237
    %v2260 = vmul.f32 %v2188, %v2233
    %v2261 = vmul.f32 %v2189, %v2237
    %v2262 = vmul.f32 %v2190, %v2233
    %v2263 = vmul.f32 %v2191, %v2237
    %v2264 = vmul.f32 %v2192, %v2233
    %v2265 = vmul.f32 %v2193, %v2237
    %v2266 = vmul.f32 %v2194, %v2233
    %v2267 = vmul.f32 %v2195, %v2237
    %v2268 = vmul.f32 %v2196, %v2233
    %v2269 = vmul.f32 %v2197, %v2237
    %v2270 = vmul.f32 %v2198, %v2233
    %v2271 = vmul.f32 %v2199, %v2237
    %v2272 = vmul.f32 %v2200, %v2233
    %v2273 = vmul.f32 %v2201, %v2237
    %v2274 = vmul.f32 %v2202, %v2233
    %v2275 = vmul.f32 %v2203, %v2237
    %v2276 = vmul.f32 %v2204, %v2233
    %v2277 = vmul.f32 %v2205, %v2237
    %v2278 = vmul.f32 %v2206, %v2233
    %v2279 = vmul.f32 %v2207, %v2237
    %v2280 = vmul.f32 %v2208, %v2233
    %v2281 = vmul.f32 %v2209, %v2237
    %v2282 = vmul.f32 %v2210, %v2233
    %v2283 = vmul.f32 %v2211, %v2237
    %v2284 = vmul.f32 %v2212, %v2233
    %v2285 = vmul.f32 %v2213, %v2237
    %v2286 = vmul.f32 %v2214, %v2233
    %v2287 = vmul.f32 %v2215, %v2237
    %v2288 = vmul.f32 %v2216, %v2233
    %v2289 = vmul.f32 %v2217, %v2237
    %v2290 = vmul.f32 %v2218, %v2233
    %v2291 = vmul.f32 %v2219, %v2237
    %v2292 = vmul.f32 %v2220, %v2233
    %v2293 = vmul.f32 %v2221, %v2237
    %v2294 = vmul.f32 %v2222, %v2233
    %v2295 = vmul.f32 %v2223, %v2237
    %v2296 = vmul.f32 %v2224, %v2233
    %v2297 = vmul.f32 %v2225, %v2237
    %v2298 = vmul.f32 %v2226, %v2233
    %v2299 = vmul.f32 %v2227, %v2237
    %v2300 = vmul.f32 %v2228, %v2233
    %v2301 = vmul.f32 %v2229, %v2237
    %vm2366 = vcmask 1046528
    %v2367 = vrot.slane %v2238, 1
    %v2368 = vrot.slane %v2240, 1
    %v2369 = vsel %vm2366, %v2367, %v2368
    %v2370 = vrot.slane %v2239, 1
    %v2371 = vrot.slane %v2241, 1
    %v2372 = vsel %vm2366, %v2370, %v2371
    %v2373 = vrot.slane %v2242, 1
    %v2374 = vrot.slane %v2244, 1
    %v2375 = vsel %vm2366, %v2373, %v2374
    %v2376 = vrot.slane %v2243, 1
    %v2377 = vrot.slane %v2245, 1
    %v2378 = vsel %vm2366, %v2376, %v2377
    %v2379 = vrot.slane %v2246, 1
    %v2380 = vrot.slane %v2248, 1
    %v2381 = vsel %vm2366, %v2379, %v2380
    %v2382 = vrot.slane %v2247, 1
    %v2383 = vrot.slane %v2249, 1
    %v2384 = vsel %vm2366, %v2382, %v2383
    %v2385 = vrot.slane %v2250, 1
    %v2386 = vrot.slane %v2252, 1
    %v2387 = vsel %vm2366, %v2385, %v2386
    %v2388 = vrot.slane %v2251, 1
    %v2389 = vrot.slane %v2253, 1
    %v2390 = vsel %vm2366, %v2388, %v2389
    %v2391 = vrot.slane %v2254, 1
    %v2392 = vrot.slane %v2256, 1
    %v2393 = vsel %vm2366, %v2391, %v2392
    %v2394 = vrot.slane %v2255, 1
    %v2395 = vrot.slane %v2257, 1
    %v2396 = vsel %vm2366, %v2394, %v2395
    %v2397 = vrot.slane %v2258, 1
    %v2398 = vrot.slane %v2260, 1
    %v2399 = vsel %vm2366, %v2397, %v2398
    %v2400 = vrot.slane %v2259, 1
    %v2401 = vrot.slane %v2261, 1
    %v2402 = vsel %vm2366, %v2400, %v2401
    %v2403 = vrot.slane %v2262, 1
    %v2404 = vrot.slane %v2264, 1
    %v2405 = vsel %vm2366, %v2403, %v2404
    %v2406 = vrot.slane %v2263, 1
    %v2407 = vrot.slane %v2265, 1
    %v2408 = vsel %vm2366, %v2406, %v2407
    %v2409 = vrot.slane %v2266, 1
    %v2410 = vrot.slane %v2268, 1
    %v2411 = vsel %vm2366, %v2409, %v2410
    %v2412 = vrot.slane %v2267, 1
    %v2413 = vrot.slane %v2269, 1
    %v2414 = vsel %vm2366, %v2412, %v2413
    %v2415 = vrot.slane %v2270, 1
    %v2416 = vrot.slane %v2272, 1
    %v2417 = vsel %vm2366, %v2415, %v2416
    %v2418 = vrot.slane %v2271, 1
    %v2419 = vrot.slane %v2273, 1
    %v2420 = vsel %vm2366, %v2418, %v2419
    %v2421 = vrot.slane %v2274, 1
    %v2422 = vrot.slane %v2276, 1
    %v2423 = vsel %vm2366, %v2421, %v2422
    %v2424 = vrot.slane %v2275, 1
    %v2425 = vrot.slane %v2277, 1
    %v2426 = vsel %vm2366, %v2424, %v2425
    %v2427 = vrot.slane %v2278, 1
    %v2428 = vrot.slane %v2280, 1
    %v2429 = vsel %vm2366, %v2427, %v2428
    %v2430 = vrot.slane %v2279, 1
    %v2431 = vrot.slane %v2281, 1
    %v2432 = vsel %vm2366, %v2430, %v2431
    %v2433 = vrot.slane %v2282, 1
    %v2434 = vrot.slane %v2284, 1
    %v2435 = vsel %vm2366, %v2433, %v2434
    %v2436 = vrot.slane %v2283, 1
    %v2437 = vrot.slane %v2285, 1
    %v2438 = vsel %vm2366, %v2436, %v2437
    %v2439 = vrot.slane %v2286, 1
    %v2440 = vrot.slane %v2288, 1
    %v2441 = vsel %vm2366, %v2439, %v2440
    %v2442 = vrot.slane %v2287, 1
    %v2443 = vrot.slane %v2289, 1
    %v2444 = vsel %vm2366, %v2442, %v2443
    %v2445 = vrot.slane %v2290, 1
    %v2446 = vrot.slane %v2292, 1
    %v2447 = vsel %vm2366, %v2445, %v2446
    %v2448 = vrot.slane %v2291, 1
    %v2449 = vrot.slane %v2293, 1
    %v2450 = vsel %vm2366, %v2448, %v2449
    %v2451 = vrot.slane %v2294, 1
    %v2452 = vrot.slane %v2296, 1
    %v2453 = vsel %vm2366, %v2451, %v2452
    %v2454 = vrot.slane %v2295, 1
    %v2455 = vrot.slane %v2297, 1
    %v2456 = vsel %vm2366, %v2454, %v2455
    %v2457 = vrot.slane %v2298, 1
    %v2458 = vrot.slane %v2300, 1
    %v2459 = vsel %vm2366, %v2457, %v2458
    %v2460 = vrot.slane %v2299, 1
    %v2461 = vrot.slane %v2301, 1
    %v2462 = vsel %vm2366, %v2460, %v2461
    %v2495 = vadd.f32 %v2134, %v2369
    %v2496 = vadd.f32 %v2135, %v2372
    %v2497 = vadd.f32 %v2136, %v2375
    %v2498 = vadd.f32 %v2137, %v2378
    %v2499 = vadd.f32 %v2138, %v2381
    %v2500 = vadd.f32 %v2139, %v2384
    %v2501 = vadd.f32 %v2140, %v2387
    %v2502 = vadd.f32 %v2141, %v2390
    %v2503 = vadd.f32 %v2142, %v2393
    %v2504 = vadd.f32 %v2143, %v2396
    %v2505 = vadd.f32 %v2144, %v2399
    %v2506 = vadd.f32 %v2145, %v2402
    %v2507 = vadd.f32 %v2146, %v2405
    %v2508 = vadd.f32 %v2147, %v2408
    %v2509 = vadd.f32 %v2148, %v2411
    %v2510 = vadd.f32 %v2149, %v2414
    %v2511 = vadd.f32 %v2150, %v2417
    %v2512 = vadd.f32 %v2151, %v2420
    %v2513 = vadd.f32 %v2152, %v2423
    %v2514 = vadd.f32 %v2153, %v2426
    %v2515 = vadd.f32 %v2154, %v2429
    %v2516 = vadd.f32 %v2155, %v2432
    %v2517 = vadd.f32 %v2156, %v2435
    %v2518 = vadd.f32 %v2157, %v2438
    %v2519 = vadd.f32 %v2158, %v2441
    %v2520 = vadd.f32 %v2159, %v2444
    %v2521 = vadd.f32 %v2160, %v2447
    %v2522 = vadd.f32 %v2161, %v2450
    %v2523 = vadd.f32 %v2162, %v2453
    %v2524 = vadd.f32 %v2163, %v2456
    %v2525 = vadd.f32 %v2164, %v2459
    %v2526 = vadd.f32 %v2165, %v2462
    %v2527 = vld [vmem:[#allocation4] sm:$0xfc]
    %v2528 = vld [vmem:[#allocation4 + $0x8] sm:$0xfc]
    %v2529 = vld [vmem:[#allocation4 + $0x10] sm:$0x3]
    %v2530 = vld [vmem:[#allocation4 + $0x18] sm:$0x3]
    %v2531 = vld [vmem:[#allocation4 + $0x20] sm:$0xfc]
    %v2532 = vld [vmem:[#allocation4 + $0x28] sm:$0xfc]
    %v2533 = vld [vmem:[#allocation4 + $0x30] sm:$0x3]
    %v2534 = vld [vmem:[#allocation4 + $0x38] sm:$0x3]
    %v2535 = vld [vmem:[#allocation4 + $0x40] sm:$0xfc]
    %v2536 = vld [vmem:[#allocation4 + $0x48] sm:$0xfc]
    %v2537 = vld [vmem:[#allocation4 + $0x50] sm:$0x3]
    %v2538 = vld [vmem:[#allocation4 + $0x58] sm:$0x3]
    %v2539 = vld [vmem:[#allocation4 + $0x60] sm:$0xfc]
    %v2540 = vld [vmem:[#allocation4 + $0x68] sm:$0xfc]
    %v2541 = vld [vmem:[#allocation4 + $0x70] sm:$0x3]
    %v2542 = vld [vmem:[#allocation4 + $0x78] sm:$0x3]
    %v2543 = vld [vmem:[#allocation4 + $0x80] sm:$0xfc]
    %v2544 = vld [vmem:[#allocation4 + $0x88] sm:$0xfc]
    %v2545 = vld [vmem:[#allocation4 + $0x90] sm:$0x3]
    %v2546 = vld [vmem:[#allocation4 + $0x98] sm:$0x3]
    %v2547 = vld [vmem:[#allocation4 + $0xa0] sm:$0xfc]
    %v2548 = vld [vmem:[#allocation4 + $0xa8] sm:$0xfc]
    %v2549 = vld [vmem:[#allocation4 + $0xb0] sm:$0x3]
    %v2550 = vld [vmem:[#allocation4 + $0xb8] sm:$0x3]
    %v2551 = vld [vmem:[#allocation4 + $0xc0] sm:$0xfc]
    %v2552 = vld [vmem:[#allocation4 + $0xc8] sm:$0xfc]
    %v2553 = vld [vmem:[#allocation4 + $0xd0] sm:$0x3]
    %v2554 = vld [vmem:[#allocation4 + $0xd8] sm:$0x3]
    %v2555 = vld [vmem:[#allocation4 + $0xe0] sm:$0xfc]
    %v2556 = vld [vmem:[#allocation4 + $0xe8] sm:$0xfc]
    %v2557 = vld [vmem:[#allocation4 + $0xf0] sm:$0x3]
    %v2558 = vld [vmem:[#allocation4 + $0xf8] sm:$0x3]
    %v2559 = vld [vmem:[#allocation4 + $0x140] sm:$0xfc]
    %v2560 = vld [vmem:[#allocation4 + $0x148] sm:$0xfc]
    %v2561 = vld [vmem:[#allocation4 + $0x150] sm:$0x3]
    %v2562 = vld [vmem:[#allocation4 + $0x158] sm:$0x3]
    %v2563 = vld [vmem:[#allocation4 + $0x160] sm:$0xfc]
    %v2564 = vld [vmem:[#allocation4 + $0x168] sm:$0xfc]
    %v2565 = vld [vmem:[#allocation4 + $0x170] sm:$0x3]
    %v2566 = vld [vmem:[#allocation4 + $0x178] sm:$0x3]
    %v2567 = vld [vmem:[#allocation4 + $0x180] sm:$0xfc]
    %v2568 = vld [vmem:[#allocation4 + $0x188] sm:$0xfc]
    %v2569 = vld [vmem:[#allocation4 + $0x190] sm:$0x3]
    %v2570 = vld [vmem:[#allocation4 + $0x198] sm:$0x3]
    %v2571 = vld [vmem:[#allocation4 + $0x1a0] sm:$0xfc]
    %v2572 = vld [vmem:[#allocation4 + $0x1a8] sm:$0xfc]
    %v2573 = vld [vmem:[#allocation4 + $0x1b0] sm:$0x3]
    %v2574 = vld [vmem:[#allocation4 + $0x1b8] sm:$0x3]
    %v2575 = vld [vmem:[#allocation4 + $0x1c0] sm:$0xfc]
    %v2576 = vld [vmem:[#allocation4 + $0x1c8] sm:$0xfc]
    %v2577 = vld [vmem:[#allocation4 + $0x1d0] sm:$0x3]
    %v2578 = vld [vmem:[#allocation4 + $0x1d8] sm:$0x3]
    %v2579 = vld [vmem:[#allocation4 + $0x1e0] sm:$0xfc]
    %v2580 = vld [vmem:[#allocation4 + $0x1e8] sm:$0xfc]
    %v2581 = vld [vmem:[#allocation4 + $0x1f0] sm:$0x3]
    %v2582 = vld [vmem:[#allocation4 + $0x1f8] sm:$0x3]
    %v2583 = vld [vmem:[#allocation4 + $0x200] sm:$0xfc]
    %v2584 = vld [vmem:[#allocation4 + $0x208] sm:$0xfc]
    %v2585 = vld [vmem:[#allocation4 + $0x210] sm:$0x3]
    %v2586 = vld [vmem:[#allocation4 + $0x218] sm:$0x3]
    %v2587 = vld [vmem:[#allocation4 + $0x220] sm:$0xfc]
    %v2588 = vld [vmem:[#allocation4 + $0x228] sm:$0xfc]
    %v2589 = vld [vmem:[#allocation4 + $0x230] sm:$0x3]
    %v2590 = vld [vmem:[#allocation4 + $0x238] sm:$0x3]
    %v2591 = vlaneseq
    %v2592 = vshrl.u32 %v2591, 7
    %v2593 = vsub.s32 2, %v2592
    %v2594 = vrot.slane %v2090, %v2593
    %v2595 = vlaneseq
    %v2596 = vshrl.u32 %v2595, 7
    %v2597 = vsub.s32 2, %v2596
    %v2598 = vrot.slane %v2091, %v2597
    %v2599 = vmul.f32 %v2527, %v2594
    %v2600 = vmul.f32 %v2528, %v2598
    %v2601 = vmul.f32 %v2529, %v2594
    %v2602 = vmul.f32 %v2530, %v2598
    %v2603 = vmul.f32 %v2531, %v2594
    %v2604 = vmul.f32 %v2532, %v2598
    %v2605 = vmul.f32 %v2533, %v2594
    %v2606 = vmul.f32 %v2534, %v2598
    %v2607 = vmul.f32 %v2535, %v2594
    %v2608 = vmul.f32 %v2536, %v2598
    %v2609 = vmul.f32 %v2537, %v2594
    %v2610 = vmul.f32 %v2538, %v2598
    %v2611 = vmul.f32 %v2539, %v2594
    %v2612 = vmul.f32 %v2540, %v2598
    %v2613 = vmul.f32 %v2541, %v2594
    %v2614 = vmul.f32 %v2542, %v2598
    %v2615 = vmul.f32 %v2543, %v2594
    %v2616 = vmul.f32 %v2544, %v2598
    %v2617 = vmul.f32 %v2545, %v2594
    %v2618 = vmul.f32 %v2546, %v2598
    %v2619 = vmul.f32 %v2547, %v2594
    %v2620 = vmul.f32 %v2548, %v2598
    %v2621 = vmul.f32 %v2549, %v2594
    %v2622 = vmul.f32 %v2550, %v2598
    %v2623 = vmul.f32 %v2551, %v2594
    %v2624 = vmul.f32 %v2552, %v2598
    %v2625 = vmul.f32 %v2553, %v2594
    %v2626 = vmul.f32 %v2554, %v2598
    %v2627 = vmul.f32 %v2555, %v2594
    %v2628 = vmul.f32 %v2556, %v2598
    %v2629 = vmul.f32 %v2557, %v2594
    %v2630 = vmul.f32 %v2558, %v2598
    %v2631 = vmul.f32 %v2559, %v2594
    %v2632 = vmul.f32 %v2560, %v2598
    %v2633 = vmul.f32 %v2561, %v2594
    %v2634 = vmul.f32 %v2562, %v2598
    %v2635 = vmul.f32 %v2563, %v2594
    %v2636 = vmul.f32 %v2564, %v2598
    %v2637 = vmul.f32 %v2565, %v2594
    %v2638 = vmul.f32 %v2566, %v2598
    %v2639 = vmul.f32 %v2567, %v2594
    %v2640 = vmul.f32 %v2568, %v2598
    %v2641 = vmul.f32 %v2569, %v2594
    %v2642 = vmul.f32 %v2570, %v2598
    %v2643 = vmul.f32 %v2571, %v2594
    %v2644 = vmul.f32 %v2572, %v2598
    %v2645 = vmul.f32 %v2573, %v2594
    %v2646 = vmul.f32 %v2574, %v2598
    %v2647 = vmul.f32 %v2575, %v2594
    %v2648 = vmul.f32 %v2576, %v2598
    %v2649 = vmul.f32 %v2577, %v2594
    %v2650 = vmul.f32 %v2578, %v2598
    %v2651 = vmul.f32 %v2579, %v2594
    %v2652 = vmul.f32 %v2580, %v2598
    %v2653 = vmul.f32 %v2581, %v2594
    %v2654 = vmul.f32 %v2582, %v2598
    %v2655 = vmul.f32 %v2583, %v2594
    %v2656 = vmul.f32 %v2584, %v2598
    %v2657 = vmul.f32 %v2585, %v2594
    %v2658 = vmul.f32 %v2586, %v2598
    %v2659 = vmul.f32 %v2587, %v2594
    %v2660 = vmul.f32 %v2588, %v2598
    %v2661 = vmul.f32 %v2589, %v2594
    %v2662 = vmul.f32 %v2590, %v2598
    %vm2727 = vcmask 1045504
    %v2728 = vrot.slane %v2599, 2
    %v2729 = vrot.slane %v2601, 2
    %v2730 = vsel %vm2727, %v2728, %v2729
    %v2731 = vrot.slane %v2600, 2
    %v2732 = vrot.slane %v2602, 2
    %v2733 = vsel %vm2727, %v2731, %v2732
    %v2734 = vrot.slane %v2603, 2
    %v2735 = vrot.slane %v2605, 2
    %v2736 = vsel %vm2727, %v2734, %v2735
    %v2737 = vrot.slane %v2604, 2
    %v2738 = vrot.slane %v2606, 2
    %v2739 = vsel %vm2727, %v2737, %v2738
    %v2740 = vrot.slane %v2607, 2
    %v2741 = vrot.slane %v2609, 2
    %v2742 = vsel %vm2727, %v2740, %v2741
    %v2743 = vrot.slane %v2608, 2
    %v2744 = vrot.slane %v2610, 2
    %v2745 = vsel %vm2727, %v2743, %v2744
    %v2746 = vrot.slane %v2611, 2
    %v2747 = vrot.slane %v2613, 2
    %v2748 = vsel %vm2727, %v2746, %v2747
    %v2749 = vrot.slane %v2612, 2
    %v2750 = vrot.slane %v2614, 2
    %v2751 = vsel %vm2727, %v2749, %v2750
    %v2752 = vrot.slane %v2615, 2
    %v2753 = vrot.slane %v2617, 2
    %v2754 = vsel %vm2727, %v2752, %v2753
    %v2755 = vrot.slane %v2616, 2
    %v2756 = vrot.slane %v2618, 2
    %v2757 = vsel %vm2727, %v2755, %v2756
    %v2758 = vrot.slane %v2619, 2
    %v2759 = vrot.slane %v2621, 2
    %v2760 = vsel %vm2727, %v2758, %v2759
    %v2761 = vrot.slane %v2620, 2
    %v2762 = vrot.slane %v2622, 2
    %v2763 = vsel %vm2727, %v2761, %v2762
    %v2764 = vrot.slane %v2623, 2
    %v2765 = vrot.slane %v2625, 2
    %v2766 = vsel %vm2727, %v2764, %v2765
    %v2767 = vrot.slane %v2624, 2
    %v2768 = vrot.slane %v2626, 2
    %v2769 = vsel %vm2727, %v2767, %v2768
    %v2770 = vrot.slane %v2627, 2
    %v2771 = vrot.slane %v2629, 2
    %v2772 = vsel %vm2727, %v2770, %v2771
    %v2773 = vrot.slane %v2628, 2
    %v2774 = vrot.slane %v2630, 2
    %v2775 = vsel %vm2727, %v2773, %v2774
    %v2776 = vrot.slane %v2631, 2
    %v2777 = vrot.slane %v2633, 2
    %v2778 = vsel %vm2727, %v2776, %v2777
    %v2779 = vrot.slane %v2632, 2
    %v2780 = vrot.slane %v2634, 2
    %v2781 = vsel %vm2727, %v2779, %v2780
    %v2782 = vrot.slane %v2635, 2
    %v2783 = vrot.slane %v2637, 2
    %v2784 = vsel %vm2727, %v2782, %v2783
    %v2785 = vrot.slane %v2636, 2
    %v2786 = vrot.slane %v2638, 2
    %v2787 = vsel %vm2727, %v2785, %v2786
    %v2788 = vrot.slane %v2639, 2
    %v2789 = vrot.slane %v2641, 2
    %v2790 = vsel %vm2727, %v2788, %v2789
    %v2791 = vrot.slane %v2640, 2
    %v2792 = vrot.slane %v2642, 2
    %v2793 = vsel %vm2727, %v2791, %v2792
    %v2794 = vrot.slane %v2643, 2
    %v2795 = vrot.slane %v2645, 2
    %v2796 = vsel %vm2727, %v2794, %v2795
    %v2797 = vrot.slane %v2644, 2
    %v2798 = vrot.slane %v2646, 2
    %v2799 = vsel %vm2727, %v2797, %v2798
    %v2800 = vrot.slane %v2647, 2
    %v2801 = vrot.slane %v2649, 2
    %v2802 = vsel %vm2727, %v2800, %v2801
    %v2803 = vrot.slane %v2648, 2
    %v2804 = vrot.slane %v2650, 2
    %v2805 = vsel %vm2727, %v2803, %v2804
    %v2806 = vrot.slane %v2651, 2
    %v2807 = vrot.slane %v2653, 2
    %v2808 = vsel %vm2727, %v2806, %v2807
    %v2809 = vrot.slane %v2652, 2
    %v2810 = vrot.slane %v2654, 2
    %v2811 = vsel %vm2727, %v2809, %v2810
    %v2812 = vrot.slane %v2655, 2
    %v2813 = vrot.slane %v2657, 2
    %v2814 = vsel %vm2727, %v2812, %v2813
    %v2815 = vrot.slane %v2656, 2
    %v2816 = vrot.slane %v2658, 2
    %v2817 = vsel %vm2727, %v2815, %v2816
    %v2818 = vrot.slane %v2659, 2
    %v2819 = vrot.slane %v2661, 2
    %v2820 = vsel %vm2727, %v2818, %v2819
    %v2821 = vrot.slane %v2660, 2
    %v2822 = vrot.slane %v2662, 2
    %v2823 = vsel %vm2727, %v2821, %v2822
    %v2856 = vadd.f32 %v2495, %v2730
    %v2857 = vadd.f32 %v2496, %v2733
    %v2858 = vadd.f32 %v2497, %v2736
    %v2859 = vadd.f32 %v2498, %v2739
    %v2860 = vadd.f32 %v2499, %v2742
    %v2861 = vadd.f32 %v2500, %v2745
    %v2862 = vadd.f32 %v2501, %v2748
    %v2863 = vadd.f32 %v2502, %v2751
    %v2864 = vadd.f32 %v2503, %v2754
    %v2865 = vadd.f32 %v2504, %v2757
    %v2866 = vadd.f32 %v2505, %v2760
    %v2867 = vadd.f32 %v2506, %v2763
    %v2868 = vadd.f32 %v2507, %v2766
    %v2869 = vadd.f32 %v2508, %v2769
    %v2870 = vadd.f32 %v2509, %v2772
    %v2871 = vadd.f32 %v2510, %v2775
    %v2872 = vadd.f32 %v2511, %v2778
    %v2873 = vadd.f32 %v2512, %v2781
    %v2874 = vadd.f32 %v2513, %v2784
    %v2875 = vadd.f32 %v2514, %v2787
    %v2876 = vadd.f32 %v2515, %v2790
    %v2877 = vadd.f32 %v2516, %v2793
    %v2878 = vadd.f32 %v2517, %v2796
    %v2879 = vadd.f32 %v2518, %v2799
    %v2880 = vadd.f32 %v2519, %v2802
    %v2881 = vadd.f32 %v2520, %v2805
    %v2882 = vadd.f32 %v2521, %v2808
    %v2883 = vadd.f32 %v2522, %v2811
    %v2884 = vadd.f32 %v2523, %v2814
    %v2885 = vadd.f32 %v2524, %v2817
    %v2886 = vadd.f32 %v2525, %v2820
    %v2887 = vadd.f32 %v2526, %v2823
    %v2888 = vld [vmem:[%s1961] sm:$0xff]
    %v2889 = vld [vmem:[%s1961 + $0x8] sm:$0xff]
    %v2890 = vld [vmem:[%s1961 + $0x20] sm:$0xff]
    %v2891 = vld [vmem:[%s1961 + $0x28] sm:$0xff]
    %v2892 = vld [vmem:[%s1961 + $0x40] sm:$0xff]
    %v2893 = vld [vmem:[%s1961 + $0x48] sm:$0xff]
    %v2894 = vld [vmem:[%s1961 + $0x60] sm:$0xff]
    %v2895 = vld [vmem:[%s1961 + $0x68] sm:$0xff]
    %v2896 = vld [vmem:[%s1961 + $0x80] sm:$0xff]
    %v2897 = vld [vmem:[%s1961 + $0x88] sm:$0xff]
    %v2898 = vld [vmem:[%s1961 + $0xa0] sm:$0xff]
    %v2899 = vld [vmem:[%s1961 + $0xa8] sm:$0xff]
    %v2900 = vld [vmem:[%s1961 + $0xc0] sm:$0xff]
    %v2901 = vld [vmem:[%s1961 + $0xc8] sm:$0xff]
    %v2902 = vld [vmem:[%s1961 + $0xe0] sm:$0xff]
    %v2903 = vld [vmem:[%s1961 + $0xe8] sm:$0xff]
    %v2904 = vld [vmem:[%s1961 + $0x140] sm:$0xff]
    %v2905 = vld [vmem:[%s1961 + $0x148] sm:$0xff]
    %v2906 = vld [vmem:[%s1961 + $0x160] sm:$0xff]
    %v2907 = vld [vmem:[%s1961 + $0x168] sm:$0xff]
    %v2908 = vld [vmem:[%s1961 + $0x180] sm:$0xff]
    %v2909 = vld [vmem:[%s1961 + $0x188] sm:$0xff]
    %v2910 = vld [vmem:[%s1961 + $0x1a0] sm:$0xff]
    %v2911 = vld [vmem:[%s1961 + $0x1a8] sm:$0xff]
    %v2912 = vld [vmem:[%s1961 + $0x1c0] sm:$0xff]
    %v2913 = vld [vmem:[%s1961 + $0x1c8] sm:$0xff]
    %v2914 = vld [vmem:[%s1961 + $0x1e0] sm:$0xff]
    %v2915 = vld [vmem:[%s1961 + $0x1e8] sm:$0xff]
    %v2916 = vld [vmem:[%s1961 + $0x200] sm:$0xff]
    %v2917 = vld [vmem:[%s1961 + $0x208] sm:$0xff]
    %v2918 = vld [vmem:[%s1961 + $0x220] sm:$0xff]
    %v2919 = vld [vmem:[%s1961 + $0x228] sm:$0xff]
    %v2920 = vlaneseq
    %v2921 = vshrl.u32 %v2920, 7
    %v2922 = vsub.s32 3, %v2921
    %v2923 = vrot.slane %v2090, %v2922
    %v2924 = vlaneseq
    %v2925 = vshrl.u32 %v2924, 7
    %v2926 = vsub.s32 3, %v2925
    %v2927 = vrot.slane %v2091, %v2926
    %v2928 = vmul.f32 %v2888, %v2923
    %v2929 = vmul.f32 %v2889, %v2927
    %v2930 = vmul.f32 %v2890, %v2923
    %v2931 = vmul.f32 %v2891, %v2927
    %v2932 = vmul.f32 %v2892, %v2923
    %v2933 = vmul.f32 %v2893, %v2927
    %v2934 = vmul.f32 %v2894, %v2923
    %v2935 = vmul.f32 %v2895, %v2927
    %v2936 = vmul.f32 %v2896, %v2923
    %v2937 = vmul.f32 %v2897, %v2927
    %v2938 = vmul.f32 %v2898, %v2923
    %v2939 = vmul.f32 %v2899, %v2927
    %v2940 = vmul.f32 %v2900, %v2923
    %v2941 = vmul.f32 %v2901, %v2927
    %v2942 = vmul.f32 %v2902, %v2923
    %v2943 = vmul.f32 %v2903, %v2927
    %v2944 = vmul.f32 %v2904, %v2923
    %v2945 = vmul.f32 %v2905, %v2927
    %v2946 = vmul.f32 %v2906, %v2923
    %v2947 = vmul.f32 %v2907, %v2927
    %v2948 = vmul.f32 %v2908, %v2923
    %v2949 = vmul.f32 %v2909, %v2927
    %v2950 = vmul.f32 %v2910, %v2923
    %v2951 = vmul.f32 %v2911, %v2927
    %v2952 = vmul.f32 %v2912, %v2923
    %v2953 = vmul.f32 %v2913, %v2927
    %v2954 = vmul.f32 %v2914, %v2923
    %v2955 = vmul.f32 %v2915, %v2927
    %v2956 = vmul.f32 %v2916, %v2923
    %v2957 = vmul.f32 %v2917, %v2927
    %v2958 = vmul.f32 %v2918, %v2923
    %v2959 = vmul.f32 %v2919, %v2927
    %v2960 = vadd.f32 %v2856, %v2928
    %v2961 = vadd.f32 %v2857, %v2929
    %v2962 = vadd.f32 %v2858, %v2930
    %v2963 = vadd.f32 %v2859, %v2931
    %v2964 = vadd.f32 %v2860, %v2932
    %v2965 = vadd.f32 %v2861, %v2933
    %v2966 = vadd.f32 %v2862, %v2934
    %v2967 = vadd.f32 %v2863, %v2935
    %v2968 = vadd.f32 %v2864, %v2936
    %v2969 = vadd.f32 %v2865, %v2937
    %v2970 = vadd.f32 %v2866, %v2938
    %v2971 = vadd.f32 %v2867, %v2939
    %v2972 = vadd.f32 %v2868, %v2940
    %v2973 = vadd.f32 %v2869, %v2941
    %v2974 = vadd.f32 %v2870, %v2942
    %v2975 = vadd.f32 %v2871, %v2943
    %v2976 = vadd.f32 %v2872, %v2944
    %v2977 = vadd.f32 %v2873, %v2945
    %v2978 = vadd.f32 %v2874, %v2946
    %v2979 = vadd.f32 %v2875, %v2947
    %v2980 = vadd.f32 %v2876, %v2948
    %v2981 = vadd.f32 %v2877, %v2949
    %v2982 = vadd.f32 %v2878, %v2950
    %v2983 = vadd.f32 %v2879, %v2951
    %v2984 = vadd.f32 %v2880, %v2952
    %v2985 = vadd.f32 %v2881, %v2953
    %v2986 = vadd.f32 %v2882, %v2954
    %v2987 = vadd.f32 %v2883, %v2955
    %v2988 = vadd.f32 %v2884, %v2956
    %v2989 = vadd.f32 %v2885, %v2957
    %v2990 = vadd.f32 %v2886, %v2958
    %v2991 = vadd.f32 %v2887, %v2959
    %v2992 = vld [vmem:[%s1961] sm:$0xfe]
    %v2993 = vld [vmem:[%s1961 + $0x8] sm:$0xfe]
    %v2994 = vld [vmem:[%s1961 + $0x10] sm:$0x1]
    %v2995 = vld [vmem:[%s1961 + $0x18] sm:$0x1]
    %v2996 = vld [vmem:[%s1961 + $0x20] sm:$0xfe]
    %v2997 = vld [vmem:[%s1961 + $0x28] sm:$0xfe]
    %v2998 = vld [vmem:[%s1961 + $0x30] sm:$0x1]
    %v2999 = vld [vmem:[%s1961 + $0x38] sm:$0x1]
    %v3000 = vld [vmem:[%s1961 + $0x40] sm:$0xfe]
    %v3001 = vld [vmem:[%s1961 + $0x48] sm:$0xfe]
    %v3002 = vld [vmem:[%s1961 + $0x50] sm:$0x1]
    %v3003 = vld [vmem:[%s1961 + $0x58] sm:$0x1]
    %v3004 = vld [vmem:[%s1961 + $0x60] sm:$0xfe]
    %v3005 = vld [vmem:[%s1961 + $0x68] sm:$0xfe]
    %v3006 = vld [vmem:[%s1961 + $0x70] sm:$0x1]
    %v3007 = vld [vmem:[%s1961 + $0x78] sm:$0x1]
    %v3008 = vld [vmem:[%s1961 + $0x80] sm:$0xfe]
    %v3009 = vld [vmem:[%s1961 + $0x88] sm:$0xfe]
    %v3010 = vld [vmem:[%s1961 + $0x90] sm:$0x1]
    %v3011 = vld [vmem:[%s1961 + $0x98] sm:$0x1]
    %v3012 = vld [vmem:[%s1961 + $0xa0] sm:$0xfe]
    %v3013 = vld [vmem:[%s1961 + $0xa8] sm:$0xfe]
    %v3014 = vld [vmem:[%s1961 + $0xb0] sm:$0x1]
    %v3015 = vld [vmem:[%s1961 + $0xb8] sm:$0x1]
    %v3016 = vld [vmem:[%s1961 + $0xc0] sm:$0xfe]
    %v3017 = vld [vmem:[%s1961 + $0xc8] sm:$0xfe]
    %v3018 = vld [vmem:[%s1961 + $0xd0] sm:$0x1]
    %v3019 = vld [vmem:[%s1961 + $0xd8] sm:$0x1]
    %v3020 = vld [vmem:[%s1961 + $0xe0] sm:$0xfe]
    %v3021 = vld [vmem:[%s1961 + $0xe8] sm:$0xfe]
    %v3022 = vld [vmem:[%s1961 + $0xf0] sm:$0x1]
    %v3023 = vld [vmem:[%s1961 + $0xf8] sm:$0x1]
    %v3024 = vld [vmem:[%s1961 + $0x140] sm:$0xfe]
    %v3025 = vld [vmem:[%s1961 + $0x148] sm:$0xfe]
    %v3026 = vld [vmem:[%s1961 + $0x150] sm:$0x1]
    %v3027 = vld [vmem:[%s1961 + $0x158] sm:$0x1]
    %v3028 = vld [vmem:[%s1961 + $0x160] sm:$0xfe]
    %v3029 = vld [vmem:[%s1961 + $0x168] sm:$0xfe]
    %v3030 = vld [vmem:[%s1961 + $0x170] sm:$0x1]
    %v3031 = vld [vmem:[%s1961 + $0x178] sm:$0x1]
    %v3032 = vld [vmem:[%s1961 + $0x180] sm:$0xfe]
    %v3033 = vld [vmem:[%s1961 + $0x188] sm:$0xfe]
    %v3034 = vld [vmem:[%s1961 + $0x190] sm:$0x1]
    %v3035 = vld [vmem:[%s1961 + $0x198] sm:$0x1]
    %v3036 = vld [vmem:[%s1961 + $0x1a0] sm:$0xfe]
    %v3037 = vld [vmem:[%s1961 + $0x1a8] sm:$0xfe]
    %v3038 = vld [vmem:[%s1961 + $0x1b0] sm:$0x1]
    %v3039 = vld [vmem:[%s1961 + $0x1b8] sm:$0x1]
    %v3040 = vld [vmem:[%s1961 + $0x1c0] sm:$0xfe]
    %v3041 = vld [vmem:[%s1961 + $0x1c8] sm:$0xfe]
    %v3042 = vld [vmem:[%s1961 + $0x1d0] sm:$0x1]
    %v3043 = vld [vmem:[%s1961 + $0x1d8] sm:$0x1]
    %v3044 = vld [vmem:[%s1961 + $0x1e0] sm:$0xfe]
    %v3045 = vld [vmem:[%s1961 + $0x1e8] sm:$0xfe]
    %v3046 = vld [vmem:[%s1961 + $0x1f0] sm:$0x1]
    %v3047 = vld [vmem:[%s1961 + $0x1f8] sm:$0x1]
    %v3048 = vld [vmem:[%s1961 + $0x200] sm:$0xfe]
    %v3049 = vld [vmem:[%s1961 + $0x208] sm:$0xfe]
    %v3050 = vld [vmem:[%s1961 + $0x210] sm:$0x1]
    %v3051 = vld [vmem:[%s1961 + $0x218] sm:$0x1]
    %v3052 = vld [vmem:[%s1961 + $0x220] sm:$0xfe]
    %v3053 = vld [vmem:[%s1961 + $0x228] sm:$0xfe]
    %v3054 = vld [vmem:[%s1961 + $0x230] sm:$0x1]
    %v3055 = vld [vmem:[%s1961 + $0x238] sm:$0x1]
    %v3056 = vlaneseq
    %v3057 = vshrl.u32 %v3056, 7
    %v3058 = vsub.s32 4, %v3057
    %v3059 = vrot.slane %v2090, %v3058
    %v3060 = vlaneseq
    %v3061 = vshrl.u32 %v3060, 7
    %v3062 = vsub.s32 4, %v3061
    %v3063 = vrot.slane %v2091, %v3062
    %v3064 = vmul.f32 %v2992, %v3059
    %v3065 = vmul.f32 %v2993, %v3063
    %v3066 = vmul.f32 %v2994, %v3059
    %v3067 = vmul.f32 %v2995, %v3063
    %v3068 = vmul.f32 %v2996, %v3059
    %v3069 = vmul.f32 %v2997, %v3063
    %v3070 = vmul.f32 %v2998, %v3059
    %v3071 = vmul.f32 %v2999, %v3063
    %v3072 = vmul.f32 %v3000, %v3059
    %v3073 = vmul.f32 %v3001, %v3063
    %v3074 = vmul.f32 %v3002, %v3059
    %v3075 = vmul.f32 %v3003, %v3063
    %v3076 = vmul.f32 %v3004, %v3059
    %v3077 = vmul.f32 %v3005, %v3063
    %v3078 = vmul.f32 %v3006, %v3059
    %v3079 = vmul.f32 %v3007, %v3063
    %v3080 = vmul.f32 %v3008, %v3059
    %v3081 = vmul.f32 %v3009, %v3063
    %v3082 = vmul.f32 %v3010, %v3059
    %v3083 = vmul.f32 %v3011, %v3063
    %v3084 = vmul.f32 %v3012, %v3059
    %v3085 = vmul.f32 %v3013, %v3063
    %v3086 = vmul.f32 %v3014, %v3059
    %v3087 = vmul.f32 %v3015, %v3063
    %v3088 = vmul.f32 %v3016, %v3059
    %v3089 = vmul.f32 %v3017, %v3063
    %v3090 = vmul.f32 %v3018, %v3059
    %v3091 = vmul.f32 %v3019, %v3063
    %v3092 = vmul.f32 %v3020, %v3059
    %v3093 = vmul.f32 %v3021, %v3063
    %v3094 = vmul.f32 %v3022, %v3059
    %v3095 = vmul.f32 %v3023, %v3063
    %v3096 = vmul.f32 %v3024, %v3059
    %v3097 = vmul.f32 %v3025, %v3063
    %v3098 = vmul.f32 %v3026, %v3059
    %v3099 = vmul.f32 %v3027, %v3063
    %v3100 = vmul.f32 %v3028, %v3059
    %v3101 = vmul.f32 %v3029, %v3063
    %v3102 = vmul.f32 %v3030, %v3059
    %v3103 = vmul.f32 %v3031, %v3063
    %v3104 = vmul.f32 %v3032, %v3059
    %v3105 = vmul.f32 %v3033, %v3063
    %v3106 = vmul.f32 %v3034, %v3059
    %v3107 = vmul.f32 %v3035, %v3063
    %v3108 = vmul.f32 %v3036, %v3059
    %v3109 = vmul.f32 %v3037, %v3063
    %v3110 = vmul.f32 %v3038, %v3059
    %v3111 = vmul.f32 %v3039, %v3063
    %v3112 = vmul.f32 %v3040, %v3059
    %v3113 = vmul.f32 %v3041, %v3063
    %v3114 = vmul.f32 %v3042, %v3059
    %v3115 = vmul.f32 %v3043, %v3063
    %v3116 = vmul.f32 %v3044, %v3059
    %v3117 = vmul.f32 %v3045, %v3063
    %v3118 = vmul.f32 %v3046, %v3059
    %v3119 = vmul.f32 %v3047, %v3063
    %v3120 = vmul.f32 %v3048, %v3059
    %v3121 = vmul.f32 %v3049, %v3063
    %v3122 = vmul.f32 %v3050, %v3059
    %v3123 = vmul.f32 %v3051, %v3063
    %v3124 = vmul.f32 %v3052, %v3059
    %v3125 = vmul.f32 %v3053, %v3063
    %v3126 = vmul.f32 %v3054, %v3059
    %v3127 = vmul.f32 %v3055, %v3063
    %v3192 = vrot.slane %v3064, 1
    %v3193 = vrot.slane %v3066, 1
    %v3194 = vsel %vm2366, %v3192, %v3193
    %v3195 = vrot.slane %v3065, 1
    %v3196 = vrot.slane %v3067, 1
    %v3197 = vsel %vm2366, %v3195, %v3196
    %v3198 = vrot.slane %v3068, 1
    %v3199 = vrot.slane %v3070, 1
    %v3200 = vsel %vm2366, %v3198, %v3199
    %v3201 = vrot.slane %v3069, 1
    %v3202 = vrot.slane %v3071, 1
    %v3203 = vsel %vm2366, %v3201, %v3202
    %v3204 = vrot.slane %v3072, 1
    %v3205 = vrot.slane %v3074, 1
    %v3206 = vsel %vm2366, %v3204, %v3205
    %v3207 = vrot.slane %v3073, 1
    %v3208 = vrot.slane %v3075, 1
    %v3209 = vsel %vm2366, %v3207, %v3208
    %v3210 = vrot.slane %v3076, 1
    %v3211 = vrot.slane %v3078, 1
    %v3212 = vsel %vm2366, %v3210, %v3211
    %v3213 = vrot.slane %v3077, 1
    %v3214 = vrot.slane %v3079, 1
    %v3215 = vsel %vm2366, %v3213, %v3214
    %v3216 = vrot.slane %v3080, 1
    %v3217 = vrot.slane %v3082, 1
    %v3218 = vsel %vm2366, %v3216, %v3217
    %v3219 = vrot.slane %v3081, 1
    %v3220 = vrot.slane %v3083, 1
    %v3221 = vsel %vm2366, %v3219, %v3220
    %v3222 = vrot.slane %v3084, 1
    %v3223 = vrot.slane %v3086, 1
    %v3224 = vsel %vm2366, %v3222, %v3223
    %v3225 = vrot.slane %v3085, 1
    %v3226 = vrot.slane %v3087, 1
    %v3227 = vsel %vm2366, %v3225, %v3226
    %v3228 = vrot.slane %v3088, 1
    %v3229 = vrot.slane %v3090, 1
    %v3230 = vsel %vm2366, %v3228, %v3229
    %v3231 = vrot.slane %v3089, 1
    %v3232 = vrot.slane %v3091, 1
    %v3233 = vsel %vm2366, %v3231, %v3232
    %v3234 = vrot.slane %v3092, 1
    %v3235 = vrot.slane %v3094, 1
    %v3236 = vsel %vm2366, %v3234, %v3235
    %v3237 = vrot.slane %v3093, 1
    %v3238 = vrot.slane %v3095, 1
    %v3239 = vsel %vm2366, %v3237, %v3238
    %v3240 = vrot.slane %v3096, 1
    %v3241 = vrot.slane %v3098, 1
    %v3242 = vsel %vm2366, %v3240, %v3241
    %v3243 = vrot.slane %v3097, 1
    %v3244 = vrot.slane %v3099, 1
    %v3245 = vsel %vm2366, %v3243, %v3244
    %v3246 = vrot.slane %v3100, 1
    %v3247 = vrot.slane %v3102, 1
    %v3248 = vsel %vm2366, %v3246, %v3247
    %v3249 = vrot.slane %v3101, 1
    %v3250 = vrot.slane %v3103, 1
    %v3251 = vsel %vm2366, %v3249, %v3250
    %v3252 = vrot.slane %v3104, 1
    %v3253 = vrot.slane %v3106, 1
    %v3254 = vsel %vm2366, %v3252, %v3253
    %v3255 = vrot.slane %v3105, 1
    %v3256 = vrot.slane %v3107, 1
    %v3257 = vsel %vm2366, %v3255, %v3256
    %v3258 = vrot.slane %v3108, 1
    %v3259 = vrot.slane %v3110, 1
    %v3260 = vsel %vm2366, %v3258, %v3259
    %v3261 = vrot.slane %v3109, 1
    %v3262 = vrot.slane %v3111, 1
    %v3263 = vsel %vm2366, %v3261, %v3262
    %v3264 = vrot.slane %v3112, 1
    %v3265 = vrot.slane %v3114, 1
    %v3266 = vsel %vm2366, %v3264, %v3265
    %v3267 = vrot.slane %v3113, 1
    %v3268 = vrot.slane %v3115, 1
    %v3269 = vsel %vm2366, %v3267, %v3268
    %v3270 = vrot.slane %v3116, 1
    %v3271 = vrot.slane %v3118, 1
    %v3272 = vsel %vm2366, %v3270, %v3271
    %v3273 = vrot.slane %v3117, 1
    %v3274 = vrot.slane %v3119, 1
    %v3275 = vsel %vm2366, %v3273, %v3274
    %v3276 = vrot.slane %v3120, 1
    %v3277 = vrot.slane %v3122, 1
    %v3278 = vsel %vm2366, %v3276, %v3277
    %v3279 = vrot.slane %v3121, 1
    %v3280 = vrot.slane %v3123, 1
    %v3281 = vsel %vm2366, %v3279, %v3280
    %v3282 = vrot.slane %v3124, 1
    %v3283 = vrot.slane %v3126, 1
    %v3284 = vsel %vm2366, %v3282, %v3283
    %v3285 = vrot.slane %v3125, 1
    %v3286 = vrot.slane %v3127, 1
    %v3287 = vsel %vm2366, %v3285, %v3286
    %v3320 = vadd.f32 %v2960, %v3194
    %v3321 = vadd.f32 %v2961, %v3197
    %v3322 = vadd.f32 %v2962, %v3200
    %v3323 = vadd.f32 %v2963, %v3203
    %v3324 = vadd.f32 %v2964, %v3206
    %v3325 = vadd.f32 %v2965, %v3209
    %v3326 = vadd.f32 %v2966, %v3212
    %v3327 = vadd.f32 %v2967, %v3215
    %v3328 = vadd.f32 %v2968, %v3218
    %v3329 = vadd.f32 %v2969, %v3221
    %v3330 = vadd.f32 %v2970, %v3224
    %v3331 = vadd.f32 %v2971, %v3227
    %v3332 = vadd.f32 %v2972, %v3230
    %v3333 = vadd.f32 %v2973, %v3233
    %v3334 = vadd.f32 %v2974, %v3236
    %v3335 = vadd.f32 %v2975, %v3239
    %v3336 = vadd.f32 %v2976, %v3242
    %v3337 = vadd.f32 %v2977, %v3245
    %v3338 = vadd.f32 %v2978, %v3248
    %v3339 = vadd.f32 %v2979, %v3251
    %v3340 = vadd.f32 %v2980, %v3254
    %v3341 = vadd.f32 %v2981, %v3257
    %v3342 = vadd.f32 %v2982, %v3260
    %v3343 = vadd.f32 %v2983, %v3263
    %v3344 = vadd.f32 %v2984, %v3266
    %v3345 = vadd.f32 %v2985, %v3269
    %v3346 = vadd.f32 %v2986, %v3272
    %v3347 = vadd.f32 %v2987, %v3275
    %v3348 = vadd.f32 %v2988, %v3278
    %v3349 = vadd.f32 %v2989, %v3281
    %v3350 = vadd.f32 %v2990, %v3284
    %v3351 = vadd.f32 %v2991, %v3287
    %v3352 = vld [vmem:[%s1961] sm:$0xfc]
    %v3353 = vld [vmem:[%s1961 + $0x8] sm:$0xfc]
    %v3354 = vld [vmem:[%s1961 + $0x10] sm:$0x3]
    %v3355 = vld [vmem:[%s1961 + $0x18] sm:$0x3]
    %v3356 = vld [vmem:[%s1961 + $0x20] sm:$0xfc]
    %v3357 = vld [vmem:[%s1961 + $0x28] sm:$0xfc]
    %v3358 = vld [vmem:[%s1961 + $0x30] sm:$0x3]
    %v3359 = vld [vmem:[%s1961 + $0x38] sm:$0x3]
    %v3360 = vld [vmem:[%s1961 + $0x40] sm:$0xfc]
    %v3361 = vld [vmem:[%s1961 + $0x48] sm:$0xfc]
    %v3362 = vld [vmem:[%s1961 + $0x50] sm:$0x3]
    %v3363 = vld [vmem:[%s1961 + $0x58] sm:$0x3]
    %v3364 = vld [vmem:[%s1961 + $0x60] sm:$0xfc]
    %v3365 = vld [vmem:[%s1961 + $0x68] sm:$0xfc]
    %v3366 = vld [vmem:[%s1961 + $0x70] sm:$0x3]
    %v3367 = vld [vmem:[%s1961 + $0x78] sm:$0x3]
    %v3368 = vld [vmem:[%s1961 + $0x80] sm:$0xfc]
    %v3369 = vld [vmem:[%s1961 + $0x88] sm:$0xfc]
    %v3370 = vld [vmem:[%s1961 + $0x90] sm:$0x3]
    %v3371 = vld [vmem:[%s1961 + $0x98] sm:$0x3]
    %v3372 = vld [vmem:[%s1961 + $0xa0] sm:$0xfc]
    %v3373 = vld [vmem:[%s1961 + $0xa8] sm:$0xfc]
    %v3374 = vld [vmem:[%s1961 + $0xb0] sm:$0x3]
    %v3375 = vld [vmem:[%s1961 + $0xb8] sm:$0x3]
    %v3376 = vld [vmem:[%s1961 + $0xc0] sm:$0xfc]
    %v3377 = vld [vmem:[%s1961 + $0xc8] sm:$0xfc]
    %v3378 = vld [vmem:[%s1961 + $0xd0] sm:$0x3]
    %v3379 = vld [vmem:[%s1961 + $0xd8] sm:$0x3]
    %v3380 = vld [vmem:[%s1961 + $0xe0] sm:$0xfc]
    %v3381 = vld [vmem:[%s1961 + $0xe8] sm:$0xfc]
    %v3382 = vld [vmem:[%s1961 + $0xf0] sm:$0x3]
    %v3383 = vld [vmem:[%s1961 + $0xf8] sm:$0x3]
    %v3384 = vld [vmem:[%s1961 + $0x140] sm:$0xfc]
    %v3385 = vld [vmem:[%s1961 + $0x148] sm:$0xfc]
    %v3386 = vld [vmem:[%s1961 + $0x150] sm:$0x3]
    %v3387 = vld [vmem:[%s1961 + $0x158] sm:$0x3]
    %v3388 = vld [vmem:[%s1961 + $0x160] sm:$0xfc]
    %v3389 = vld [vmem:[%s1961 + $0x168] sm:$0xfc]
    %v3390 = vld [vmem:[%s1961 + $0x170] sm:$0x3]
    %v3391 = vld [vmem:[%s1961 + $0x178] sm:$0x3]
    %v3392 = vld [vmem:[%s1961 + $0x180] sm:$0xfc]
    %v3393 = vld [vmem:[%s1961 + $0x188] sm:$0xfc]
    %v3394 = vld [vmem:[%s1961 + $0x190] sm:$0x3]
    %v3395 = vld [vmem:[%s1961 + $0x198] sm:$0x3]
    %v3396 = vld [vmem:[%s1961 + $0x1a0] sm:$0xfc]
    %v3397 = vld [vmem:[%s1961 + $0x1a8] sm:$0xfc]
    %v3398 = vld [vmem:[%s1961 + $0x1b0] sm:$0x3]
    %v3399 = vld [vmem:[%s1961 + $0x1b8] sm:$0x3]
    %v3400 = vld [vmem:[%s1961 + $0x1c0] sm:$0xfc]
    %v3401 = vld [vmem:[%s1961 + $0x1c8] sm:$0xfc]
    %v3402 = vld [vmem:[%s1961 + $0x1d0] sm:$0x3]
    %v3403 = vld [vmem:[%s1961 + $0x1d8] sm:$0x3]
    %v3404 = vld [vmem:[%s1961 + $0x1e0] sm:$0xfc]
    %v3405 = vld [vmem:[%s1961 + $0x1e8] sm:$0xfc]
    %v3406 = vld [vmem:[%s1961 + $0x1f0] sm:$0x3]
    %v3407 = vld [vmem:[%s1961 + $0x1f8] sm:$0x3]
    %v3408 = vld [vmem:[%s1961 + $0x200] sm:$0xfc]
    %v3409 = vld [vmem:[%s1961 + $0x208] sm:$0xfc]
    %v3410 = vld [vmem:[%s1961 + $0x210] sm:$0x3]
    %v3411 = vld [vmem:[%s1961 + $0x218] sm:$0x3]
    %v3412 = vld [vmem:[%s1961 + $0x220] sm:$0xfc]
    %v3413 = vld [vmem:[%s1961 + $0x228] sm:$0xfc]
    %v3414 = vld [vmem:[%s1961 + $0x230] sm:$0x3]
    %v3415 = vld [vmem:[%s1961 + $0x238] sm:$0x3]
    %v3416 = vlaneseq
    %v3417 = vshrl.u32 %v3416, 7
    %v3418 = vsub.s32 5, %v3417
    %v3419 = vrot.slane %v2090, %v3418
    %v3420 = vlaneseq
    %v3421 = vshrl.u32 %v3420, 7
    %v3422 = vsub.s32 5, %v3421
    %v3423 = vrot.slane %v2091, %v3422
    %v3424 = vmul.f32 %v3352, %v3419
    %v3425 = vmul.f32 %v3353, %v3423
    %v3426 = vmul.f32 %v3354, %v3419
    %v3427 = vmul.f32 %v3355, %v3423
    %v3428 = vmul.f32 %v3356, %v3419
    %v3429 = vmul.f32 %v3357, %v3423
    %v3430 = vmul.f32 %v3358, %v3419
    %v3431 = vmul.f32 %v3359, %v3423
    %v3432 = vmul.f32 %v3360, %v3419
    %v3433 = vmul.f32 %v3361, %v3423
    %v3434 = vmul.f32 %v3362, %v3419
    %v3435 = vmul.f32 %v3363, %v3423
    %v3436 = vmul.f32 %v3364, %v3419
    %v3437 = vmul.f32 %v3365, %v3423
    %v3438 = vmul.f32 %v3366, %v3419
    %v3439 = vmul.f32 %v3367, %v3423
    %v3440 = vmul.f32 %v3368, %v3419
    %v3441 = vmul.f32 %v3369, %v3423
    %v3442 = vmul.f32 %v3370, %v3419
    %v3443 = vmul.f32 %v3371, %v3423
    %v3444 = vmul.f32 %v3372, %v3419
    %v3445 = vmul.f32 %v3373, %v3423
    %v3446 = vmul.f32 %v3374, %v3419
    %v3447 = vmul.f32 %v3375, %v3423
    %v3448 = vmul.f32 %v3376, %v3419
    %v3449 = vmul.f32 %v3377, %v3423
    %v3450 = vmul.f32 %v3378, %v3419
    %v3451 = vmul.f32 %v3379, %v3423
    %v3452 = vmul.f32 %v3380, %v3419
    %v3453 = vmul.f32 %v3381, %v3423
    %v3454 = vmul.f32 %v3382, %v3419
    %v3455 = vmul.f32 %v3383, %v3423
    %v3456 = vmul.f32 %v3384, %v3419
    %v3457 = vmul.f32 %v3385, %v3423
    %v3458 = vmul.f32 %v3386, %v3419
    %v3459 = vmul.f32 %v3387, %v3423
    %v3460 = vmul.f32 %v3388, %v3419
    %v3461 = vmul.f32 %v3389, %v3423
    %v3462 = vmul.f32 %v3390, %v3419
    %v3463 = vmul.f32 %v3391, %v3423
    %v3464 = vmul.f32 %v3392, %v3419
    %v3465 = vmul.f32 %v3393, %v3423
    %v3466 = vmul.f32 %v3394, %v3419
    %v3467 = vmul.f32 %v3395, %v3423
    %v3468 = vmul.f32 %v3396, %v3419
    %v3469 = vmul.f32 %v3397, %v3423
    %v3470 = vmul.f32 %v3398, %v3419
    %v3471 = vmul.f32 %v3399, %v3423
    %v3472 = vmul.f32 %v3400, %v3419
    %v3473 = vmul.f32 %v3401, %v3423
    %v3474 = vmul.f32 %v3402, %v3419
    %v3475 = vmul.f32 %v3403, %v3423
    %v3476 = vmul.f32 %v3404, %v3419
    %v3477 = vmul.f32 %v3405, %v3423
    %v3478 = vmul.f32 %v3406, %v3419
    %v3479 = vmul.f32 %v3407, %v3423
    %v3480 = vmul.f32 %v3408, %v3419
    %v3481 = vmul.f32 %v3409, %v3423
    %v3482 = vmul.f32 %v3410, %v3419
    %v3483 = vmul.f32 %v3411, %v3423
    %v3484 = vmul.f32 %v3412, %v3419
    %v3485 = vmul.f32 %v3413, %v3423
    %v3486 = vmul.f32 %v3414, %v3419
    %v3487 = vmul.f32 %v3415, %v3423
    %v3552 = vrot.slane %v3424, 2
    %v3553 = vrot.slane %v3426, 2
    %v3554 = vsel %vm2727, %v3552, %v3553
    %v3555 = vrot.slane %v3425, 2
    %v3556 = vrot.slane %v3427, 2
    %v3557 = vsel %vm2727, %v3555, %v3556
    %v3558 = vrot.slane %v3428, 2
    %v3559 = vrot.slane %v3430, 2
    %v3560 = vsel %vm2727, %v3558, %v3559
    %v3561 = vrot.slane %v3429, 2
    %v3562 = vrot.slane %v3431, 2
    %v3563 = vsel %vm2727, %v3561, %v3562
    %v3564 = vrot.slane %v3432, 2
    %v3565 = vrot.slane %v3434, 2
    %v3566 = vsel %vm2727, %v3564, %v3565
    %v3567 = vrot.slane %v3433, 2
    %v3568 = vrot.slane %v3435, 2
    %v3569 = vsel %vm2727, %v3567, %v3568
    %v3570 = vrot.slane %v3436, 2
    %v3571 = vrot.slane %v3438, 2
    %v3572 = vsel %vm2727, %v3570, %v3571
    %v3573 = vrot.slane %v3437, 2
    %v3574 = vrot.slane %v3439, 2
    %v3575 = vsel %vm2727, %v3573, %v3574
    %v3576 = vrot.slane %v3440, 2
    %v3577 = vrot.slane %v3442, 2
    %v3578 = vsel %vm2727, %v3576, %v3577
    %v3579 = vrot.slane %v3441, 2
    %v3580 = vrot.slane %v3443, 2
    %v3581 = vsel %vm2727, %v3579, %v3580
    %v3582 = vrot.slane %v3444, 2
    %v3583 = vrot.slane %v3446, 2
    %v3584 = vsel %vm2727, %v3582, %v3583
    %v3585 = vrot.slane %v3445, 2
    %v3586 = vrot.slane %v3447, 2
    %v3587 = vsel %vm2727, %v3585, %v3586
    %v3588 = vrot.slane %v3448, 2
    %v3589 = vrot.slane %v3450, 2
    %v3590 = vsel %vm2727, %v3588, %v3589
    %v3591 = vrot.slane %v3449, 2
    %v3592 = vrot.slane %v3451, 2
    %v3593 = vsel %vm2727, %v3591, %v3592
    %v3594 = vrot.slane %v3452, 2
    %v3595 = vrot.slane %v3454, 2
    %v3596 = vsel %vm2727, %v3594, %v3595
    %v3597 = vrot.slane %v3453, 2
    %v3598 = vrot.slane %v3455, 2
    %v3599 = vsel %vm2727, %v3597, %v3598
    %v3600 = vrot.slane %v3456, 2
    %v3601 = vrot.slane %v3458, 2
    %v3602 = vsel %vm2727, %v3600, %v3601
    %v3603 = vrot.slane %v3457, 2
    %v3604 = vrot.slane %v3459, 2
    %v3605 = vsel %vm2727, %v3603, %v3604
    %v3606 = vrot.slane %v3460, 2
    %v3607 = vrot.slane %v3462, 2
    %v3608 = vsel %vm2727, %v3606, %v3607
    %v3609 = vrot.slane %v3461, 2
    %v3610 = vrot.slane %v3463, 2
    %v3611 = vsel %vm2727, %v3609, %v3610
    %v3612 = vrot.slane %v3464, 2
    %v3613 = vrot.slane %v3466, 2
    %v3614 = vsel %vm2727, %v3612, %v3613
    %v3615 = vrot.slane %v3465, 2
    %v3616 = vrot.slane %v3467, 2
    %v3617 = vsel %vm2727, %v3615, %v3616
    %v3618 = vrot.slane %v3468, 2
    %v3619 = vrot.slane %v3470, 2
    %v3620 = vsel %vm2727, %v3618, %v3619
    %v3621 = vrot.slane %v3469, 2
    %v3622 = vrot.slane %v3471, 2
    %v3623 = vsel %vm2727, %v3621, %v3622
    %v3624 = vrot.slane %v3472, 2
    %v3625 = vrot.slane %v3474, 2
    %v3626 = vsel %vm2727, %v3624, %v3625
    %v3627 = vrot.slane %v3473, 2
    %v3628 = vrot.slane %v3475, 2
    %v3629 = vsel %vm2727, %v3627, %v3628
    %v3630 = vrot.slane %v3476, 2
    %v3631 = vrot.slane %v3478, 2
    %v3632 = vsel %vm2727, %v3630, %v3631
    %v3633 = vrot.slane %v3477, 2
    %v3634 = vrot.slane %v3479, 2
    %v3635 = vsel %vm2727, %v3633, %v3634
    %v3636 = vrot.slane %v3480, 2
    %v3637 = vrot.slane %v3482, 2
    %v3638 = vsel %vm2727, %v3636, %v3637
    %v3639 = vrot.slane %v3481, 2
    %v3640 = vrot.slane %v3483, 2
    %v3641 = vsel %vm2727, %v3639, %v3640
    %v3642 = vrot.slane %v3484, 2
    %v3643 = vrot.slane %v3486, 2
    %v3644 = vsel %vm2727, %v3642, %v3643
    %v3645 = vrot.slane %v3485, 2
    %v3646 = vrot.slane %v3487, 2
    %v3647 = vsel %vm2727, %v3645, %v3646
    %v3680 = vadd.f32 %v3320, %v3554
    %v3681 = vadd.f32 %v3321, %v3557
    %v3682 = vadd.f32 %v3322, %v3560
    %v3683 = vadd.f32 %v3323, %v3563
    %v3684 = vadd.f32 %v3324, %v3566
    %v3685 = vadd.f32 %v3325, %v3569
    %v3686 = vadd.f32 %v3326, %v3572
    %v3687 = vadd.f32 %v3327, %v3575
    %v3688 = vadd.f32 %v3328, %v3578
    %v3689 = vadd.f32 %v3329, %v3581
    %v3690 = vadd.f32 %v3330, %v3584
    %v3691 = vadd.f32 %v3331, %v3587
    %v3692 = vadd.f32 %v3332, %v3590
    %v3693 = vadd.f32 %v3333, %v3593
    %v3694 = vadd.f32 %v3334, %v3596
    %v3695 = vadd.f32 %v3335, %v3599
    %v3696 = vadd.f32 %v3336, %v3602
    %v3697 = vadd.f32 %v3337, %v3605
    %v3698 = vadd.f32 %v3338, %v3608
    %v3699 = vadd.f32 %v3339, %v3611
    %v3700 = vadd.f32 %v3340, %v3614
    %v3701 = vadd.f32 %v3341, %v3617
    %v3702 = vadd.f32 %v3342, %v3620
    %v3703 = vadd.f32 %v3343, %v3623
    %v3704 = vadd.f32 %v3344, %v3626
    %v3705 = vadd.f32 %v3345, %v3629
    %v3706 = vadd.f32 %v3346, %v3632
    %v3707 = vadd.f32 %v3347, %v3635
    %v3708 = vadd.f32 %v3348, %v3638
    %v3709 = vadd.f32 %v3349, %v3641
    %v3710 = vadd.f32 %v3350, %v3644
    %v3711 = vadd.f32 %v3351, %v3647
    %s3712 = scalar_lea.vmem [#allocation4], 64
    %v3713 = vld [vmem:[%s3712] sm:$0xff]
    %v3714 = vld [vmem:[%s3712 + $0x8] sm:$0xff]
    %v3715 = vld [vmem:[%s3712 + $0x20] sm:$0xff]
    %v3716 = vld [vmem:[%s3712 + $0x28] sm:$0xff]
    %v3717 = vld [vmem:[%s3712 + $0x40] sm:$0xff]
    %v3718 = vld [vmem:[%s3712 + $0x48] sm:$0xff]
    %v3719 = vld [vmem:[%s3712 + $0x60] sm:$0xff]
    %v3720 = vld [vmem:[%s3712 + $0x68] sm:$0xff]
    %v3721 = vld [vmem:[%s3712 + $0x80] sm:$0xff]
    %v3722 = vld [vmem:[%s3712 + $0x88] sm:$0xff]
    %v3723 = vld [vmem:[%s3712 + $0xa0] sm:$0xff]
    %v3724 = vld [vmem:[%s3712 + $0xa8] sm:$0xff]
    %v3725 = vld [vmem:[%s3712 + $0xc0] sm:$0xff]
    %v3726 = vld [vmem:[%s3712 + $0xc8] sm:$0xff]
    %v3727 = vld [vmem:[%s3712 + $0xe0] sm:$0xff]
    %v3728 = vld [vmem:[%s3712 + $0xe8] sm:$0xff]
    %v3729 = vld [vmem:[%s3712 + $0x140] sm:$0xff]
    %v3730 = vld [vmem:[%s3712 + $0x148] sm:$0xff]
    %v3731 = vld [vmem:[%s3712 + $0x160] sm:$0xff]
    %v3732 = vld [vmem:[%s3712 + $0x168] sm:$0xff]
    %v3733 = vld [vmem:[%s3712 + $0x180] sm:$0xff]
    %v3734 = vld [vmem:[%s3712 + $0x188] sm:$0xff]
    %v3735 = vld [vmem:[%s3712 + $0x1a0] sm:$0xff]
    %v3736 = vld [vmem:[%s3712 + $0x1a8] sm:$0xff]
    %v3737 = vld [vmem:[%s3712 + $0x1c0] sm:$0xff]
    %v3738 = vld [vmem:[%s3712 + $0x1c8] sm:$0xff]
    %v3739 = vld [vmem:[%s3712 + $0x1e0] sm:$0xff]
    %v3740 = vld [vmem:[%s3712 + $0x1e8] sm:$0xff]
    %v3741 = vld [vmem:[%s3712 + $0x200] sm:$0xff]
    %v3742 = vld [vmem:[%s3712 + $0x208] sm:$0xff]
    %v3743 = vld [vmem:[%s3712 + $0x220] sm:$0xff]
    %v3744 = vld [vmem:[%s3712 + $0x228] sm:$0xff]
    %v3745 = vlaneseq
    %v3746 = vshrl.u32 %v3745, 7
    %v3747 = vsub.s32 6, %v3746
    %v3748 = vrot.slane %v2090, %v3747
    %v3749 = vlaneseq
    %v3750 = vshrl.u32 %v3749, 7
    %v3751 = vsub.s32 6, %v3750
    %v3752 = vrot.slane %v2091, %v3751
    %v3753 = vmul.f32 %v3713, %v3748
    %v3754 = vmul.f32 %v3714, %v3752
    %v3755 = vmul.f32 %v3715, %v3748
    %v3756 = vmul.f32 %v3716, %v3752
    %v3757 = vmul.f32 %v3717, %v3748
    %v3758 = vmul.f32 %v3718, %v3752
    %v3759 = vmul.f32 %v3719, %v3748
    %v3760 = vmul.f32 %v3720, %v3752
    %v3761 = vmul.f32 %v3721, %v3748
    %v3762 = vmul.f32 %v3722, %v3752
    %v3763 = vmul.f32 %v3723, %v3748
    %v3764 = vmul.f32 %v3724, %v3752
    %v3765 = vmul.f32 %v3725, %v3748
    %v3766 = vmul.f32 %v3726, %v3752
    %v3767 = vmul.f32 %v3727, %v3748
    %v3768 = vmul.f32 %v3728, %v3752
    %v3769 = vmul.f32 %v3729, %v3748
    %v3770 = vmul.f32 %v3730, %v3752
    %v3771 = vmul.f32 %v3731, %v3748
    %v3772 = vmul.f32 %v3732, %v3752
    %v3773 = vmul.f32 %v3733, %v3748
    %v3774 = vmul.f32 %v3734, %v3752
    %v3775 = vmul.f32 %v3735, %v3748
    %v3776 = vmul.f32 %v3736, %v3752
    %v3777 = vmul.f32 %v3737, %v3748
    %v3778 = vmul.f32 %v3738, %v3752
    %v3779 = vmul.f32 %v3739, %v3748
    %v3780 = vmul.f32 %v3740, %v3752
    %v3781 = vmul.f32 %v3741, %v3748
    %v3782 = vmul.f32 %v3742, %v3752
    %v3783 = vmul.f32 %v3743, %v3748
    %v3784 = vmul.f32 %v3744, %v3752
    %v3785 = vadd.f32 %v3680, %v3753
    %v3786 = vadd.f32 %v3681, %v3754
    %v3787 = vadd.f32 %v3682, %v3755
    %v3788 = vadd.f32 %v3683, %v3756
    %v3789 = vadd.f32 %v3684, %v3757
    %v3790 = vadd.f32 %v3685, %v3758
    %v3791 = vadd.f32 %v3686, %v3759
    %v3792 = vadd.f32 %v3687, %v3760
    %v3793 = vadd.f32 %v3688, %v3761
    %v3794 = vadd.f32 %v3689, %v3762
    %v3795 = vadd.f32 %v3690, %v3763
    %v3796 = vadd.f32 %v3691, %v3764
    %v3797 = vadd.f32 %v3692, %v3765
    %v3798 = vadd.f32 %v3693, %v3766
    %v3799 = vadd.f32 %v3694, %v3767
    %v3800 = vadd.f32 %v3695, %v3768
    %v3801 = vadd.f32 %v3696, %v3769
    %v3802 = vadd.f32 %v3697, %v3770
    %v3803 = vadd.f32 %v3698, %v3771
    %v3804 = vadd.f32 %v3699, %v3772
    %v3805 = vadd.f32 %v3700, %v3773
    %v3806 = vadd.f32 %v3701, %v3774
    %v3807 = vadd.f32 %v3702, %v3775
    %v3808 = vadd.f32 %v3703, %v3776
    %v3809 = vadd.f32 %v3704, %v3777
    %v3810 = vadd.f32 %v3705, %v3778
    %v3811 = vadd.f32 %v3706, %v3779
    %v3812 = vadd.f32 %v3707, %v3780
    %v3813 = vadd.f32 %v3708, %v3781
    %v3814 = vadd.f32 %v3709, %v3782
    %v3815 = vadd.f32 %v3710, %v3783
    %v3816 = vadd.f32 %v3711, %v3784
    %v3817 = vld [vmem:[%s3712] sm:$0xfe]
    %v3818 = vld [vmem:[%s3712 + $0x8] sm:$0xfe]
    %v3819 = vld [vmem:[%s3712 + $0x10] sm:$0x1]
    %v3820 = vld [vmem:[%s3712 + $0x18] sm:$0x1]
    %v3821 = vld [vmem:[%s3712 + $0x20] sm:$0xfe]
    %v3822 = vld [vmem:[%s3712 + $0x28] sm:$0xfe]
    %v3823 = vld [vmem:[%s3712 + $0x30] sm:$0x1]
    %v3824 = vld [vmem:[%s3712 + $0x38] sm:$0x1]
    %v3825 = vld [vmem:[%s3712 + $0x40] sm:$0xfe]
    %v3826 = vld [vmem:[%s3712 + $0x48] sm:$0xfe]
    %v3827 = vld [vmem:[%s3712 + $0x50] sm:$0x1]
    %v3828 = vld [vmem:[%s3712 + $0x58] sm:$0x1]
    %v3829 = vld [vmem:[%s3712 + $0x60] sm:$0xfe]
    %v3830 = vld [vmem:[%s3712 + $0x68] sm:$0xfe]
    %v3831 = vld [vmem:[%s3712 + $0x70] sm:$0x1]
    %v3832 = vld [vmem:[%s3712 + $0x78] sm:$0x1]
    %v3833 = vld [vmem:[%s3712 + $0x80] sm:$0xfe]
    %v3834 = vld [vmem:[%s3712 + $0x88] sm:$0xfe]
    %v3835 = vld [vmem:[%s3712 + $0x90] sm:$0x1]
    %v3836 = vld [vmem:[%s3712 + $0x98] sm:$0x1]
    %v3837 = vld [vmem:[%s3712 + $0xa0] sm:$0xfe]
    %v3838 = vld [vmem:[%s3712 + $0xa8] sm:$0xfe]
    %v3839 = vld [vmem:[%s3712 + $0xb0] sm:$0x1]
    %v3840 = vld [vmem:[%s3712 + $0xb8] sm:$0x1]
    %v3841 = vld [vmem:[%s3712 + $0xc0] sm:$0xfe]
    %v3842 = vld [vmem:[%s3712 + $0xc8] sm:$0xfe]
    %v3843 = vld [vmem:[%s3712 + $0xd0] sm:$0x1]
    %v3844 = vld [vmem:[%s3712 + $0xd8] sm:$0x1]
    %v3845 = vld [vmem:[%s3712 + $0xe0] sm:$0xfe]
    %v3846 = vld [vmem:[%s3712 + $0xe8] sm:$0xfe]
    %v3847 = vld [vmem:[%s3712 + $0xf0] sm:$0x1]
    %v3848 = vld [vmem:[%s3712 + $0xf8] sm:$0x1]
    %v3849 = vld [vmem:[%s3712 + $0x140] sm:$0xfe]
    %v3850 = vld [vmem:[%s3712 + $0x148] sm:$0xfe]
    %v3851 = vld [vmem:[%s3712 + $0x150] sm:$0x1]
    %v3852 = vld [vmem:[%s3712 + $0x158] sm:$0x1]
    %v3853 = vld [vmem:[%s3712 + $0x160] sm:$0xfe]
    %v3854 = vld [vmem:[%s3712 + $0x168] sm:$0xfe]
    %v3855 = vld [vmem:[%s3712 + $0x170] sm:$0x1]
    %v3856 = vld [vmem:[%s3712 + $0x178] sm:$0x1]
    %v3857 = vld [vmem:[%s3712 + $0x180] sm:$0xfe]
    %v3858 = vld [vmem:[%s3712 + $0x188] sm:$0xfe]
    %v3859 = vld [vmem:[%s3712 + $0x190] sm:$0x1]
    %v3860 = vld [vmem:[%s3712 + $0x198] sm:$0x1]
    %v3861 = vld [vmem:[%s3712 + $0x1a0] sm:$0xfe]
    %v3862 = vld [vmem:[%s3712 + $0x1a8] sm:$0xfe]
    %v3863 = vld [vmem:[%s3712 + $0x1b0] sm:$0x1]
    %v3864 = vld [vmem:[%s3712 + $0x1b8] sm:$0x1]
    %v3865 = vld [vmem:[%s3712 + $0x1c0] sm:$0xfe]
    %v3866 = vld [vmem:[%s3712 + $0x1c8] sm:$0xfe]
    %v3867 = vld [vmem:[%s3712 + $0x1d0] sm:$0x1]
    %v3868 = vld [vmem:[%s3712 + $0x1d8] sm:$0x1]
    %v3869 = vld [vmem:[%s3712 + $0x1e0] sm:$0xfe]
    %v3870 = vld [vmem:[%s3712 + $0x1e8] sm:$0xfe]
    %v3871 = vld [vmem:[%s3712 + $0x1f0] sm:$0x1]
    %v3872 = vld [vmem:[%s3712 + $0x1f8] sm:$0x1]
    %v3873 = vld [vmem:[%s3712 + $0x200] sm:$0xfe]
    %v3874 = vld [vmem:[%s3712 + $0x208] sm:$0xfe]
    %v3875 = vld [vmem:[%s3712 + $0x210] sm:$0x1]
    %v3876 = vld [vmem:[%s3712 + $0x218] sm:$0x1]
    %v3877 = vld [vmem:[%s3712 + $0x220] sm:$0xfe]
    %v3878 = vld [vmem:[%s3712 + $0x228] sm:$0xfe]
    %v3879 = vld [vmem:[%s3712 + $0x230] sm:$0x1]
    %v3880 = vld [vmem:[%s3712 + $0x238] sm:$0x1]
    %v3881 = vlaneseq
    %v3882 = vshrl.u32 %v3881, 7
    %v3883 = vsub.s32 7, %v3882
    %v3884 = vrot.slane %v2090, %v3883
    %v3885 = vlaneseq
    %v3886 = vshrl.u32 %v3885, 7
    %v3887 = vsub.s32 7, %v3886
    %v3888 = vrot.slane %v2091, %v3887
    %v3889 = vmul.f32 %v3817, %v3884
    %v3890 = vmul.f32 %v3818, %v3888
    %v3891 = vmul.f32 %v3819, %v3884
    %v3892 = vmul.f32 %v3820, %v3888
    %v3893 = vmul.f32 %v3821, %v3884
    %v3894 = vmul.f32 %v3822, %v3888
    %v3895 = vmul.f32 %v3823, %v3884
    %v3896 = vmul.f32 %v3824, %v3888
    %v3897 = vmul.f32 %v3825, %v3884
    %v3898 = vmul.f32 %v3826, %v3888
    %v3899 = vmul.f32 %v3827, %v3884
    %v3900 = vmul.f32 %v3828, %v3888
    %v3901 = vmul.f32 %v3829, %v3884
    %v3902 = vmul.f32 %v3830, %v3888
    %v3903 = vmul.f32 %v3831, %v3884
    %v3904 = vmul.f32 %v3832, %v3888
    %v3905 = vmul.f32 %v3833, %v3884
    %v3906 = vmul.f32 %v3834, %v3888
    %v3907 = vmul.f32 %v3835, %v3884
    %v3908 = vmul.f32 %v3836, %v3888
    %v3909 = vmul.f32 %v3837, %v3884
    %v3910 = vmul.f32 %v3838, %v3888
    %v3911 = vmul.f32 %v3839, %v3884
    %v3912 = vmul.f32 %v3840, %v3888
    %v3913 = vmul.f32 %v3841, %v3884
    %v3914 = vmul.f32 %v3842, %v3888
    %v3915 = vmul.f32 %v3843, %v3884
    %v3916 = vmul.f32 %v3844, %v3888
    %v3917 = vmul.f32 %v3845, %v3884
    %v3918 = vmul.f32 %v3846, %v3888
    %v3919 = vmul.f32 %v3847, %v3884
    %v3920 = vmul.f32 %v3848, %v3888
    %v3921 = vmul.f32 %v3849, %v3884
    %v3922 = vmul.f32 %v3850, %v3888
    %v3923 = vmul.f32 %v3851, %v3884
    %v3924 = vmul.f32 %v3852, %v3888
    %v3925 = vmul.f32 %v3853, %v3884
    %v3926 = vmul.f32 %v3854, %v3888
    %v3927 = vmul.f32 %v3855, %v3884
    %v3928 = vmul.f32 %v3856, %v3888
    %v3929 = vmul.f32 %v3857, %v3884
    %v3930 = vmul.f32 %v3858, %v3888
    %v3931 = vmul.f32 %v3859, %v3884
    %v3932 = vmul.f32 %v3860, %v3888
    %v3933 = vmul.f32 %v3861, %v3884
    %v3934 = vmul.f32 %v3862, %v3888
    %v3935 = vmul.f32 %v3863, %v3884
    %v3936 = vmul.f32 %v3864, %v3888
    %v3937 = vmul.f32 %v3865, %v3884
    %v3938 = vmul.f32 %v3866, %v3888
    %v3939 = vmul.f32 %v3867, %v3884
    %v3940 = vmul.f32 %v3868, %v3888
    %v3941 = vmul.f32 %v3869, %v3884
    %v3942 = vmul.f32 %v3870, %v3888
    %v3943 = vmul.f32 %v3871, %v3884
    %v3944 = vmul.f32 %v3872, %v3888
    %v3945 = vmul.f32 %v3873, %v3884
    %v3946 = vmul.f32 %v3874, %v3888
    %v3947 = vmul.f32 %v3875, %v3884
    %v3948 = vmul.f32 %v3876, %v3888
    %v3949 = vmul.f32 %v3877, %v3884
    %v3950 = vmul.f32 %v3878, %v3888
    %v3951 = vmul.f32 %v3879, %v3884
    %v3952 = vmul.f32 %v3880, %v3888
    %v4017 = vrot.slane %v3889, 1
    %v4018 = vrot.slane %v3891, 1
    %v4019 = vsel %vm2366, %v4017, %v4018
    %v4020 = vrot.slane %v3890, 1
    %v4021 = vrot.slane %v3892, 1
    %v4022 = vsel %vm2366, %v4020, %v4021
    %v4023 = vrot.slane %v3893, 1
    %v4024 = vrot.slane %v3895, 1
    %v4025 = vsel %vm2366, %v4023, %v4024
    %v4026 = vrot.slane %v3894, 1
    %v4027 = vrot.slane %v3896, 1
    %v4028 = vsel %vm2366, %v4026, %v4027
    %v4029 = vrot.slane %v3897, 1
    %v4030 = vrot.slane %v3899, 1
    %v4031 = vsel %vm2366, %v4029, %v4030
    %v4032 = vrot.slane %v3898, 1
    %v4033 = vrot.slane %v3900, 1
    %v4034 = vsel %vm2366, %v4032, %v4033
    %v4035 = vrot.slane %v3901, 1
    %v4036 = vrot.slane %v3903, 1
    %v4037 = vsel %vm2366, %v4035, %v4036
    %v4038 = vrot.slane %v3902, 1
    %v4039 = vrot.slane %v3904, 1
    %v4040 = vsel %vm2366, %v4038, %v4039
    %v4041 = vrot.slane %v3905, 1
    %v4042 = vrot.slane %v3907, 1
    %v4043 = vsel %vm2366, %v4041, %v4042
    %v4044 = vrot.slane %v3906, 1
    %v4045 = vrot.slane %v3908, 1
    %v4046 = vsel %vm2366, %v4044, %v4045
    %v4047 = vrot.slane %v3909, 1
    %v4048 = vrot.slane %v3911, 1
    %v4049 = vsel %vm2366, %v4047, %v4048
    %v4050 = vrot.slane %v3910, 1
    %v4051 = vrot.slane %v3912, 1
    %v4052 = vsel %vm2366, %v4050, %v4051
    %v4053 = vrot.slane %v3913, 1
    %v4054 = vrot.slane %v3915, 1
    %v4055 = vsel %vm2366, %v4053, %v4054
    %v4056 = vrot.slane %v3914, 1
    %v4057 = vrot.slane %v3916, 1
    %v4058 = vsel %vm2366, %v4056, %v4057
    %v4059 = vrot.slane %v3917, 1
    %v4060 = vrot.slane %v3919, 1
    %v4061 = vsel %vm2366, %v4059, %v4060
    %v4062 = vrot.slane %v3918, 1
    %v4063 = vrot.slane %v3920, 1
    %v4064 = vsel %vm2366, %v4062, %v4063
    %v4065 = vrot.slane %v3921, 1
    %v4066 = vrot.slane %v3923, 1
    %v4067 = vsel %vm2366, %v4065, %v4066
    %v4068 = vrot.slane %v3922, 1
    %v4069 = vrot.slane %v3924, 1
    %v4070 = vsel %vm2366, %v4068, %v4069
    %v4071 = vrot.slane %v3925, 1
    %v4072 = vrot.slane %v3927, 1
    %v4073 = vsel %vm2366, %v4071, %v4072
    %v4074 = vrot.slane %v3926, 1
    %v4075 = vrot.slane %v3928, 1
    %v4076 = vsel %vm2366, %v4074, %v4075
    %v4077 = vrot.slane %v3929, 1
    %v4078 = vrot.slane %v3931, 1
    %v4079 = vsel %vm2366, %v4077, %v4078
    %v4080 = vrot.slane %v3930, 1
    %v4081 = vrot.slane %v3932, 1
    %v4082 = vsel %vm2366, %v4080, %v4081
    %v4083 = vrot.slane %v3933, 1
    %v4084 = vrot.slane %v3935, 1
    %v4085 = vsel %vm2366, %v4083, %v4084
    %v4086 = vrot.slane %v3934, 1
    %v4087 = vrot.slane %v3936, 1
    %v4088 = vsel %vm2366, %v4086, %v4087
    %v4089 = vrot.slane %v3937, 1
    %v4090 = vrot.slane %v3939, 1
    %v4091 = vsel %vm2366, %v4089, %v4090
    %v4092 = vrot.slane %v3938, 1
    %v4093 = vrot.slane %v3940, 1
    %v4094 = vsel %vm2366, %v4092, %v4093
    %v4095 = vrot.slane %v3941, 1
    %v4096 = vrot.slane %v3943, 1
    %v4097 = vsel %vm2366, %v4095, %v4096
    %v4098 = vrot.slane %v3942, 1
    %v4099 = vrot.slane %v3944, 1
    %v4100 = vsel %vm2366, %v4098, %v4099
    %v4101 = vrot.slane %v3945, 1
    %v4102 = vrot.slane %v3947, 1
    %v4103 = vsel %vm2366, %v4101, %v4102
    %v4104 = vrot.slane %v3946, 1
    %v4105 = vrot.slane %v3948, 1
    %v4106 = vsel %vm2366, %v4104, %v4105
    %v4107 = vrot.slane %v3949, 1
    %v4108 = vrot.slane %v3951, 1
    %v4109 = vsel %vm2366, %v4107, %v4108
    %v4110 = vrot.slane %v3950, 1
    %v4111 = vrot.slane %v3952, 1
    %v4112 = vsel %vm2366, %v4110, %v4111
    %v4145 = vadd.f32 %v3785, %v4019
    %v4146 = vadd.f32 %v3786, %v4022
    %v4147 = vadd.f32 %v3787, %v4025
    %v4148 = vadd.f32 %v3788, %v4028
    %v4149 = vadd.f32 %v3789, %v4031
    %v4150 = vadd.f32 %v3790, %v4034
    %v4151 = vadd.f32 %v3791, %v4037
    %v4152 = vadd.f32 %v3792, %v4040
    %v4153 = vadd.f32 %v3793, %v4043
    %v4154 = vadd.f32 %v3794, %v4046
    %v4155 = vadd.f32 %v3795, %v4049
    %v4156 = vadd.f32 %v3796, %v4052
    %v4157 = vadd.f32 %v3797, %v4055
    %v4158 = vadd.f32 %v3798, %v4058
    %v4159 = vadd.f32 %v3799, %v4061
    %v4160 = vadd.f32 %v3800, %v4064
    %v4161 = vadd.f32 %v3801, %v4067
    %v4162 = vadd.f32 %v3802, %v4070
    %v4163 = vadd.f32 %v3803, %v4073
    %v4164 = vadd.f32 %v3804, %v4076
    %v4165 = vadd.f32 %v3805, %v4079
    %v4166 = vadd.f32 %v3806, %v4082
    %v4167 = vadd.f32 %v3807, %v4085
    %v4168 = vadd.f32 %v3808, %v4088
    %v4169 = vadd.f32 %v3809, %v4091
    %v4170 = vadd.f32 %v3810, %v4094
    %v4171 = vadd.f32 %v3811, %v4097
    %v4172 = vadd.f32 %v3812, %v4100
    %v4173 = vadd.f32 %v3813, %v4103
    %v4174 = vadd.f32 %v3814, %v4106
    %v4175 = vadd.f32 %v3815, %v4109
    %v4176 = vadd.f32 %v3816, %v4112
    %v4177 = vld [vmem:[%s3712] sm:$0xfc]
    %v4178 = vld [vmem:[%s3712 + $0x8] sm:$0xfc]
    %v4179 = vld [vmem:[%s3712 + $0x10] sm:$0x3]
    %v4180 = vld [vmem:[%s3712 + $0x18] sm:$0x3]
    %v4181 = vld [vmem:[%s3712 + $0x20] sm:$0xfc]
    %v4182 = vld [vmem:[%s3712 + $0x28] sm:$0xfc]
    %v4183 = vld [vmem:[%s3712 + $0x30] sm:$0x3]
    %v4184 = vld [vmem:[%s3712 + $0x38] sm:$0x3]
    %v4185 = vld [vmem:[%s3712 + $0x40] sm:$0xfc]
    %v4186 = vld [vmem:[%s3712 + $0x48] sm:$0xfc]
    %v4187 = vld [vmem:[%s3712 + $0x50] sm:$0x3]
    %v4188 = vld [vmem:[%s3712 + $0x58] sm:$0x3]
    %v4189 = vld [vmem:[%s3712 + $0x60] sm:$0xfc]
    %v4190 = vld [vmem:[%s3712 + $0x68] sm:$0xfc]
    %v4191 = vld [vmem:[%s3712 + $0x70] sm:$0x3]
    %v4192 = vld [vmem:[%s3712 + $0x78] sm:$0x3]
    %v4193 = vld [vmem:[%s3712 + $0x80] sm:$0xfc]
    %v4194 = vld [vmem:[%s3712 + $0x88] sm:$0xfc]
    %v4195 = vld [vmem:[%s3712 + $0x90] sm:$0x3]
    %v4196 = vld [vmem:[%s3712 + $0x98] sm:$0x3]
    %v4197 = vld [vmem:[%s3712 + $0xa0] sm:$0xfc]
    %v4198 = vld [vmem:[%s3712 + $0xa8] sm:$0xfc]
    %v4199 = vld [vmem:[%s3712 + $0xb0] sm:$0x3]
    %v4200 = vld [vmem:[%s3712 + $0xb8] sm:$0x3]
    %v4201 = vld [vmem:[%s3712 + $0xc0] sm:$0xfc]
    %v4202 = vld [vmem:[%s3712 + $0xc8] sm:$0xfc]
    %v4203 = vld [vmem:[%s3712 + $0xd0] sm:$0x3]
    %v4204 = vld [vmem:[%s3712 + $0xd8] sm:$0x3]
    %v4205 = vld [vmem:[%s3712 + $0xe0] sm:$0xfc]
    %v4206 = vld [vmem:[%s3712 + $0xe8] sm:$0xfc]
    %v4207 = vld [vmem:[%s3712 + $0xf0] sm:$0x3]
    %v4208 = vld [vmem:[%s3712 + $0xf8] sm:$0x3]
    %v4209 = vld [vmem:[%s3712 + $0x140] sm:$0xfc]
    %v4210 = vld [vmem:[%s3712 + $0x148] sm:$0xfc]
    %v4211 = vld [vmem:[%s3712 + $0x150] sm:$0x3]
    %v4212 = vld [vmem:[%s3712 + $0x158] sm:$0x3]
    %v4213 = vld [vmem:[%s3712 + $0x160] sm:$0xfc]
    %v4214 = vld [vmem:[%s3712 + $0x168] sm:$0xfc]
    %v4215 = vld [vmem:[%s3712 + $0x170] sm:$0x3]
    %v4216 = vld [vmem:[%s3712 + $0x178] sm:$0x3]
    %v4217 = vld [vmem:[%s3712 + $0x180] sm:$0xfc]
    %v4218 = vld [vmem:[%s3712 + $0x188] sm:$0xfc]
    %v4219 = vld [vmem:[%s3712 + $0x190] sm:$0x3]
    %v4220 = vld [vmem:[%s3712 + $0x198] sm:$0x3]
    %v4221 = vld [vmem:[%s3712 + $0x1a0] sm:$0xfc]
    %v4222 = vld [vmem:[%s3712 + $0x1a8] sm:$0xfc]
    %v4223 = vld [vmem:[%s3712 + $0x1b0] sm:$0x3]
    %v4224 = vld [vmem:[%s3712 + $0x1b8] sm:$0x3]
    %v4225 = vld [vmem:[%s3712 + $0x1c0] sm:$0xfc]
    %v4226 = vld [vmem:[%s3712 + $0x1c8] sm:$0xfc]
    %v4227 = vld [vmem:[%s3712 + $0x1d0] sm:$0x3]
    %v4228 = vld [vmem:[%s3712 + $0x1d8] sm:$0x3]
    %v4229 = vld [vmem:[%s3712 + $0x1e0] sm:$0xfc]
    %v4230 = vld [vmem:[%s3712 + $0x1e8] sm:$0xfc]
    %v4231 = vld [vmem:[%s3712 + $0x1f0] sm:$0x3]
    %v4232 = vld [vmem:[%s3712 + $0x1f8] sm:$0x3]
    %v4233 = vld [vmem:[%s3712 + $0x200] sm:$0xfc]
    %v4234 = vld [vmem:[%s3712 + $0x208] sm:$0xfc]
    %v4235 = vld [vmem:[%s3712 + $0x210] sm:$0x3]
    %v4236 = vld [vmem:[%s3712 + $0x218] sm:$0x3]
    %v4237 = vld [vmem:[%s3712 + $0x220] sm:$0xfc]
    %v4238 = vld [vmem:[%s3712 + $0x228] sm:$0xfc]
    %v4239 = vld [vmem:[%s3712 + $0x230] sm:$0x3]
    %v4240 = vld [vmem:[%s3712 + $0x238] sm:$0x3]
    %v4241 = vlaneseq
    %v4242 = vshrl.u32 %v4241, 7
    %v4243 = vsub.s32 0, %v4242
    %v4244 = vrot.slane %v2092, %v4243
    %v4245 = vlaneseq
    %v4246 = vshrl.u32 %v4245, 7
    %v4247 = vsub.s32 0, %v4246
    %v4248 = vrot.slane %v2093, %v4247
    %v4249 = vmul.f32 %v4177, %v4244
    %v4250 = vmul.f32 %v4178, %v4248
    %v4251 = vmul.f32 %v4179, %v4244
    %v4252 = vmul.f32 %v4180, %v4248
    %v4253 = vmul.f32 %v4181, %v4244
    %v4254 = vmul.f32 %v4182, %v4248
    %v4255 = vmul.f32 %v4183, %v4244
    %v4256 = vmul.f32 %v4184, %v4248
    %v4257 = vmul.f32 %v4185, %v4244
    %v4258 = vmul.f32 %v4186, %v4248
    %v4259 = vmul.f32 %v4187, %v4244
    %v4260 = vmul.f32 %v4188, %v4248
    %v4261 = vmul.f32 %v4189, %v4244
    %v4262 = vmul.f32 %v4190, %v4248
    %v4263 = vmul.f32 %v4191, %v4244
    %v4264 = vmul.f32 %v4192, %v4248
    %v4265 = vmul.f32 %v4193, %v4244
    %v4266 = vmul.f32 %v4194, %v4248
    %v4267 = vmul.f32 %v4195, %v4244
    %v4268 = vmul.f32 %v4196, %v4248
    %v4269 = vmul.f32 %v4197, %v4244
    %v4270 = vmul.f32 %v4198, %v4248
    %v4271 = vmul.f32 %v4199, %v4244
    %v4272 = vmul.f32 %v4200, %v4248
    %v4273 = vmul.f32 %v4201, %v4244
    %v4274 = vmul.f32 %v4202, %v4248
    %v4275 = vmul.f32 %v4203, %v4244
    %v4276 = vmul.f32 %v4204, %v4248
    %v4277 = vmul.f32 %v4205, %v4244
    %v4278 = vmul.f32 %v4206, %v4248
    %v4279 = vmul.f32 %v4207, %v4244
    %v4280 = vmul.f32 %v4208, %v4248
    %v4281 = vmul.f32 %v4209, %v4244
    %v4282 = vmul.f32 %v4210, %v4248
    %v4283 = vmul.f32 %v4211, %v4244
    %v4284 = vmul.f32 %v4212, %v4248
    %v4285 = vmul.f32 %v4213, %v4244
    %v4286 = vmul.f32 %v4214, %v4248
    %v4287 = vmul.f32 %v4215, %v4244
    %v4288 = vmul.f32 %v4216, %v4248
    %v4289 = vmul.f32 %v4217, %v4244
    %v4290 = vmul.f32 %v4218, %v4248
    %v4291 = vmul.f32 %v4219, %v4244
    %v4292 = vmul.f32 %v4220, %v4248
    %v4293 = vmul.f32 %v4221, %v4244
    %v4294 = vmul.f32 %v4222, %v4248
    %v4295 = vmul.f32 %v4223, %v4244
    %v4296 = vmul.f32 %v4224, %v4248
    %v4297 = vmul.f32 %v4225, %v4244
    %v4298 = vmul.f32 %v4226, %v4248
    %v4299 = vmul.f32 %v4227, %v4244
    %v4300 = vmul.f32 %v4228, %v4248
    %v4301 = vmul.f32 %v4229, %v4244
    %v4302 = vmul.f32 %v4230, %v4248
    %v4303 = vmul.f32 %v4231, %v4244
    %v4304 = vmul.f32 %v4232, %v4248
    %v4305 = vmul.f32 %v4233, %v4244
    %v4306 = vmul.f32 %v4234, %v4248
    %v4307 = vmul.f32 %v4235, %v4244
    %v4308 = vmul.f32 %v4236, %v4248
    %v4309 = vmul.f32 %v4237, %v4244
    %v4310 = vmul.f32 %v4238, %v4248
    %v4311 = vmul.f32 %v4239, %v4244
    %v4312 = vmul.f32 %v4240, %v4248
    %v4377 = vrot.slane %v4249, 2
    %v4378 = vrot.slane %v4251, 2
    %v4379 = vsel %vm2727, %v4377, %v4378
    %v4380 = vrot.slane %v4250, 2
    %v4381 = vrot.slane %v4252, 2
    %v4382 = vsel %vm2727, %v4380, %v4381
    %v4383 = vrot.slane %v4253, 2
    %v4384 = vrot.slane %v4255, 2
    %v4385 = vsel %vm2727, %v4383, %v4384
    %v4386 = vrot.slane %v4254, 2
    %v4387 = vrot.slane %v4256, 2
    %v4388 = vsel %vm2727, %v4386, %v4387
    %v4389 = vrot.slane %v4257, 2
    %v4390 = vrot.slane %v4259, 2
    %v4391 = vsel %vm2727, %v4389, %v4390
    %v4392 = vrot.slane %v4258, 2
    %v4393 = vrot.slane %v4260, 2
    %v4394 = vsel %vm2727, %v4392, %v4393
    %v4395 = vrot.slane %v4261, 2
    %v4396 = vrot.slane %v4263, 2
    %v4397 = vsel %vm2727, %v4395, %v4396
    %v4398 = vrot.slane %v4262, 2
    %v4399 = vrot.slane %v4264, 2
    %v4400 = vsel %vm2727, %v4398, %v4399
    %v4401 = vrot.slane %v4265, 2
    %v4402 = vrot.slane %v4267, 2
    %v4403 = vsel %vm2727, %v4401, %v4402
    %v4404 = vrot.slane %v4266, 2
    %v4405 = vrot.slane %v4268, 2
    %v4406 = vsel %vm2727, %v4404, %v4405
    %v4407 = vrot.slane %v4269, 2
    %v4408 = vrot.slane %v4271, 2
    %v4409 = vsel %vm2727, %v4407, %v4408
    %v4410 = vrot.slane %v4270, 2
    %v4411 = vrot.slane %v4272, 2
    %v4412 = vsel %vm2727, %v4410, %v4411
    %v4413 = vrot.slane %v4273, 2
    %v4414 = vrot.slane %v4275, 2
    %v4415 = vsel %vm2727, %v4413, %v4414
    %v4416 = vrot.slane %v4274, 2
    %v4417 = vrot.slane %v4276, 2
    %v4418 = vsel %vm2727, %v4416, %v4417
    %v4419 = vrot.slane %v4277, 2
    %v4420 = vrot.slane %v4279, 2
    %v4421 = vsel %vm2727, %v4419, %v4420
    %v4422 = vrot.slane %v4278, 2
    %v4423 = vrot.slane %v4280, 2
    %v4424 = vsel %vm2727, %v4422, %v4423
    %v4425 = vrot.slane %v4281, 2
    %v4426 = vrot.slane %v4283, 2
    %v4427 = vsel %vm2727, %v4425, %v4426
    %v4428 = vrot.slane %v4282, 2
    %v4429 = vrot.slane %v4284, 2
    %v4430 = vsel %vm2727, %v4428, %v4429
    %v4431 = vrot.slane %v4285, 2
    %v4432 = vrot.slane %v4287, 2
    %v4433 = vsel %vm2727, %v4431, %v4432
    %v4434 = vrot.slane %v4286, 2
    %v4435 = vrot.slane %v4288, 2
    %v4436 = vsel %vm2727, %v4434, %v4435
    %v4437 = vrot.slane %v4289, 2
    %v4438 = vrot.slane %v4291, 2
    %v4439 = vsel %vm2727, %v4437, %v4438
    %v4440 = vrot.slane %v4290, 2
    %v4441 = vrot.slane %v4292, 2
    %v4442 = vsel %vm2727, %v4440, %v4441
    %v4443 = vrot.slane %v4293, 2
    %v4444 = vrot.slane %v4295, 2
    %v4445 = vsel %vm2727, %v4443, %v4444
    %v4446 = vrot.slane %v4294, 2
    %v4447 = vrot.slane %v4296, 2
    %v4448 = vsel %vm2727, %v4446, %v4447
    %v4449 = vrot.slane %v4297, 2
    %v4450 = vrot.slane %v4299, 2
    %v4451 = vsel %vm2727, %v4449, %v4450
    %v4452 = vrot.slane %v4298, 2
    %v4453 = vrot.slane %v4300, 2
    %v4454 = vsel %vm2727, %v4452, %v4453
    %v4455 = vrot.slane %v4301, 2
    %v4456 = vrot.slane %v4303, 2
    %v4457 = vsel %vm2727, %v4455, %v4456
    %v4458 = vrot.slane %v4302, 2
    %v4459 = vrot.slane %v4304, 2
    %v4460 = vsel %vm2727, %v4458, %v4459
    %v4461 = vrot.slane %v4305, 2
    %v4462 = vrot.slane %v4307, 2
    %v4463 = vsel %vm2727, %v4461, %v4462
    %v4464 = vrot.slane %v4306, 2
    %v4465 = vrot.slane %v4308, 2
    %v4466 = vsel %vm2727, %v4464, %v4465
    %v4467 = vrot.slane %v4309, 2
    %v4468 = vrot.slane %v4311, 2
    %v4469 = vsel %vm2727, %v4467, %v4468
    %v4470 = vrot.slane %v4310, 2
    %v4471 = vrot.slane %v4312, 2
    %v4472 = vsel %vm2727, %v4470, %v4471
    %v4505 = vadd.f32 %v4145, %v4379
    %v4506 = vadd.f32 %v4146, %v4382
    %v4507 = vadd.f32 %v4147, %v4385
    %v4508 = vadd.f32 %v4148, %v4388
    %v4509 = vadd.f32 %v4149, %v4391
    %v4510 = vadd.f32 %v4150, %v4394
    %v4511 = vadd.f32 %v4151, %v4397
    %v4512 = vadd.f32 %v4152, %v4400
    %v4513 = vadd.f32 %v4153, %v4403
    %v4514 = vadd.f32 %v4154, %v4406
    %v4515 = vadd.f32 %v4155, %v4409
    %v4516 = vadd.f32 %v4156, %v4412
    %v4517 = vadd.f32 %v4157, %v4415
    %v4518 = vadd.f32 %v4158, %v4418
    %v4519 = vadd.f32 %v4159, %v4421
    %v4520 = vadd.f32 %v4160, %v4424
    %v4521 = vadd.f32 %v4161, %v4427
    %v4522 = vadd.f32 %v4162, %v4430
    %v4523 = vadd.f32 %v4163, %v4433
    %v4524 = vadd.f32 %v4164, %v4436
    %v4525 = vadd.f32 %v4165, %v4439
    %v4526 = vadd.f32 %v4166, %v4442
    %v4527 = vadd.f32 %v4167, %v4445
    %v4528 = vadd.f32 %v4168, %v4448
    %v4529 = vadd.f32 %v4169, %v4451
    %v4530 = vadd.f32 %v4170, %v4454
    %v4531 = vadd.f32 %v4171, %v4457
    %v4532 = vadd.f32 %v4172, %v4460
    %v4533 = vadd.f32 %v4173, %v4463
    %v4534 = vadd.f32 %v4174, %v4466
    %v4535 = vadd.f32 %v4175, %v4469
    %v4536 = vadd.f32 %v4176, %v4472
    %v4537 = vpack.c.bf16 %v4507, %v4505
    %v4538 = vpack.c.bf16 %v4508, %v4506
    %v4539 = vpack.c.bf16 %v4511, %v4509
    %v4540 = vpack.c.bf16 %v4512, %v4510
    %v4541 = vpack.c.bf16 %v4515, %v4513
    %v4542 = vpack.c.bf16 %v4516, %v4514
    %v4543 = vpack.c.bf16 %v4519, %v4517
    %v4544 = vpack.c.bf16 %v4520, %v4518
    %v4545 = vpack.c.bf16 %v4523, %v4521
    %v4546 = vpack.c.bf16 %v4524, %v4522
    %v4547 = vpack.c.bf16 %v4527, %v4525
    %v4548 = vpack.c.bf16 %v4528, %v4526
    %v4549 = vpack.c.bf16 %v4531, %v4529
    %v4550 = vpack.c.bf16 %v4532, %v4530
    %v4551 = vpack.c.bf16 %v4535, %v4533
    %v4552 = vpack.c.bf16 %v4536, %v4534
    %v4553 = vld [vmem:[%s2 + $0x40] sm:$0xf]
    %v4554 = vld [vmem:[%s2 + $0x44] sm:$0xf]
    %v4555 = vld [vmem:[%s2 + $0x48] sm:$0xf]
    %v4556 = vld [vmem:[%s2 + $0x4c] sm:$0xf]
    %v4557 = vld [vmem:[%s2 + $0x50] sm:$0xf]
    %v4558 = vld [vmem:[%s2 + $0x54] sm:$0xf]
    %v4559 = vld [vmem:[%s2 + $0x58] sm:$0xf]
    %v4560 = vld [vmem:[%s2 + $0x5c] sm:$0xf]
    %v4561 = vld [vmem:[%s2 + $0x60] sm:$0xf]
    %v4562 = vld [vmem:[%s2 + $0x64] sm:$0xf]
    %v4563 = vld [vmem:[%s2 + $0x68] sm:$0xf]
    %v4564 = vld [vmem:[%s2 + $0x6c] sm:$0xf]
    %v4565 = vld [vmem:[%s2 + $0x70] sm:$0xf]
    %v4566 = vld [vmem:[%s2 + $0x74] sm:$0xf]
    %v4567 = vld [vmem:[%s2 + $0x78] sm:$0xf]
    %v4568 = vld [vmem:[%s2 + $0x7c] sm:$0xf]
    %v4569 = vld [vmem:[%s2 + $0x80] sm:$0xf]
    %v4570 = vld [vmem:[%s2 + $0x84] sm:$0xf]
    %v4571 = vld [vmem:[%s4 + $0x3] sm:$0x1]
    %v4573 = vlaneseq
    %v4574 = vshrl.u32 %v4573, 7
    %v4575 = vsub.s32 0, %v4574
    %v4576 = vrot.slane %v4571, %v4575
    %v4596 = vunpack.c.l.b16 %v4553
    %v4597 = vunpack.c.l.b16 %v4554
    %v4598 = vunpack.c.l.b16 %v4555
    %v4599 = vunpack.c.l.b16 %v4556
    %v4600 = vunpack.c.l.b16 %v4557
    %v4601 = vunpack.c.l.b16 %v4558
    %v4602 = vunpack.c.l.b16 %v4559
    %v4603 = vunpack.c.l.b16 %v4560
    %v4604 = vunpack.c.l.b16 %v4561
    %v4605 = vunpack.c.l.b16 %v4562
    %v4606 = vunpack.c.l.b16 %v4563
    %v4607 = vunpack.c.l.b16 %v4564
    %v4608 = vunpack.c.l.b16 %v4565
    %v4609 = vunpack.c.l.b16 %v4566
    %v4610 = vunpack.c.l.b16 %v4567
    %v4611 = vunpack.c.l.b16 %v4568
    %v4612 = vunpack.c.l.b16 %v4569
    %v4613 = vunpack.c.l.b16 %v4570
    %v4614 = vpack.c.b16 %v4597, %v4596
    %v4615 = vpack.c.b16 %v4599, %v4598
    %v4616 = vpack.c.b16 %v4601, %v4600
    %v4617 = vpack.c.b16 %v4603, %v4602
    %v4618 = vpack.c.b16 %v4605, %v4604
    %v4619 = vpack.c.b16 %v4607, %v4606
    %v4620 = vpack.c.b16 %v4609, %v4608
    %v4621 = vpack.c.b16 %v4611, %v4610
    %v4622 = vpack.c.b16 %v4613, %v4612
    %vm4632 = vcmask 130048
    %v4634 = vsel %vm4632, %v4538, 0
    %v4637 = vsel %vm4632, %v4540, 0
    %v4640 = vsel %vm4632, %v4542, 0
    %v4643 = vsel %vm4632, %v4544, 0
    %v4646 = vsel %vm4632, %v4546, 0
    %v4649 = vsel %vm4632, %v4548, 0
    %v4652 = vsel %vm4632, %v4550, 0
    %v4655 = vsel %vm4632, %v4552, 0
    %4657 = vmatprep.subr.bf16.mxu0 0
    %4658 = vmatpush1.bf16.msra.mxu0 %v4621
    %4659 = vmatprep.subr.bf16.mxu0 0
    %4660 = vmatpush1.bf16.msra.mxu0 %v4620
    %4661 = vmatprep.subr.bf16.mxu0 0
    %4662 = vmatpush1.bf16.msra.mxu0 %v4619
    %4663 = vmatprep.subr.bf16.mxu0 0
    %4664 = vmatpush1.bf16.msra.mxu0 %v4618
    %4665 = vmatprep.subr.bf16.mxu0 0
    %4666 = vmatpush1.bf16.msra.mxu0 %v4617
    %4667 = vmatprep.subr.bf16.mxu0 0
    %4668 = vmatpush1.bf16.msra.mxu0 %v4616
    %4669 = vmatprep.subr.bf16.mxu0 0
    %4670 = vmatpush1.bf16.msra.mxu0 %v4615
    %4671 = vmatprep.subr.bf16.mxu0 0
    %4672 = vmatpush1.bf16.msra.mxu0 %v4614
    %4673 = vmatprep.subr.bf16.mxu0 0
    %4674 = vmatpush2.bf16.msra.mxu0 0
    %4675 = vmatprep.subr.bf16.mxu0 0
    %4676 = vmatpush2.bf16.msra.mxu0 0
    %4677 = vmatprep.subr.bf16.mxu0 0
    %4678 = vmatpush2.bf16.msra.mxu0 0
    %4679 = vmatprep.subr.bf16.mxu0 0
    %4680 = vmatpush2.bf16.msra.mxu0 0
    %4681 = vmatprep.subr.bf16.mxu0 0
    %4682 = vmatpush2.bf16.msra.mxu0 0
    %4683 = vmatprep.subr.bf16.mxu0 0
    %4684 = vmatpush2.bf16.msra.mxu0 0
    %4685 = vmatprep.subr.bf16.mxu0 0
    %4686 = vmatpush2.bf16.msra.mxu0 0
    %4687 = vmatprep.subr.bf16.mxu0 0
    %4688 = vmatpush2.bf16.msra.mxu0 %v4622
    %4689 = vmatprep.mubr.bf16.mxu0 %v4634
    %4690 = vmatmul.mubr.bf16.gmra.mxu0 %v4537
    %v4691 = vpop.f32.mrf.mxu0
    %v4692 = vadd.f32 %v4576, %v4691
    %v4693 = vpop.f32.mrf.mxu0
    %v4694 = vpop.f32.mrf.mxu0
    %v4695 = vadd.f32 %v4576, %v4694
    %v4696 = vpop.f32.mrf.mxu0
    %4697 = vmatprep.mubr.bf16.mxu0 %v4637
    %4698 = vmatmul.mubr.bf16.gmra.mxu0 %v4539
    %v4699 = vpop.f32.mrf.mxu0
    %v4700 = vadd.f32 %v4576, %v4699
    %v4701 = vpop.f32.mrf.mxu0
    %v4702 = vpop.f32.mrf.mxu0
    %v4703 = vadd.f32 %v4576, %v4702
    %v4704 = vpop.f32.mrf.mxu0
    %4705 = vmatprep.mubr.bf16.mxu0 %v4640
    %4706 = vmatmul.mubr.bf16.gmra.mxu0 %v4541
    %v4707 = vpop.f32.mrf.mxu0
    %v4708 = vadd.f32 %v4576, %v4707
    %v4709 = vpop.f32.mrf.mxu0
    %v4710 = vpop.f32.mrf.mxu0
    %v4711 = vadd.f32 %v4576, %v4710
    %v4712 = vpop.f32.mrf.mxu0
    %4713 = vmatprep.mubr.bf16.mxu0 %v4643
    %4714 = vmatmul.mubr.bf16.gmra.mxu0 %v4543
    %v4715 = vpop.f32.mrf.mxu0
    %v4716 = vadd.f32 %v4576, %v4715
    %v4717 = vpop.f32.mrf.mxu0
    %v4718 = vpop.f32.mrf.mxu0
    %v4719 = vadd.f32 %v4576, %v4718
    %v4720 = vpop.f32.mrf.mxu0
    %4721 = vmatprep.mubr.bf16.mxu0 %v4646
    %4722 = vmatmul.mubr.bf16.gmra.mxu0 %v4545
    %v4723 = vpop.f32.mrf.mxu0
    %v4724 = vadd.f32 %v4576, %v4723
    %v4725 = vpop.f32.mrf.mxu0
    %v4726 = vpop.f32.mrf.mxu0
    %v4727 = vadd.f32 %v4576, %v4726
    %v4728 = vpop.f32.mrf.mxu0
    %4729 = vmatprep.mubr.bf16.mxu0 %v4649
    %4730 = vmatmul.mubr.bf16.gmra.mxu0 %v4547
    %v4731 = vpop.f32.mrf.mxu0
    %v4732 = vadd.f32 %v4576, %v4731
    %v4733 = vpop.f32.mrf.mxu0
    %v4734 = vpop.f32.mrf.mxu0
    %v4735 = vadd.f32 %v4576, %v4734
    %v4736 = vpop.f32.mrf.mxu0
    %4737 = vmatprep.mubr.bf16.mxu0 %v4652
    %4738 = vmatmul.mubr.bf16.gmra.mxu0 %v4549
    %v4739 = vpop.f32.mrf.mxu0
    %v4740 = vadd.f32 %v4576, %v4739
    %v4741 = vpop.f32.mrf.mxu0
    %v4742 = vpop.f32.mrf.mxu0
    %v4743 = vadd.f32 %v4576, %v4742
    %v4744 = vpop.f32.mrf.mxu0
    %4745 = vmatprep.mubr.bf16.mxu0 %v4655
    %4746 = vmatmul.mubr.bf16.gmra.mxu0 %v4551
    %v4747 = vpop.f32.mrf.mxu0
    %v4748 = vadd.f32 %v4576, %v4747
    %v4749 = vpop.f32.mrf.mxu0
    %v4750 = vpop.f32.mrf.mxu0
    %v4751 = vadd.f32 %v4576, %v4750
    %v4752 = vpop.f32.mrf.mxu0
    %4753 = vdwg.mxu0
    %v4754 = vmax.f32 %v4692, 0.0
    %v4755 = vmax.f32 %v4695, 0.0
    %v4756 = vmax.f32 %v4700, 0.0
    %v4757 = vmax.f32 %v4703, 0.0
    %v4758 = vmax.f32 %v4708, 0.0
    %v4759 = vmax.f32 %v4711, 0.0
    %v4760 = vmax.f32 %v4716, 0.0
    %v4761 = vmax.f32 %v4719, 0.0
    %v4762 = vmax.f32 %v4724, 0.0
    %v4763 = vmax.f32 %v4727, 0.0
    %v4764 = vmax.f32 %v4732, 0.0
    %v4765 = vmax.f32 %v4735, 0.0
    %v4766 = vmax.f32 %v4740, 0.0
    %v4767 = vmax.f32 %v4743, 0.0
    %v4768 = vmax.f32 %v4748, 0.0
    %v4769 = vmax.f32 %v4751, 0.0
    %s4770 = scalar_lea.vmem [#allocation5], 16
    %4771 = vst [vmem:[%s4770 + $0x1] sm:$0xff] %v4754
    %4772 = vst [vmem:[%s4770 + $0x11] sm:$0xff] %v4755
    %4773 = vst [vmem:[%s4770 + $0x21] sm:$0xff] %v4756
    %4774 = vst [vmem:[%s4770 + $0x31] sm:$0xff] %v4757
    %4775 = vst [vmem:[%s4770 + $0x41] sm:$0xff] %v4758
    %4776 = vst [vmem:[%s4770 + $0x51] sm:$0xff] %v4759
    %4777 = vst [vmem:[%s4770 + $0x61] sm:$0xff] %v4760
    %4778 = vst [vmem:[%s4770 + $0x71] sm:$0xff] %v4761
    %4779 = vst [vmem:[%s4770 + $0xa1] sm:$0xff] %v4762
    %4780 = vst [vmem:[%s4770 + $0xb1] sm:$0xff] %v4763
    %4781 = vst [vmem:[%s4770 + $0xc1] sm:$0xff] %v4764
    %4782 = vst [vmem:[%s4770 + $0xd1] sm:$0xff] %v4765
    %4783 = vst [vmem:[%s4770 + $0xe1] sm:$0xff] %v4766
    %4784 = vst [vmem:[%s4770 + $0xf1] sm:$0xff] %v4767
    %4785 = vst [vmem:[%s4770 + $0x101] sm:$0xff] %v4768
    %4786 = vst [vmem:[%s4770 + $0x111] sm:$0xff] %v4769
    %v4787 = vld [vmem:[%s1 + $0x20] sm:$0xff]
    %v4788 = vld [vmem:[%s1 + $0x60] sm:$0x1]
    %v4789 = vld [vmem:[#allocation5] sm:$0xff]
    %v4790 = vld [vmem:[#allocation5 + $0x10] sm:$0xff]
    %v4791 = vld [vmem:[#allocation5 + $0x20] sm:$0xff]
    %v4792 = vld [vmem:[#allocation5 + $0x30] sm:$0xff]
    %v4793 = vld [vmem:[#allocation5 + $0x40] sm:$0xff]
    %v4794 = vld [vmem:[#allocation5 + $0x50] sm:$0xff]
    %v4795 = vld [vmem:[#allocation5 + $0x60] sm:$0xff]
    %v4796 = vld [vmem:[#allocation5 + $0x70] sm:$0xff]
    %v4797 = vld [vmem:[#allocation5 + $0xa0] sm:$0xff]
    %v4798 = vld [vmem:[#allocation5 + $0xb0] sm:$0xff]
    %v4799 = vld [vmem:[#allocation5 + $0xc0] sm:$0xff]
    %v4800 = vld [vmem:[#allocation5 + $0xd0] sm:$0xff]
    %v4801 = vld [vmem:[#allocation5 + $0xe0] sm:$0xff]
    %v4802 = vld [vmem:[#allocation5 + $0xf0] sm:$0xff]
    %v4803 = vld [vmem:[#allocation5 + $0x100] sm:$0xff]
    %v4804 = vld [vmem:[#allocation5 + $0x110] sm:$0xff]
    %v4805 = vlaneseq
    %v4806 = vshrl.u32 %v4805, 7
    %v4807 = vsub.s32 0, %v4806
    %v4808 = vrot.slane %v4787, %v4807
    %v4809 = vmul.f32 %v4789, %v4808
    %v4810 = vmul.f32 %v4790, %v4808
    %v4811 = vmul.f32 %v4791, %v4808
    %v4812 = vmul.f32 %v4792, %v4808
    %v4813 = vmul.f32 %v4793, %v4808
    %v4814 = vmul.f32 %v4794, %v4808
    %v4815 = vmul.f32 %v4795, %v4808
    %v4816 = vmul.f32 %v4796, %v4808
    %v4817 = vmul.f32 %v4797, %v4808
    %v4818 = vmul.f32 %v4798, %v4808
    %v4819 = vmul.f32 %v4799, %v4808
    %v4820 = vmul.f32 %v4800, %v4808
    %v4821 = vmul.f32 %v4801, %v4808
    %v4822 = vmul.f32 %v4802, %v4808
    %v4823 = vmul.f32 %v4803, %v4808
    %v4824 = vmul.f32 %v4804, %v4808
    %v4825 = vld [vmem:[#allocation5 + $0x1] sm:$0xff]
    %v4826 = vld [vmem:[#allocation5 + $0x11] sm:$0xff]
    %v4827 = vld [vmem:[#allocation5 + $0x21] sm:$0xff]
    %v4828 = vld [vmem:[#allocation5 + $0x31] sm:$0xff]
    %v4829 = vld [vmem:[#allocation5 + $0x41] sm:$0xff]
    %v4830 = vld [vmem:[#allocation5 + $0x51] sm:$0xff]
    %v4831 = vld [vmem:[#allocation5 + $0x61] sm:$0xff]
    %v4832 = vld [vmem:[#allocation5 + $0x71] sm:$0xff]
    %v4833 = vld [vmem:[#allocation5 + $0xa1] sm:$0xff]
    %v4834 = vld [vmem:[#allocation5 + $0xb1] sm:$0xff]
    %v4835 = vld [vmem:[#allocation5 + $0xc1] sm:$0xff]
    %v4836 = vld [vmem:[#allocation5 + $0xd1] sm:$0xff]
    %v4837 = vld [vmem:[#allocation5 + $0xe1] sm:$0xff]
    %v4838 = vld [vmem:[#allocation5 + $0xf1] sm:$0xff]
    %v4839 = vld [vmem:[#allocation5 + $0x101] sm:$0xff]
    %v4840 = vld [vmem:[#allocation5 + $0x111] sm:$0xff]
    %v4841 = vlaneseq
    %v4842 = vshrl.u32 %v4841, 7
    %v4843 = vsub.s32 1, %v4842
    %v4844 = vrot.slane %v4787, %v4843
    %v4845 = vmul.f32 %v4825, %v4844
    %v4846 = vmul.f32 %v4826, %v4844
    %v4847 = vmul.f32 %v4827, %v4844
    %v4848 = vmul.f32 %v4828, %v4844
    %v4849 = vmul.f32 %v4829, %v4844
    %v4850 = vmul.f32 %v4830, %v4844
    %v4851 = vmul.f32 %v4831, %v4844
    %v4852 = vmul.f32 %v4832, %v4844
    %v4853 = vmul.f32 %v4833, %v4844
    %v4854 = vmul.f32 %v4834, %v4844
    %v4855 = vmul.f32 %v4835, %v4844
    %v4856 = vmul.f32 %v4836, %v4844
    %v4857 = vmul.f32 %v4837, %v4844
    %v4858 = vmul.f32 %v4838, %v4844
    %v4859 = vmul.f32 %v4839, %v4844
    %v4860 = vmul.f32 %v4840, %v4844
    %v4861 = vadd.f32 %v4809, %v4845
    %v4862 = vadd.f32 %v4810, %v4846
    %v4863 = vadd.f32 %v4811, %v4847
    %v4864 = vadd.f32 %v4812, %v4848
    %v4865 = vadd.f32 %v4813, %v4849
    %v4866 = vadd.f32 %v4814, %v4850
    %v4867 = vadd.f32 %v4815, %v4851
    %v4868 = vadd.f32 %v4816, %v4852
    %v4869 = vadd.f32 %v4817, %v4853
    %v4870 = vadd.f32 %v4818, %v4854
    %v4871 = vadd.f32 %v4819, %v4855
    %v4872 = vadd.f32 %v4820, %v4856
    %v4873 = vadd.f32 %v4821, %v4857
    %v4874 = vadd.f32 %v4822, %v4858
    %v4875 = vadd.f32 %v4823, %v4859
    %v4876 = vadd.f32 %v4824, %v4860
    %v4877 = vld [vmem:[#allocation5 + $0x2] sm:$0xff]
    %v4878 = vld [vmem:[#allocation5 + $0x12] sm:$0xff]
    %v4879 = vld [vmem:[#allocation5 + $0x22] sm:$0xff]
    %v4880 = vld [vmem:[#allocation5 + $0x32] sm:$0xff]
    %v4881 = vld [vmem:[#allocation5 + $0x42] sm:$0xff]
    %v4882 = vld [vmem:[#allocation5 + $0x52] sm:$0xff]
    %v4883 = vld [vmem:[#allocation5 + $0x62] sm:$0xff]
    %v4884 = vld [vmem:[#allocation5 + $0x72] sm:$0xff]
    %v4885 = vld [vmem:[#allocation5 + $0xa2] sm:$0xff]
    %v4886 = vld [vmem:[#allocation5 + $0xb2] sm:$0xff]
    %v4887 = vld [vmem:[#allocation5 + $0xc2] sm:$0xff]
    %v4888 = vld [vmem:[#allocation5 + $0xd2] sm:$0xff]
    %v4889 = vld [vmem:[#allocation5 + $0xe2] sm:$0xff]
    %v4890 = vld [vmem:[#allocation5 + $0xf2] sm:$0xff]
    %v4891 = vld [vmem:[#allocation5 + $0x102] sm:$0xff]
    %v4892 = vld [vmem:[#allocation5 + $0x112] sm:$0xff]
    %v4893 = vlaneseq
    %v4894 = vshrl.u32 %v4893, 7
    %v4895 = vsub.s32 2, %v4894
    %v4896 = vrot.slane %v4787, %v4895
    %v4897 = vmul.f32 %v4877, %v4896
    %v4898 = vmul.f32 %v4878, %v4896
    %v4899 = vmul.f32 %v4879, %v4896
    %v4900 = vmul.f32 %v4880, %v4896
    %v4901 = vmul.f32 %v4881, %v4896
    %v4902 = vmul.f32 %v4882, %v4896
    %v4903 = vmul.f32 %v4883, %v4896
    %v4904 = vmul.f32 %v4884, %v4896
    %v4905 = vmul.f32 %v4885, %v4896
    %v4906 = vmul.f32 %v4886, %v4896
    %v4907 = vmul.f32 %v4887, %v4896
    %v4908 = vmul.f32 %v4888, %v4896
    %v4909 = vmul.f32 %v4889, %v4896
    %v4910 = vmul.f32 %v4890, %v4896
    %v4911 = vmul.f32 %v4891, %v4896
    %v4912 = vmul.f32 %v4892, %v4896
    %v4913 = vadd.f32 %v4861, %v4897
    %v4914 = vadd.f32 %v4862, %v4898
    %v4915 = vadd.f32 %v4863, %v4899
    %v4916 = vadd.f32 %v4864, %v4900
    %v4917 = vadd.f32 %v4865, %v4901
    %v4918 = vadd.f32 %v4866, %v4902
    %v4919 = vadd.f32 %v4867, %v4903
    %v4920 = vadd.f32 %v4868, %v4904
    %v4921 = vadd.f32 %v4869, %v4905
    %v4922 = vadd.f32 %v4870, %v4906
    %v4923 = vadd.f32 %v4871, %v4907
    %v4924 = vadd.f32 %v4872, %v4908
    %v4925 = vadd.f32 %v4873, %v4909
    %v4926 = vadd.f32 %v4874, %v4910
    %v4927 = vadd.f32 %v4875, %v4911
    %v4928 = vadd.f32 %v4876, %v4912
    %v4929 = vld [vmem:[%s4770] sm:$0xff]
    %v4930 = vld [vmem:[%s4770 + $0x10] sm:$0xff]
    %v4931 = vld [vmem:[%s4770 + $0x20] sm:$0xff]
    %v4932 = vld [vmem:[%s4770 + $0x30] sm:$0xff]
    %v4933 = vld [vmem:[%s4770 + $0x40] sm:$0xff]
    %v4934 = vld [vmem:[%s4770 + $0x50] sm:$0xff]
    %v4935 = vld [vmem:[%s4770 + $0x60] sm:$0xff]
    %v4936 = vld [vmem:[%s4770 + $0x70] sm:$0xff]
    %v4937 = vld [vmem:[%s4770 + $0xa0] sm:$0xff]
    %v4938 = vld [vmem:[%s4770 + $0xb0] sm:$0xff]
    %v4939 = vld [vmem:[%s4770 + $0xc0] sm:$0xff]
    %v4940 = vld [vmem:[%s4770 + $0xd0] sm:$0xff]
    %v4941 = vld [vmem:[%s4770 + $0xe0] sm:$0xff]
    %v4942 = vld [vmem:[%s4770 + $0xf0] sm:$0xff]
    %v4943 = vld [vmem:[%s4770 + $0x100] sm:$0xff]
    %v4944 = vld [vmem:[%s4770 + $0x110] sm:$0xff]
    %v4945 = vlaneseq
    %v4946 = vshrl.u32 %v4945, 7
    %v4947 = vsub.s32 3, %v4946
    %v4948 = vrot.slane %v4787, %v4947
    %v4949 = vmul.f32 %v4929, %v4948
    %v4950 = vmul.f32 %v4930, %v4948
    %v4951 = vmul.f32 %v4931, %v4948
    %v4952 = vmul.f32 %v4932, %v4948
    %v4953 = vmul.f32 %v4933, %v4948
    %v4954 = vmul.f32 %v4934, %v4948
    %v4955 = vmul.f32 %v4935, %v4948
    %v4956 = vmul.f32 %v4936, %v4948
    %v4957 = vmul.f32 %v4937, %v4948
    %v4958 = vmul.f32 %v4938, %v4948
    %v4959 = vmul.f32 %v4939, %v4948
    %v4960 = vmul.f32 %v4940, %v4948
    %v4961 = vmul.f32 %v4941, %v4948
    %v4962 = vmul.f32 %v4942, %v4948
    %v4963 = vmul.f32 %v4943, %v4948
    %v4964 = vmul.f32 %v4944, %v4948
    %v4965 = vadd.f32 %v4913, %v4949
    %v4966 = vadd.f32 %v4914, %v4950
    %v4967 = vadd.f32 %v4915, %v4951
    %v4968 = vadd.f32 %v4916, %v4952
    %v4969 = vadd.f32 %v4917, %v4953
    %v4970 = vadd.f32 %v4918, %v4954
    %v4971 = vadd.f32 %v4919, %v4955
    %v4972 = vadd.f32 %v4920, %v4956
    %v4973 = vadd.f32 %v4921, %v4957
    %v4974 = vadd.f32 %v4922, %v4958
    %v4975 = vadd.f32 %v4923, %v4959
    %v4976 = vadd.f32 %v4924, %v4960
    %v4977 = vadd.f32 %v4925, %v4961
    %v4978 = vadd.f32 %v4926, %v4962
    %v4979 = vadd.f32 %v4927, %v4963
    %v4980 = vadd.f32 %v4928, %v4964
    %v4981 = vld [vmem:[%s4770 + $0x1] sm:$0xff]
    %v4982 = vld [vmem:[%s4770 + $0x11] sm:$0xff]
    %v4983 = vld [vmem:[%s4770 + $0x21] sm:$0xff]
    %v4984 = vld [vmem:[%s4770 + $0x31] sm:$0xff]
    %v4985 = vld [vmem:[%s4770 + $0x41] sm:$0xff]
    %v4986 = vld [vmem:[%s4770 + $0x51] sm:$0xff]
    %v4987 = vld [vmem:[%s4770 + $0x61] sm:$0xff]
    %v4988 = vld [vmem:[%s4770 + $0x71] sm:$0xff]
    %v4989 = vld [vmem:[%s4770 + $0xa1] sm:$0xff]
    %v4990 = vld [vmem:[%s4770 + $0xb1] sm:$0xff]
    %v4991 = vld [vmem:[%s4770 + $0xc1] sm:$0xff]
    %v4992 = vld [vmem:[%s4770 + $0xd1] sm:$0xff]
    %v4993 = vld [vmem:[%s4770 + $0xe1] sm:$0xff]
    %v4994 = vld [vmem:[%s4770 + $0xf1] sm:$0xff]
    %v4995 = vld [vmem:[%s4770 + $0x101] sm:$0xff]
    %v4996 = vld [vmem:[%s4770 + $0x111] sm:$0xff]
    %v4997 = vlaneseq
    %v4998 = vshrl.u32 %v4997, 7
    %v4999 = vsub.s32 4, %v4998
    %v5000 = vrot.slane %v4787, %v4999
    %v5001 = vmul.f32 %v4981, %v5000
    %v5002 = vmul.f32 %v4982, %v5000
    %v5003 = vmul.f32 %v4983, %v5000
    %v5004 = vmul.f32 %v4984, %v5000
    %v5005 = vmul.f32 %v4985, %v5000
    %v5006 = vmul.f32 %v4986, %v5000
    %v5007 = vmul.f32 %v4987, %v5000
    %v5008 = vmul.f32 %v4988, %v5000
    %v5009 = vmul.f32 %v4989, %v5000
    %v5010 = vmul.f32 %v4990, %v5000
    %v5011 = vmul.f32 %v4991, %v5000
    %v5012 = vmul.f32 %v4992, %v5000
    %v5013 = vmul.f32 %v4993, %v5000
    %v5014 = vmul.f32 %v4994, %v5000
    %v5015 = vmul.f32 %v4995, %v5000
    %v5016 = vmul.f32 %v4996, %v5000
    %v5017 = vadd.f32 %v4965, %v5001
    %v5018 = vadd.f32 %v4966, %v5002
    %v5019 = vadd.f32 %v4967, %v5003
    %v5020 = vadd.f32 %v4968, %v5004
    %v5021 = vadd.f32 %v4969, %v5005
    %v5022 = vadd.f32 %v4970, %v5006
    %v5023 = vadd.f32 %v4971, %v5007
    %v5024 = vadd.f32 %v4972, %v5008
    %v5025 = vadd.f32 %v4973, %v5009
    %v5026 = vadd.f32 %v4974, %v5010
    %v5027 = vadd.f32 %v4975, %v5011
    %v5028 = vadd.f32 %v4976, %v5012
    %v5029 = vadd.f32 %v4977, %v5013
    %v5030 = vadd.f32 %v4978, %v5014
    %v5031 = vadd.f32 %v4979, %v5015
    %v5032 = vadd.f32 %v4980, %v5016
    %v5033 = vld [vmem:[%s4770 + $0x2] sm:$0xff]
    %v5034 = vld [vmem:[%s4770 + $0x12] sm:$0xff]
    %v5035 = vld [vmem:[%s4770 + $0x22] sm:$0xff]
    %v5036 = vld [vmem:[%s4770 + $0x32] sm:$0xff]
    %v5037 = vld [vmem:[%s4770 + $0x42] sm:$0xff]
    %v5038 = vld [vmem:[%s4770 + $0x52] sm:$0xff]
    %v5039 = vld [vmem:[%s4770 + $0x62] sm:$0xff]
    %v5040 = vld [vmem:[%s4770 + $0x72] sm:$0xff]
    %v5041 = vld [vmem:[%s4770 + $0xa2] sm:$0xff]
    %v5042 = vld [vmem:[%s4770 + $0xb2] sm:$0xff]
    %v5043 = vld [vmem:[%s4770 + $0xc2] sm:$0xff]
    %v5044 = vld [vmem:[%s4770 + $0xd2] sm:$0xff]
    %v5045 = vld [vmem:[%s4770 + $0xe2] sm:$0xff]
    %v5046 = vld [vmem:[%s4770 + $0xf2] sm:$0xff]
    %v5047 = vld [vmem:[%s4770 + $0x102] sm:$0xff]
    %v5048 = vld [vmem:[%s4770 + $0x112] sm:$0xff]
    %v5049 = vlaneseq
    %v5050 = vshrl.u32 %v5049, 7
    %v5051 = vsub.s32 5, %v5050
    %v5052 = vrot.slane %v4787, %v5051
    %v5053 = vmul.f32 %v5033, %v5052
    %v5054 = vmul.f32 %v5034, %v5052
    %v5055 = vmul.f32 %v5035, %v5052
    %v5056 = vmul.f32 %v5036, %v5052
    %v5057 = vmul.f32 %v5037, %v5052
    %v5058 = vmul.f32 %v5038, %v5052
    %v5059 = vmul.f32 %v5039, %v5052
    %v5060 = vmul.f32 %v5040, %v5052
    %v5061 = vmul.f32 %v5041, %v5052
    %v5062 = vmul.f32 %v5042, %v5052
    %v5063 = vmul.f32 %v5043, %v5052
    %v5064 = vmul.f32 %v5044, %v5052
    %v5065 = vmul.f32 %v5045, %v5052
    %v5066 = vmul.f32 %v5046, %v5052
    %v5067 = vmul.f32 %v5047, %v5052
    %v5068 = vmul.f32 %v5048, %v5052
    %v5069 = vadd.f32 %v5017, %v5053
    %v5070 = vadd.f32 %v5018, %v5054
    %v5071 = vadd.f32 %v5019, %v5055
    %v5072 = vadd.f32 %v5020, %v5056
    %v5073 = vadd.f32 %v5021, %v5057
    %v5074 = vadd.f32 %v5022, %v5058
    %v5075 = vadd.f32 %v5023, %v5059
    %v5076 = vadd.f32 %v5024, %v5060
    %v5077 = vadd.f32 %v5025, %v5061
    %v5078 = vadd.f32 %v5026, %v5062
    %v5079 = vadd.f32 %v5027, %v5063
    %v5080 = vadd.f32 %v5028, %v5064
    %v5081 = vadd.f32 %v5029, %v5065
    %v5082 = vadd.f32 %v5030, %v5066
    %v5083 = vadd.f32 %v5031, %v5067
    %v5084 = vadd.f32 %v5032, %v5068
    %s5085 = scalar_lea.vmem [#allocation5], 32
    %v5086 = vld [vmem:[%s5085] sm:$0xff]
    %v5087 = vld [vmem:[%s5085 + $0x10] sm:$0xff]
    %v5088 = vld [vmem:[%s5085 + $0x20] sm:$0xff]
    %v5089 = vld [vmem:[%s5085 + $0x30] sm:$0xff]
    %v5090 = vld [vmem:[%s5085 + $0x40] sm:$0xff]
    %v5091 = vld [vmem:[%s5085 + $0x50] sm:$0xff]
    %v5092 = vld [vmem:[%s5085 + $0x60] sm:$0xff]
    %v5093 = vld [vmem:[%s5085 + $0x70] sm:$0xff]
    %v5094 = vld [vmem:[%s5085 + $0xa0] sm:$0xff]
    %v5095 = vld [vmem:[%s5085 + $0xb0] sm:$0xff]
    %v5096 = vld [vmem:[%s5085 + $0xc0] sm:$0xff]
    %v5097 = vld [vmem:[%s5085 + $0xd0] sm:$0xff]
    %v5098 = vld [vmem:[%s5085 + $0xe0] sm:$0xff]
    %v5099 = vld [vmem:[%s5085 + $0xf0] sm:$0xff]
    %v5100 = vld [vmem:[%s5085 + $0x100] sm:$0xff]
    %v5101 = vld [vmem:[%s5085 + $0x110] sm:$0xff]
    %v5102 = vlaneseq
    %v5103 = vshrl.u32 %v5102, 7
    %v5104 = vsub.s32 6, %v5103
    %v5105 = vrot.slane %v4787, %v5104
    %v5106 = vmul.f32 %v5086, %v5105
    %v5107 = vmul.f32 %v5087, %v5105
    %v5108 = vmul.f32 %v5088, %v5105
    %v5109 = vmul.f32 %v5089, %v5105
    %v5110 = vmul.f32 %v5090, %v5105
    %v5111 = vmul.f32 %v5091, %v5105
    %v5112 = vmul.f32 %v5092, %v5105
    %v5113 = vmul.f32 %v5093, %v5105
    %v5114 = vmul.f32 %v5094, %v5105
    %v5115 = vmul.f32 %v5095, %v5105
    %v5116 = vmul.f32 %v5096, %v5105
    %v5117 = vmul.f32 %v5097, %v5105
    %v5118 = vmul.f32 %v5098, %v5105
    %v5119 = vmul.f32 %v5099, %v5105
    %v5120 = vmul.f32 %v5100, %v5105
    %v5121 = vmul.f32 %v5101, %v5105
    %v5122 = vadd.f32 %v5069, %v5106
    %v5123 = vadd.f32 %v5070, %v5107
    %v5124 = vadd.f32 %v5071, %v5108
    %v5125 = vadd.f32 %v5072, %v5109
    %v5126 = vadd.f32 %v5073, %v5110
    %v5127 = vadd.f32 %v5074, %v5111
    %v5128 = vadd.f32 %v5075, %v5112
    %v5129 = vadd.f32 %v5076, %v5113
    %v5130 = vadd.f32 %v5077, %v5114
    %v5131 = vadd.f32 %v5078, %v5115
    %v5132 = vadd.f32 %v5079, %v5116
    %v5133 = vadd.f32 %v5080, %v5117
    %v5134 = vadd.f32 %v5081, %v5118
    %v5135 = vadd.f32 %v5082, %v5119
    %v5136 = vadd.f32 %v5083, %v5120
    %v5137 = vadd.f32 %v5084, %v5121
    %v5138 = vld [vmem:[%s5085 + $0x1] sm:$0xff]
    %v5139 = vld [vmem:[%s5085 + $0x11] sm:$0xff]
    %v5140 = vld [vmem:[%s5085 + $0x21] sm:$0xff]
    %v5141 = vld [vmem:[%s5085 + $0x31] sm:$0xff]
    %v5142 = vld [vmem:[%s5085 + $0x41] sm:$0xff]
    %v5143 = vld [vmem:[%s5085 + $0x51] sm:$0xff]
    %v5144 = vld [vmem:[%s5085 + $0x61] sm:$0xff]
    %v5145 = vld [vmem:[%s5085 + $0x71] sm:$0xff]
    %v5146 = vld [vmem:[%s5085 + $0xa1] sm:$0xff]
    %v5147 = vld [vmem:[%s5085 + $0xb1] sm:$0xff]
    %v5148 = vld [vmem:[%s5085 + $0xc1] sm:$0xff]
    %v5149 = vld [vmem:[%s5085 + $0xd1] sm:$0xff]
    %v5150 = vld [vmem:[%s5085 + $0xe1] sm:$0xff]
    %v5151 = vld [vmem:[%s5085 + $0xf1] sm:$0xff]
    %v5152 = vld [vmem:[%s5085 + $0x101] sm:$0xff]
    %v5153 = vld [vmem:[%s5085 + $0x111] sm:$0xff]
    %v5154 = vlaneseq
    %v5155 = vshrl.u32 %v5154, 7
    %v5156 = vsub.s32 7, %v5155
    %v5157 = vrot.slane %v4787, %v5156
    %v5158 = vmul.f32 %v5138, %v5157
    %v5159 = vmul.f32 %v5139, %v5157
    %v5160 = vmul.f32 %v5140, %v5157
    %v5161 = vmul.f32 %v5141, %v5157
    %v5162 = vmul.f32 %v5142, %v5157
    %v5163 = vmul.f32 %v5143, %v5157
    %v5164 = vmul.f32 %v5144, %v5157
    %v5165 = vmul.f32 %v5145, %v5157
    %v5166 = vmul.f32 %v5146, %v5157
    %v5167 = vmul.f32 %v5147, %v5157
    %v5168 = vmul.f32 %v5148, %v5157
    %v5169 = vmul.f32 %v5149, %v5157
    %v5170 = vmul.f32 %v5150, %v5157
    %v5171 = vmul.f32 %v5151, %v5157
    %v5172 = vmul.f32 %v5152, %v5157
    %v5173 = vmul.f32 %v5153, %v5157
    %v5174 = vadd.f32 %v5122, %v5158
    %v5175 = vadd.f32 %v5123, %v5159
    %v5176 = vadd.f32 %v5124, %v5160
    %v5177 = vadd.f32 %v5125, %v5161
    %v5178 = vadd.f32 %v5126, %v5162
    %v5179 = vadd.f32 %v5127, %v5163
    %v5180 = vadd.f32 %v5128, %v5164
    %v5181 = vadd.f32 %v5129, %v5165
    %v5182 = vadd.f32 %v5130, %v5166
    %v5183 = vadd.f32 %v5131, %v5167
    %v5184 = vadd.f32 %v5132, %v5168
    %v5185 = vadd.f32 %v5133, %v5169
    %v5186 = vadd.f32 %v5134, %v5170
    %v5187 = vadd.f32 %v5135, %v5171
    %v5188 = vadd.f32 %v5136, %v5172
    %v5189 = vadd.f32 %v5137, %v5173
    %v5190 = vld [vmem:[%s5085 + $0x2] sm:$0xff]
    %v5191 = vld [vmem:[%s5085 + $0x12] sm:$0xff]
    %v5192 = vld [vmem:[%s5085 + $0x22] sm:$0xff]
    %v5193 = vld [vmem:[%s5085 + $0x32] sm:$0xff]
    %v5194 = vld [vmem:[%s5085 + $0x42] sm:$0xff]
    %v5195 = vld [vmem:[%s5085 + $0x52] sm:$0xff]
    %v5196 = vld [vmem:[%s5085 + $0x62] sm:$0xff]
    %v5197 = vld [vmem:[%s5085 + $0x72] sm:$0xff]
    %v5198 = vld [vmem:[%s5085 + $0xa2] sm:$0xff]
    %v5199 = vld [vmem:[%s5085 + $0xb2] sm:$0xff]
    %v5200 = vld [vmem:[%s5085 + $0xc2] sm:$0xff]
    %v5201 = vld [vmem:[%s5085 + $0xd2] sm:$0xff]
    %v5202 = vld [vmem:[%s5085 + $0xe2] sm:$0xff]
    %v5203 = vld [vmem:[%s5085 + $0xf2] sm:$0xff]
    %v5204 = vld [vmem:[%s5085 + $0x102] sm:$0xff]
    %v5205 = vld [vmem:[%s5085 + $0x112] sm:$0xff]
    %v5206 = vlaneseq
    %v5207 = vshrl.u32 %v5206, 7
    %v5208 = vsub.s32 0, %v5207
    %v5209 = vrot.slane %v4788, %v5208
    %v5210 = vmul.f32 %v5190, %v5209
    %v5211 = vmul.f32 %v5191, %v5209
    %v5212 = vmul.f32 %v5192, %v5209
    %v5213 = vmul.f32 %v5193, %v5209
    %v5214 = vmul.f32 %v5194, %v5209
    %v5215 = vmul.f32 %v5195, %v5209
    %v5216 = vmul.f32 %v5196, %v5209
    %v5217 = vmul.f32 %v5197, %v5209
    %v5218 = vmul.f32 %v5198, %v5209
    %v5219 = vmul.f32 %v5199, %v5209
    %v5220 = vmul.f32 %v5200, %v5209
    %v5221 = vmul.f32 %v5201, %v5209
    %v5222 = vmul.f32 %v5202, %v5209
    %v5223 = vmul.f32 %v5203, %v5209
    %v5224 = vmul.f32 %v5204, %v5209
    %v5225 = vmul.f32 %v5205, %v5209
    %v5226 = vadd.f32 %v5174, %v5210
    %v5227 = vadd.f32 %v5175, %v5211
    %v5228 = vadd.f32 %v5176, %v5212
    %v5229 = vadd.f32 %v5177, %v5213
    %v5230 = vadd.f32 %v5178, %v5214
    %v5231 = vadd.f32 %v5179, %v5215
    %v5232 = vadd.f32 %v5180, %v5216
    %v5233 = vadd.f32 %v5181, %v5217
    %v5234 = vadd.f32 %v5182, %v5218
    %v5235 = vadd.f32 %v5183, %v5219
    %v5236 = vadd.f32 %v5184, %v5220
    %v5237 = vadd.f32 %v5185, %v5221
    %v5238 = vadd.f32 %v5186, %v5222
    %v5239 = vadd.f32 %v5187, %v5223
    %v5240 = vadd.f32 %v5188, %v5224
    %v5241 = vadd.f32 %v5189, %v5225
    %v5242 = vpack.c.bf16 %v5227, %v5226
    %v5243 = vpack.c.bf16 %v5229, %v5228
    %v5244 = vpack.c.bf16 %v5231, %v5230
    %v5245 = vpack.c.bf16 %v5233, %v5232
    %v5246 = vpack.c.bf16 %v5235, %v5234
    %v5247 = vpack.c.bf16 %v5237, %v5236
    %v5248 = vpack.c.bf16 %v5239, %v5238
    %v5249 = vpack.c.bf16 %v5241, %v5240
    %v5250 = vld [vmem:[%s3 + $0x28] sm:$0xff]
    %v5251 = vld [vmem:[%s3 + $0x30] sm:$0xff]
    %v5252 = vld [vmem:[%s3 + $0x38] sm:$0xff]
    %v5253 = vld [vmem:[%s3 + $0x40] sm:$0xff]
    %v5254 = vld [vmem:[%s3 + $0x48] sm:$0xff]
    %v5255 = vld [vmem:[%s3 + $0x50] sm:$0xff]
    %v5256 = vld [vmem:[%s4 + $0x4] sm:$0x3]
    %v5258 = vlaneseq
    %v5259 = vshrl.u32 %v5258, 7
    %v5260 = vsub.s32 0, %v5259
    %v5261 = vrot.slane %v5256, %v5260
    %v5262 = vlaneseq
    %v5263 = vshrl.u32 %v5262, 7
    %v5264 = vsub.s32 1, %v5263
    %v5265 = vrot.slane %v5256, %v5264
    %v5274 = vunpack.c.l.b16 %v5250
    %v5275 = vunpack.c.h.b16 %v5250
    %v5276 = vunpack.c.l.b16 %v5251
    %v5277 = vunpack.c.h.b16 %v5251
    %v5278 = vunpack.c.l.b16 %v5252
    %v5279 = vunpack.c.h.b16 %v5252
    %v5280 = vunpack.c.l.b16 %v5253
    %v5281 = vunpack.c.h.b16 %v5253
    %v5282 = vunpack.c.l.b16 %v5254
    %v5283 = vunpack.c.h.b16 %v5254
    %v5284 = vunpack.c.l.b16 %v5255
    %v5285 = vunpack.c.h.b16 %v5255
    %v5286 = vpack.c.b16 %v5276, %v5274
    %v5287 = vpack.c.b16 %v5277, %v5275
    %v5288 = vpack.c.b16 %v5280, %v5278
    %v5289 = vpack.c.b16 %v5281, %v5279
    %v5290 = vpack.c.b16 %v5284, %v5282
    %v5291 = vpack.c.b16 %v5285, %v5283
    %vm5298 = vcmask 392192
    %v5300 = vsel %vm5298, %v5242, 0
    %v5303 = vsel %vm5298, %v5243, 0
    %v5306 = vsel %vm5298, %v5244, 0
    %v5309 = vsel %vm5298, %v5245, 0
    %v5312 = vsel %vm5298, %v5246, 0
    %v5315 = vsel %vm5298, %v5247, 0
    %v5318 = vsel %vm5298, %v5248, 0
    %v5321 = vsel %vm5298, %v5249, 0
    %5323 = vmatprep.subr.bf16.mxu0 0
    %5324 = vmatpush1.bf16.msra.mxu0 0
    %5325 = vmatprep.subr.bf16.mxu0 0
    %5326 = vmatpush1.bf16.msra.mxu0 0
    %5327 = vmatprep.subr.bf16.mxu0 0
    %5328 = vmatpush1.bf16.msra.mxu0 0
    %5329 = vmatprep.subr.bf16.mxu0 0
    %5330 = vmatpush1.bf16.msra.mxu0 0
    %5331 = vmatprep.subr.bf16.mxu0 0
    %5332 = vmatpush1.bf16.msra.mxu0 0
    %5333 = vmatprep.subr.bf16.mxu0 %v5291
    %5334 = vmatpush1.bf16.msra.mxu0 %v5290
    %5335 = vmatprep.subr.bf16.mxu0 %v5289
    %5336 = vmatpush1.bf16.msra.mxu0 %v5288
    %5337 = vmatprep.subr.bf16.mxu0 %v5287
    %5338 = vmatpush1.bf16.msra.mxu0 %v5286
    %5339 = vmatprep.subr.bf16.mxu0 0
    %5340 = vmatpush2.bf16.msra.mxu0 0
    %5341 = vmatprep.subr.bf16.mxu0 0
    %5342 = vmatpush2.bf16.msra.mxu0 0
    %5343 = vmatprep.subr.bf16.mxu0 0
    %5344 = vmatpush2.bf16.msra.mxu0 0
    %5345 = vmatprep.subr.bf16.mxu0 0
    %5346 = vmatpush2.bf16.msra.mxu0 0
    %5347 = vmatprep.subr.bf16.mxu0 0
    %5348 = vmatpush2.bf16.msra.mxu0 0
    %5349 = vmatprep.subr.bf16.mxu0 0
    %5350 = vmatpush2.bf16.msra.mxu0 0
    %5351 = vmatprep.subr.bf16.mxu0 0
    %5352 = vmatpush2.bf16.msra.mxu0 0
    %5353 = vmatprep.subr.bf16.mxu0 0
    %5354 = vmatpush2.bf16.msra.mxu0 0
    %5355 = vmatprep.mubr.bf16.mxu0 0
    %5356 = vmatmul.mubr.bf16.gmra.mxu0 %v5300
    %v5357 = vpop.f32.mrf.mxu0
    %v5358 = vadd.f32 %v5261, %v5357
    %v5359 = vpop.f32.mrf.mxu0
    %v5360 = vadd.f32 %v5265, %v5359
    %v5361 = vpop.f32.mrf.mxu0
    %v5362 = vadd.f32 %v5261, %v5361
    %v5363 = vpop.f32.mrf.mxu0
    %v5364 = vadd.f32 %v5265, %v5363
    %5365 = vmatprep.mubr.bf16.mxu0 0
    %5366 = vmatmul.mubr.bf16.gmra.mxu0 %v5303
    %v5367 = vpop.f32.mrf.mxu0
    %v5368 = vadd.f32 %v5261, %v5367
    %v5369 = vpop.f32.mrf.mxu0
    %v5370 = vadd.f32 %v5265, %v5369
    %v5371 = vpop.f32.mrf.mxu0
    %v5372 = vadd.f32 %v5261, %v5371
    %v5373 = vpop.f32.mrf.mxu0
    %v5374 = vadd.f32 %v5265, %v5373
    %5375 = vmatprep.mubr.bf16.mxu0 0
    %5376 = vmatmul.mubr.bf16.gmra.mxu0 %v5306
    %v5377 = vpop.f32.mrf.mxu0
    %v5378 = vadd.f32 %v5261, %v5377
    %v5379 = vpop.f32.mrf.mxu0
    %v5380 = vadd.f32 %v5265, %v5379
    %v5381 = vpop.f32.mrf.mxu0
    %v5382 = vadd.f32 %v5261, %v5381
    %v5383 = vpop.f32.mrf.mxu0
    %v5384 = vadd.f32 %v5265, %v5383
    %5385 = vmatprep.mubr.bf16.mxu0 0
    %5386 = vmatmul.mubr.bf16.gmra.mxu0 %v5309
    %v5387 = vpop.f32.mrf.mxu0
    %v5388 = vadd.f32 %v5261, %v5387
    %v5389 = vpop.f32.mrf.mxu0
    %v5390 = vadd.f32 %v5265, %v5389
    %v5391 = vpop.f32.mrf.mxu0
    %v5392 = vadd.f32 %v5261, %v5391
    %v5393 = vpop.f32.mrf.mxu0
    %v5394 = vadd.f32 %v5265, %v5393
    %5395 = vmatprep.mubr.bf16.mxu0 0
    %5396 = vmatmul.mubr.bf16.gmra.mxu0 %v5312
    %v5397 = vpop.f32.mrf.mxu0
    %v5398 = vadd.f32 %v5261, %v5397
    %v5399 = vpop.f32.mrf.mxu0
    %v5400 = vadd.f32 %v5265, %v5399
    %v5401 = vpop.f32.mrf.mxu0
    %v5402 = vadd.f32 %v5261, %v5401
    %v5403 = vpop.f32.mrf.mxu0
    %v5404 = vadd.f32 %v5265, %v5403
    %5405 = vmatprep.mubr.bf16.mxu0 0
    %5406 = vmatmul.mubr.bf16.gmra.mxu0 %v5315
    %v5407 = vpop.f32.mrf.mxu0
    %v5408 = vadd.f32 %v5261, %v5407
    %v5409 = vpop.f32.mrf.mxu0
    %v5410 = vadd.f32 %v5265, %v5409
    %v5411 = vpop.f32.mrf.mxu0
    %v5412 = vadd.f32 %v5261, %v5411
    %v5413 = vpop.f32.mrf.mxu0
    %v5414 = vadd.f32 %v5265, %v5413
    %5415 = vmatprep.mubr.bf16.mxu0 0
    %5416 = vmatmul.mubr.bf16.gmra.mxu0 %v5318
    %v5417 = vpop.f32.mrf.mxu0
    %v5418 = vadd.f32 %v5261, %v5417
    %v5419 = vpop.f32.mrf.mxu0
    %v5420 = vadd.f32 %v5265, %v5419
    %v5421 = vpop.f32.mrf.mxu0
    %v5422 = vadd.f32 %v5261, %v5421
    %v5423 = vpop.f32.mrf.mxu0
    %v5424 = vadd.f32 %v5265, %v5423
    %5425 = vmatprep.mubr.bf16.mxu0 0
    %5426 = vmatmul.mubr.bf16.gmra.mxu0 %v5321
    %v5427 = vpop.f32.mrf.mxu0
    %v5428 = vadd.f32 %v5261, %v5427
    %v5429 = vpop.f32.mrf.mxu0
    %v5430 = vadd.f32 %v5265, %v5429
    %v5431 = vpop.f32.mrf.mxu0
    %v5432 = vadd.f32 %v5261, %v5431
    %v5433 = vpop.f32.mrf.mxu0
    %v5434 = vadd.f32 %v5265, %v5433
    %5435 = vdwg.mxu0
    %v5436 = vld [vmem:[%s1961] sm:$0xfe]
    %v5437 = vld [vmem:[%s1961 + $0x8] sm:$0xfe]
    %v5438 = vld [vmem:[%s1961 + $0x10] sm:$0x1]
    %v5439 = vld [vmem:[%s1961 + $0x18] sm:$0x1]
    %v5440 = vld [vmem:[%s1961 + $0x20] sm:$0xfe]
    %v5441 = vld [vmem:[%s1961 + $0x28] sm:$0xfe]
    %v5442 = vld [vmem:[%s1961 + $0x30] sm:$0x1]
    %v5443 = vld [vmem:[%s1961 + $0x38] sm:$0x1]
    %v5444 = vld [vmem:[%s1961 + $0x40] sm:$0xfe]
    %v5445 = vld [vmem:[%s1961 + $0x48] sm:$0xfe]
    %v5446 = vld [vmem:[%s1961 + $0x50] sm:$0x1]
    %v5447 = vld [vmem:[%s1961 + $0x58] sm:$0x1]
    %v5448 = vld [vmem:[%s1961 + $0x60] sm:$0xfe]
    %v5449 = vld [vmem:[%s1961 + $0x68] sm:$0xfe]
    %v5450 = vld [vmem:[%s1961 + $0x70] sm:$0x1]
    %v5451 = vld [vmem:[%s1961 + $0x78] sm:$0x1]
    %v5452 = vld [vmem:[%s1961 + $0x80] sm:$0xfe]
    %v5453 = vld [vmem:[%s1961 + $0x88] sm:$0xfe]
    %v5454 = vld [vmem:[%s1961 + $0x90] sm:$0x1]
    %v5455 = vld [vmem:[%s1961 + $0x98] sm:$0x1]
    %v5456 = vld [vmem:[%s1961 + $0xa0] sm:$0xfe]
    %v5457 = vld [vmem:[%s1961 + $0xa8] sm:$0xfe]
    %v5458 = vld [vmem:[%s1961 + $0xb0] sm:$0x1]
    %v5459 = vld [vmem:[%s1961 + $0xb8] sm:$0x1]
    %v5460 = vld [vmem:[%s1961 + $0xc0] sm:$0xfe]
    %v5461 = vld [vmem:[%s1961 + $0xc8] sm:$0xfe]
    %v5462 = vld [vmem:[%s1961 + $0xd0] sm:$0x1]
    %v5463 = vld [vmem:[%s1961 + $0xd8] sm:$0x1]
    %v5464 = vld [vmem:[%s1961 + $0xe0] sm:$0xfe]
    %v5465 = vld [vmem:[%s1961 + $0xe8] sm:$0xfe]
    %v5466 = vld [vmem:[%s1961 + $0xf0] sm:$0x1]
    %v5467 = vld [vmem:[%s1961 + $0xf8] sm:$0x1]
    %v5468 = vld [vmem:[%s1961 + $0x140] sm:$0xfe]
    %v5469 = vld [vmem:[%s1961 + $0x148] sm:$0xfe]
    %v5470 = vld [vmem:[%s1961 + $0x150] sm:$0x1]
    %v5471 = vld [vmem:[%s1961 + $0x158] sm:$0x1]
    %v5472 = vld [vmem:[%s1961 + $0x160] sm:$0xfe]
    %v5473 = vld [vmem:[%s1961 + $0x168] sm:$0xfe]
    %v5474 = vld [vmem:[%s1961 + $0x170] sm:$0x1]
    %v5475 = vld [vmem:[%s1961 + $0x178] sm:$0x1]
    %v5476 = vld [vmem:[%s1961 + $0x180] sm:$0xfe]
    %v5477 = vld [vmem:[%s1961 + $0x188] sm:$0xfe]
    %v5478 = vld [vmem:[%s1961 + $0x190] sm:$0x1]
    %v5479 = vld [vmem:[%s1961 + $0x198] sm:$0x1]
    %v5480 = vld [vmem:[%s1961 + $0x1a0] sm:$0xfe]
    %v5481 = vld [vmem:[%s1961 + $0x1a8] sm:$0xfe]
    %v5482 = vld [vmem:[%s1961 + $0x1b0] sm:$0x1]
    %v5483 = vld [vmem:[%s1961 + $0x1b8] sm:$0x1]
    %v5484 = vld [vmem:[%s1961 + $0x1c0] sm:$0xfe]
    %v5485 = vld [vmem:[%s1961 + $0x1c8] sm:$0xfe]
    %v5486 = vld [vmem:[%s1961 + $0x1d0] sm:$0x1]
    %v5487 = vld [vmem:[%s1961 + $0x1d8] sm:$0x1]
    %v5488 = vld [vmem:[%s1961 + $0x1e0] sm:$0xfe]
    %v5489 = vld [vmem:[%s1961 + $0x1e8] sm:$0xfe]
    %v5490 = vld [vmem:[%s1961 + $0x1f0] sm:$0x1]
    %v5491 = vld [vmem:[%s1961 + $0x1f8] sm:$0x1]
    %v5492 = vld [vmem:[%s1961 + $0x200] sm:$0xfe]
    %v5493 = vld [vmem:[%s1961 + $0x208] sm:$0xfe]
    %v5494 = vld [vmem:[%s1961 + $0x210] sm:$0x1]
    %v5495 = vld [vmem:[%s1961 + $0x218] sm:$0x1]
    %v5496 = vld [vmem:[%s1961 + $0x220] sm:$0xfe]
    %v5497 = vld [vmem:[%s1961 + $0x228] sm:$0xfe]
    %v5498 = vld [vmem:[%s1961 + $0x230] sm:$0x1]
    %v5499 = vld [vmem:[%s1961 + $0x238] sm:$0x1]
    %v5564 = vrot.slane %v5436, 1
    %v5565 = vrot.slane %v5438, 1
    %v5566 = vsel %vm2366, %v5564, %v5565
    %v5567 = vrot.slane %v5437, 1
    %v5568 = vrot.slane %v5439, 1
    %v5569 = vsel %vm2366, %v5567, %v5568
    %v5570 = vrot.slane %v5440, 1
    %v5571 = vrot.slane %v5442, 1
    %v5572 = vsel %vm2366, %v5570, %v5571
    %v5573 = vrot.slane %v5441, 1
    %v5574 = vrot.slane %v5443, 1
    %v5575 = vsel %vm2366, %v5573, %v5574
    %v5576 = vrot.slane %v5444, 1
    %v5577 = vrot.slane %v5446, 1
    %v5578 = vsel %vm2366, %v5576, %v5577
    %v5579 = vrot.slane %v5445, 1
    %v5580 = vrot.slane %v5447, 1
    %v5581 = vsel %vm2366, %v5579, %v5580
    %v5582 = vrot.slane %v5448, 1
    %v5583 = vrot.slane %v5450, 1
    %v5584 = vsel %vm2366, %v5582, %v5583
    %v5585 = vrot.slane %v5449, 1
    %v5586 = vrot.slane %v5451, 1
    %v5587 = vsel %vm2366, %v5585, %v5586
    %v5588 = vrot.slane %v5452, 1
    %v5589 = vrot.slane %v5454, 1
    %v5590 = vsel %vm2366, %v5588, %v5589
    %v5591 = vrot.slane %v5453, 1
    %v5592 = vrot.slane %v5455, 1
    %v5593 = vsel %vm2366, %v5591, %v5592
    %v5594 = vrot.slane %v5456, 1
    %v5595 = vrot.slane %v5458, 1
    %v5596 = vsel %vm2366, %v5594, %v5595
    %v5597 = vrot.slane %v5457, 1
    %v5598 = vrot.slane %v5459, 1
    %v5599 = vsel %vm2366, %v5597, %v5598
    %v5600 = vrot.slane %v5460, 1
    %v5601 = vrot.slane %v5462, 1
    %v5602 = vsel %vm2366, %v5600, %v5601
    %v5603 = vrot.slane %v5461, 1
    %v5604 = vrot.slane %v5463, 1
    %v5605 = vsel %vm2366, %v5603, %v5604
    %v5606 = vrot.slane %v5464, 1
    %v5607 = vrot.slane %v5466, 1
    %v5608 = vsel %vm2366, %v5606, %v5607
    %v5609 = vrot.slane %v5465, 1
    %v5610 = vrot.slane %v5467, 1
    %v5611 = vsel %vm2366, %v5609, %v5610
    %v5612 = vrot.slane %v5468, 1
    %v5613 = vrot.slane %v5470, 1
    %v5614 = vsel %vm2366, %v5612, %v5613
    %v5615 = vrot.slane %v5469, 1
    %v5616 = vrot.slane %v5471, 1
    %v5617 = vsel %vm2366, %v5615, %v5616
    %v5618 = vrot.slane %v5472, 1
    %v5619 = vrot.slane %v5474, 1
    %v5620 = vsel %vm2366, %v5618, %v5619
    %v5621 = vrot.slane %v5473, 1
    %v5622 = vrot.slane %v5475, 1
    %v5623 = vsel %vm2366, %v5621, %v5622
    %v5624 = vrot.slane %v5476, 1
    %v5625 = vrot.slane %v5478, 1
    %v5626 = vsel %vm2366, %v5624, %v5625
    %v5627 = vrot.slane %v5477, 1
    %v5628 = vrot.slane %v5479, 1
    %v5629 = vsel %vm2366, %v5627, %v5628
    %v5630 = vrot.slane %v5480, 1
    %v5631 = vrot.slane %v5482, 1
    %v5632 = vsel %vm2366, %v5630, %v5631
    %v5633 = vrot.slane %v5481, 1
    %v5634 = vrot.slane %v5483, 1
    %v5635 = vsel %vm2366, %v5633, %v5634
    %v5636 = vrot.slane %v5484, 1
    %v5637 = vrot.slane %v5486, 1
    %v5638 = vsel %vm2366, %v5636, %v5637
    %v5639 = vrot.slane %v5485, 1
    %v5640 = vrot.slane %v5487, 1
    %v5641 = vsel %vm2366, %v5639, %v5640
    %v5642 = vrot.slane %v5488, 1
    %v5643 = vrot.slane %v5490, 1
    %v5644 = vsel %vm2366, %v5642, %v5643
    %v5645 = vrot.slane %v5489, 1
    %v5646 = vrot.slane %v5491, 1
    %v5647 = vsel %vm2366, %v5645, %v5646
    %v5648 = vrot.slane %v5492, 1
    %v5649 = vrot.slane %v5494, 1
    %v5650 = vsel %vm2366, %v5648, %v5649
    %v5651 = vrot.slane %v5493, 1
    %v5652 = vrot.slane %v5495, 1
    %v5653 = vsel %vm2366, %v5651, %v5652
    %v5654 = vrot.slane %v5496, 1
    %v5655 = vrot.slane %v5498, 1
    %v5656 = vsel %vm2366, %v5654, %v5655
    %v5657 = vrot.slane %v5497, 1
    %v5658 = vrot.slane %v5499, 1
    %v5659 = vsel %vm2366, %v5657, %v5658
    %v5692 = vadd.f32 %v5358, %v5566
    %v5693 = vadd.f32 %v5360, %v5569
    %v5694 = vadd.f32 %v5362, %v5572
    %v5695 = vadd.f32 %v5364, %v5575
    %v5696 = vadd.f32 %v5368, %v5578
    %v5697 = vadd.f32 %v5370, %v5581
    %v5698 = vadd.f32 %v5372, %v5584
    %v5699 = vadd.f32 %v5374, %v5587
    %v5700 = vadd.f32 %v5378, %v5590
    %v5701 = vadd.f32 %v5380, %v5593
    %v5702 = vadd.f32 %v5382, %v5596
    %v5703 = vadd.f32 %v5384, %v5599
    %v5704 = vadd.f32 %v5388, %v5602
    %v5705 = vadd.f32 %v5390, %v5605
    %v5706 = vadd.f32 %v5392, %v5608
    %v5707 = vadd.f32 %v5394, %v5611
    %v5708 = vadd.f32 %v5398, %v5614
    %v5709 = vadd.f32 %v5400, %v5617
    %v5710 = vadd.f32 %v5402, %v5620
    %v5711 = vadd.f32 %v5404, %v5623
    %v5712 = vadd.f32 %v5408, %v5626
    %v5713 = vadd.f32 %v5410, %v5629
    %v5714 = vadd.f32 %v5412, %v5632
    %v5715 = vadd.f32 %v5414, %v5635
    %v5716 = vadd.f32 %v5418, %v5638
    %v5717 = vadd.f32 %v5420, %v5641
    %v5718 = vadd.f32 %v5422, %v5644
    %v5719 = vadd.f32 %v5424, %v5647
    %v5720 = vadd.f32 %v5428, %v5650
    %v5721 = vadd.f32 %v5430, %v5653
    %v5722 = vadd.f32 %v5432, %v5656
    %v5723 = vadd.f32 %v5434, %v5659
    %v5724 = vmax.f32 %v5692, 0.0
    %v5725 = vmax.f32 %v5693, 0.0
    %v5726 = vmax.f32 %v5694, 0.0
    %v5727 = vmax.f32 %v5695, 0.0
    %v5728 = vmax.f32 %v5696, 0.0
    %v5729 = vmax.f32 %v5697, 0.0
    %v5730 = vmax.f32 %v5698, 0.0
    %v5731 = vmax.f32 %v5699, 0.0
    %v5732 = vmax.f32 %v5700, 0.0
    %v5733 = vmax.f32 %v5701, 0.0
    %v5734 = vmax.f32 %v5702, 0.0
    %v5735 = vmax.f32 %v5703, 0.0
    %v5736 = vmax.f32 %v5704, 0.0
    %v5737 = vmax.f32 %v5705, 0.0
    %v5738 = vmax.f32 %v5706, 0.0
    %v5739 = vmax.f32 %v5707, 0.0
    %v5740 = vmax.f32 %v5708, 0.0
    %v5741 = vmax.f32 %v5709, 0.0
    %v5742 = vmax.f32 %v5710, 0.0
    %v5743 = vmax.f32 %v5711, 0.0
    %v5744 = vmax.f32 %v5712, 0.0
    %v5745 = vmax.f32 %v5713, 0.0
    %v5746 = vmax.f32 %v5714, 0.0
    %v5747 = vmax.f32 %v5715, 0.0
    %v5748 = vmax.f32 %v5716, 0.0
    %v5749 = vmax.f32 %v5717, 0.0
    %v5750 = vmax.f32 %v5718, 0.0
    %v5751 = vmax.f32 %v5719, 0.0
    %v5752 = vmax.f32 %v5720, 0.0
    %v5753 = vmax.f32 %v5721, 0.0
    %v5754 = vmax.f32 %v5722, 0.0
    %v5755 = vmax.f32 %v5723, 0.0
    %v5788 = vrot.slane %v5724, 7
    %v5789 = vrot.slane %v5725, 7
    %v5790 = vrot.slane %v5726, 7
    %v5791 = vrot.slane %v5727, 7
    %v5792 = vrot.slane %v5728, 7
    %v5793 = vrot.slane %v5729, 7
    %v5794 = vrot.slane %v5730, 7
    %v5795 = vrot.slane %v5731, 7
    %v5796 = vrot.slane %v5732, 7
    %v5797 = vrot.slane %v5733, 7
    %v5798 = vrot.slane %v5734, 7
    %v5799 = vrot.slane %v5735, 7
    %v5800 = vrot.slane %v5736, 7
    %v5801 = vrot.slane %v5737, 7
    %v5802 = vrot.slane %v5738, 7
    %v5803 = vrot.slane %v5739, 7
    %v5804 = vrot.slane %v5740, 7
    %v5805 = vrot.slane %v5741, 7
    %v5806 = vrot.slane %v5742, 7
    %v5807 = vrot.slane %v5743, 7
    %v5808 = vrot.slane %v5744, 7
    %v5809 = vrot.slane %v5745, 7
    %v5810 = vrot.slane %v5746, 7
    %v5811 = vrot.slane %v5747, 7
    %v5812 = vrot.slane %v5748, 7
    %v5813 = vrot.slane %v5749, 7
    %v5814 = vrot.slane %v5750, 7
    %v5815 = vrot.slane %v5751, 7
    %v5816 = vrot.slane %v5752, 7
    %v5817 = vrot.slane %v5753, 7
    %v5818 = vrot.slane %v5754, 7
    %v5819 = vrot.slane %v5755, 7
    %s5852 = scalar_lea.vmem [#allocation6], 32
    %5853 = vst [vmem:[%s5852] sm:$0xfe] %v5788
    %5854 = vst [vmem:[%s5852 + $0x8] sm:$0xfe] %v5789
    %5855 = vst [vmem:[%s5852 + $0x10] sm:$0x1] %v5788
    %5856 = vst [vmem:[%s5852 + $0x18] sm:$0x1] %v5789
    %5857 = vst [vmem:[%s5852 + $0x20] sm:$0xfe] %v5790
    %5858 = vst [vmem:[%s5852 + $0x28] sm:$0xfe] %v5791
    %5859 = vst [vmem:[%s5852 + $0x30] sm:$0x1] %v5790
    %5860 = vst [vmem:[%s5852 + $0x38] sm:$0x1] %v5791
    %5861 = vst [vmem:[%s5852 + $0x40] sm:$0xfe] %v5792
    %5862 = vst [vmem:[%s5852 + $0x48] sm:$0xfe] %v5793
    %5863 = vst [vmem:[%s5852 + $0x50] sm:$0x1] %v5792
    %5864 = vst [vmem:[%s5852 + $0x58] sm:$0x1] %v5793
    %5865 = vst [vmem:[%s5852 + $0x60] sm:$0xfe] %v5794
    %5866 = vst [vmem:[%s5852 + $0x68] sm:$0xfe] %v5795
    %5867 = vst [vmem:[%s5852 + $0x70] sm:$0x1] %v5794
    %5868 = vst [vmem:[%s5852 + $0x78] sm:$0x1] %v5795
    %5869 = vst [vmem:[%s5852 + $0x80] sm:$0xfe] %v5796
    %5870 = vst [vmem:[%s5852 + $0x88] sm:$0xfe] %v5797
    %5871 = vst [vmem:[%s5852 + $0x90] sm:$0x1] %v5796
    %5872 = vst [vmem:[%s5852 + $0x98] sm:$0x1] %v5797
    %5873 = vst [vmem:[%s5852 + $0xa0] sm:$0xfe] %v5798
    %5874 = vst [vmem:[%s5852 + $0xa8] sm:$0xfe] %v5799
    %5875 = vst [vmem:[%s5852 + $0xb0] sm:$0x1] %v5798
    %5876 = vst [vmem:[%s5852 + $0xb8] sm:$0x1] %v5799
    %5877 = vst [vmem:[%s5852 + $0xc0] sm:$0xfe] %v5800
    %5878 = vst [vmem:[%s5852 + $0xc8] sm:$0xfe] %v5801
    %5879 = vst [vmem:[%s5852 + $0xd0] sm:$0x1] %v5800
    %5880 = vst [vmem:[%s5852 + $0xd8] sm:$0x1] %v5801
    %5881 = vst [vmem:[%s5852 + $0xe0] sm:$0xfe] %v5802
    %5882 = vst [vmem:[%s5852 + $0xe8] sm:$0xfe] %v5803
    %5883 = vst [vmem:[%s5852 + $0xf0] sm:$0x1] %v5802
    %5884 = vst [vmem:[%s5852 + $0xf8] sm:$0x1] %v5803
    %5885 = vst [vmem:[%s5852 + $0x140] sm:$0xfe] %v5804
    %5886 = vst [vmem:[%s5852 + $0x148] sm:$0xfe] %v5805
    %5887 = vst [vmem:[%s5852 + $0x150] sm:$0x1] %v5804
    %5888 = vst [vmem:[%s5852 + $0x158] sm:$0x1] %v5805
    %5889 = vst [vmem:[%s5852 + $0x160] sm:$0xfe] %v5806
    %5890 = vst [vmem:[%s5852 + $0x168] sm:$0xfe] %v5807
    %5891 = vst [vmem:[%s5852 + $0x170] sm:$0x1] %v5806
    %5892 = vst [vmem:[%s5852 + $0x178] sm:$0x1] %v5807
    %5893 = vst [vmem:[%s5852 + $0x180] sm:$0xfe] %v5808
    %5894 = vst [vmem:[%s5852 + $0x188] sm:$0xfe] %v5809
    %5895 = vst [vmem:[%s5852 + $0x190] sm:$0x1] %v5808
    %5896 = vst [vmem:[%s5852 + $0x198] sm:$0x1] %v5809
    %5897 = vst [vmem:[%s5852 + $0x1a0] sm:$0xfe] %v5810
    %5898 = vst [vmem:[%s5852 + $0x1a8] sm:$0xfe] %v5811
    %5899 = vst [vmem:[%s5852 + $0x1b0] sm:$0x1] %v5810
    %5900 = vst [vmem:[%s5852 + $0x1b8] sm:$0x1] %v5811
    %5901 = vst [vmem:[%s5852 + $0x1c0] sm:$0xfe] %v5812
    %5902 = vst [vmem:[%s5852 + $0x1c8] sm:$0xfe] %v5813
    %5903 = vst [vmem:[%s5852 + $0x1d0] sm:$0x1] %v5812
    %5904 = vst [vmem:[%s5852 + $0x1d8] sm:$0x1] %v5813
    %5905 = vst [vmem:[%s5852 + $0x1e0] sm:$0xfe] %v5814
    %5906 = vst [vmem:[%s5852 + $0x1e8] sm:$0xfe] %v5815
    %5907 = vst [vmem:[%s5852 + $0x1f0] sm:$0x1] %v5814
    %5908 = vst [vmem:[%s5852 + $0x1f8] sm:$0x1] %v5815
    %5909 = vst [vmem:[%s5852 + $0x200] sm:$0xfe] %v5816
    %5910 = vst [vmem:[%s5852 + $0x208] sm:$0xfe] %v5817
    %5911 = vst [vmem:[%s5852 + $0x210] sm:$0x1] %v5816
    %5912 = vst [vmem:[%s5852 + $0x218] sm:$0x1] %v5817
    %5913 = vst [vmem:[%s5852 + $0x220] sm:$0xfe] %v5818
    %5914 = vst [vmem:[%s5852 + $0x228] sm:$0xfe] %v5819
    %5915 = vst [vmem:[%s5852 + $0x230] sm:$0x1] %v5818
    %5916 = vst [vmem:[%s5852 + $0x238] sm:$0x1] %v5819
    %v5917 = vld [vmem:[%s1 + $0x28] sm:$0xff]
    %v5918 = vld [vmem:[%s1 + $0x30] sm:$0xff]
    %v5919 = vld [vmem:[%s1 + $0x68] sm:$0x1]
    %v5920 = vld [vmem:[%s1 + $0x70] sm:$0x1]
    %v5921 = vld [vmem:[#allocation6] sm:$0xff]
    %v5922 = vld [vmem:[#allocation6 + $0x8] sm:$0xff]
    %v5923 = vld [vmem:[#allocation6 + $0x20] sm:$0xff]
    %v5924 = vld [vmem:[#allocation6 + $0x28] sm:$0xff]
    %v5925 = vld [vmem:[#allocation6 + $0x40] sm:$0xff]
    %v5926 = vld [vmem:[#allocation6 + $0x48] sm:$0xff]
    %v5927 = vld [vmem:[#allocation6 + $0x60] sm:$0xff]
    %v5928 = vld [vmem:[#allocation6 + $0x68] sm:$0xff]
    %v5929 = vld [vmem:[#allocation6 + $0x80] sm:$0xff]
    %v5930 = vld [vmem:[#allocation6 + $0x88] sm:$0xff]
    %v5931 = vld [vmem:[#allocation6 + $0xa0] sm:$0xff]
    %v5932 = vld [vmem:[#allocation6 + $0xa8] sm:$0xff]
    %v5933 = vld [vmem:[#allocation6 + $0xc0] sm:$0xff]
    %v5934 = vld [vmem:[#allocation6 + $0xc8] sm:$0xff]
    %v5935 = vld [vmem:[#allocation6 + $0xe0] sm:$0xff]
    %v5936 = vld [vmem:[#allocation6 + $0xe8] sm:$0xff]
    %v5937 = vld [vmem:[#allocation6 + $0x140] sm:$0xff]
    %v5938 = vld [vmem:[#allocation6 + $0x148] sm:$0xff]
    %v5939 = vld [vmem:[#allocation6 + $0x160] sm:$0xff]
    %v5940 = vld [vmem:[#allocation6 + $0x168] sm:$0xff]
    %v5941 = vld [vmem:[#allocation6 + $0x180] sm:$0xff]
    %v5942 = vld [vmem:[#allocation6 + $0x188] sm:$0xff]
    %v5943 = vld [vmem:[#allocation6 + $0x1a0] sm:$0xff]
    %v5944 = vld [vmem:[#allocation6 + $0x1a8] sm:$0xff]
    %v5945 = vld [vmem:[#allocation6 + $0x1c0] sm:$0xff]
    %v5946 = vld [vmem:[#allocation6 + $0x1c8] sm:$0xff]
    %v5947 = vld [vmem:[#allocation6 + $0x1e0] sm:$0xff]
    %v5948 = vld [vmem:[#allocation6 + $0x1e8] sm:$0xff]
    %v5949 = vld [vmem:[#allocation6 + $0x200] sm:$0xff]
    %v5950 = vld [vmem:[#allocation6 + $0x208] sm:$0xff]
    %v5951 = vld [vmem:[#allocation6 + $0x220] sm:$0xff]
    %v5952 = vld [vmem:[#allocation6 + $0x228] sm:$0xff]
    %v5953 = vlaneseq
    %v5954 = vshrl.u32 %v5953, 7
    %v5955 = vsub.s32 0, %v5954
    %v5956 = vrot.slane %v5917, %v5955
    %v5957 = vlaneseq
    %v5958 = vshrl.u32 %v5957, 7
    %v5959 = vsub.s32 0, %v5958
    %v5960 = vrot.slane %v5918, %v5959
    %v5961 = vmul.f32 %v5921, %v5956
    %v5962 = vmul.f32 %v5922, %v5960
    %v5963 = vmul.f32 %v5923, %v5956
    %v5964 = vmul.f32 %v5924, %v5960
    %v5965 = vmul.f32 %v5925, %v5956
    %v5966 = vmul.f32 %v5926, %v5960
    %v5967 = vmul.f32 %v5927, %v5956
    %v5968 = vmul.f32 %v5928, %v5960
    %v5969 = vmul.f32 %v5929, %v5956
    %v5970 = vmul.f32 %v5930, %v5960
    %v5971 = vmul.f32 %v5931, %v5956
    %v5972 = vmul.f32 %v5932, %v5960
    %v5973 = vmul.f32 %v5933, %v5956
    %v5974 = vmul.f32 %v5934, %v5960
    %v5975 = vmul.f32 %v5935, %v5956
    %v5976 = vmul.f32 %v5936, %v5960
    %v5977 = vmul.f32 %v5937, %v5956
    %v5978 = vmul.f32 %v5938, %v5960
    %v5979 = vmul.f32 %v5939, %v5956
    %v5980 = vmul.f32 %v5940, %v5960
    %v5981 = vmul.f32 %v5941, %v5956
    %v5982 = vmul.f32 %v5942, %v5960
    %v5983 = vmul.f32 %v5943, %v5956
    %v5984 = vmul.f32 %v5944, %v5960
    %v5985 = vmul.f32 %v5945, %v5956
    %v5986 = vmul.f32 %v5946, %v5960
    %v5987 = vmul.f32 %v5947, %v5956
    %v5988 = vmul.f32 %v5948, %v5960
    %v5989 = vmul.f32 %v5949, %v5956
    %v5990 = vmul.f32 %v5950, %v5960
    %v5991 = vmul.f32 %v5951, %v5956
    %v5992 = vmul.f32 %v5952, %v5960
    %v5993 = vld [vmem:[#allocation6] sm:$0xfe]
    %v5994 = vld [vmem:[#allocation6 + $0x8] sm:$0xfe]
    %v5995 = vld [vmem:[#allocation6 + $0x10] sm:$0x1]
    %v5996 = vld [vmem:[#allocation6 + $0x18] sm:$0x1]
    %v5997 = vld [vmem:[#allocation6 + $0x20] sm:$0xfe]
    %v5998 = vld [vmem:[#allocation6 + $0x28] sm:$0xfe]
    %v5999 = vld [vmem:[#allocation6 + $0x30] sm:$0x1]
    %v6000 = vld [vmem:[#allocation6 + $0x38] sm:$0x1]
    %v6001 = vld [vmem:[#allocation6 + $0x40] sm:$0xfe]
    %v6002 = vld [vmem:[#allocation6 + $0x48] sm:$0xfe]
    %v6003 = vld [vmem:[#allocation6 + $0x50] sm:$0x1]
    %v6004 = vld [vmem:[#allocation6 + $0x58] sm:$0x1]
    %v6005 = vld [vmem:[#allocation6 + $0x60] sm:$0xfe]
    %v6006 = vld [vmem:[#allocation6 + $0x68] sm:$0xfe]
    %v6007 = vld [vmem:[#allocation6 + $0x70] sm:$0x1]
    %v6008 = vld [vmem:[#allocation6 + $0x78] sm:$0x1]
    %v6009 = vld [vmem:[#allocation6 + $0x80] sm:$0xfe]
    %v6010 = vld [vmem:[#allocation6 + $0x88] sm:$0xfe]
    %v6011 = vld [vmem:[#allocation6 + $0x90] sm:$0x1]
    %v6012 = vld [vmem:[#allocation6 + $0x98] sm:$0x1]
    %v6013 = vld [vmem:[#allocation6 + $0xa0] sm:$0xfe]
    %v6014 = vld [vmem:[#allocation6 + $0xa8] sm:$0xfe]
    %v6015 = vld [vmem:[#allocation6 + $0xb0] sm:$0x1]
    %v6016 = vld [vmem:[#allocation6 + $0xb8] sm:$0x1]
    %v6017 = vld [vmem:[#allocation6 + $0xc0] sm:$0xfe]
    %v6018 = vld [vmem:[#allocation6 + $0xc8] sm:$0xfe]
    %v6019 = vld [vmem:[#allocation6 + $0xd0] sm:$0x1]
    %v6020 = vld [vmem:[#allocation6 + $0xd8] sm:$0x1]
    %v6021 = vld [vmem:[#allocation6 + $0xe0] sm:$0xfe]
    %v6022 = vld [vmem:[#allocation6 + $0xe8] sm:$0xfe]
    %v6023 = vld [vmem:[#allocation6 + $0xf0] sm:$0x1]
    %v6024 = vld [vmem:[#allocation6 + $0xf8] sm:$0x1]
    %v6025 = vld [vmem:[#allocation6 + $0x140] sm:$0xfe]
    %v6026 = vld [vmem:[#allocation6 + $0x148] sm:$0xfe]
    %v6027 = vld [vmem:[#allocation6 + $0x150] sm:$0x1]
    %v6028 = vld [vmem:[#allocation6 + $0x158] sm:$0x1]
    %v6029 = vld [vmem:[#allocation6 + $0x160] sm:$0xfe]
    %v6030 = vld [vmem:[#allocation6 + $0x168] sm:$0xfe]
    %v6031 = vld [vmem:[#allocation6 + $0x170] sm:$0x1]
    %v6032 = vld [vmem:[#allocation6 + $0x178] sm:$0x1]
    %v6033 = vld [vmem:[#allocation6 + $0x180] sm:$0xfe]
    %v6034 = vld [vmem:[#allocation6 + $0x188] sm:$0xfe]
    %v6035 = vld [vmem:[#allocation6 + $0x190] sm:$0x1]
    %v6036 = vld [vmem:[#allocation6 + $0x198] sm:$0x1]
    %v6037 = vld [vmem:[#allocation6 + $0x1a0] sm:$0xfe]
    %v6038 = vld [vmem:[#allocation6 + $0x1a8] sm:$0xfe]
    %v6039 = vld [vmem:[#allocation6 + $0x1b0] sm:$0x1]
    %v6040 = vld [vmem:[#allocation6 + $0x1b8] sm:$0x1]
    %v6041 = vld [vmem:[#allocation6 + $0x1c0] sm:$0xfe]
    %v6042 = vld [vmem:[#allocation6 + $0x1c8] sm:$0xfe]
    %v6043 = vld [vmem:[#allocation6 + $0x1d0] sm:$0x1]
    %v6044 = vld [vmem:[#allocation6 + $0x1d8] sm:$0x1]
    %v6045 = vld [vmem:[#allocation6 + $0x1e0] sm:$0xfe]
    %v6046 = vld [vmem:[#allocation6 + $0x1e8] sm:$0xfe]
    %v6047 = vld [vmem:[#allocation6 + $0x1f0] sm:$0x1]
    %v6048 = vld [vmem:[#allocation6 + $0x1f8] sm:$0x1]
    %v6049 = vld [vmem:[#allocation6 + $0x200] sm:$0xfe]
    %v6050 = vld [vmem:[#allocation6 + $0x208] sm:$0xfe]
    %v6051 = vld [vmem:[#allocation6 + $0x210] sm:$0x1]
    %v6052 = vld [vmem:[#allocation6 + $0x218] sm:$0x1]
    %v6053 = vld [vmem:[#allocation6 + $0x220] sm:$0xfe]
    %v6054 = vld [vmem:[#allocation6 + $0x228] sm:$0xfe]
    %v6055 = vld [vmem:[#allocation6 + $0x230] sm:$0x1]
    %v6056 = vld [vmem:[#allocation6 + $0x238] sm:$0x1]
    %v6057 = vlaneseq
    %v6058 = vshrl.u32 %v6057, 7
    %v6059 = vsub.s32 1, %v6058
    %v6060 = vrot.slane %v5917, %v6059
    %v6061 = vlaneseq
    %v6062 = vshrl.u32 %v6061, 7
    %v6063 = vsub.s32 1, %v6062
    %v6064 = vrot.slane %v5918, %v6063
    %v6065 = vmul.f32 %v5993, %v6060
    %v6066 = vmul.f32 %v5994, %v6064
    %v6067 = vmul.f32 %v5995, %v6060
    %v6068 = vmul.f32 %v5996, %v6064
    %v6069 = vmul.f32 %v5997, %v6060
    %v6070 = vmul.f32 %v5998, %v6064
    %v6071 = vmul.f32 %v5999, %v6060
    %v6072 = vmul.f32 %v6000, %v6064
    %v6073 = vmul.f32 %v6001, %v6060
    %v6074 = vmul.f32 %v6002, %v6064
    %v6075 = vmul.f32 %v6003, %v6060
    %v6076 = vmul.f32 %v6004, %v6064
    %v6077 = vmul.f32 %v6005, %v6060
    %v6078 = vmul.f32 %v6006, %v6064
    %v6079 = vmul.f32 %v6007, %v6060
    %v6080 = vmul.f32 %v6008, %v6064
    %v6081 = vmul.f32 %v6009, %v6060
    %v6082 = vmul.f32 %v6010, %v6064
    %v6083 = vmul.f32 %v6011, %v6060
    %v6084 = vmul.f32 %v6012, %v6064
    %v6085 = vmul.f32 %v6013, %v6060
    %v6086 = vmul.f32 %v6014, %v6064
    %v6087 = vmul.f32 %v6015, %v6060
    %v6088 = vmul.f32 %v6016, %v6064
    %v6089 = vmul.f32 %v6017, %v6060
    %v6090 = vmul.f32 %v6018, %v6064
    %v6091 = vmul.f32 %v6019, %v6060
    %v6092 = vmul.f32 %v6020, %v6064
    %v6093 = vmul.f32 %v6021, %v6060
    %v6094 = vmul.f32 %v6022, %v6064
    %v6095 = vmul.f32 %v6023, %v6060
    %v6096 = vmul.f32 %v6024, %v6064
    %v6097 = vmul.f32 %v6025, %v6060
    %v6098 = vmul.f32 %v6026, %v6064
    %v6099 = vmul.f32 %v6027, %v6060
    %v6100 = vmul.f32 %v6028, %v6064
    %v6101 = vmul.f32 %v6029, %v6060
    %v6102 = vmul.f32 %v6030, %v6064
    %v6103 = vmul.f32 %v6031, %v6060
    %v6104 = vmul.f32 %v6032, %v6064
    %v6105 = vmul.f32 %v6033, %v6060
    %v6106 = vmul.f32 %v6034, %v6064
    %v6107 = vmul.f32 %v6035, %v6060
    %v6108 = vmul.f32 %v6036, %v6064
    %v6109 = vmul.f32 %v6037, %v6060
    %v6110 = vmul.f32 %v6038, %v6064
    %v6111 = vmul.f32 %v6039, %v6060
    %v6112 = vmul.f32 %v6040, %v6064
    %v6113 = vmul.f32 %v6041, %v6060
    %v6114 = vmul.f32 %v6042, %v6064
    %v6115 = vmul.f32 %v6043, %v6060
    %v6116 = vmul.f32 %v6044, %v6064
    %v6117 = vmul.f32 %v6045, %v6060
    %v6118 = vmul.f32 %v6046, %v6064
    %v6119 = vmul.f32 %v6047, %v6060
    %v6120 = vmul.f32 %v6048, %v6064
    %v6121 = vmul.f32 %v6049, %v6060
    %v6122 = vmul.f32 %v6050, %v6064
    %v6123 = vmul.f32 %v6051, %v6060
    %v6124 = vmul.f32 %v6052, %v6064
    %v6125 = vmul.f32 %v6053, %v6060
    %v6126 = vmul.f32 %v6054, %v6064
    %v6127 = vmul.f32 %v6055, %v6060
    %v6128 = vmul.f32 %v6056, %v6064
    %v6193 = vrot.slane %v6065, 1
    %v6194 = vrot.slane %v6067, 1
    %v6195 = vsel %vm2366, %v6193, %v6194
    %v6196 = vrot.slane %v6066, 1
    %v6197 = vrot.slane %v6068, 1
    %v6198 = vsel %vm2366, %v6196, %v6197
    %v6199 = vrot.slane %v6069, 1
    %v6200 = vrot.slane %v6071, 1
    %v6201 = vsel %vm2366, %v6199, %v6200
    %v6202 = vrot.slane %v6070, 1
    %v6203 = vrot.slane %v6072, 1
    %v6204 = vsel %vm2366, %v6202, %v6203
    %v6205 = vrot.slane %v6073, 1
    %v6206 = vrot.slane %v6075, 1
    %v6207 = vsel %vm2366, %v6205, %v6206
    %v6208 = vrot.slane %v6074, 1
    %v6209 = vrot.slane %v6076, 1
    %v6210 = vsel %vm2366, %v6208, %v6209
    %v6211 = vrot.slane %v6077, 1
    %v6212 = vrot.slane %v6079, 1
    %v6213 = vsel %vm2366, %v6211, %v6212
    %v6214 = vrot.slane %v6078, 1
    %v6215 = vrot.slane %v6080, 1
    %v6216 = vsel %vm2366, %v6214, %v6215
    %v6217 = vrot.slane %v6081, 1
    %v6218 = vrot.slane %v6083, 1
    %v6219 = vsel %vm2366, %v6217, %v6218
    %v6220 = vrot.slane %v6082, 1
    %v6221 = vrot.slane %v6084, 1
    %v6222 = vsel %vm2366, %v6220, %v6221
    %v6223 = vrot.slane %v6085, 1
    %v6224 = vrot.slane %v6087, 1
    %v6225 = vsel %vm2366, %v6223, %v6224
    %v6226 = vrot.slane %v6086, 1
    %v6227 = vrot.slane %v6088, 1
    %v6228 = vsel %vm2366, %v6226, %v6227
    %v6229 = vrot.slane %v6089, 1
    %v6230 = vrot.slane %v6091, 1
    %v6231 = vsel %vm2366, %v6229, %v6230
    %v6232 = vrot.slane %v6090, 1
    %v6233 = vrot.slane %v6092, 1
    %v6234 = vsel %vm2366, %v6232, %v6233
    %v6235 = vrot.slane %v6093, 1
    %v6236 = vrot.slane %v6095, 1
    %v6237 = vsel %vm2366, %v6235, %v6236
    %v6238 = vrot.slane %v6094, 1
    %v6239 = vrot.slane %v6096, 1
    %v6240 = vsel %vm2366, %v6238, %v6239
    %v6241 = vrot.slane %v6097, 1
    %v6242 = vrot.slane %v6099, 1
    %v6243 = vsel %vm2366, %v6241, %v6242
    %v6244 = vrot.slane %v6098, 1
    %v6245 = vrot.slane %v6100, 1
    %v6246 = vsel %vm2366, %v6244, %v6245
    %v6247 = vrot.slane %v6101, 1
    %v6248 = vrot.slane %v6103, 1
    %v6249 = vsel %vm2366, %v6247, %v6248
    %v6250 = vrot.slane %v6102, 1
    %v6251 = vrot.slane %v6104, 1
    %v6252 = vsel %vm2366, %v6250, %v6251
    %v6253 = vrot.slane %v6105, 1
    %v6254 = vrot.slane %v6107, 1
    %v6255 = vsel %vm2366, %v6253, %v6254
    %v6256 = vrot.slane %v6106, 1
    %v6257 = vrot.slane %v6108, 1
    %v6258 = vsel %vm2366, %v6256, %v6257
    %v6259 = vrot.slane %v6109, 1
    %v6260 = vrot.slane %v6111, 1
    %v6261 = vsel %vm2366, %v6259, %v6260
    %v6262 = vrot.slane %v6110, 1
    %v6263 = vrot.slane %v6112, 1
    %v6264 = vsel %vm2366, %v6262, %v6263
    %v6265 = vrot.slane %v6113, 1
    %v6266 = vrot.slane %v6115, 1
    %v6267 = vsel %vm2366, %v6265, %v6266
    %v6268 = vrot.slane %v6114, 1
    %v6269 = vrot.slane %v6116, 1
    %v6270 = vsel %vm2366, %v6268, %v6269
    %v6271 = vrot.slane %v6117, 1
    %v6272 = vrot.slane %v6119, 1
    %v6273 = vsel %vm2366, %v6271, %v6272
    %v6274 = vrot.slane %v6118, 1
    %v6275 = vrot.slane %v6120, 1
    %v6276 = vsel %vm2366, %v6274, %v6275
    %v6277 = vrot.slane %v6121, 1
    %v6278 = vrot.slane %v6123, 1
    %v6279 = vsel %vm2366, %v6277, %v6278
    %v6280 = vrot.slane %v6122, 1
    %v6281 = vrot.slane %v6124, 1
    %v6282 = vsel %vm2366, %v6280, %v6281
    %v6283 = vrot.slane %v6125, 1
    %v6284 = vrot.slane %v6127, 1
    %v6285 = vsel %vm2366, %v6283, %v6284
    %v6286 = vrot.slane %v6126, 1
    %v6287 = vrot.slane %v6128, 1
    %v6288 = vsel %vm2366, %v6286, %v6287
    %v6321 = vadd.f32 %v5961, %v6195
    %v6322 = vadd.f32 %v5962, %v6198
    %v6323 = vadd.f32 %v5963, %v6201
    %v6324 = vadd.f32 %v5964, %v6204
    %v6325 = vadd.f32 %v5965, %v6207
    %v6326 = vadd.f32 %v5966, %v6210
    %v6327 = vadd.f32 %v5967, %v6213
    %v6328 = vadd.f32 %v5968, %v6216
    %v6329 = vadd.f32 %v5969, %v6219
    %v6330 = vadd.f32 %v5970, %v6222
    %v6331 = vadd.f32 %v5971, %v6225
    %v6332 = vadd.f32 %v5972, %v6228
    %v6333 = vadd.f32 %v5973, %v6231
    %v6334 = vadd.f32 %v5974, %v6234
    %v6335 = vadd.f32 %v5975, %v6237
    %v6336 = vadd.f32 %v5976, %v6240
    %v6337 = vadd.f32 %v5977, %v6243
    %v6338 = vadd.f32 %v5978, %v6246
    %v6339 = vadd.f32 %v5979, %v6249
    %v6340 = vadd.f32 %v5980, %v6252
    %v6341 = vadd.f32 %v5981, %v6255
    %v6342 = vadd.f32 %v5982, %v6258
    %v6343 = vadd.f32 %v5983, %v6261
    %v6344 = vadd.f32 %v5984, %v6264
    %v6345 = vadd.f32 %v5985, %v6267
    %v6346 = vadd.f32 %v5986, %v6270
    %v6347 = vadd.f32 %v5987, %v6273
    %v6348 = vadd.f32 %v5988, %v6276
    %v6349 = vadd.f32 %v5989, %v6279
    %v6350 = vadd.f32 %v5990, %v6282
    %v6351 = vadd.f32 %v5991, %v6285
    %v6352 = vadd.f32 %v5992, %v6288
    %v6353 = vld [vmem:[#allocation6] sm:$0xfc]
    %v6354 = vld [vmem:[#allocation6 + $0x8] sm:$0xfc]
    %v6355 = vld [vmem:[#allocation6 + $0x10] sm:$0x3]
    %v6356 = vld [vmem:[#allocation6 + $0x18] sm:$0x3]
    %v6357 = vld [vmem:[#allocation6 + $0x20] sm:$0xfc]
    %v6358 = vld [vmem:[#allocation6 + $0x28] sm:$0xfc]
    %v6359 = vld [vmem:[#allocation6 + $0x30] sm:$0x3]
    %v6360 = vld [vmem:[#allocation6 + $0x38] sm:$0x3]
    %v6361 = vld [vmem:[#allocation6 + $0x40] sm:$0xfc]
    %v6362 = vld [vmem:[#allocation6 + $0x48] sm:$0xfc]
    %v6363 = vld [vmem:[#allocation6 + $0x50] sm:$0x3]
    %v6364 = vld [vmem:[#allocation6 + $0x58] sm:$0x3]
    %v6365 = vld [vmem:[#allocation6 + $0x60] sm:$0xfc]
    %v6366 = vld [vmem:[#allocation6 + $0x68] sm:$0xfc]
    %v6367 = vld [vmem:[#allocation6 + $0x70] sm:$0x3]
    %v6368 = vld [vmem:[#allocation6 + $0x78] sm:$0x3]
    %v6369 = vld [vmem:[#allocation6 + $0x80] sm:$0xfc]
    %v6370 = vld [vmem:[#allocation6 + $0x88] sm:$0xfc]
    %v6371 = vld [vmem:[#allocation6 + $0x90] sm:$0x3]
    %v6372 = vld [vmem:[#allocation6 + $0x98] sm:$0x3]
    %v6373 = vld [vmem:[#allocation6 + $0xa0] sm:$0xfc]
    %v6374 = vld [vmem:[#allocation6 + $0xa8] sm:$0xfc]
    %v6375 = vld [vmem:[#allocation6 + $0xb0] sm:$0x3]
    %v6376 = vld [vmem:[#allocation6 + $0xb8] sm:$0x3]
    %v6377 = vld [vmem:[#allocation6 + $0xc0] sm:$0xfc]
    %v6378 = vld [vmem:[#allocation6 + $0xc8] sm:$0xfc]
    %v6379 = vld [vmem:[#allocation6 + $0xd0] sm:$0x3]
    %v6380 = vld [vmem:[#allocation6 + $0xd8] sm:$0x3]
    %v6381 = vld [vmem:[#allocation6 + $0xe0] sm:$0xfc]
    %v6382 = vld [vmem:[#allocation6 + $0xe8] sm:$0xfc]
    %v6383 = vld [vmem:[#allocation6 + $0xf0] sm:$0x3]
    %v6384 = vld [vmem:[#allocation6 + $0xf8] sm:$0x3]
    %v6385 = vld [vmem:[#allocation6 + $0x140] sm:$0xfc]
    %v6386 = vld [vmem:[#allocation6 + $0x148] sm:$0xfc]
    %v6387 = vld [vmem:[#allocation6 + $0x150] sm:$0x3]
    %v6388 = vld [vmem:[#allocation6 + $0x158] sm:$0x3]
    %v6389 = vld [vmem:[#allocation6 + $0x160] sm:$0xfc]
    %v6390 = vld [vmem:[#allocation6 + $0x168] sm:$0xfc]
    %v6391 = vld [vmem:[#allocation6 + $0x170] sm:$0x3]
    %v6392 = vld [vmem:[#allocation6 + $0x178] sm:$0x3]
    %v6393 = vld [vmem:[#allocation6 + $0x180] sm:$0xfc]
    %v6394 = vld [vmem:[#allocation6 + $0x188] sm:$0xfc]
    %v6395 = vld [vmem:[#allocation6 + $0x190] sm:$0x3]
    %v6396 = vld [vmem:[#allocation6 + $0x198] sm:$0x3]
    %v6397 = vld [vmem:[#allocation6 + $0x1a0] sm:$0xfc]
    %v6398 = vld [vmem:[#allocation6 + $0x1a8] sm:$0xfc]
    %v6399 = vld [vmem:[#allocation6 + $0x1b0] sm:$0x3]
    %v6400 = vld [vmem:[#allocation6 + $0x1b8] sm:$0x3]
    %v6401 = vld [vmem:[#allocation6 + $0x1c0] sm:$0xfc]
    %v6402 = vld [vmem:[#allocation6 + $0x1c8] sm:$0xfc]
    %v6403 = vld [vmem:[#allocation6 + $0x1d0] sm:$0x3]
    %v6404 = vld [vmem:[#allocation6 + $0x1d8] sm:$0x3]
    %v6405 = vld [vmem:[#allocation6 + $0x1e0] sm:$0xfc]
    %v6406 = vld [vmem:[#allocation6 + $0x1e8] sm:$0xfc]
    %v6407 = vld [vmem:[#allocation6 + $0x1f0] sm:$0x3]
    %v6408 = vld [vmem:[#allocation6 + $0x1f8] sm:$0x3]
    %v6409 = vld [vmem:[#allocation6 + $0x200] sm:$0xfc]
    %v6410 = vld [vmem:[#allocation6 + $0x208] sm:$0xfc]
    %v6411 = vld [vmem:[#allocation6 + $0x210] sm:$0x3]
    %v6412 = vld [vmem:[#allocation6 + $0x218] sm:$0x3]
    %v6413 = vld [vmem:[#allocation6 + $0x220] sm:$0xfc]
    %v6414 = vld [vmem:[#allocation6 + $0x228] sm:$0xfc]
    %v6415 = vld [vmem:[#allocation6 + $0x230] sm:$0x3]
    %v6416 = vld [vmem:[#allocation6 + $0x238] sm:$0x3]
    %v6417 = vlaneseq
    %v6418 = vshrl.u32 %v6417, 7
    %v6419 = vsub.s32 2, %v6418
    %v6420 = vrot.slane %v5917, %v6419
    %v6421 = vlaneseq
    %v6422 = vshrl.u32 %v6421, 7
    %v6423 = vsub.s32 2, %v6422
    %v6424 = vrot.slane %v5918, %v6423
    %v6425 = vmul.f32 %v6353, %v6420
    %v6426 = vmul.f32 %v6354, %v6424
    %v6427 = vmul.f32 %v6355, %v6420
    %v6428 = vmul.f32 %v6356, %v6424
    %v6429 = vmul.f32 %v6357, %v6420
    %v6430 = vmul.f32 %v6358, %v6424
    %v6431 = vmul.f32 %v6359, %v6420
    %v6432 = vmul.f32 %v6360, %v6424
    %v6433 = vmul.f32 %v6361, %v6420
    %v6434 = vmul.f32 %v6362, %v6424
    %v6435 = vmul.f32 %v6363, %v6420
    %v6436 = vmul.f32 %v6364, %v6424
    %v6437 = vmul.f32 %v6365, %v6420
    %v6438 = vmul.f32 %v6366, %v6424
    %v6439 = vmul.f32 %v6367, %v6420
    %v6440 = vmul.f32 %v6368, %v6424
    %v6441 = vmul.f32 %v6369, %v6420
    %v6442 = vmul.f32 %v6370, %v6424
    %v6443 = vmul.f32 %v6371, %v6420
    %v6444 = vmul.f32 %v6372, %v6424
    %v6445 = vmul.f32 %v6373, %v6420
    %v6446 = vmul.f32 %v6374, %v6424
    %v6447 = vmul.f32 %v6375, %v6420
    %v6448 = vmul.f32 %v6376, %v6424
    %v6449 = vmul.f32 %v6377, %v6420
    %v6450 = vmul.f32 %v6378, %v6424
    %v6451 = vmul.f32 %v6379, %v6420
    %v6452 = vmul.f32 %v6380, %v6424
    %v6453 = vmul.f32 %v6381, %v6420
    %v6454 = vmul.f32 %v6382, %v6424
    %v6455 = vmul.f32 %v6383, %v6420
    %v6456 = vmul.f32 %v6384, %v6424
    %v6457 = vmul.f32 %v6385, %v6420
    %v6458 = vmul.f32 %v6386, %v6424
    %v6459 = vmul.f32 %v6387, %v6420
    %v6460 = vmul.f32 %v6388, %v6424
    %v6461 = vmul.f32 %v6389, %v6420
    %v6462 = vmul.f32 %v6390, %v6424
    %v6463 = vmul.f32 %v6391, %v6420
    %v6464 = vmul.f32 %v6392, %v6424
    %v6465 = vmul.f32 %v6393, %v6420
    %v6466 = vmul.f32 %v6394, %v6424
    %v6467 = vmul.f32 %v6395, %v6420
    %v6468 = vmul.f32 %v6396, %v6424
    %v6469 = vmul.f32 %v6397, %v6420
    %v6470 = vmul.f32 %v6398, %v6424
    %v6471 = vmul.f32 %v6399, %v6420
    %v6472 = vmul.f32 %v6400, %v6424
    %v6473 = vmul.f32 %v6401, %v6420
    %v6474 = vmul.f32 %v6402, %v6424
    %v6475 = vmul.f32 %v6403, %v6420
    %v6476 = vmul.f32 %v6404, %v6424
    %v6477 = vmul.f32 %v6405, %v6420
    %v6478 = vmul.f32 %v6406, %v6424
    %v6479 = vmul.f32 %v6407, %v6420
    %v6480 = vmul.f32 %v6408, %v6424
    %v6481 = vmul.f32 %v6409, %v6420
    %v6482 = vmul.f32 %v6410, %v6424
    %v6483 = vmul.f32 %v6411, %v6420
    %v6484 = vmul.f32 %v6412, %v6424
    %v6485 = vmul.f32 %v6413, %v6420
    %v6486 = vmul.f32 %v6414, %v6424
    %v6487 = vmul.f32 %v6415, %v6420
    %v6488 = vmul.f32 %v6416, %v6424
    %v6553 = vrot.slane %v6425, 2
    %v6554 = vrot.slane %v6427, 2
    %v6555 = vsel %vm2727, %v6553, %v6554
    %v6556 = vrot.slane %v6426, 2
    %v6557 = vrot.slane %v6428, 2
    %v6558 = vsel %vm2727, %v6556, %v6557
    %v6559 = vrot.slane %v6429, 2
    %v6560 = vrot.slane %v6431, 2
    %v6561 = vsel %vm2727, %v6559, %v6560
    %v6562 = vrot.slane %v6430, 2
    %v6563 = vrot.slane %v6432, 2
    %v6564 = vsel %vm2727, %v6562, %v6563
    %v6565 = vrot.slane %v6433, 2
    %v6566 = vrot.slane %v6435, 2
    %v6567 = vsel %vm2727, %v6565, %v6566
    %v6568 = vrot.slane %v6434, 2
    %v6569 = vrot.slane %v6436, 2
    %v6570 = vsel %vm2727, %v6568, %v6569
    %v6571 = vrot.slane %v6437, 2
    %v6572 = vrot.slane %v6439, 2
    %v6573 = vsel %vm2727, %v6571, %v6572
    %v6574 = vrot.slane %v6438, 2
    %v6575 = vrot.slane %v6440, 2
    %v6576 = vsel %vm2727, %v6574, %v6575
    %v6577 = vrot.slane %v6441, 2
    %v6578 = vrot.slane %v6443, 2
    %v6579 = vsel %vm2727, %v6577, %v6578
    %v6580 = vrot.slane %v6442, 2
    %v6581 = vrot.slane %v6444, 2
    %v6582 = vsel %vm2727, %v6580, %v6581
    %v6583 = vrot.slane %v6445, 2
    %v6584 = vrot.slane %v6447, 2
    %v6585 = vsel %vm2727, %v6583, %v6584
    %v6586 = vrot.slane %v6446, 2
    %v6587 = vrot.slane %v6448, 2
    %v6588 = vsel %vm2727, %v6586, %v6587
    %v6589 = vrot.slane %v6449, 2
    %v6590 = vrot.slane %v6451, 2
    %v6591 = vsel %vm2727, %v6589, %v6590
    %v6592 = vrot.slane %v6450, 2
    %v6593 = vrot.slane %v6452, 2
    %v6594 = vsel %vm2727, %v6592, %v6593
    %v6595 = vrot.slane %v6453, 2
    %v6596 = vrot.slane %v6455, 2
    %v6597 = vsel %vm2727, %v6595, %v6596
    %v6598 = vrot.slane %v6454, 2
    %v6599 = vrot.slane %v6456, 2
    %v6600 = vsel %vm2727, %v6598, %v6599
    %v6601 = vrot.slane %v6457, 2
    %v6602 = vrot.slane %v6459, 2
    %v6603 = vsel %vm2727, %v6601, %v6602
    %v6604 = vrot.slane %v6458, 2
    %v6605 = vrot.slane %v6460, 2
    %v6606 = vsel %vm2727, %v6604, %v6605
    %v6607 = vrot.slane %v6461, 2
    %v6608 = vrot.slane %v6463, 2
    %v6609 = vsel %vm2727, %v6607, %v6608
    %v6610 = vrot.slane %v6462, 2
    %v6611 = vrot.slane %v6464, 2
    %v6612 = vsel %vm2727, %v6610, %v6611
    %v6613 = vrot.slane %v6465, 2
    %v6614 = vrot.slane %v6467, 2
    %v6615 = vsel %vm2727, %v6613, %v6614
    %v6616 = vrot.slane %v6466, 2
    %v6617 = vrot.slane %v6468, 2
    %v6618 = vsel %vm2727, %v6616, %v6617
    %v6619 = vrot.slane %v6469, 2
    %v6620 = vrot.slane %v6471, 2
    %v6621 = vsel %vm2727, %v6619, %v6620
    %v6622 = vrot.slane %v6470, 2
    %v6623 = vrot.slane %v6472, 2
    %v6624 = vsel %vm2727, %v6622, %v6623
    %v6625 = vrot.slane %v6473, 2
    %v6626 = vrot.slane %v6475, 2
    %v6627 = vsel %vm2727, %v6625, %v6626
    %v6628 = vrot.slane %v6474, 2
    %v6629 = vrot.slane %v6476, 2
    %v6630 = vsel %vm2727, %v6628, %v6629
    %v6631 = vrot.slane %v6477, 2
    %v6632 = vrot.slane %v6479, 2
    %v6633 = vsel %vm2727, %v6631, %v6632
    %v6634 = vrot.slane %v6478, 2
    %v6635 = vrot.slane %v6480, 2
    %v6636 = vsel %vm2727, %v6634, %v6635
    %v6637 = vrot.slane %v6481, 2
    %v6638 = vrot.slane %v6483, 2
    %v6639 = vsel %vm2727, %v6637, %v6638
    %v6640 = vrot.slane %v6482, 2
    %v6641 = vrot.slane %v6484, 2
    %v6642 = vsel %vm2727, %v6640, %v6641
    %v6643 = vrot.slane %v6485, 2
    %v6644 = vrot.slane %v6487, 2
    %v6645 = vsel %vm2727, %v6643, %v6644
    %v6646 = vrot.slane %v6486, 2
    %v6647 = vrot.slane %v6488, 2
    %v6648 = vsel %vm2727, %v6646, %v6647
    %v6681 = vadd.f32 %v6321, %v6555
    %v6682 = vadd.f32 %v6322, %v6558
    %v6683 = vadd.f32 %v6323, %v6561
    %v6684 = vadd.f32 %v6324, %v6564
    %v6685 = vadd.f32 %v6325, %v6567
    %v6686 = vadd.f32 %v6326, %v6570
    %v6687 = vadd.f32 %v6327, %v6573
    %v6688 = vadd.f32 %v6328, %v6576
    %v6689 = vadd.f32 %v6329, %v6579
    %v6690 = vadd.f32 %v6330, %v6582
    %v6691 = vadd.f32 %v6331, %v6585
    %v6692 = vadd.f32 %v6332, %v6588
    %v6693 = vadd.f32 %v6333, %v6591
    %v6694 = vadd.f32 %v6334, %v6594
    %v6695 = vadd.f32 %v6335, %v6597
    %v6696 = vadd.f32 %v6336, %v6600
    %v6697 = vadd.f32 %v6337, %v6603
    %v6698 = vadd.f32 %v6338, %v6606
    %v6699 = vadd.f32 %v6339, %v6609
    %v6700 = vadd.f32 %v6340, %v6612
    %v6701 = vadd.f32 %v6341, %v6615
    %v6702 = vadd.f32 %v6342, %v6618
    %v6703 = vadd.f32 %v6343, %v6621
    %v6704 = vadd.f32 %v6344, %v6624
    %v6705 = vadd.f32 %v6345, %v6627
    %v6706 = vadd.f32 %v6346, %v6630
    %v6707 = vadd.f32 %v6347, %v6633
    %v6708 = vadd.f32 %v6348, %v6636
    %v6709 = vadd.f32 %v6349, %v6639
    %v6710 = vadd.f32 %v6350, %v6642
    %v6711 = vadd.f32 %v6351, %v6645
    %v6712 = vadd.f32 %v6352, %v6648
    %v6713 = vld [vmem:[%s5852] sm:$0xff]
    %v6714 = vld [vmem:[%s5852 + $0x8] sm:$0xff]
    %v6715 = vld [vmem:[%s5852 + $0x20] sm:$0xff]
    %v6716 = vld [vmem:[%s5852 + $0x28] sm:$0xff]
    %v6717 = vld [vmem:[%s5852 + $0x40] sm:$0xff]
    %v6718 = vld [vmem:[%s5852 + $0x48] sm:$0xff]
    %v6719 = vld [vmem:[%s5852 + $0x60] sm:$0xff]
    %v6720 = vld [vmem:[%s5852 + $0x68] sm:$0xff]
    %v6721 = vld [vmem:[%s5852 + $0x80] sm:$0xff]
    %v6722 = vld [vmem:[%s5852 + $0x88] sm:$0xff]
    %v6723 = vld [vmem:[%s5852 + $0xa0] sm:$0xff]
    %v6724 = vld [vmem:[%s5852 + $0xa8] sm:$0xff]
    %v6725 = vld [vmem:[%s5852 + $0xc0] sm:$0xff]
    %v6726 = vld [vmem:[%s5852 + $0xc8] sm:$0xff]
    %v6727 = vld [vmem:[%s5852 + $0xe0] sm:$0xff]
    %v6728 = vld [vmem:[%s5852 + $0xe8] sm:$0xff]
    %v6729 = vld [vmem:[%s5852 + $0x140] sm:$0xff]
    %v6730 = vld [vmem:[%s5852 + $0x148] sm:$0xff]
    %v6731 = vld [vmem:[%s5852 + $0x160] sm:$0xff]
    %v6732 = vld [vmem:[%s5852 + $0x168] sm:$0xff]
    %v6733 = vld [vmem:[%s5852 + $0x180] sm:$0xff]
    %v6734 = vld [vmem:[%s5852 + $0x188] sm:$0xff]
    %v6735 = vld [vmem:[%s5852 + $0x1a0] sm:$0xff]
    %v6736 = vld [vmem:[%s5852 + $0x1a8] sm:$0xff]
    %v6737 = vld [vmem:[%s5852 + $0x1c0] sm:$0xff]
    %v6738 = vld [vmem:[%s5852 + $0x1c8] sm:$0xff]
    %v6739 = vld [vmem:[%s5852 + $0x1e0] sm:$0xff]
    %v6740 = vld [vmem:[%s5852 + $0x1e8] sm:$0xff]
    %v6741 = vld [vmem:[%s5852 + $0x200] sm:$0xff]
    %v6742 = vld [vmem:[%s5852 + $0x208] sm:$0xff]
    %v6743 = vld [vmem:[%s5852 + $0x220] sm:$0xff]
    %v6744 = vld [vmem:[%s5852 + $0x228] sm:$0xff]
    %v6745 = vlaneseq
    %v6746 = vshrl.u32 %v6745, 7
    %v6747 = vsub.s32 3, %v6746
    %v6748 = vrot.slane %v5917, %v6747
    %v6749 = vlaneseq
    %v6750 = vshrl.u32 %v6749, 7
    %v6751 = vsub.s32 3, %v6750
    %v6752 = vrot.slane %v5918, %v6751
    %v6753 = vmul.f32 %v6713, %v6748
    %v6754 = vmul.f32 %v6714, %v6752
    %v6755 = vmul.f32 %v6715, %v6748
    %v6756 = vmul.f32 %v6716, %v6752
    %v6757 = vmul.f32 %v6717, %v6748
    %v6758 = vmul.f32 %v6718, %v6752
    %v6759 = vmul.f32 %v6719, %v6748
    %v6760 = vmul.f32 %v6720, %v6752
    %v6761 = vmul.f32 %v6721, %v6748
    %v6762 = vmul.f32 %v6722, %v6752
    %v6763 = vmul.f32 %v6723, %v6748
    %v6764 = vmul.f32 %v6724, %v6752
    %v6765 = vmul.f32 %v6725, %v6748
    %v6766 = vmul.f32 %v6726, %v6752
    %v6767 = vmul.f32 %v6727, %v6748
    %v6768 = vmul.f32 %v6728, %v6752
    %v6769 = vmul.f32 %v6729, %v6748
    %v6770 = vmul.f32 %v6730, %v6752
    %v6771 = vmul.f32 %v6731, %v6748
    %v6772 = vmul.f32 %v6732, %v6752
    %v6773 = vmul.f32 %v6733, %v6748
    %v6774 = vmul.f32 %v6734, %v6752
    %v6775 = vmul.f32 %v6735, %v6748
    %v6776 = vmul.f32 %v6736, %v6752
    %v6777 = vmul.f32 %v6737, %v6748
    %v6778 = vmul.f32 %v6738, %v6752
    %v6779 = vmul.f32 %v6739, %v6748
    %v6780 = vmul.f32 %v6740, %v6752
    %v6781 = vmul.f32 %v6741, %v6748
    %v6782 = vmul.f32 %v6742, %v6752
    %v6783 = vmul.f32 %v6743, %v6748
    %v6784 = vmul.f32 %v6744, %v6752
    %v6785 = vadd.f32 %v6681, %v6753
    %v6786 = vadd.f32 %v6682, %v6754
    %v6787 = vadd.f32 %v6683, %v6755
    %v6788 = vadd.f32 %v6684, %v6756
    %v6789 = vadd.f32 %v6685, %v6757
    %v6790 = vadd.f32 %v6686, %v6758
    %v6791 = vadd.f32 %v6687, %v6759
    %v6792 = vadd.f32 %v6688, %v6760
    %v6793 = vadd.f32 %v6689, %v6761
    %v6794 = vadd.f32 %v6690, %v6762
    %v6795 = vadd.f32 %v6691, %v6763
    %v6796 = vadd.f32 %v6692, %v6764
    %v6797 = vadd.f32 %v6693, %v6765
    %v6798 = vadd.f32 %v6694, %v6766
    %v6799 = vadd.f32 %v6695, %v6767
    %v6800 = vadd.f32 %v6696, %v6768
    %v6801 = vadd.f32 %v6697, %v6769
    %v6802 = vadd.f32 %v6698, %v6770
    %v6803 = vadd.f32 %v6699, %v6771
    %v6804 = vadd.f32 %v6700, %v6772
    %v6805 = vadd.f32 %v6701, %v6773
    %v6806 = vadd.f32 %v6702, %v6774
    %v6807 = vadd.f32 %v6703, %v6775
    %v6808 = vadd.f32 %v6704, %v6776
    %v6809 = vadd.f32 %v6705, %v6777
    %v6810 = vadd.f32 %v6706, %v6778
    %v6811 = vadd.f32 %v6707, %v6779
    %v6812 = vadd.f32 %v6708, %v6780
    %v6813 = vadd.f32 %v6709, %v6781
    %v6814 = vadd.f32 %v6710, %v6782
    %v6815 = vadd.f32 %v6711, %v6783
    %v6816 = vadd.f32 %v6712, %v6784
    %v6817 = vld [vmem:[%s5852] sm:$0xfe]
    %v6818 = vld [vmem:[%s5852 + $0x8] sm:$0xfe]
    %v6819 = vld [vmem:[%s5852 + $0x10] sm:$0x1]
    %v6820 = vld [vmem:[%s5852 + $0x18] sm:$0x1]
    %v6821 = vld [vmem:[%s5852 + $0x20] sm:$0xfe]
    %v6822 = vld [vmem:[%s5852 + $0x28] sm:$0xfe]
    %v6823 = vld [vmem:[%s5852 + $0x30] sm:$0x1]
    %v6824 = vld [vmem:[%s5852 + $0x38] sm:$0x1]
    %v6825 = vld [vmem:[%s5852 + $0x40] sm:$0xfe]
    %v6826 = vld [vmem:[%s5852 + $0x48] sm:$0xfe]
    %v6827 = vld [vmem:[%s5852 + $0x50] sm:$0x1]
    %v6828 = vld [vmem:[%s5852 + $0x58] sm:$0x1]
    %v6829 = vld [vmem:[%s5852 + $0x60] sm:$0xfe]
    %v6830 = vld [vmem:[%s5852 + $0x68] sm:$0xfe]
    %v6831 = vld [vmem:[%s5852 + $0x70] sm:$0x1]
    %v6832 = vld [vmem:[%s5852 + $0x78] sm:$0x1]
    %v6833 = vld [vmem:[%s5852 + $0x80] sm:$0xfe]
    %v6834 = vld [vmem:[%s5852 + $0x88] sm:$0xfe]
    %v6835 = vld [vmem:[%s5852 + $0x90] sm:$0x1]
    %v6836 = vld [vmem:[%s5852 + $0x98] sm:$0x1]
    %v6837 = vld [vmem:[%s5852 + $0xa0] sm:$0xfe]
    %v6838 = vld [vmem:[%s5852 + $0xa8] sm:$0xfe]
    %v6839 = vld [vmem:[%s5852 + $0xb0] sm:$0x1]
    %v6840 = vld [vmem:[%s5852 + $0xb8] sm:$0x1]
    %v6841 = vld [vmem:[%s5852 + $0xc0] sm:$0xfe]
    %v6842 = vld [vmem:[%s5852 + $0xc8] sm:$0xfe]
    %v6843 = vld [vmem:[%s5852 + $0xd0] sm:$0x1]
    %v6844 = vld [vmem:[%s5852 + $0xd8] sm:$0x1]
    %v6845 = vld [vmem:[%s5852 + $0xe0] sm:$0xfe]
    %v6846 = vld [vmem:[%s5852 + $0xe8] sm:$0xfe]
    %v6847 = vld [vmem:[%s5852 + $0xf0] sm:$0x1]
    %v6848 = vld [vmem:[%s5852 + $0xf8] sm:$0x1]
    %v6849 = vld [vmem:[%s5852 + $0x140] sm:$0xfe]
    %v6850 = vld [vmem:[%s5852 + $0x148] sm:$0xfe]
    %v6851 = vld [vmem:[%s5852 + $0x150] sm:$0x1]
    %v6852 = vld [vmem:[%s5852 + $0x158] sm:$0x1]
    %v6853 = vld [vmem:[%s5852 + $0x160] sm:$0xfe]
    %v6854 = vld [vmem:[%s5852 + $0x168] sm:$0xfe]
    %v6855 = vld [vmem:[%s5852 + $0x170] sm:$0x1]
    %v6856 = vld [vmem:[%s5852 + $0x178] sm:$0x1]
    %v6857 = vld [vmem:[%s5852 + $0x180] sm:$0xfe]
    %v6858 = vld [vmem:[%s5852 + $0x188] sm:$0xfe]
    %v6859 = vld [vmem:[%s5852 + $0x190] sm:$0x1]
    %v6860 = vld [vmem:[%s5852 + $0x198] sm:$0x1]
    %v6861 = vld [vmem:[%s5852 + $0x1a0] sm:$0xfe]
    %v6862 = vld [vmem:[%s5852 + $0x1a8] sm:$0xfe]
    %v6863 = vld [vmem:[%s5852 + $0x1b0] sm:$0x1]
    %v6864 = vld [vmem:[%s5852 + $0x1b8] sm:$0x1]
    %v6865 = vld [vmem:[%s5852 + $0x1c0] sm:$0xfe]
    %v6866 = vld [vmem:[%s5852 + $0x1c8] sm:$0xfe]
    %v6867 = vld [vmem:[%s5852 + $0x1d0] sm:$0x1]
    %v6868 = vld [vmem:[%s5852 + $0x1d8] sm:$0x1]
    %v6869 = vld [vmem:[%s5852 + $0x1e0] sm:$0xfe]
    %v6870 = vld [vmem:[%s5852 + $0x1e8] sm:$0xfe]
    %v6871 = vld [vmem:[%s5852 + $0x1f0] sm:$0x1]
    %v6872 = vld [vmem:[%s5852 + $0x1f8] sm:$0x1]
    %v6873 = vld [vmem:[%s5852 + $0x200] sm:$0xfe]
    %v6874 = vld [vmem:[%s5852 + $0x208] sm:$0xfe]
    %v6875 = vld [vmem:[%s5852 + $0x210] sm:$0x1]
    %v6876 = vld [vmem:[%s5852 + $0x218] sm:$0x1]
    %v6877 = vld [vmem:[%s5852 + $0x220] sm:$0xfe]
    %v6878 = vld [vmem:[%s5852 + $0x228] sm:$0xfe]
    %v6879 = vld [vmem:[%s5852 + $0x230] sm:$0x1]
    %v6880 = vld [vmem:[%s5852 + $0x238] sm:$0x1]
    %v6881 = vlaneseq
    %v6882 = vshrl.u32 %v6881, 7
    %v6883 = vsub.s32 4, %v6882
    %v6884 = vrot.slane %v5917, %v6883
    %v6885 = vlaneseq
    %v6886 = vshrl.u32 %v6885, 7
    %v6887 = vsub.s32 4, %v6886
    %v6888 = vrot.slane %v5918, %v6887
    %v6889 = vmul.f32 %v6817, %v6884
    %v6890 = vmul.f32 %v6818, %v6888
    %v6891 = vmul.f32 %v6819, %v6884
    %v6892 = vmul.f32 %v6820, %v6888
    %v6893 = vmul.f32 %v6821, %v6884
    %v6894 = vmul.f32 %v6822, %v6888
    %v6895 = vmul.f32 %v6823, %v6884
    %v6896 = vmul.f32 %v6824, %v6888
    %v6897 = vmul.f32 %v6825, %v6884
    %v6898 = vmul.f32 %v6826, %v6888
    %v6899 = vmul.f32 %v6827, %v6884
    %v6900 = vmul.f32 %v6828, %v6888
    %v6901 = vmul.f32 %v6829, %v6884
    %v6902 = vmul.f32 %v6830, %v6888
    %v6903 = vmul.f32 %v6831, %v6884
    %v6904 = vmul.f32 %v6832, %v6888
    %v6905 = vmul.f32 %v6833, %v6884
    %v6906 = vmul.f32 %v6834, %v6888
    %v6907 = vmul.f32 %v6835, %v6884
    %v6908 = vmul.f32 %v6836, %v6888
    %v6909 = vmul.f32 %v6837, %v6884
    %v6910 = vmul.f32 %v6838, %v6888
    %v6911 = vmul.f32 %v6839, %v6884
    %v6912 = vmul.f32 %v6840, %v6888
    %v6913 = vmul.f32 %v6841, %v6884
    %v6914 = vmul.f32 %v6842, %v6888
    %v6915 = vmul.f32 %v6843, %v6884
    %v6916 = vmul.f32 %v6844, %v6888
    %v6917 = vmul.f32 %v6845, %v6884
    %v6918 = vmul.f32 %v6846, %v6888
    %v6919 = vmul.f32 %v6847, %v6884
    %v6920 = vmul.f32 %v6848, %v6888
    %v6921 = vmul.f32 %v6849, %v6884
    %v6922 = vmul.f32 %v6850, %v6888
    %v6923 = vmul.f32 %v6851, %v6884
    %v6924 = vmul.f32 %v6852, %v6888
    %v6925 = vmul.f32 %v6853, %v6884
    %v6926 = vmul.f32 %v6854, %v6888
    %v6927 = vmul.f32 %v6855, %v6884
    %v6928 = vmul.f32 %v6856, %v6888
    %v6929 = vmul.f32 %v6857, %v6884
    %v6930 = vmul.f32 %v6858, %v6888
    %v6931 = vmul.f32 %v6859, %v6884
    %v6932 = vmul.f32 %v6860, %v6888
    %v6933 = vmul.f32 %v6861, %v6884
    %v6934 = vmul.f32 %v6862, %v6888
    %v6935 = vmul.f32 %v6863, %v6884
    %v6936 = vmul.f32 %v6864, %v6888
    %v6937 = vmul.f32 %v6865, %v6884
    %v6938 = vmul.f32 %v6866, %v6888
    %v6939 = vmul.f32 %v6867, %v6884
    %v6940 = vmul.f32 %v6868, %v6888
    %v6941 = vmul.f32 %v6869, %v6884
    %v6942 = vmul.f32 %v6870, %v6888
    %v6943 = vmul.f32 %v6871, %v6884
    %v6944 = vmul.f32 %v6872, %v6888
    %v6945 = vmul.f32 %v6873, %v6884
    %v6946 = vmul.f32 %v6874, %v6888
    %v6947 = vmul.f32 %v6875, %v6884
    %v6948 = vmul.f32 %v6876, %v6888
    %v6949 = vmul.f32 %v6877, %v6884
    %v6950 = vmul.f32 %v6878, %v6888
    %v6951 = vmul.f32 %v6879, %v6884
    %v6952 = vmul.f32 %v6880, %v6888
    %v7017 = vrot.slane %v6889, 1
    %v7018 = vrot.slane %v6891, 1
    %v7019 = vsel %vm2366, %v7017, %v7018
    %v7020 = vrot.slane %v6890, 1
    %v7021 = vrot.slane %v6892, 1
    %v7022 = vsel %vm2366, %v7020, %v7021
    %v7023 = vrot.slane %v6893, 1
    %v7024 = vrot.slane %v6895, 1
    %v7025 = vsel %vm2366, %v7023, %v7024
    %v7026 = vrot.slane %v6894, 1
    %v7027 = vrot.slane %v6896, 1
    %v7028 = vsel %vm2366, %v7026, %v7027
    %v7029 = vrot.slane %v6897, 1
    %v7030 = vrot.slane %v6899, 1
    %v7031 = vsel %vm2366, %v7029, %v7030
    %v7032 = vrot.slane %v6898, 1
    %v7033 = vrot.slane %v6900, 1
    %v7034 = vsel %vm2366, %v7032, %v7033
    %v7035 = vrot.slane %v6901, 1
    %v7036 = vrot.slane %v6903, 1
    %v7037 = vsel %vm2366, %v7035, %v7036
    %v7038 = vrot.slane %v6902, 1
    %v7039 = vrot.slane %v6904, 1
    %v7040 = vsel %vm2366, %v7038, %v7039
    %v7041 = vrot.slane %v6905, 1
    %v7042 = vrot.slane %v6907, 1
    %v7043 = vsel %vm2366, %v7041, %v7042
    %v7044 = vrot.slane %v6906, 1
    %v7045 = vrot.slane %v6908, 1
    %v7046 = vsel %vm2366, %v7044, %v7045
    %v7047 = vrot.slane %v6909, 1
    %v7048 = vrot.slane %v6911, 1
    %v7049 = vsel %vm2366, %v7047, %v7048
    %v7050 = vrot.slane %v6910, 1
    %v7051 = vrot.slane %v6912, 1
    %v7052 = vsel %vm2366, %v7050, %v7051
    %v7053 = vrot.slane %v6913, 1
    %v7054 = vrot.slane %v6915, 1
    %v7055 = vsel %vm2366, %v7053, %v7054
    %v7056 = vrot.slane %v6914, 1
    %v7057 = vrot.slane %v6916, 1
    %v7058 = vsel %vm2366, %v7056, %v7057
    %v7059 = vrot.slane %v6917, 1
    %v7060 = vrot.slane %v6919, 1
    %v7061 = vsel %vm2366, %v7059, %v7060
    %v7062 = vrot.slane %v6918, 1
    %v7063 = vrot.slane %v6920, 1
    %v7064 = vsel %vm2366, %v7062, %v7063
    %v7065 = vrot.slane %v6921, 1
    %v7066 = vrot.slane %v6923, 1
    %v7067 = vsel %vm2366, %v7065, %v7066
    %v7068 = vrot.slane %v6922, 1
    %v7069 = vrot.slane %v6924, 1
    %v7070 = vsel %vm2366, %v7068, %v7069
    %v7071 = vrot.slane %v6925, 1
    %v7072 = vrot.slane %v6927, 1
    %v7073 = vsel %vm2366, %v7071, %v7072
    %v7074 = vrot.slane %v6926, 1
    %v7075 = vrot.slane %v6928, 1
    %v7076 = vsel %vm2366, %v7074, %v7075
    %v7077 = vrot.slane %v6929, 1
    %v7078 = vrot.slane %v6931, 1
    %v7079 = vsel %vm2366, %v7077, %v7078
    %v7080 = vrot.slane %v6930, 1
    %v7081 = vrot.slane %v6932, 1
    %v7082 = vsel %vm2366, %v7080, %v7081
    %v7083 = vrot.slane %v6933, 1
    %v7084 = vrot.slane %v6935, 1
    %v7085 = vsel %vm2366, %v7083, %v7084
    %v7086 = vrot.slane %v6934, 1
    %v7087 = vrot.slane %v6936, 1
    %v7088 = vsel %vm2366, %v7086, %v7087
    %v7089 = vrot.slane %v6937, 1
    %v7090 = vrot.slane %v6939, 1
    %v7091 = vsel %vm2366, %v7089, %v7090
    %v7092 = vrot.slane %v6938, 1
    %v7093 = vrot.slane %v6940, 1
    %v7094 = vsel %vm2366, %v7092, %v7093
    %v7095 = vrot.slane %v6941, 1
    %v7096 = vrot.slane %v6943, 1
    %v7097 = vsel %vm2366, %v7095, %v7096
    %v7098 = vrot.slane %v6942, 1
    %v7099 = vrot.slane %v6944, 1
    %v7100 = vsel %vm2366, %v7098, %v7099
    %v7101 = vrot.slane %v6945, 1
    %v7102 = vrot.slane %v6947, 1
    %v7103 = vsel %vm2366, %v7101, %v7102
    %v7104 = vrot.slane %v6946, 1
    %v7105 = vrot.slane %v6948, 1
    %v7106 = vsel %vm2366, %v7104, %v7105
    %v7107 = vrot.slane %v6949, 1
    %v7108 = vrot.slane %v6951, 1
    %v7109 = vsel %vm2366, %v7107, %v7108
    %v7110 = vrot.slane %v6950, 1
    %v7111 = vrot.slane %v6952, 1
    %v7112 = vsel %vm2366, %v7110, %v7111
    %v7145 = vadd.f32 %v6785, %v7019
    %v7146 = vadd.f32 %v6786, %v7022
    %v7147 = vadd.f32 %v6787, %v7025
    %v7148 = vadd.f32 %v6788, %v7028
    %v7149 = vadd.f32 %v6789, %v7031
    %v7150 = vadd.f32 %v6790, %v7034
    %v7151 = vadd.f32 %v6791, %v7037
    %v7152 = vadd.f32 %v6792, %v7040
    %v7153 = vadd.f32 %v6793, %v7043
    %v7154 = vadd.f32 %v6794, %v7046
    %v7155 = vadd.f32 %v6795, %v7049
    %v7156 = vadd.f32 %v6796, %v7052
    %v7157 = vadd.f32 %v6797, %v7055
    %v7158 = vadd.f32 %v6798, %v7058
    %v7159 = vadd.f32 %v6799, %v7061
    %v7160 = vadd.f32 %v6800, %v7064
    %v7161 = vadd.f32 %v6801, %v7067
    %v7162 = vadd.f32 %v6802, %v7070
    %v7163 = vadd.f32 %v6803, %v7073
    %v7164 = vadd.f32 %v6804, %v7076
    %v7165 = vadd.f32 %v6805, %v7079
    %v7166 = vadd.f32 %v6806, %v7082
    %v7167 = vadd.f32 %v6807, %v7085
    %v7168 = vadd.f32 %v6808, %v7088
    %v7169 = vadd.f32 %v6809, %v7091
    %v7170 = vadd.f32 %v6810, %v7094
    %v7171 = vadd.f32 %v6811, %v7097
    %v7172 = vadd.f32 %v6812, %v7100
    %v7173 = vadd.f32 %v6813, %v7103
    %v7174 = vadd.f32 %v6814, %v7106
    %v7175 = vadd.f32 %v6815, %v7109
    %v7176 = vadd.f32 %v6816, %v7112
    %v7177 = vld [vmem:[%s5852] sm:$0xfc]
    %v7178 = vld [vmem:[%s5852 + $0x8] sm:$0xfc]
    %v7179 = vld [vmem:[%s5852 + $0x10] sm:$0x3]
    %v7180 = vld [vmem:[%s5852 + $0x18] sm:$0x3]
    %v7181 = vld [vmem:[%s5852 + $0x20] sm:$0xfc]
    %v7182 = vld [vmem:[%s5852 + $0x28] sm:$0xfc]
    %v7183 = vld [vmem:[%s5852 + $0x30] sm:$0x3]
    %v7184 = vld [vmem:[%s5852 + $0x38] sm:$0x3]
    %v7185 = vld [vmem:[%s5852 + $0x40] sm:$0xfc]
    %v7186 = vld [vmem:[%s5852 + $0x48] sm:$0xfc]
    %v7187 = vld [vmem:[%s5852 + $0x50] sm:$0x3]
    %v7188 = vld [vmem:[%s5852 + $0x58] sm:$0x3]
    %v7189 = vld [vmem:[%s5852 + $0x60] sm:$0xfc]
    %v7190 = vld [vmem:[%s5852 + $0x68] sm:$0xfc]
    %v7191 = vld [vmem:[%s5852 + $0x70] sm:$0x3]
    %v7192 = vld [vmem:[%s5852 + $0x78] sm:$0x3]
    %v7193 = vld [vmem:[%s5852 + $0x80] sm:$0xfc]
    %v7194 = vld [vmem:[%s5852 + $0x88] sm:$0xfc]
    %v7195 = vld [vmem:[%s5852 + $0x90] sm:$0x3]
    %v7196 = vld [vmem:[%s5852 + $0x98] sm:$0x3]
    %v7197 = vld [vmem:[%s5852 + $0xa0] sm:$0xfc]
    %v7198 = vld [vmem:[%s5852 + $0xa8] sm:$0xfc]
    %v7199 = vld [vmem:[%s5852 + $0xb0] sm:$0x3]
    %v7200 = vld [vmem:[%s5852 + $0xb8] sm:$0x3]
    %v7201 = vld [vmem:[%s5852 + $0xc0] sm:$0xfc]
    %v7202 = vld [vmem:[%s5852 + $0xc8] sm:$0xfc]
    %v7203 = vld [vmem:[%s5852 + $0xd0] sm:$0x3]
    %v7204 = vld [vmem:[%s5852 + $0xd8] sm:$0x3]
    %v7205 = vld [vmem:[%s5852 + $0xe0] sm:$0xfc]
    %v7206 = vld [vmem:[%s5852 + $0xe8] sm:$0xfc]
    %v7207 = vld [vmem:[%s5852 + $0xf0] sm:$0x3]
    %v7208 = vld [vmem:[%s5852 + $0xf8] sm:$0x3]
    %v7209 = vld [vmem:[%s5852 + $0x140] sm:$0xfc]
    %v7210 = vld [vmem:[%s5852 + $0x148] sm:$0xfc]
    %v7211 = vld [vmem:[%s5852 + $0x150] sm:$0x3]
    %v7212 = vld [vmem:[%s5852 + $0x158] sm:$0x3]
    %v7213 = vld [vmem:[%s5852 + $0x160] sm:$0xfc]
    %v7214 = vld [vmem:[%s5852 + $0x168] sm:$0xfc]
    %v7215 = vld [vmem:[%s5852 + $0x170] sm:$0x3]
    %v7216 = vld [vmem:[%s5852 + $0x178] sm:$0x3]
    %v7217 = vld [vmem:[%s5852 + $0x180] sm:$0xfc]
    %v7218 = vld [vmem:[%s5852 + $0x188] sm:$0xfc]
    %v7219 = vld [vmem:[%s5852 + $0x190] sm:$0x3]
    %v7220 = vld [vmem:[%s5852 + $0x198] sm:$0x3]
    %v7221 = vld [vmem:[%s5852 + $0x1a0] sm:$0xfc]
    %v7222 = vld [vmem:[%s5852 + $0x1a8] sm:$0xfc]
    %v7223 = vld [vmem:[%s5852 + $0x1b0] sm:$0x3]
    %v7224 = vld [vmem:[%s5852 + $0x1b8] sm:$0x3]
    %v7225 = vld [vmem:[%s5852 + $0x1c0] sm:$0xfc]
    %v7226 = vld [vmem:[%s5852 + $0x1c8] sm:$0xfc]
    %v7227 = vld [vmem:[%s5852 + $0x1d0] sm:$0x3]
    %v7228 = vld [vmem:[%s5852 + $0x1d8] sm:$0x3]
    %v7229 = vld [vmem:[%s5852 + $0x1e0] sm:$0xfc]
    %v7230 = vld [vmem:[%s5852 + $0x1e8] sm:$0xfc]
    %v7231 = vld [vmem:[%s5852 + $0x1f0] sm:$0x3]
    %v7232 = vld [vmem:[%s5852 + $0x1f8] sm:$0x3]
    %v7233 = vld [vmem:[%s5852 + $0x200] sm:$0xfc]
    %v7234 = vld [vmem:[%s5852 + $0x208] sm:$0xfc]
    %v7235 = vld [vmem:[%s5852 + $0x210] sm:$0x3]
    %v7236 = vld [vmem:[%s5852 + $0x218] sm:$0x3]
    %v7237 = vld [vmem:[%s5852 + $0x220] sm:$0xfc]
    %v7238 = vld [vmem:[%s5852 + $0x228] sm:$0xfc]
    %v7239 = vld [vmem:[%s5852 + $0x230] sm:$0x3]
    %v7240 = vld [vmem:[%s5852 + $0x238] sm:$0x3]
    %v7241 = vlaneseq
    %v7242 = vshrl.u32 %v7241, 7
    %v7243 = vsub.s32 5, %v7242
    %v7244 = vrot.slane %v5917, %v7243
    %v7245 = vlaneseq
    %v7246 = vshrl.u32 %v7245, 7
    %v7247 = vsub.s32 5, %v7246
    %v7248 = vrot.slane %v5918, %v7247
    %v7249 = vmul.f32 %v7177, %v7244
    %v7250 = vmul.f32 %v7178, %v7248
    %v7251 = vmul.f32 %v7179, %v7244
    %v7252 = vmul.f32 %v7180, %v7248
    %v7253 = vmul.f32 %v7181, %v7244
    %v7254 = vmul.f32 %v7182, %v7248
    %v7255 = vmul.f32 %v7183, %v7244
    %v7256 = vmul.f32 %v7184, %v7248
    %v7257 = vmul.f32 %v7185, %v7244
    %v7258 = vmul.f32 %v7186, %v7248
    %v7259 = vmul.f32 %v7187, %v7244
    %v7260 = vmul.f32 %v7188, %v7248
    %v7261 = vmul.f32 %v7189, %v7244
    %v7262 = vmul.f32 %v7190, %v7248
    %v7263 = vmul.f32 %v7191, %v7244
    %v7264 = vmul.f32 %v7192, %v7248
    %v7265 = vmul.f32 %v7193, %v7244
    %v7266 = vmul.f32 %v7194, %v7248
    %v7267 = vmul.f32 %v7195, %v7244
    %v7268 = vmul.f32 %v7196, %v7248
    %v7269 = vmul.f32 %v7197, %v7244
    %v7270 = vmul.f32 %v7198, %v7248
    %v7271 = vmul.f32 %v7199, %v7244
    %v7272 = vmul.f32 %v7200, %v7248
    %v7273 = vmul.f32 %v7201, %v7244
    %v7274 = vmul.f32 %v7202, %v7248
    %v7275 = vmul.f32 %v7203, %v7244
    %v7276 = vmul.f32 %v7204, %v7248
    %v7277 = vmul.f32 %v7205, %v7244
    %v7278 = vmul.f32 %v7206, %v7248
    %v7279 = vmul.f32 %v7207, %v7244
    %v7280 = vmul.f32 %v7208, %v7248
    %v7281 = vmul.f32 %v7209, %v7244
    %v7282 = vmul.f32 %v7210, %v7248
    %v7283 = vmul.f32 %v7211, %v7244
    %v7284 = vmul.f32 %v7212, %v7248
    %v7285 = vmul.f32 %v7213, %v7244
    %v7286 = vmul.f32 %v7214, %v7248
    %v7287 = vmul.f32 %v7215, %v7244
    %v7288 = vmul.f32 %v7216, %v7248
    %v7289 = vmul.f32 %v7217, %v7244
    %v7290 = vmul.f32 %v7218, %v7248
    %v7291 = vmul.f32 %v7219, %v7244
    %v7292 = vmul.f32 %v7220, %v7248
    %v7293 = vmul.f32 %v7221, %v7244
    %v7294 = vmul.f32 %v7222, %v7248
    %v7295 = vmul.f32 %v7223, %v7244
    %v7296 = vmul.f32 %v7224, %v7248
    %v7297 = vmul.f32 %v7225, %v7244
    %v7298 = vmul.f32 %v7226, %v7248
    %v7299 = vmul.f32 %v7227, %v7244
    %v7300 = vmul.f32 %v7228, %v7248
    %v7301 = vmul.f32 %v7229, %v7244
    %v7302 = vmul.f32 %v7230, %v7248
    %v7303 = vmul.f32 %v7231, %v7244
    %v7304 = vmul.f32 %v7232, %v7248
    %v7305 = vmul.f32 %v7233, %v7244
    %v7306 = vmul.f32 %v7234, %v7248
    %v7307 = vmul.f32 %v7235, %v7244
    %v7308 = vmul.f32 %v7236, %v7248
    %v7309 = vmul.f32 %v7237, %v7244
    %v7310 = vmul.f32 %v7238, %v7248
    %v7311 = vmul.f32 %v7239, %v7244
    %v7312 = vmul.f32 %v7240, %v7248
    %v7377 = vrot.slane %v7249, 2
    %v7378 = vrot.slane %v7251, 2
    %v7379 = vsel %vm2727, %v7377, %v7378
    %v7380 = vrot.slane %v7250, 2
    %v7381 = vrot.slane %v7252, 2
    %v7382 = vsel %vm2727, %v7380, %v7381
    %v7383 = vrot.slane %v7253, 2
    %v7384 = vrot.slane %v7255, 2
    %v7385 = vsel %vm2727, %v7383, %v7384
    %v7386 = vrot.slane %v7254, 2
    %v7387 = vrot.slane %v7256, 2
    %v7388 = vsel %vm2727, %v7386, %v7387
    %v7389 = vrot.slane %v7257, 2
    %v7390 = vrot.slane %v7259, 2
    %v7391 = vsel %vm2727, %v7389, %v7390
    %v7392 = vrot.slane %v7258, 2
    %v7393 = vrot.slane %v7260, 2
    %v7394 = vsel %vm2727, %v7392, %v7393
    %v7395 = vrot.slane %v7261, 2
    %v7396 = vrot.slane %v7263, 2
    %v7397 = vsel %vm2727, %v7395, %v7396
    %v7398 = vrot.slane %v7262, 2
    %v7399 = vrot.slane %v7264, 2
    %v7400 = vsel %vm2727, %v7398, %v7399
    %v7401 = vrot.slane %v7265, 2
    %v7402 = vrot.slane %v7267, 2
    %v7403 = vsel %vm2727, %v7401, %v7402
    %v7404 = vrot.slane %v7266, 2
    %v7405 = vrot.slane %v7268, 2
    %v7406 = vsel %vm2727, %v7404, %v7405
    %v7407 = vrot.slane %v7269, 2
    %v7408 = vrot.slane %v7271, 2
    %v7409 = vsel %vm2727, %v7407, %v7408
    %v7410 = vrot.slane %v7270, 2
    %v7411 = vrot.slane %v7272, 2
    %v7412 = vsel %vm2727, %v7410, %v7411
    %v7413 = vrot.slane %v7273, 2
    %v7414 = vrot.slane %v7275, 2
    %v7415 = vsel %vm2727, %v7413, %v7414
    %v7416 = vrot.slane %v7274, 2
    %v7417 = vrot.slane %v7276, 2
    %v7418 = vsel %vm2727, %v7416, %v7417
    %v7419 = vrot.slane %v7277, 2
    %v7420 = vrot.slane %v7279, 2
    %v7421 = vsel %vm2727, %v7419, %v7420
    %v7422 = vrot.slane %v7278, 2
    %v7423 = vrot.slane %v7280, 2
    %v7424 = vsel %vm2727, %v7422, %v7423
    %v7425 = vrot.slane %v7281, 2
    %v7426 = vrot.slane %v7283, 2
    %v7427 = vsel %vm2727, %v7425, %v7426
    %v7428 = vrot.slane %v7282, 2
    %v7429 = vrot.slane %v7284, 2
    %v7430 = vsel %vm2727, %v7428, %v7429
    %v7431 = vrot.slane %v7285, 2
    %v7432 = vrot.slane %v7287, 2
    %v7433 = vsel %vm2727, %v7431, %v7432
    %v7434 = vrot.slane %v7286, 2
    %v7435 = vrot.slane %v7288, 2
    %v7436 = vsel %vm2727, %v7434, %v7435
    %v7437 = vrot.slane %v7289, 2
    %v7438 = vrot.slane %v7291, 2
    %v7439 = vsel %vm2727, %v7437, %v7438
    %v7440 = vrot.slane %v7290, 2
    %v7441 = vrot.slane %v7292, 2
    %v7442 = vsel %vm2727, %v7440, %v7441
    %v7443 = vrot.slane %v7293, 2
    %v7444 = vrot.slane %v7295, 2
    %v7445 = vsel %vm2727, %v7443, %v7444
    %v7446 = vrot.slane %v7294, 2
    %v7447 = vrot.slane %v7296, 2
    %v7448 = vsel %vm2727, %v7446, %v7447
    %v7449 = vrot.slane %v7297, 2
    %v7450 = vrot.slane %v7299, 2
    %v7451 = vsel %vm2727, %v7449, %v7450
    %v7452 = vrot.slane %v7298, 2
    %v7453 = vrot.slane %v7300, 2
    %v7454 = vsel %vm2727, %v7452, %v7453
    %v7455 = vrot.slane %v7301, 2
    %v7456 = vrot.slane %v7303, 2
    %v7457 = vsel %vm2727, %v7455, %v7456
    %v7458 = vrot.slane %v7302, 2
    %v7459 = vrot.slane %v7304, 2
    %v7460 = vsel %vm2727, %v7458, %v7459
    %v7461 = vrot.slane %v7305, 2
    %v7462 = vrot.slane %v7307, 2
    %v7463 = vsel %vm2727, %v7461, %v7462
    %v7464 = vrot.slane %v7306, 2
    %v7465 = vrot.slane %v7308, 2
    %v7466 = vsel %vm2727, %v7464, %v7465
    %v7467 = vrot.slane %v7309, 2
    %v7468 = vrot.slane %v7311, 2
    %v7469 = vsel %vm2727, %v7467, %v7468
    %v7470 = vrot.slane %v7310, 2
    %v7471 = vrot.slane %v7312, 2
    %v7472 = vsel %vm2727, %v7470, %v7471
    %v7505 = vadd.f32 %v7145, %v7379
    %v7506 = vadd.f32 %v7146, %v7382
    %v7507 = vadd.f32 %v7147, %v7385
    %v7508 = vadd.f32 %v7148, %v7388
    %v7509 = vadd.f32 %v7149, %v7391
    %v7510 = vadd.f32 %v7150, %v7394
    %v7511 = vadd.f32 %v7151, %v7397
    %v7512 = vadd.f32 %v7152, %v7400
    %v7513 = vadd.f32 %v7153, %v7403
    %v7514 = vadd.f32 %v7154, %v7406
    %v7515 = vadd.f32 %v7155, %v7409
    %v7516 = vadd.f32 %v7156, %v7412
    %v7517 = vadd.f32 %v7157, %v7415
    %v7518 = vadd.f32 %v7158, %v7418
    %v7519 = vadd.f32 %v7159, %v7421
    %v7520 = vadd.f32 %v7160, %v7424
    %v7521 = vadd.f32 %v7161, %v7427
    %v7522 = vadd.f32 %v7162, %v7430
    %v7523 = vadd.f32 %v7163, %v7433
    %v7524 = vadd.f32 %v7164, %v7436
    %v7525 = vadd.f32 %v7165, %v7439
    %v7526 = vadd.f32 %v7166, %v7442
    %v7527 = vadd.f32 %v7167, %v7445
    %v7528 = vadd.f32 %v7168, %v7448
    %v7529 = vadd.f32 %v7169, %v7451
    %v7530 = vadd.f32 %v7170, %v7454
    %v7531 = vadd.f32 %v7171, %v7457
    %v7532 = vadd.f32 %v7172, %v7460
    %v7533 = vadd.f32 %v7173, %v7463
    %v7534 = vadd.f32 %v7174, %v7466
    %v7535 = vadd.f32 %v7175, %v7469
    %v7536 = vadd.f32 %v7176, %v7472
    %s7537 = scalar_lea.vmem [#allocation6], 64
    %v7538 = vld [vmem:[%s7537] sm:$0xff]
    %v7539 = vld [vmem:[%s7537 + $0x8] sm:$0xff]
    %v7540 = vld [vmem:[%s7537 + $0x20] sm:$0xff]
    %v7541 = vld [vmem:[%s7537 + $0x28] sm:$0xff]
    %v7542 = vld [vmem:[%s7537 + $0x40] sm:$0xff]
    %v7543 = vld [vmem:[%s7537 + $0x48] sm:$0xff]
    %v7544 = vld [vmem:[%s7537 + $0x60] sm:$0xff]
    %v7545 = vld [vmem:[%s7537 + $0x68] sm:$0xff]
    %v7546 = vld [vmem:[%s7537 + $0x80] sm:$0xff]
    %v7547 = vld [vmem:[%s7537 + $0x88] sm:$0xff]
    %v7548 = vld [vmem:[%s7537 + $0xa0] sm:$0xff]
    %v7549 = vld [vmem:[%s7537 + $0xa8] sm:$0xff]
    %v7550 = vld [vmem:[%s7537 + $0xc0] sm:$0xff]
    %v7551 = vld [vmem:[%s7537 + $0xc8] sm:$0xff]
    %v7552 = vld [vmem:[%s7537 + $0xe0] sm:$0xff]
    %v7553 = vld [vmem:[%s7537 + $0xe8] sm:$0xff]
    %v7554 = vld [vmem:[%s7537 + $0x140] sm:$0xff]
    %v7555 = vld [vmem:[%s7537 + $0x148] sm:$0xff]
    %v7556 = vld [vmem:[%s7537 + $0x160] sm:$0xff]
    %v7557 = vld [vmem:[%s7537 + $0x168] sm:$0xff]
    %v7558 = vld [vmem:[%s7537 + $0x180] sm:$0xff]
    %v7559 = vld [vmem:[%s7537 + $0x188] sm:$0xff]
    %v7560 = vld [vmem:[%s7537 + $0x1a0] sm:$0xff]
    %v7561 = vld [vmem:[%s7537 + $0x1a8] sm:$0xff]
    %v7562 = vld [vmem:[%s7537 + $0x1c0] sm:$0xff]
    %v7563 = vld [vmem:[%s7537 + $0x1c8] sm:$0xff]
    %v7564 = vld [vmem:[%s7537 + $0x1e0] sm:$0xff]
    %v7565 = vld [vmem:[%s7537 + $0x1e8] sm:$0xff]
    %v7566 = vld [vmem:[%s7537 + $0x200] sm:$0xff]
    %v7567 = vld [vmem:[%s7537 + $0x208] sm:$0xff]
    %v7568 = vld [vmem:[%s7537 + $0x220] sm:$0xff]
    %v7569 = vld [vmem:[%s7537 + $0x228] sm:$0xff]
    %v7570 = vlaneseq
    %v7571 = vshrl.u32 %v7570, 7
    %v7572 = vsub.s32 6, %v7571
    %v7573 = vrot.slane %v5917, %v7572
    %v7574 = vlaneseq
    %v7575 = vshrl.u32 %v7574, 7
    %v7576 = vsub.s32 6, %v7575
    %v7577 = vrot.slane %v5918, %v7576
    %v7578 = vmul.f32 %v7538, %v7573
    %v7579 = vmul.f32 %v7539, %v7577
    %v7580 = vmul.f32 %v7540, %v7573
    %v7581 = vmul.f32 %v7541, %v7577
    %v7582 = vmul.f32 %v7542, %v7573
    %v7583 = vmul.f32 %v7543, %v7577
    %v7584 = vmul.f32 %v7544, %v7573
    %v7585 = vmul.f32 %v7545, %v7577
    %v7586 = vmul.f32 %v7546, %v7573
    %v7587 = vmul.f32 %v7547, %v7577
    %v7588 = vmul.f32 %v7548, %v7573
    %v7589 = vmul.f32 %v7549, %v7577
    %v7590 = vmul.f32 %v7550, %v7573
    %v7591 = vmul.f32 %v7551, %v7577
    %v7592 = vmul.f32 %v7552, %v7573
    %v7593 = vmul.f32 %v7553, %v7577
    %v7594 = vmul.f32 %v7554, %v7573
    %v7595 = vmul.f32 %v7555, %v7577
    %v7596 = vmul.f32 %v7556, %v7573
    %v7597 = vmul.f32 %v7557, %v7577
    %v7598 = vmul.f32 %v7558, %v7573
    %v7599 = vmul.f32 %v7559, %v7577
    %v7600 = vmul.f32 %v7560, %v7573
    %v7601 = vmul.f32 %v7561, %v7577
    %v7602 = vmul.f32 %v7562, %v7573
    %v7603 = vmul.f32 %v7563, %v7577
    %v7604 = vmul.f32 %v7564, %v7573
    %v7605 = vmul.f32 %v7565, %v7577
    %v7606 = vmul.f32 %v7566, %v7573
    %v7607 = vmul.f32 %v7567, %v7577
    %v7608 = vmul.f32 %v7568, %v7573
    %v7609 = vmul.f32 %v7569, %v7577
    %v7610 = vadd.f32 %v7505, %v7578
    %v7611 = vadd.f32 %v7506, %v7579
    %v7612 = vadd.f32 %v7507, %v7580
    %v7613 = vadd.f32 %v7508, %v7581
    %v7614 = vadd.f32 %v7509, %v7582
    %v7615 = vadd.f32 %v7510, %v7583
    %v7616 = vadd.f32 %v7511, %v7584
    %v7617 = vadd.f32 %v7512, %v7585
    %v7618 = vadd.f32 %v7513, %v7586
    %v7619 = vadd.f32 %v7514, %v7587
    %v7620 = vadd.f32 %v7515, %v7588
    %v7621 = vadd.f32 %v7516, %v7589
    %v7622 = vadd.f32 %v7517, %v7590
    %v7623 = vadd.f32 %v7518, %v7591
    %v7624 = vadd.f32 %v7519, %v7592
    %v7625 = vadd.f32 %v7520, %v7593
    %v7626 = vadd.f32 %v7521, %v7594
    %v7627 = vadd.f32 %v7522, %v7595
    %v7628 = vadd.f32 %v7523, %v7596
    %v7629 = vadd.f32 %v7524, %v7597
    %v7630 = vadd.f32 %v7525, %v7598
    %v7631 = vadd.f32 %v7526, %v7599
    %v7632 = vadd.f32 %v7527, %v7600
    %v7633 = vadd.f32 %v7528, %v7601
    %v7634 = vadd.f32 %v7529, %v7602
    %v7635 = vadd.f32 %v7530, %v7603
    %v7636 = vadd.f32 %v7531, %v7604
    %v7637 = vadd.f32 %v7532, %v7605
    %v7638 = vadd.f32 %v7533, %v7606
    %v7639 = vadd.f32 %v7534, %v7607
    %v7640 = vadd.f32 %v7535, %v7608
    %v7641 = vadd.f32 %v7536, %v7609
    %v7642 = vld [vmem:[%s7537] sm:$0xfe]
    %v7643 = vld [vmem:[%s7537 + $0x8] sm:$0xfe]
    %v7644 = vld [vmem:[%s7537 + $0x10] sm:$0x1]
    %v7645 = vld [vmem:[%s7537 + $0x18] sm:$0x1]
    %v7646 = vld [vmem:[%s7537 + $0x20] sm:$0xfe]
    %v7647 = vld [vmem:[%s7537 + $0x28] sm:$0xfe]
    %v7648 = vld [vmem:[%s7537 + $0x30] sm:$0x1]
    %v7649 = vld [vmem:[%s7537 + $0x38] sm:$0x1]
    %v7650 = vld [vmem:[%s7537 + $0x40] sm:$0xfe]
    %v7651 = vld [vmem:[%s7537 + $0x48] sm:$0xfe]
    %v7652 = vld [vmem:[%s7537 + $0x50] sm:$0x1]
    %v7653 = vld [vmem:[%s7537 + $0x58] sm:$0x1]
    %v7654 = vld [vmem:[%s7537 + $0x60] sm:$0xfe]
    %v7655 = vld [vmem:[%s7537 + $0x68] sm:$0xfe]
    %v7656 = vld [vmem:[%s7537 + $0x70] sm:$0x1]
    %v7657 = vld [vmem:[%s7537 + $0x78] sm:$0x1]
    %v7658 = vld [vmem:[%s7537 + $0x80] sm:$0xfe]
    %v7659 = vld [vmem:[%s7537 + $0x88] sm:$0xfe]
    %v7660 = vld [vmem:[%s7537 + $0x90] sm:$0x1]
    %v7661 = vld [vmem:[%s7537 + $0x98] sm:$0x1]
    %v7662 = vld [vmem:[%s7537 + $0xa0] sm:$0xfe]
    %v7663 = vld [vmem:[%s7537 + $0xa8] sm:$0xfe]
    %v7664 = vld [vmem:[%s7537 + $0xb0] sm:$0x1]
    %v7665 = vld [vmem:[%s7537 + $0xb8] sm:$0x1]
    %v7666 = vld [vmem:[%s7537 + $0xc0] sm:$0xfe]
    %v7667 = vld [vmem:[%s7537 + $0xc8] sm:$0xfe]
    %v7668 = vld [vmem:[%s7537 + $0xd0] sm:$0x1]
    %v7669 = vld [vmem:[%s7537 + $0xd8] sm:$0x1]
    %v7670 = vld [vmem:[%s7537 + $0xe0] sm:$0xfe]
    %v7671 = vld [vmem:[%s7537 + $0xe8] sm:$0xfe]
    %v7672 = vld [vmem:[%s7537 + $0xf0] sm:$0x1]
    %v7673 = vld [vmem:[%s7537 + $0xf8] sm:$0x1]
    %v7674 = vld [vmem:[%s7537 + $0x140] sm:$0xfe]
    %v7675 = vld [vmem:[%s7537 + $0x148] sm:$0xfe]
    %v7676 = vld [vmem:[%s7537 + $0x150] sm:$0x1]
    %v7677 = vld [vmem:[%s7537 + $0x158] sm:$0x1]
    %v7678 = vld [vmem:[%s7537 + $0x160] sm:$0xfe]
    %v7679 = vld [vmem:[%s7537 + $0x168] sm:$0xfe]
    %v7680 = vld [vmem:[%s7537 + $0x170] sm:$0x1]
    %v7681 = vld [vmem:[%s7537 + $0x178] sm:$0x1]
    %v7682 = vld [vmem:[%s7537 + $0x180] sm:$0xfe]
    %v7683 = vld [vmem:[%s7537 + $0x188] sm:$0xfe]
    %v7684 = vld [vmem:[%s7537 + $0x190] sm:$0x1]
    %v7685 = vld [vmem:[%s7537 + $0x198] sm:$0x1]
    %v7686 = vld [vmem:[%s7537 + $0x1a0] sm:$0xfe]
    %v7687 = vld [vmem:[%s7537 + $0x1a8] sm:$0xfe]
    %v7688 = vld [vmem:[%s7537 + $0x1b0] sm:$0x1]
    %v7689 = vld [vmem:[%s7537 + $0x1b8] sm:$0x1]
    %v7690 = vld [vmem:[%s7537 + $0x1c0] sm:$0xfe]
    %v7691 = vld [vmem:[%s7537 + $0x1c8] sm:$0xfe]
    %v7692 = vld [vmem:[%s7537 + $0x1d0] sm:$0x1]
    %v7693 = vld [vmem:[%s7537 + $0x1d8] sm:$0x1]
    %v7694 = vld [vmem:[%s7537 + $0x1e0] sm:$0xfe]
    %v7695 = vld [vmem:[%s7537 + $0x1e8] sm:$0xfe]
    %v7696 = vld [vmem:[%s7537 + $0x1f0] sm:$0x1]
    %v7697 = vld [vmem:[%s7537 + $0x1f8] sm:$0x1]
    %v7698 = vld [vmem:[%s7537 + $0x200] sm:$0xfe]
    %v7699 = vld [vmem:[%s7537 + $0x208] sm:$0xfe]
    %v7700 = vld [vmem:[%s7537 + $0x210] sm:$0x1]
    %v7701 = vld [vmem:[%s7537 + $0x218] sm:$0x1]
    %v7702 = vld [vmem:[%s7537 + $0x220] sm:$0xfe]
    %v7703 = vld [vmem:[%s7537 + $0x228] sm:$0xfe]
    %v7704 = vld [vmem:[%s7537 + $0x230] sm:$0x1]
    %v7705 = vld [vmem:[%s7537 + $0x238] sm:$0x1]
    %v7706 = vlaneseq
    %v7707 = vshrl.u32 %v7706, 7
    %v7708 = vsub.s32 7, %v7707
    %v7709 = vrot.slane %v5917, %v7708
    %v7710 = vlaneseq
    %v7711 = vshrl.u32 %v7710, 7
    %v7712 = vsub.s32 7, %v7711
    %v7713 = vrot.slane %v5918, %v7712
    %v7714 = vmul.f32 %v7642, %v7709
    %v7715 = vmul.f32 %v7643, %v7713
    %v7716 = vmul.f32 %v7644, %v7709
    %v7717 = vmul.f32 %v7645, %v7713
    %v7718 = vmul.f32 %v7646, %v7709
    %v7719 = vmul.f32 %v7647, %v7713
    %v7720 = vmul.f32 %v7648, %v7709
    %v7721 = vmul.f32 %v7649, %v7713
    %v7722 = vmul.f32 %v7650, %v7709
    %v7723 = vmul.f32 %v7651, %v7713
    %v7724 = vmul.f32 %v7652, %v7709
    %v7725 = vmul.f32 %v7653, %v7713
    %v7726 = vmul.f32 %v7654, %v7709
    %v7727 = vmul.f32 %v7655, %v7713
    %v7728 = vmul.f32 %v7656, %v7709
    %v7729 = vmul.f32 %v7657, %v7713
    %v7730 = vmul.f32 %v7658, %v7709
    %v7731 = vmul.f32 %v7659, %v7713
    %v7732 = vmul.f32 %v7660, %v7709
    %v7733 = vmul.f32 %v7661, %v7713
    %v7734 = vmul.f32 %v7662, %v7709
    %v7735 = vmul.f32 %v7663, %v7713
    %v7736 = vmul.f32 %v7664, %v7709
    %v7737 = vmul.f32 %v7665, %v7713
    %v7738 = vmul.f32 %v7666, %v7709
    %v7739 = vmul.f32 %v7667, %v7713
    %v7740 = vmul.f32 %v7668, %v7709
    %v7741 = vmul.f32 %v7669, %v7713
    %v7742 = vmul.f32 %v7670, %v7709
    %v7743 = vmul.f32 %v7671, %v7713
    %v7744 = vmul.f32 %v7672, %v7709
    %v7745 = vmul.f32 %v7673, %v7713
    %v7746 = vmul.f32 %v7674, %v7709
    %v7747 = vmul.f32 %v7675, %v7713
    %v7748 = vmul.f32 %v7676, %v7709
    %v7749 = vmul.f32 %v7677, %v7713
    %v7750 = vmul.f32 %v7678, %v7709
    %v7751 = vmul.f32 %v7679, %v7713
    %v7752 = vmul.f32 %v7680, %v7709
    %v7753 = vmul.f32 %v7681, %v7713
    %v7754 = vmul.f32 %v7682, %v7709
    %v7755 = vmul.f32 %v7683, %v7713
    %v7756 = vmul.f32 %v7684, %v7709
    %v7757 = vmul.f32 %v7685, %v7713
    %v7758 = vmul.f32 %v7686, %v7709
    %v7759 = vmul.f32 %v7687, %v7713
    %v7760 = vmul.f32 %v7688, %v7709
    %v7761 = vmul.f32 %v7689, %v7713
    %v7762 = vmul.f32 %v7690, %v7709
    %v7763 = vmul.f32 %v7691, %v7713
    %v7764 = vmul.f32 %v7692, %v7709
    %v7765 = vmul.f32 %v7693, %v7713
    %v7766 = vmul.f32 %v7694, %v7709
    %v7767 = vmul.f32 %v7695, %v7713
    %v7768 = vmul.f32 %v7696, %v7709
    %v7769 = vmul.f32 %v7697, %v7713
    %v7770 = vmul.f32 %v7698, %v7709
    %v7771 = vmul.f32 %v7699, %v7713
    %v7772 = vmul.f32 %v7700, %v7709
    %v7773 = vmul.f32 %v7701, %v7713
    %v7774 = vmul.f32 %v7702, %v7709
    %v7775 = vmul.f32 %v7703, %v7713
    %v7776 = vmul.f32 %v7704, %v7709
    %v7777 = vmul.f32 %v7705, %v7713
    %v7842 = vrot.slane %v7714, 1
    %v7843 = vrot.slane %v7716, 1
    %v7844 = vsel %vm2366, %v7842, %v7843
    %v7845 = vrot.slane %v7715, 1
    %v7846 = vrot.slane %v7717, 1
    %v7847 = vsel %vm2366, %v7845, %v7846
    %v7848 = vrot.slane %v7718, 1
    %v7849 = vrot.slane %v7720, 1
    %v7850 = vsel %vm2366, %v7848, %v7849
    %v7851 = vrot.slane %v7719, 1
    %v7852 = vrot.slane %v7721, 1
    %v7853 = vsel %vm2366, %v7851, %v7852
    %v7854 = vrot.slane %v7722, 1
    %v7855 = vrot.slane %v7724, 1
    %v7856 = vsel %vm2366, %v7854, %v7855
    %v7857 = vrot.slane %v7723, 1
    %v7858 = vrot.slane %v7725, 1
    %v7859 = vsel %vm2366, %v7857, %v7858
    %v7860 = vrot.slane %v7726, 1
    %v7861 = vrot.slane %v7728, 1
    %v7862 = vsel %vm2366, %v7860, %v7861
    %v7863 = vrot.slane %v7727, 1
    %v7864 = vrot.slane %v7729, 1
    %v7865 = vsel %vm2366, %v7863, %v7864
    %v7866 = vrot.slane %v7730, 1
    %v7867 = vrot.slane %v7732, 1
    %v7868 = vsel %vm2366, %v7866, %v7867
    %v7869 = vrot.slane %v7731, 1
    %v7870 = vrot.slane %v7733, 1
    %v7871 = vsel %vm2366, %v7869, %v7870
    %v7872 = vrot.slane %v7734, 1
    %v7873 = vrot.slane %v7736, 1
    %v7874 = vsel %vm2366, %v7872, %v7873
    %v7875 = vrot.slane %v7735, 1
    %v7876 = vrot.slane %v7737, 1
    %v7877 = vsel %vm2366, %v7875, %v7876
    %v7878 = vrot.slane %v7738, 1
    %v7879 = vrot.slane %v7740, 1
    %v7880 = vsel %vm2366, %v7878, %v7879
    %v7881 = vrot.slane %v7739, 1
    %v7882 = vrot.slane %v7741, 1
    %v7883 = vsel %vm2366, %v7881, %v7882
    %v7884 = vrot.slane %v7742, 1
    %v7885 = vrot.slane %v7744, 1
    %v7886 = vsel %vm2366, %v7884, %v7885
    %v7887 = vrot.slane %v7743, 1
    %v7888 = vrot.slane %v7745, 1
    %v7889 = vsel %vm2366, %v7887, %v7888
    %v7890 = vrot.slane %v7746, 1
    %v7891 = vrot.slane %v7748, 1
    %v7892 = vsel %vm2366, %v7890, %v7891
    %v7893 = vrot.slane %v7747, 1
    %v7894 = vrot.slane %v7749, 1
    %v7895 = vsel %vm2366, %v7893, %v7894
    %v7896 = vrot.slane %v7750, 1
    %v7897 = vrot.slane %v7752, 1
    %v7898 = vsel %vm2366, %v7896, %v7897
    %v7899 = vrot.slane %v7751, 1
    %v7900 = vrot.slane %v7753, 1
    %v7901 = vsel %vm2366, %v7899, %v7900
    %v7902 = vrot.slane %v7754, 1
    %v7903 = vrot.slane %v7756, 1
    %v7904 = vsel %vm2366, %v7902, %v7903
    %v7905 = vrot.slane %v7755, 1
    %v7906 = vrot.slane %v7757, 1
    %v7907 = vsel %vm2366, %v7905, %v7906
    %v7908 = vrot.slane %v7758, 1
    %v7909 = vrot.slane %v7760, 1
    %v7910 = vsel %vm2366, %v7908, %v7909
    %v7911 = vrot.slane %v7759, 1
    %v7912 = vrot.slane %v7761, 1
    %v7913 = vsel %vm2366, %v7911, %v7912
    %v7914 = vrot.slane %v7762, 1
    %v7915 = vrot.slane %v7764, 1
    %v7916 = vsel %vm2366, %v7914, %v7915
    %v7917 = vrot.slane %v7763, 1
    %v7918 = vrot.slane %v7765, 1
    %v7919 = vsel %vm2366, %v7917, %v7918
    %v7920 = vrot.slane %v7766, 1
    %v7921 = vrot.slane %v7768, 1
    %v7922 = vsel %vm2366, %v7920, %v7921
    %v7923 = vrot.slane %v7767, 1
    %v7924 = vrot.slane %v7769, 1
    %v7925 = vsel %vm2366, %v7923, %v7924
    %v7926 = vrot.slane %v7770, 1
    %v7927 = vrot.slane %v7772, 1
    %v7928 = vsel %vm2366, %v7926, %v7927
    %v7929 = vrot.slane %v7771, 1
    %v7930 = vrot.slane %v7773, 1
    %v7931 = vsel %vm2366, %v7929, %v7930
    %v7932 = vrot.slane %v7774, 1
    %v7933 = vrot.slane %v7776, 1
    %v7934 = vsel %vm2366, %v7932, %v7933
    %v7935 = vrot.slane %v7775, 1
    %v7936 = vrot.slane %v7777, 1
    %v7937 = vsel %vm2366, %v7935, %v7936
    %v7970 = vadd.f32 %v7610, %v7844
    %v7971 = vadd.f32 %v7611, %v7847
    %v7972 = vadd.f32 %v7612, %v7850
    %v7973 = vadd.f32 %v7613, %v7853
    %v7974 = vadd.f32 %v7614, %v7856
    %v7975 = vadd.f32 %v7615, %v7859
    %v7976 = vadd.f32 %v7616, %v7862
    %v7977 = vadd.f32 %v7617, %v7865
    %v7978 = vadd.f32 %v7618, %v7868
    %v7979 = vadd.f32 %v7619, %v7871
    %v7980 = vadd.f32 %v7620, %v7874
    %v7981 = vadd.f32 %v7621, %v7877
    %v7982 = vadd.f32 %v7622, %v7880
    %v7983 = vadd.f32 %v7623, %v7883
    %v7984 = vadd.f32 %v7624, %v7886
    %v7985 = vadd.f32 %v7625, %v7889
    %v7986 = vadd.f32 %v7626, %v7892
    %v7987 = vadd.f32 %v7627, %v7895
    %v7988 = vadd.f32 %v7628, %v7898
    %v7989 = vadd.f32 %v7629, %v7901
    %v7990 = vadd.f32 %v7630, %v7904
    %v7991 = vadd.f32 %v7631, %v7907
    %v7992 = vadd.f32 %v7632, %v7910
    %v7993 = vadd.f32 %v7633, %v7913
    %v7994 = vadd.f32 %v7634, %v7916
    %v7995 = vadd.f32 %v7635, %v7919
    %v7996 = vadd.f32 %v7636, %v7922
    %v7997 = vadd.f32 %v7637, %v7925
    %v7998 = vadd.f32 %v7638, %v7928
    %v7999 = vadd.f32 %v7639, %v7931
    %v8000 = vadd.f32 %v7640, %v7934
    %v8001 = vadd.f32 %v7641, %v7937
    %v8002 = vld [vmem:[%s7537] sm:$0xfc]
    %v8003 = vld [vmem:[%s7537 + $0x8] sm:$0xfc]
    %v8004 = vld [vmem:[%s7537 + $0x10] sm:$0x3]
    %v8005 = vld [vmem:[%s7537 + $0x18] sm:$0x3]
    %v8006 = vld [vmem:[%s7537 + $0x20] sm:$0xfc]
    %v8007 = vld [vmem:[%s7537 + $0x28] sm:$0xfc]
    %v8008 = vld [vmem:[%s7537 + $0x30] sm:$0x3]
    %v8009 = vld [vmem:[%s7537 + $0x38] sm:$0x3]
    %v8010 = vld [vmem:[%s7537 + $0x40] sm:$0xfc]
    %v8011 = vld [vmem:[%s7537 + $0x48] sm:$0xfc]
    %v8012 = vld [vmem:[%s7537 + $0x50] sm:$0x3]
    %v8013 = vld [vmem:[%s7537 + $0x58] sm:$0x3]
    %v8014 = vld [vmem:[%s7537 + $0x60] sm:$0xfc]
    %v8015 = vld [vmem:[%s7537 + $0x68] sm:$0xfc]
    %v8016 = vld [vmem:[%s7537 + $0x70] sm:$0x3]
    %v8017 = vld [vmem:[%s7537 + $0x78] sm:$0x3]
    %v8018 = vld [vmem:[%s7537 + $0x80] sm:$0xfc]
    %v8019 = vld [vmem:[%s7537 + $0x88] sm:$0xfc]
    %v8020 = vld [vmem:[%s7537 + $0x90] sm:$0x3]
    %v8021 = vld [vmem:[%s7537 + $0x98] sm:$0x3]
    %v8022 = vld [vmem:[%s7537 + $0xa0] sm:$0xfc]
    %v8023 = vld [vmem:[%s7537 + $0xa8] sm:$0xfc]
    %v8024 = vld [vmem:[%s7537 + $0xb0] sm:$0x3]
    %v8025 = vld [vmem:[%s7537 + $0xb8] sm:$0x3]
    %v8026 = vld [vmem:[%s7537 + $0xc0] sm:$0xfc]
    %v8027 = vld [vmem:[%s7537 + $0xc8] sm:$0xfc]
    %v8028 = vld [vmem:[%s7537 + $0xd0] sm:$0x3]
    %v8029 = vld [vmem:[%s7537 + $0xd8] sm:$0x3]
    %v8030 = vld [vmem:[%s7537 + $0xe0] sm:$0xfc]
    %v8031 = vld [vmem:[%s7537 + $0xe8] sm:$0xfc]
    %v8032 = vld [vmem:[%s7537 + $0xf0] sm:$0x3]
    %v8033 = vld [vmem:[%s7537 + $0xf8] sm:$0x3]
    %v8034 = vld [vmem:[%s7537 + $0x140] sm:$0xfc]
    %v8035 = vld [vmem:[%s7537 + $0x148] sm:$0xfc]
    %v8036 = vld [vmem:[%s7537 + $0x150] sm:$0x3]
    %v8037 = vld [vmem:[%s7537 + $0x158] sm:$0x3]
    %v8038 = vld [vmem:[%s7537 + $0x160] sm:$0xfc]
    %v8039 = vld [vmem:[%s7537 + $0x168] sm:$0xfc]
    %v8040 = vld [vmem:[%s7537 + $0x170] sm:$0x3]
    %v8041 = vld [vmem:[%s7537 + $0x178] sm:$0x3]
    %v8042 = vld [vmem:[%s7537 + $0x180] sm:$0xfc]
    %v8043 = vld [vmem:[%s7537 + $0x188] sm:$0xfc]
    %v8044 = vld [vmem:[%s7537 + $0x190] sm:$0x3]
    %v8045 = vld [vmem:[%s7537 + $0x198] sm:$0x3]
    %v8046 = vld [vmem:[%s7537 + $0x1a0] sm:$0xfc]
    %v8047 = vld [vmem:[%s7537 + $0x1a8] sm:$0xfc]
    %v8048 = vld [vmem:[%s7537 + $0x1b0] sm:$0x3]
    %v8049 = vld [vmem:[%s7537 + $0x1b8] sm:$0x3]
    %v8050 = vld [vmem:[%s7537 + $0x1c0] sm:$0xfc]
    %v8051 = vld [vmem:[%s7537 + $0x1c8] sm:$0xfc]
    %v8052 = vld [vmem:[%s7537 + $0x1d0] sm:$0x3]
    %v8053 = vld [vmem:[%s7537 + $0x1d8] sm:$0x3]
    %v8054 = vld [vmem:[%s7537 + $0x1e0] sm:$0xfc]
    %v8055 = vld [vmem:[%s7537 + $0x1e8] sm:$0xfc]
    %v8056 = vld [vmem:[%s7537 + $0x1f0] sm:$0x3]
    %v8057 = vld [vmem:[%s7537 + $0x1f8] sm:$0x3]
    %v8058 = vld [vmem:[%s7537 + $0x200] sm:$0xfc]
    %v8059 = vld [vmem:[%s7537 + $0x208] sm:$0xfc]
    %v8060 = vld [vmem:[%s7537 + $0x210] sm:$0x3]
    %v8061 = vld [vmem:[%s7537 + $0x218] sm:$0x3]
    %v8062 = vld [vmem:[%s7537 + $0x220] sm:$0xfc]
    %v8063 = vld [vmem:[%s7537 + $0x228] sm:$0xfc]
    %v8064 = vld [vmem:[%s7537 + $0x230] sm:$0x3]
    %v8065 = vld [vmem:[%s7537 + $0x238] sm:$0x3]
    %v8066 = vlaneseq
    %v8067 = vshrl.u32 %v8066, 7
    %v8068 = vsub.s32 0, %v8067
    %v8069 = vrot.slane %v5919, %v8068
    %v8070 = vlaneseq
    %v8071 = vshrl.u32 %v8070, 7
    %v8072 = vsub.s32 0, %v8071
    %v8073 = vrot.slane %v5920, %v8072
    %v8074 = vmul.f32 %v8002, %v8069
    %v8075 = vmul.f32 %v8003, %v8073
    %v8076 = vmul.f32 %v8004, %v8069
    %v8077 = vmul.f32 %v8005, %v8073
    %v8078 = vmul.f32 %v8006, %v8069
    %v8079 = vmul.f32 %v8007, %v8073
    %v8080 = vmul.f32 %v8008, %v8069
    %v8081 = vmul.f32 %v8009, %v8073
    %v8082 = vmul.f32 %v8010, %v8069
    %v8083 = vmul.f32 %v8011, %v8073
    %v8084 = vmul.f32 %v8012, %v8069
    %v8085 = vmul.f32 %v8013, %v8073
    %v8086 = vmul.f32 %v8014, %v8069
    %v8087 = vmul.f32 %v8015, %v8073
    %v8088 = vmul.f32 %v8016, %v8069
    %v8089 = vmul.f32 %v8017, %v8073
    %v8090 = vmul.f32 %v8018, %v8069
    %v8091 = vmul.f32 %v8019, %v8073
    %v8092 = vmul.f32 %v8020, %v8069
    %v8093 = vmul.f32 %v8021, %v8073
    %v8094 = vmul.f32 %v8022, %v8069
    %v8095 = vmul.f32 %v8023, %v8073
    %v8096 = vmul.f32 %v8024, %v8069
    %v8097 = vmul.f32 %v8025, %v8073
    %v8098 = vmul.f32 %v8026, %v8069
    %v8099 = vmul.f32 %v8027, %v8073
    %v8100 = vmul.f32 %v8028, %v8069
    %v8101 = vmul.f32 %v8029, %v8073
    %v8102 = vmul.f32 %v8030, %v8069
    %v8103 = vmul.f32 %v8031, %v8073
    %v8104 = vmul.f32 %v8032, %v8069
    %v8105 = vmul.f32 %v8033, %v8073
    %v8106 = vmul.f32 %v8034, %v8069
    %v8107 = vmul.f32 %v8035, %v8073
    %v8108 = vmul.f32 %v8036, %v8069
    %v8109 = vmul.f32 %v8037, %v8073
    %v8110 = vmul.f32 %v8038, %v8069
    %v8111 = vmul.f32 %v8039, %v8073
    %v8112 = vmul.f32 %v8040, %v8069
    %v8113 = vmul.f32 %v8041, %v8073
    %v8114 = vmul.f32 %v8042, %v8069
    %v8115 = vmul.f32 %v8043, %v8073
    %v8116 = vmul.f32 %v8044, %v8069
    %v8117 = vmul.f32 %v8045, %v8073
    %v8118 = vmul.f32 %v8046, %v8069
    %v8119 = vmul.f32 %v8047, %v8073
    %v8120 = vmul.f32 %v8048, %v8069
    %v8121 = vmul.f32 %v8049, %v8073
    %v8122 = vmul.f32 %v8050, %v8069
    %v8123 = vmul.f32 %v8051, %v8073
    %v8124 = vmul.f32 %v8052, %v8069
    %v8125 = vmul.f32 %v8053, %v8073
    %v8126 = vmul.f32 %v8054, %v8069
    %v8127 = vmul.f32 %v8055, %v8073
    %v8128 = vmul.f32 %v8056, %v8069
    %v8129 = vmul.f32 %v8057, %v8073
    %v8130 = vmul.f32 %v8058, %v8069
    %v8131 = vmul.f32 %v8059, %v8073
    %v8132 = vmul.f32 %v8060, %v8069
    %v8133 = vmul.f32 %v8061, %v8073
    %v8134 = vmul.f32 %v8062, %v8069
    %v8135 = vmul.f32 %v8063, %v8073
    %v8136 = vmul.f32 %v8064, %v8069
    %v8137 = vmul.f32 %v8065, %v8073
    %v8202 = vrot.slane %v8074, 2
    %v8203 = vrot.slane %v8076, 2
    %v8204 = vsel %vm2727, %v8202, %v8203
    %v8205 = vrot.slane %v8075, 2
    %v8206 = vrot.slane %v8077, 2
    %v8207 = vsel %vm2727, %v8205, %v8206
    %v8208 = vrot.slane %v8078, 2
    %v8209 = vrot.slane %v8080, 2
    %v8210 = vsel %vm2727, %v8208, %v8209
    %v8211 = vrot.slane %v8079, 2
    %v8212 = vrot.slane %v8081, 2
    %v8213 = vsel %vm2727, %v8211, %v8212
    %v8214 = vrot.slane %v8082, 2
    %v8215 = vrot.slane %v8084, 2
    %v8216 = vsel %vm2727, %v8214, %v8215
    %v8217 = vrot.slane %v8083, 2
    %v8218 = vrot.slane %v8085, 2
    %v8219 = vsel %vm2727, %v8217, %v8218
    %v8220 = vrot.slane %v8086, 2
    %v8221 = vrot.slane %v8088, 2
    %v8222 = vsel %vm2727, %v8220, %v8221
    %v8223 = vrot.slane %v8087, 2
    %v8224 = vrot.slane %v8089, 2
    %v8225 = vsel %vm2727, %v8223, %v8224
    %v8226 = vrot.slane %v8090, 2
    %v8227 = vrot.slane %v8092, 2
    %v8228 = vsel %vm2727, %v8226, %v8227
    %v8229 = vrot.slane %v8091, 2
    %v8230 = vrot.slane %v8093, 2
    %v8231 = vsel %vm2727, %v8229, %v8230
    %v8232 = vrot.slane %v8094, 2
    %v8233 = vrot.slane %v8096, 2
    %v8234 = vsel %vm2727, %v8232, %v8233
    %v8235 = vrot.slane %v8095, 2
    %v8236 = vrot.slane %v8097, 2
    %v8237 = vsel %vm2727, %v8235, %v8236
    %v8238 = vrot.slane %v8098, 2
    %v8239 = vrot.slane %v8100, 2
    %v8240 = vsel %vm2727, %v8238, %v8239
    %v8241 = vrot.slane %v8099, 2
    %v8242 = vrot.slane %v8101, 2
    %v8243 = vsel %vm2727, %v8241, %v8242
    %v8244 = vrot.slane %v8102, 2
    %v8245 = vrot.slane %v8104, 2
    %v8246 = vsel %vm2727, %v8244, %v8245
    %v8247 = vrot.slane %v8103, 2
    %v8248 = vrot.slane %v8105, 2
    %v8249 = vsel %vm2727, %v8247, %v8248
    %v8250 = vrot.slane %v8106, 2
    %v8251 = vrot.slane %v8108, 2
    %v8252 = vsel %vm2727, %v8250, %v8251
    %v8253 = vrot.slane %v8107, 2
    %v8254 = vrot.slane %v8109, 2
    %v8255 = vsel %vm2727, %v8253, %v8254
    %v8256 = vrot.slane %v8110, 2
    %v8257 = vrot.slane %v8112, 2
    %v8258 = vsel %vm2727, %v8256, %v8257
    %v8259 = vrot.slane %v8111, 2
    %v8260 = vrot.slane %v8113, 2
    %v8261 = vsel %vm2727, %v8259, %v8260
    %v8262 = vrot.slane %v8114, 2
    %v8263 = vrot.slane %v8116, 2
    %v8264 = vsel %vm2727, %v8262, %v8263
    %v8265 = vrot.slane %v8115, 2
    %v8266 = vrot.slane %v8117, 2
    %v8267 = vsel %vm2727, %v8265, %v8266
    %v8268 = vrot.slane %v8118, 2
    %v8269 = vrot.slane %v8120, 2
    %v8270 = vsel %vm2727, %v8268, %v8269
    %v8271 = vrot.slane %v8119, 2
    %v8272 = vrot.slane %v8121, 2
    %v8273 = vsel %vm2727, %v8271, %v8272
    %v8274 = vrot.slane %v8122, 2
    %v8275 = vrot.slane %v8124, 2
    %v8276 = vsel %vm2727, %v8274, %v8275
    %v8277 = vrot.slane %v8123, 2
    %v8278 = vrot.slane %v8125, 2
    %v8279 = vsel %vm2727, %v8277, %v8278
    %v8280 = vrot.slane %v8126, 2
    %v8281 = vrot.slane %v8128, 2
    %v8282 = vsel %vm2727, %v8280, %v8281
    %v8283 = vrot.slane %v8127, 2
    %v8284 = vrot.slane %v8129, 2
    %v8285 = vsel %vm2727, %v8283, %v8284
    %v8286 = vrot.slane %v8130, 2
    %v8287 = vrot.slane %v8132, 2
    %v8288 = vsel %vm2727, %v8286, %v8287
    %v8289 = vrot.slane %v8131, 2
    %v8290 = vrot.slane %v8133, 2
    %v8291 = vsel %vm2727, %v8289, %v8290
    %v8292 = vrot.slane %v8134, 2
    %v8293 = vrot.slane %v8136, 2
    %v8294 = vsel %vm2727, %v8292, %v8293
    %v8295 = vrot.slane %v8135, 2
    %v8296 = vrot.slane %v8137, 2
    %v8297 = vsel %vm2727, %v8295, %v8296
    %v8330 = vadd.f32 %v7970, %v8204
    %v8331 = vadd.f32 %v7971, %v8207
    %v8332 = vadd.f32 %v7972, %v8210
    %v8333 = vadd.f32 %v7973, %v8213
    %v8334 = vadd.f32 %v7974, %v8216
    %v8335 = vadd.f32 %v7975, %v8219
    %v8336 = vadd.f32 %v7976, %v8222
    %v8337 = vadd.f32 %v7977, %v8225
    %v8338 = vadd.f32 %v7978, %v8228
    %v8339 = vadd.f32 %v7979, %v8231
    %v8340 = vadd.f32 %v7980, %v8234
    %v8341 = vadd.f32 %v7981, %v8237
    %v8342 = vadd.f32 %v7982, %v8240
    %v8343 = vadd.f32 %v7983, %v8243
    %v8344 = vadd.f32 %v7984, %v8246
    %v8345 = vadd.f32 %v7985, %v8249
    %v8346 = vadd.f32 %v7986, %v8252
    %v8347 = vadd.f32 %v7987, %v8255
    %v8348 = vadd.f32 %v7988, %v8258
    %v8349 = vadd.f32 %v7989, %v8261
    %v8350 = vadd.f32 %v7990, %v8264
    %v8351 = vadd.f32 %v7991, %v8267
    %v8352 = vadd.f32 %v7992, %v8270
    %v8353 = vadd.f32 %v7993, %v8273
    %v8354 = vadd.f32 %v7994, %v8276
    %v8355 = vadd.f32 %v7995, %v8279
    %v8356 = vadd.f32 %v7996, %v8282
    %v8357 = vadd.f32 %v7997, %v8285
    %v8358 = vadd.f32 %v7998, %v8288
    %v8359 = vadd.f32 %v7999, %v8291
    %v8360 = vadd.f32 %v8000, %v8294
    %v8361 = vadd.f32 %v8001, %v8297
    %v8362 = vpack.c.bf16 %v8332, %v8330
    %v8363 = vpack.c.bf16 %v8333, %v8331
    %v8364 = vpack.c.bf16 %v8336, %v8334
    %v8365 = vpack.c.bf16 %v8337, %v8335
    %v8366 = vpack.c.bf16 %v8340, %v8338
    %v8367 = vpack.c.bf16 %v8341, %v8339
    %v8368 = vpack.c.bf16 %v8344, %v8342
    %v8369 = vpack.c.bf16 %v8345, %v8343
    %v8370 = vpack.c.bf16 %v8348, %v8346
    %v8371 = vpack.c.bf16 %v8349, %v8347
    %v8372 = vpack.c.bf16 %v8352, %v8350
    %v8373 = vpack.c.bf16 %v8353, %v8351
    %v8374 = vpack.c.bf16 %v8356, %v8354
    %v8375 = vpack.c.bf16 %v8357, %v8355
    %v8376 = vpack.c.bf16 %v8360, %v8358
    %v8377 = vpack.c.bf16 %v8361, %v8359
    %v8378 = vld [vmem:[%s2 + $0x88] sm:$0xf]
    %v8379 = vld [vmem:[%s2 + $0x8c] sm:$0xf]
    %v8380 = vld [vmem:[%s2 + $0x90] sm:$0xf]
    %v8381 = vld [vmem:[%s2 + $0x94] sm:$0xf]
    %v8382 = vld [vmem:[%s2 + $0x98] sm:$0xf]
    %v8383 = vld [vmem:[%s2 + $0x9c] sm:$0xf]
    %v8384 = vld [vmem:[%s2 + $0xa0] sm:$0xf]
    %v8385 = vld [vmem:[%s2 + $0xa4] sm:$0xf]
    %v8386 = vld [vmem:[%s2 + $0xa8] sm:$0xf]
    %v8387 = vld [vmem:[%s2 + $0xac] sm:$0xf]
    %v8388 = vld [vmem:[%s2 + $0xb0] sm:$0xf]
    %v8389 = vld [vmem:[%s2 + $0xb4] sm:$0xf]
    %v8390 = vld [vmem:[%s2 + $0xb8] sm:$0xf]
    %v8391 = vld [vmem:[%s2 + $0xbc] sm:$0xf]
    %v8392 = vld [vmem:[%s2 + $0xc0] sm:$0xf]
    %v8393 = vld [vmem:[%s2 + $0xc4] sm:$0xf]
    %v8394 = vld [vmem:[%s2 + $0xc8] sm:$0xf]
    %v8395 = vld [vmem:[%s2 + $0xcc] sm:$0xf]
    %v8396 = vld [vmem:[%s2 + $0xd0] sm:$0xf]
    %v8397 = vld [vmem:[%s2 + $0xd4] sm:$0xf]
    %v8398 = vld [vmem:[%s2 + $0xd8] sm:$0xf]
    %v8399 = vld [vmem:[%s2 + $0xdc] sm:$0xf]
    %v8400 = vld [vmem:[%s2 + $0xe0] sm:$0xf]
    %v8401 = vld [vmem:[%s2 + $0xe4] sm:$0xf]
    %v8402 = vld [vmem:[%s4 + $0x6] sm:$0x1]
    %v8404 = vlaneseq
    %v8405 = vshrl.u32 %v8404, 7
    %v8406 = vsub.s32 0, %v8405
    %v8407 = vrot.slane %v8402, %v8406
    %v8433 = vunpack.c.l.b16 %v8378
    %v8434 = vunpack.c.l.b16 %v8379
    %v8435 = vunpack.c.l.b16 %v8380
    %v8436 = vunpack.c.l.b16 %v8381
    %v8437 = vunpack.c.l.b16 %v8382
    %v8438 = vunpack.c.l.b16 %v8383
    %v8439 = vunpack.c.l.b16 %v8384
    %v8440 = vunpack.c.l.b16 %v8385
    %v8441 = vunpack.c.l.b16 %v8386
    %v8442 = vunpack.c.l.b16 %v8387
    %v8443 = vunpack.c.l.b16 %v8388
    %v8444 = vunpack.c.l.b16 %v8389
    %v8445 = vunpack.c.l.b16 %v8390
    %v8446 = vunpack.c.l.b16 %v8391
    %v8447 = vunpack.c.l.b16 %v8392
    %v8448 = vunpack.c.l.b16 %v8393
    %v8449 = vunpack.c.l.b16 %v8394
    %v8450 = vunpack.c.l.b16 %v8395
    %v8451 = vunpack.c.l.b16 %v8396
    %v8452 = vunpack.c.l.b16 %v8397
    %v8453 = vunpack.c.l.b16 %v8398
    %v8454 = vunpack.c.l.b16 %v8399
    %v8455 = vunpack.c.l.b16 %v8400
    %v8456 = vunpack.c.l.b16 %v8401
    %v8457 = vpack.c.b16 %v8434, %v8433
    %v8458 = vpack.c.b16 %v8436, %v8435
    %v8459 = vpack.c.b16 %v8438, %v8437
    %v8460 = vpack.c.b16 %v8440, %v8439
    %v8461 = vpack.c.b16 %v8442, %v8441
    %v8462 = vpack.c.b16 %v8444, %v8443
    %v8463 = vpack.c.b16 %v8446, %v8445
    %v8464 = vpack.c.b16 %v8448, %v8447
    %v8465 = vpack.c.b16 %v8450, %v8449
    %v8466 = vpack.c.b16 %v8452, %v8451
    %v8467 = vpack.c.b16 %v8454, %v8453
    %v8468 = vpack.c.b16 %v8456, %v8455
    %vm8481 = vcmask 523264
    %v8483 = vsel %vm8481, %v8363, 0
    %v8486 = vsel %vm8481, %v8365, 0
    %v8489 = vsel %vm8481, %v8367, 0
    %v8492 = vsel %vm8481, %v8369, 0
    %v8495 = vsel %vm8481, %v8371, 0
    %v8498 = vsel %vm8481, %v8373, 0
    %v8501 = vsel %vm8481, %v8375, 0
    %v8504 = vsel %vm8481, %v8377, 0
    %8506 = vmatprep.subr.bf16.mxu0 0
    %8507 = vmatpush1.bf16.msra.mxu0 %v8464
    %8508 = vmatprep.subr.bf16.mxu0 0
    %8509 = vmatpush1.bf16.msra.mxu0 %v8463
    %8510 = vmatprep.subr.bf16.mxu0 0
    %8511 = vmatpush1.bf16.msra.mxu0 %v8462
    %8512 = vmatprep.subr.bf16.mxu0 0
    %8513 = vmatpush1.bf16.msra.mxu0 %v8461
    %8514 = vmatprep.subr.bf16.mxu0 0
    %8515 = vmatpush1.bf16.msra.mxu0 %v8460
    %8516 = vmatprep.subr.bf16.mxu0 0
    %8517 = vmatpush1.bf16.msra.mxu0 %v8459
    %8518 = vmatprep.subr.bf16.mxu0 0
    %8519 = vmatpush1.bf16.msra.mxu0 %v8458
    %8520 = vmatprep.subr.bf16.mxu0 0
    %8521 = vmatpush1.bf16.msra.mxu0 %v8457
    %8522 = vmatprep.subr.bf16.mxu0 0
    %8523 = vmatpush2.bf16.msra.mxu0 0
    %8524 = vmatprep.subr.bf16.mxu0 0
    %8525 = vmatpush2.bf16.msra.mxu0 0
    %8526 = vmatprep.subr.bf16.mxu0 0
    %8527 = vmatpush2.bf16.msra.mxu0 0
    %8528 = vmatprep.subr.bf16.mxu0 0
    %8529 = vmatpush2.bf16.msra.mxu0 0
    %8530 = vmatprep.subr.bf16.mxu0 0
    %8531 = vmatpush2.bf16.msra.mxu0 %v8468
    %8532 = vmatprep.subr.bf16.mxu0 0
    %8533 = vmatpush2.bf16.msra.mxu0 %v8467
    %8534 = vmatprep.subr.bf16.mxu0 0
    %8535 = vmatpush2.bf16.msra.mxu0 %v8466
    %8536 = vmatprep.subr.bf16.mxu0 0
    %8537 = vmatpush2.bf16.msra.mxu0 %v8465
    %8538 = vmatprep.mubr.bf16.mxu0 %v8483
    %8539 = vmatmul.mubr.bf16.gmra.mxu0 %v8362
    %v8540 = vpop.f32.mrf.mxu0
    %v8541 = vadd.f32 %v8407, %v8540
    %v8542 = vpop.f32.mrf.mxu0
    %v8543 = vpop.f32.mrf.mxu0
    %v8544 = vadd.f32 %v8407, %v8543
    %v8545 = vpop.f32.mrf.mxu0
    %8546 = vmatprep.mubr.bf16.mxu0 %v8486
    %8547 = vmatmul.mubr.bf16.gmra.mxu0 %v8364
    %v8548 = vpop.f32.mrf.mxu0
    %v8549 = vadd.f32 %v8407, %v8548
    %v8550 = vpop.f32.mrf.mxu0
    %v8551 = vpop.f32.mrf.mxu0
    %v8552 = vadd.f32 %v8407, %v8551
    %v8553 = vpop.f32.mrf.mxu0
    %8554 = vmatprep.mubr.bf16.mxu0 %v8489
    %8555 = vmatmul.mubr.bf16.gmra.mxu0 %v8366
    %v8556 = vpop.f32.mrf.mxu0
    %v8557 = vadd.f32 %v8407, %v8556
    %v8558 = vpop.f32.mrf.mxu0
    %v8559 = vpop.f32.mrf.mxu0
    %v8560 = vadd.f32 %v8407, %v8559
    %v8561 = vpop.f32.mrf.mxu0
    %8562 = vmatprep.mubr.bf16.mxu0 %v8492
    %8563 = vmatmul.mubr.bf16.gmra.mxu0 %v8368
    %v8564 = vpop.f32.mrf.mxu0
    %v8565 = vadd.f32 %v8407, %v8564
    %v8566 = vpop.f32.mrf.mxu0
    %v8567 = vpop.f32.mrf.mxu0
    %v8568 = vadd.f32 %v8407, %v8567
    %v8569 = vpop.f32.mrf.mxu0
    %8570 = vmatprep.mubr.bf16.mxu0 %v8495
    %8571 = vmatmul.mubr.bf16.gmra.mxu0 %v8370
    %v8572 = vpop.f32.mrf.mxu0
    %v8573 = vadd.f32 %v8407, %v8572
    %v8574 = vpop.f32.mrf.mxu0
    %v8575 = vpop.f32.mrf.mxu0
    %v8576 = vadd.f32 %v8407, %v8575
    %v8577 = vpop.f32.mrf.mxu0
    %8578 = vmatprep.mubr.bf16.mxu0 %v8498
    %8579 = vmatmul.mubr.bf16.gmra.mxu0 %v8372
    %v8580 = vpop.f32.mrf.mxu0
    %v8581 = vadd.f32 %v8407, %v8580
    %v8582 = vpop.f32.mrf.mxu0
    %v8583 = vpop.f32.mrf.mxu0
    %v8584 = vadd.f32 %v8407, %v8583
    %v8585 = vpop.f32.mrf.mxu0
    %8586 = vmatprep.mubr.bf16.mxu0 %v8501
    %8587 = vmatmul.mubr.bf16.gmra.mxu0 %v8374
    %v8588 = vpop.f32.mrf.mxu0
    %v8589 = vadd.f32 %v8407, %v8588
    %v8590 = vpop.f32.mrf.mxu0
    %v8591 = vpop.f32.mrf.mxu0
    %v8592 = vadd.f32 %v8407, %v8591
    %v8593 = vpop.f32.mrf.mxu0
    %8594 = vmatprep.mubr.bf16.mxu0 %v8504
    %8595 = vmatmul.mubr.bf16.gmra.mxu0 %v8376
    %v8596 = vpop.f32.mrf.mxu0
    %v8597 = vadd.f32 %v8407, %v8596
    %v8598 = vpop.f32.mrf.mxu0
    %v8599 = vpop.f32.mrf.mxu0
    %v8600 = vadd.f32 %v8407, %v8599
    %v8601 = vpop.f32.mrf.mxu0
    %8602 = vdwg.mxu0
    %v8603 = vmax.f32 %v8541, 0.0
    %v8604 = vmax.f32 %v8544, 0.0
    %v8605 = vmax.f32 %v8549, 0.0
    %v8606 = vmax.f32 %v8552, 0.0
    %v8607 = vmax.f32 %v8557, 0.0
    %v8608 = vmax.f32 %v8560, 0.0
    %v8609 = vmax.f32 %v8565, 0.0
    %v8610 = vmax.f32 %v8568, 0.0
    %v8611 = vmax.f32 %v8573, 0.0
    %v8612 = vmax.f32 %v8576, 0.0
    %v8613 = vmax.f32 %v8581, 0.0
    %v8614 = vmax.f32 %v8584, 0.0
    %v8615 = vmax.f32 %v8589, 0.0
    %v8616 = vmax.f32 %v8592, 0.0
    %v8617 = vmax.f32 %v8597, 0.0
    %v8618 = vmax.f32 %v8600, 0.0
    %s8619 = scalar_lea.vmem [#allocation7], 16
    %8620 = vst [vmem:[%s8619 + $0x1] sm:$0xff] %v8603
    %8621 = vst [vmem:[%s8619 + $0x11] sm:$0xff] %v8604
    %8622 = vst [vmem:[%s8619 + $0x21] sm:$0xff] %v8605
    %8623 = vst [vmem:[%s8619 + $0x31] sm:$0xff] %v8606
    %8624 = vst [vmem:[%s8619 + $0x41] sm:$0xff] %v8607
    %8625 = vst [vmem:[%s8619 + $0x51] sm:$0xff] %v8608
    %8626 = vst [vmem:[%s8619 + $0x61] sm:$0xff] %v8609
    %8627 = vst [vmem:[%s8619 + $0x71] sm:$0xff] %v8610
    %8628 = vst [vmem:[%s8619 + $0xa1] sm:$0xff] %v8611
    %8629 = vst [vmem:[%s8619 + $0xb1] sm:$0xff] %v8612
    %8630 = vst [vmem:[%s8619 + $0xc1] sm:$0xff] %v8613
    %8631 = vst [vmem:[%s8619 + $0xd1] sm:$0xff] %v8614
    %8632 = vst [vmem:[%s8619 + $0xe1] sm:$0xff] %v8615
    %8633 = vst [vmem:[%s8619 + $0xf1] sm:$0xff] %v8616
    %8634 = vst [vmem:[%s8619 + $0x101] sm:$0xff] %v8617
    %8635 = vst [vmem:[%s8619 + $0x111] sm:$0xff] %v8618
    %v8636 = vld [vmem:[%s1 + $0x38] sm:$0xff]
    %v8637 = vld [vmem:[%s1 + $0x78] sm:$0x1]
    %v8638 = vld [vmem:[#allocation7] sm:$0xff]
    %v8639 = vld [vmem:[#allocation7 + $0x10] sm:$0xff]
    %v8640 = vld [vmem:[#allocation7 + $0x20] sm:$0xff]
    %v8641 = vld [vmem:[#allocation7 + $0x30] sm:$0xff]
    %v8642 = vld [vmem:[#allocation7 + $0x40] sm:$0xff]
    %v8643 = vld [vmem:[#allocation7 + $0x50] sm:$0xff]
    %v8644 = vld [vmem:[#allocation7 + $0x60] sm:$0xff]
    %v8645 = vld [vmem:[#allocation7 + $0x70] sm:$0xff]
    %v8646 = vld [vmem:[#allocation7 + $0xa0] sm:$0xff]
    %v8647 = vld [vmem:[#allocation7 + $0xb0] sm:$0xff]
    %v8648 = vld [vmem:[#allocation7 + $0xc0] sm:$0xff]
    %v8649 = vld [vmem:[#allocation7 + $0xd0] sm:$0xff]
    %v8650 = vld [vmem:[#allocation7 + $0xe0] sm:$0xff]
    %v8651 = vld [vmem:[#allocation7 + $0xf0] sm:$0xff]
    %v8652 = vld [vmem:[#allocation7 + $0x100] sm:$0xff]
    %v8653 = vld [vmem:[#allocation7 + $0x110] sm:$0xff]
    %v8654 = vlaneseq
    %v8655 = vshrl.u32 %v8654, 7
    %v8656 = vsub.s32 0, %v8655
    %v8657 = vrot.slane %v8636, %v8656
    %v8658 = vmul.f32 %v8638, %v8657
    %v8659 = vmul.f32 %v8639, %v8657
    %v8660 = vmul.f32 %v8640, %v8657
    %v8661 = vmul.f32 %v8641, %v8657
    %v8662 = vmul.f32 %v8642, %v8657
    %v8663 = vmul.f32 %v8643, %v8657
    %v8664 = vmul.f32 %v8644, %v8657
    %v8665 = vmul.f32 %v8645, %v8657
    %v8666 = vmul.f32 %v8646, %v8657
    %v8667 = vmul.f32 %v8647, %v8657
    %v8668 = vmul.f32 %v8648, %v8657
    %v8669 = vmul.f32 %v8649, %v8657
    %v8670 = vmul.f32 %v8650, %v8657
    %v8671 = vmul.f32 %v8651, %v8657
    %v8672 = vmul.f32 %v8652, %v8657
    %v8673 = vmul.f32 %v8653, %v8657
    %v8674 = vld [vmem:[#allocation7 + $0x1] sm:$0xff]
    %v8675 = vld [vmem:[#allocation7 + $0x11] sm:$0xff]
    %v8676 = vld [vmem:[#allocation7 + $0x21] sm:$0xff]
    %v8677 = vld [vmem:[#allocation7 + $0x31] sm:$0xff]
    %v8678 = vld [vmem:[#allocation7 + $0x41] sm:$0xff]
    %v8679 = vld [vmem:[#allocation7 + $0x51] sm:$0xff]
    %v8680 = vld [vmem:[#allocation7 + $0x61] sm:$0xff]
    %v8681 = vld [vmem:[#allocation7 + $0x71] sm:$0xff]
    %v8682 = vld [vmem:[#allocation7 + $0xa1] sm:$0xff]
    %v8683 = vld [vmem:[#allocation7 + $0xb1] sm:$0xff]
    %v8684 = vld [vmem:[#allocation7 + $0xc1] sm:$0xff]
    %v8685 = vld [vmem:[#allocation7 + $0xd1] sm:$0xff]
    %v8686 = vld [vmem:[#allocation7 + $0xe1] sm:$0xff]
    %v8687 = vld [vmem:[#allocation7 + $0xf1] sm:$0xff]
    %v8688 = vld [vmem:[#allocation7 + $0x101] sm:$0xff]
    %v8689 = vld [vmem:[#allocation7 + $0x111] sm:$0xff]
    %v8690 = vlaneseq
    %v8691 = vshrl.u32 %v8690, 7
    %v8692 = vsub.s32 1, %v8691
    %v8693 = vrot.slane %v8636, %v8692
    %v8694 = vmul.f32 %v8674, %v8693
    %v8695 = vmul.f32 %v8675, %v8693
    %v8696 = vmul.f32 %v8676, %v8693
    %v8697 = vmul.f32 %v8677, %v8693
    %v8698 = vmul.f32 %v8678, %v8693
    %v8699 = vmul.f32 %v8679, %v8693
    %v8700 = vmul.f32 %v8680, %v8693
    %v8701 = vmul.f32 %v8681, %v8693
    %v8702 = vmul.f32 %v8682, %v8693
    %v8703 = vmul.f32 %v8683, %v8693
    %v8704 = vmul.f32 %v8684, %v8693
    %v8705 = vmul.f32 %v8685, %v8693
    %v8706 = vmul.f32 %v8686, %v8693
    %v8707 = vmul.f32 %v8687, %v8693
    %v8708 = vmul.f32 %v8688, %v8693
    %v8709 = vmul.f32 %v8689, %v8693
    %v8710 = vadd.f32 %v8658, %v8694
    %v8711 = vadd.f32 %v8659, %v8695
    %v8712 = vadd.f32 %v8660, %v8696
    %v8713 = vadd.f32 %v8661, %v8697
    %v8714 = vadd.f32 %v8662, %v8698
    %v8715 = vadd.f32 %v8663, %v8699
    %v8716 = vadd.f32 %v8664, %v8700
    %v8717 = vadd.f32 %v8665, %v8701
    %v8718 = vadd.f32 %v8666, %v8702
    %v8719 = vadd.f32 %v8667, %v8703
    %v8720 = vadd.f32 %v8668, %v8704
    %v8721 = vadd.f32 %v8669, %v8705
    %v8722 = vadd.f32 %v8670, %v8706
    %v8723 = vadd.f32 %v8671, %v8707
    %v8724 = vadd.f32 %v8672, %v8708
    %v8725 = vadd.f32 %v8673, %v8709
    %v8726 = vld [vmem:[#allocation7 + $0x2] sm:$0xff]
    %v8727 = vld [vmem:[#allocation7 + $0x12] sm:$0xff]
    %v8728 = vld [vmem:[#allocation7 + $0x22] sm:$0xff]
    %v8729 = vld [vmem:[#allocation7 + $0x32] sm:$0xff]
    %v8730 = vld [vmem:[#allocation7 + $0x42] sm:$0xff]
    %v8731 = vld [vmem:[#allocation7 + $0x52] sm:$0xff]
    %v8732 = vld [vmem:[#allocation7 + $0x62] sm:$0xff]
    %v8733 = vld [vmem:[#allocation7 + $0x72] sm:$0xff]
    %v8734 = vld [vmem:[#allocation7 + $0xa2] sm:$0xff]
    %v8735 = vld [vmem:[#allocation7 + $0xb2] sm:$0xff]
    %v8736 = vld [vmem:[#allocation7 + $0xc2] sm:$0xff]
    %v8737 = vld [vmem:[#allocation7 + $0xd2] sm:$0xff]
    %v8738 = vld [vmem:[#allocation7 + $0xe2] sm:$0xff]
    %v8739 = vld [vmem:[#allocation7 + $0xf2] sm:$0xff]
    %v8740 = vld [vmem:[#allocation7 + $0x102] sm:$0xff]
    %v8741 = vld [vmem:[#allocation7 + $0x112] sm:$0xff]
    %v8742 = vlaneseq
    %v8743 = vshrl.u32 %v8742, 7
    %v8744 = vsub.s32 2, %v8743
    %v8745 = vrot.slane %v8636, %v8744
    %v8746 = vmul.f32 %v8726, %v8745
    %v8747 = vmul.f32 %v8727, %v8745
    %v8748 = vmul.f32 %v8728, %v8745
    %v8749 = vmul.f32 %v8729, %v8745
    %v8750 = vmul.f32 %v8730, %v8745
    %v8751 = vmul.f32 %v8731, %v8745
    %v8752 = vmul.f32 %v8732, %v8745
    %v8753 = vmul.f32 %v8733, %v8745
    %v8754 = vmul.f32 %v8734, %v8745
    %v8755 = vmul.f32 %v8735, %v8745
    %v8756 = vmul.f32 %v8736, %v8745
    %v8757 = vmul.f32 %v8737, %v8745
    %v8758 = vmul.f32 %v8738, %v8745
    %v8759 = vmul.f32 %v8739, %v8745
    %v8760 = vmul.f32 %v8740, %v8745
    %v8761 = vmul.f32 %v8741, %v8745
    %v8762 = vadd.f32 %v8710, %v8746
    %v8763 = vadd.f32 %v8711, %v8747
    %v8764 = vadd.f32 %v8712, %v8748
    %v8765 = vadd.f32 %v8713, %v8749
    %v8766 = vadd.f32 %v8714, %v8750
    %v8767 = vadd.f32 %v8715, %v8751
    %v8768 = vadd.f32 %v8716, %v8752
    %v8769 = vadd.f32 %v8717, %v8753
    %v8770 = vadd.f32 %v8718, %v8754
    %v8771 = vadd.f32 %v8719, %v8755
    %v8772 = vadd.f32 %v8720, %v8756
    %v8773 = vadd.f32 %v8721, %v8757
    %v8774 = vadd.f32 %v8722, %v8758
    %v8775 = vadd.f32 %v8723, %v8759
    %v8776 = vadd.f32 %v8724, %v8760
    %v8777 = vadd.f32 %v8725, %v8761
    %v8778 = vld [vmem:[%s8619] sm:$0xff]
    %v8779 = vld [vmem:[%s8619 + $0x10] sm:$0xff]
    %v8780 = vld [vmem:[%s8619 + $0x20] sm:$0xff]
    %v8781 = vld [vmem:[%s8619 + $0x30] sm:$0xff]
    %v8782 = vld [vmem:[%s8619 + $0x40] sm:$0xff]
    %v8783 = vld [vmem:[%s8619 + $0x50] sm:$0xff]
    %v8784 = vld [vmem:[%s8619 + $0x60] sm:$0xff]
    %v8785 = vld [vmem:[%s8619 + $0x70] sm:$0xff]
    %v8786 = vld [vmem:[%s8619 + $0xa0] sm:$0xff]
    %v8787 = vld [vmem:[%s8619 + $0xb0] sm:$0xff]
    %v8788 = vld [vmem:[%s8619 + $0xc0] sm:$0xff]
    %v8789 = vld [vmem:[%s8619 + $0xd0] sm:$0xff]
    %v8790 = vld [vmem:[%s8619 + $0xe0] sm:$0xff]
    %v8791 = vld [vmem:[%s8619 + $0xf0] sm:$0xff]
    %v8792 = vld [vmem:[%s8619 + $0x100] sm:$0xff]
    %v8793 = vld [vmem:[%s8619 + $0x110] sm:$0xff]
    %v8794 = vlaneseq
    %v8795 = vshrl.u32 %v8794, 7
    %v8796 = vsub.s32 3, %v8795
    %v8797 = vrot.slane %v8636, %v8796
    %v8798 = vmul.f32 %v8778, %v8797
    %v8799 = vmul.f32 %v8779, %v8797
    %v8800 = vmul.f32 %v8780, %v8797
    %v8801 = vmul.f32 %v8781, %v8797
    %v8802 = vmul.f32 %v8782, %v8797
    %v8803 = vmul.f32 %v8783, %v8797
    %v8804 = vmul.f32 %v8784, %v8797
    %v8805 = vmul.f32 %v8785, %v8797
    %v8806 = vmul.f32 %v8786, %v8797
    %v8807 = vmul.f32 %v8787, %v8797
    %v8808 = vmul.f32 %v8788, %v8797
    %v8809 = vmul.f32 %v8789, %v8797
    %v8810 = vmul.f32 %v8790, %v8797
    %v8811 = vmul.f32 %v8791, %v8797
    %v8812 = vmul.f32 %v8792, %v8797
    %v8813 = vmul.f32 %v8793, %v8797
    %v8814 = vadd.f32 %v8762, %v8798
    %v8815 = vadd.f32 %v8763, %v8799
    %v8816 = vadd.f32 %v8764, %v8800
    %v8817 = vadd.f32 %v8765, %v8801
    %v8818 = vadd.f32 %v8766, %v8802
    %v8819 = vadd.f32 %v8767, %v8803
    %v8820 = vadd.f32 %v8768, %v8804
    %v8821 = vadd.f32 %v8769, %v8805
    %v8822 = vadd.f32 %v8770, %v8806
    %v8823 = vadd.f32 %v8771, %v8807
    %v8824 = vadd.f32 %v8772, %v8808
    %v8825 = vadd.f32 %v8773, %v8809
    %v8826 = vadd.f32 %v8774, %v8810
    %v8827 = vadd.f32 %v8775, %v8811
    %v8828 = vadd.f32 %v8776, %v8812
    %v8829 = vadd.f32 %v8777, %v8813
    %v8830 = vld [vmem:[%s8619 + $0x1] sm:$0xff]
    %v8831 = vld [vmem:[%s8619 + $0x11] sm:$0xff]
    %v8832 = vld [vmem:[%s8619 + $0x21] sm:$0xff]
    %v8833 = vld [vmem:[%s8619 + $0x31] sm:$0xff]
    %v8834 = vld [vmem:[%s8619 + $0x41] sm:$0xff]
    %v8835 = vld [vmem:[%s8619 + $0x51] sm:$0xff]
    %v8836 = vld [vmem:[%s8619 + $0x61] sm:$0xff]
    %v8837 = vld [vmem:[%s8619 + $0x71] sm:$0xff]
    %v8838 = vld [vmem:[%s8619 + $0xa1] sm:$0xff]
    %v8839 = vld [vmem:[%s8619 + $0xb1] sm:$0xff]
    %v8840 = vld [vmem:[%s8619 + $0xc1] sm:$0xff]
    %v8841 = vld [vmem:[%s8619 + $0xd1] sm:$0xff]
    %v8842 = vld [vmem:[%s8619 + $0xe1] sm:$0xff]
    %v8843 = vld [vmem:[%s8619 + $0xf1] sm:$0xff]
    %v8844 = vld [vmem:[%s8619 + $0x101] sm:$0xff]
    %v8845 = vld [vmem:[%s8619 + $0x111] sm:$0xff]
    %v8846 = vlaneseq
    %v8847 = vshrl.u32 %v8846, 7
    %v8848 = vsub.s32 4, %v8847
    %v8849 = vrot.slane %v8636, %v8848
    %v8850 = vmul.f32 %v8830, %v8849
    %v8851 = vmul.f32 %v8831, %v8849
    %v8852 = vmul.f32 %v8832, %v8849
    %v8853 = vmul.f32 %v8833, %v8849
    %v8854 = vmul.f32 %v8834, %v8849
    %v8855 = vmul.f32 %v8835, %v8849
    %v8856 = vmul.f32 %v8836, %v8849
    %v8857 = vmul.f32 %v8837, %v8849
    %v8858 = vmul.f32 %v8838, %v8849
    %v8859 = vmul.f32 %v8839, %v8849
    %v8860 = vmul.f32 %v8840, %v8849
    %v8861 = vmul.f32 %v8841, %v8849
    %v8862 = vmul.f32 %v8842, %v8849
    %v8863 = vmul.f32 %v8843, %v8849
    %v8864 = vmul.f32 %v8844, %v8849
    %v8865 = vmul.f32 %v8845, %v8849
    %v8866 = vadd.f32 %v8814, %v8850
    %v8867 = vadd.f32 %v8815, %v8851
    %v8868 = vadd.f32 %v8816, %v8852
    %v8869 = vadd.f32 %v8817, %v8853
    %v8870 = vadd.f32 %v8818, %v8854
    %v8871 = vadd.f32 %v8819, %v8855
    %v8872 = vadd.f32 %v8820, %v8856
    %v8873 = vadd.f32 %v8821, %v8857
    %v8874 = vadd.f32 %v8822, %v8858
    %v8875 = vadd.f32 %v8823, %v8859
    %v8876 = vadd.f32 %v8824, %v8860
    %v8877 = vadd.f32 %v8825, %v8861
    %v8878 = vadd.f32 %v8826, %v8862
    %v8879 = vadd.f32 %v8827, %v8863
    %v8880 = vadd.f32 %v8828, %v8864
    %v8881 = vadd.f32 %v8829, %v8865
    %v8882 = vld [vmem:[%s8619 + $0x2] sm:$0xff]
    %v8883 = vld [vmem:[%s8619 + $0x12] sm:$0xff]
    %v8884 = vld [vmem:[%s8619 + $0x22] sm:$0xff]
    %v8885 = vld [vmem:[%s8619 + $0x32] sm:$0xff]
    %v8886 = vld [vmem:[%s8619 + $0x42] sm:$0xff]
    %v8887 = vld [vmem:[%s8619 + $0x52] sm:$0xff]
    %v8888 = vld [vmem:[%s8619 + $0x62] sm:$0xff]
    %v8889 = vld [vmem:[%s8619 + $0x72] sm:$0xff]
    %v8890 = vld [vmem:[%s8619 + $0xa2] sm:$0xff]
    %v8891 = vld [vmem:[%s8619 + $0xb2] sm:$0xff]
    %v8892 = vld [vmem:[%s8619 + $0xc2] sm:$0xff]
    %v8893 = vld [vmem:[%s8619 + $0xd2] sm:$0xff]
    %v8894 = vld [vmem:[%s8619 + $0xe2] sm:$0xff]
    %v8895 = vld [vmem:[%s8619 + $0xf2] sm:$0xff]
    %v8896 = vld [vmem:[%s8619 + $0x102] sm:$0xff]
    %v8897 = vld [vmem:[%s8619 + $0x112] sm:$0xff]
    %v8898 = vlaneseq
    %v8899 = vshrl.u32 %v8898, 7
    %v8900 = vsub.s32 5, %v8899
    %v8901 = vrot.slane %v8636, %v8900
    %v8902 = vmul.f32 %v8882, %v8901
    %v8903 = vmul.f32 %v8883, %v8901
    %v8904 = vmul.f32 %v8884, %v8901
    %v8905 = vmul.f32 %v8885, %v8901
    %v8906 = vmul.f32 %v8886, %v8901
    %v8907 = vmul.f32 %v8887, %v8901
    %v8908 = vmul.f32 %v8888, %v8901
    %v8909 = vmul.f32 %v8889, %v8901
    %v8910 = vmul.f32 %v8890, %v8901
    %v8911 = vmul.f32 %v8891, %v8901
    %v8912 = vmul.f32 %v8892, %v8901
    %v8913 = vmul.f32 %v8893, %v8901
    %v8914 = vmul.f32 %v8894, %v8901
    %v8915 = vmul.f32 %v8895, %v8901
    %v8916 = vmul.f32 %v8896, %v8901
    %v8917 = vmul.f32 %v8897, %v8901
    %v8918 = vadd.f32 %v8866, %v8902
    %v8919 = vadd.f32 %v8867, %v8903
    %v8920 = vadd.f32 %v8868, %v8904
    %v8921 = vadd.f32 %v8869, %v8905
    %v8922 = vadd.f32 %v8870, %v8906
    %v8923 = vadd.f32 %v8871, %v8907
    %v8924 = vadd.f32 %v8872, %v8908
    %v8925 = vadd.f32 %v8873, %v8909
    %v8926 = vadd.f32 %v8874, %v8910
    %v8927 = vadd.f32 %v8875, %v8911
    %v8928 = vadd.f32 %v8876, %v8912
    %v8929 = vadd.f32 %v8877, %v8913
    %v8930 = vadd.f32 %v8878, %v8914
    %v8931 = vadd.f32 %v8879, %v8915
    %v8932 = vadd.f32 %v8880, %v8916
    %v8933 = vadd.f32 %v8881, %v8917
    %s8934 = scalar_lea.vmem [#allocation7], 32
    %v8935 = vld [vmem:[%s8934] sm:$0xff]
    %v8936 = vld [vmem:[%s8934 + $0x10] sm:$0xff]
    %v8937 = vld [vmem:[%s8934 + $0x20] sm:$0xff]
    %v8938 = vld [vmem:[%s8934 + $0x30] sm:$0xff]
    %v8939 = vld [vmem:[%s8934 + $0x40] sm:$0xff]
    %v8940 = vld [vmem:[%s8934 + $0x50] sm:$0xff]
    %v8941 = vld [vmem:[%s8934 + $0x60] sm:$0xff]
    %v8942 = vld [vmem:[%s8934 + $0x70] sm:$0xff]
    %v8943 = vld [vmem:[%s8934 + $0xa0] sm:$0xff]
    %v8944 = vld [vmem:[%s8934 + $0xb0] sm:$0xff]
    %v8945 = vld [vmem:[%s8934 + $0xc0] sm:$0xff]
    %v8946 = vld [vmem:[%s8934 + $0xd0] sm:$0xff]
    %v8947 = vld [vmem:[%s8934 + $0xe0] sm:$0xff]
    %v8948 = vld [vmem:[%s8934 + $0xf0] sm:$0xff]
    %v8949 = vld [vmem:[%s8934 + $0x100] sm:$0xff]
    %v8950 = vld [vmem:[%s8934 + $0x110] sm:$0xff]
    %v8951 = vlaneseq
    %v8952 = vshrl.u32 %v8951, 7
    %v8953 = vsub.s32 6, %v8952
    %v8954 = vrot.slane %v8636, %v8953
    %v8955 = vmul.f32 %v8935, %v8954
    %v8956 = vmul.f32 %v8936, %v8954
    %v8957 = vmul.f32 %v8937, %v8954
    %v8958 = vmul.f32 %v8938, %v8954
    %v8959 = vmul.f32 %v8939, %v8954
    %v8960 = vmul.f32 %v8940, %v8954
    %v8961 = vmul.f32 %v8941, %v8954
    %v8962 = vmul.f32 %v8942, %v8954
    %v8963 = vmul.f32 %v8943, %v8954
    %v8964 = vmul.f32 %v8944, %v8954
    %v8965 = vmul.f32 %v8945, %v8954
    %v8966 = vmul.f32 %v8946, %v8954
    %v8967 = vmul.f32 %v8947, %v8954
    %v8968 = vmul.f32 %v8948, %v8954
    %v8969 = vmul.f32 %v8949, %v8954
    %v8970 = vmul.f32 %v8950, %v8954
    %v8971 = vadd.f32 %v8918, %v8955
    %v8972 = vadd.f32 %v8919, %v8956
    %v8973 = vadd.f32 %v8920, %v8957
    %v8974 = vadd.f32 %v8921, %v8958
    %v8975 = vadd.f32 %v8922, %v8959
    %v8976 = vadd.f32 %v8923, %v8960
    %v8977 = vadd.f32 %v8924, %v8961
    %v8978 = vadd.f32 %v8925, %v8962
    %v8979 = vadd.f32 %v8926, %v8963
    %v8980 = vadd.f32 %v8927, %v8964
    %v8981 = vadd.f32 %v8928, %v8965
    %v8982 = vadd.f32 %v8929, %v8966
    %v8983 = vadd.f32 %v8930, %v8967
    %v8984 = vadd.f32 %v8931, %v8968
    %v8985 = vadd.f32 %v8932, %v8969
    %v8986 = vadd.f32 %v8933, %v8970
    %v8987 = vld [vmem:[%s8934 + $0x1] sm:$0xff]
    %v8988 = vld [vmem:[%s8934 + $0x11] sm:$0xff]
    %v8989 = vld [vmem:[%s8934 + $0x21] sm:$0xff]
    %v8990 = vld [vmem:[%s8934 + $0x31] sm:$0xff]
    %v8991 = vld [vmem:[%s8934 + $0x41] sm:$0xff]
    %v8992 = vld [vmem:[%s8934 + $0x51] sm:$0xff]
    %v8993 = vld [vmem:[%s8934 + $0x61] sm:$0xff]
    %v8994 = vld [vmem:[%s8934 + $0x71] sm:$0xff]
    %v8995 = vld [vmem:[%s8934 + $0xa1] sm:$0xff]
    %v8996 = vld [vmem:[%s8934 + $0xb1] sm:$0xff]
    %v8997 = vld [vmem:[%s8934 + $0xc1] sm:$0xff]
    %v8998 = vld [vmem:[%s8934 + $0xd1] sm:$0xff]
    %v8999 = vld [vmem:[%s8934 + $0xe1] sm:$0xff]
    %v9000 = vld [vmem:[%s8934 + $0xf1] sm:$0xff]
    %v9001 = vld [vmem:[%s8934 + $0x101] sm:$0xff]
    %v9002 = vld [vmem:[%s8934 + $0x111] sm:$0xff]
    %v9003 = vlaneseq
    %v9004 = vshrl.u32 %v9003, 7
    %v9005 = vsub.s32 7, %v9004
    %v9006 = vrot.slane %v8636, %v9005
    %v9007 = vmul.f32 %v8987, %v9006
    %v9008 = vmul.f32 %v8988, %v9006
    %v9009 = vmul.f32 %v8989, %v9006
    %v9010 = vmul.f32 %v8990, %v9006
    %v9011 = vmul.f32 %v8991, %v9006
    %v9012 = vmul.f32 %v8992, %v9006
    %v9013 = vmul.f32 %v8993, %v9006
    %v9014 = vmul.f32 %v8994, %v9006
    %v9015 = vmul.f32 %v8995, %v9006
    %v9016 = vmul.f32 %v8996, %v9006
    %v9017 = vmul.f32 %v8997, %v9006
    %v9018 = vmul.f32 %v8998, %v9006
    %v9019 = vmul.f32 %v8999, %v9006
    %v9020 = vmul.f32 %v9000, %v9006
    %v9021 = vmul.f32 %v9001, %v9006
    %v9022 = vmul.f32 %v9002, %v9006
    %v9023 = vadd.f32 %v8971, %v9007
    %v9024 = vadd.f32 %v8972, %v9008
    %v9025 = vadd.f32 %v8973, %v9009
    %v9026 = vadd.f32 %v8974, %v9010
    %v9027 = vadd.f32 %v8975, %v9011
    %v9028 = vadd.f32 %v8976, %v9012
    %v9029 = vadd.f32 %v8977, %v9013
    %v9030 = vadd.f32 %v8978, %v9014
    %v9031 = vadd.f32 %v8979, %v9015
    %v9032 = vadd.f32 %v8980, %v9016
    %v9033 = vadd.f32 %v8981, %v9017
    %v9034 = vadd.f32 %v8982, %v9018
    %v9035 = vadd.f32 %v8983, %v9019
    %v9036 = vadd.f32 %v8984, %v9020
    %v9037 = vadd.f32 %v8985, %v9021
    %v9038 = vadd.f32 %v8986, %v9022
    %v9039 = vld [vmem:[%s8934 + $0x2] sm:$0xff]
    %v9040 = vld [vmem:[%s8934 + $0x12] sm:$0xff]
    %v9041 = vld [vmem:[%s8934 + $0x22] sm:$0xff]
    %v9042 = vld [vmem:[%s8934 + $0x32] sm:$0xff]
    %v9043 = vld [vmem:[%s8934 + $0x42] sm:$0xff]
    %v9044 = vld [vmem:[%s8934 + $0x52] sm:$0xff]
    %v9045 = vld [vmem:[%s8934 + $0x62] sm:$0xff]
    %v9046 = vld [vmem:[%s8934 + $0x72] sm:$0xff]
    %v9047 = vld [vmem:[%s8934 + $0xa2] sm:$0xff]
    %v9048 = vld [vmem:[%s8934 + $0xb2] sm:$0xff]
    %v9049 = vld [vmem:[%s8934 + $0xc2] sm:$0xff]
    %v9050 = vld [vmem:[%s8934 + $0xd2] sm:$0xff]
    %v9051 = vld [vmem:[%s8934 + $0xe2] sm:$0xff]
    %v9052 = vld [vmem:[%s8934 + $0xf2] sm:$0xff]
    %v9053 = vld [vmem:[%s8934 + $0x102] sm:$0xff]
    %v9054 = vld [vmem:[%s8934 + $0x112] sm:$0xff]
    %v9055 = vlaneseq
    %v9056 = vshrl.u32 %v9055, 7
    %v9057 = vsub.s32 0, %v9056
    %v9058 = vrot.slane %v8637, %v9057
    %v9059 = vmul.f32 %v9039, %v9058
    %v9060 = vmul.f32 %v9040, %v9058
    %v9061 = vmul.f32 %v9041, %v9058
    %v9062 = vmul.f32 %v9042, %v9058
    %v9063 = vmul.f32 %v9043, %v9058
    %v9064 = vmul.f32 %v9044, %v9058
    %v9065 = vmul.f32 %v9045, %v9058
    %v9066 = vmul.f32 %v9046, %v9058
    %v9067 = vmul.f32 %v9047, %v9058
    %v9068 = vmul.f32 %v9048, %v9058
    %v9069 = vmul.f32 %v9049, %v9058
    %v9070 = vmul.f32 %v9050, %v9058
    %v9071 = vmul.f32 %v9051, %v9058
    %v9072 = vmul.f32 %v9052, %v9058
    %v9073 = vmul.f32 %v9053, %v9058
    %v9074 = vmul.f32 %v9054, %v9058
    %v9075 = vadd.f32 %v9023, %v9059
    %v9076 = vadd.f32 %v9024, %v9060
    %v9077 = vadd.f32 %v9025, %v9061
    %v9078 = vadd.f32 %v9026, %v9062
    %v9079 = vadd.f32 %v9027, %v9063
    %v9080 = vadd.f32 %v9028, %v9064
    %v9081 = vadd.f32 %v9029, %v9065
    %v9082 = vadd.f32 %v9030, %v9066
    %v9083 = vadd.f32 %v9031, %v9067
    %v9084 = vadd.f32 %v9032, %v9068
    %v9085 = vadd.f32 %v9033, %v9069
    %v9086 = vadd.f32 %v9034, %v9070
    %v9087 = vadd.f32 %v9035, %v9071
    %v9088 = vadd.f32 %v9036, %v9072
    %v9089 = vadd.f32 %v9037, %v9073
    %v9090 = vadd.f32 %v9038, %v9074
    %v9091 = vpack.c.bf16 %v9076, %v9075
    %v9092 = vpack.c.bf16 %v9078, %v9077
    %v9093 = vpack.c.bf16 %v9080, %v9079
    %v9094 = vpack.c.bf16 %v9082, %v9081
    %v9095 = vpack.c.bf16 %v9084, %v9083
    %v9096 = vpack.c.bf16 %v9086, %v9085
    %v9097 = vpack.c.bf16 %v9088, %v9087
    %v9098 = vpack.c.bf16 %v9090, %v9089
    %v9099 = vld [vmem:[%s3 + $0x58] sm:$0xff]
    %v9100 = vld [vmem:[%s3 + $0x60] sm:$0xff]
    %v9101 = vld [vmem:[%s3 + $0x68] sm:$0xff]
    %v9102 = vld [vmem:[%s3 + $0x70] sm:$0xff]
    %v9103 = vld [vmem:[%s3 + $0x78] sm:$0xff]
    %v9104 = vld [vmem:[%s3 + $0x80] sm:$0xff]
    %v9105 = vld [vmem:[%s3 + $0x88] sm:$0xff]
    %v9106 = vld [vmem:[%s3 + $0x90] sm:$0xff]
    %v9107 = vld [vmem:[%s4 + $0x7] sm:$0x3]
    %v9109 = vlaneseq
    %v9110 = vshrl.u32 %v9109, 7
    %v9111 = vsub.s32 0, %v9110
    %v9112 = vrot.slane %v9107, %v9111
    %v9113 = vlaneseq
    %v9114 = vshrl.u32 %v9113, 7
    %v9115 = vsub.s32 1, %v9114
    %v9116 = vrot.slane %v9107, %v9115
    %v9127 = vunpack.c.l.b16 %v9099
    %v9128 = vunpack.c.h.b16 %v9099
    %v9129 = vunpack.c.l.b16 %v9100
    %v9130 = vunpack.c.h.b16 %v9100
    %v9131 = vunpack.c.l.b16 %v9101
    %v9132 = vunpack.c.h.b16 %v9101
    %v9133 = vunpack.c.l.b16 %v9102
    %v9134 = vunpack.c.h.b16 %v9102
    %v9135 = vunpack.c.l.b16 %v9103
    %v9136 = vunpack.c.h.b16 %v9103
    %v9137 = vunpack.c.l.b16 %v9104
    %v9138 = vunpack.c.h.b16 %v9104
    %v9139 = vunpack.c.l.b16 %v9105
    %v9140 = vunpack.c.h.b16 %v9105
    %v9141 = vunpack.c.l.b16 %v9106
    %v9142 = vunpack.c.h.b16 %v9106
    %v9143 = vpack.c.b16 %v9129, %v9127
    %v9144 = vpack.c.b16 %v9130, %v9128
    %v9145 = vpack.c.b16 %v9133, %v9131
    %v9146 = vpack.c.b16 %v9134, %v9132
    %v9147 = vpack.c.b16 %v9137, %v9135
    %v9148 = vpack.c.b16 %v9138, %v9136
    %v9149 = vpack.c.b16 %v9141, %v9139
    %v9150 = vpack.c.b16 %v9142, %v9140
    %v9160 = vsel %vm8481, %v9091, 0
    %v9163 = vsel %vm8481, %v9092, 0
    %v9166 = vsel %vm8481, %v9093, 0
    %v9169 = vsel %vm8481, %v9094, 0
    %v9172 = vsel %vm8481, %v9095, 0
    %v9175 = vsel %vm8481, %v9096, 0
    %v9178 = vsel %vm8481, %v9097, 0
    %v9181 = vsel %vm8481, %v9098, 0
    %9183 = vmatprep.subr.bf16.mxu0 0
    %9184 = vmatpush1.bf16.msra.mxu0 0
    %9185 = vmatprep.subr.bf16.mxu0 0
    %9186 = vmatpush1.bf16.msra.mxu0 0
    %9187 = vmatprep.subr.bf16.mxu0 0
    %9188 = vmatpush1.bf16.msra.mxu0 0
    %9189 = vmatprep.subr.bf16.mxu0 0
    %9190 = vmatpush1.bf16.msra.mxu0 0
    %9191 = vmatprep.subr.bf16.mxu0 %v9150
    %9192 = vmatpush1.bf16.msra.mxu0 %v9149
    %9193 = vmatprep.subr.bf16.mxu0 %v9148
    %9194 = vmatpush1.bf16.msra.mxu0 %v9147
    %9195 = vmatprep.subr.bf16.mxu0 %v9146
    %9196 = vmatpush1.bf16.msra.mxu0 %v9145
    %9197 = vmatprep.subr.bf16.mxu0 %v9144
    %9198 = vmatpush1.bf16.msra.mxu0 %v9143
    %9199 = vmatprep.subr.bf16.mxu0 0
    %9200 = vmatpush2.bf16.msra.mxu0 0
    %9201 = vmatprep.subr.bf16.mxu0 0
    %9202 = vmatpush2.bf16.msra.mxu0 0
    %9203 = vmatprep.subr.bf16.mxu0 0
    %9204 = vmatpush2.bf16.msra.mxu0 0
    %9205 = vmatprep.subr.bf16.mxu0 0
    %9206 = vmatpush2.bf16.msra.mxu0 0
    %9207 = vmatprep.subr.bf16.mxu0 0
    %9208 = vmatpush2.bf16.msra.mxu0 0
    %9209 = vmatprep.subr.bf16.mxu0 0
    %9210 = vmatpush2.bf16.msra.mxu0 0
    %9211 = vmatprep.subr.bf16.mxu0 0
    %9212 = vmatpush2.bf16.msra.mxu0 0
    %9213 = vmatprep.subr.bf16.mxu0 0
    %9214 = vmatpush2.bf16.msra.mxu0 0
    %9215 = vmatprep.mubr.bf16.mxu0 0
    %9216 = vmatmul.mubr.bf16.gmra.mxu0 %v9160
    %v9217 = vpop.f32.mrf.mxu0
    %v9218 = vadd.f32 %v9112, %v9217
    %v9219 = vpop.f32.mrf.mxu0
    %v9220 = vadd.f32 %v9116, %v9219
    %v9221 = vpop.f32.mrf.mxu0
    %v9222 = vadd.f32 %v9112, %v9221
    %v9223 = vpop.f32.mrf.mxu0
    %v9224 = vadd.f32 %v9116, %v9223
    %9225 = vmatprep.mubr.bf16.mxu0 0
    %9226 = vmatmul.mubr.bf16.gmra.mxu0 %v9163
    %v9227 = vpop.f32.mrf.mxu0
    %v9228 = vadd.f32 %v9112, %v9227
    %v9229 = vpop.f32.mrf.mxu0
    %v9230 = vadd.f32 %v9116, %v9229
    %v9231 = vpop.f32.mrf.mxu0
    %v9232 = vadd.f32 %v9112, %v9231
    %v9233 = vpop.f32.mrf.mxu0
    %v9234 = vadd.f32 %v9116, %v9233
    %9235 = vmatprep.mubr.bf16.mxu0 0
    %9236 = vmatmul.mubr.bf16.gmra.mxu0 %v9166
    %v9237 = vpop.f32.mrf.mxu0
    %v9238 = vadd.f32 %v9112, %v9237
    %v9239 = vpop.f32.mrf.mxu0
    %v9240 = vadd.f32 %v9116, %v9239
    %v9241 = vpop.f32.mrf.mxu0
    %v9242 = vadd.f32 %v9112, %v9241
    %v9243 = vpop.f32.mrf.mxu0
    %v9244 = vadd.f32 %v9116, %v9243
    %9245 = vmatprep.mubr.bf16.mxu0 0
    %9246 = vmatmul.mubr.bf16.gmra.mxu0 %v9169
    %v9247 = vpop.f32.mrf.mxu0
    %v9248 = vadd.f32 %v9112, %v9247
    %v9249 = vpop.f32.mrf.mxu0
    %v9250 = vadd.f32 %v9116, %v9249
    %v9251 = vpop.f32.mrf.mxu0
    %v9252 = vadd.f32 %v9112, %v9251
    %v9253 = vpop.f32.mrf.mxu0
    %v9254 = vadd.f32 %v9116, %v9253
    %9255 = vmatprep.mubr.bf16.mxu0 0
    %9256 = vmatmul.mubr.bf16.gmra.mxu0 %v9172
    %v9257 = vpop.f32.mrf.mxu0
    %v9258 = vadd.f32 %v9112, %v9257
    %v9259 = vpop.f32.mrf.mxu0
    %v9260 = vadd.f32 %v9116, %v9259
    %v9261 = vpop.f32.mrf.mxu0
    %v9262 = vadd.f32 %v9112, %v9261
    %v9263 = vpop.f32.mrf.mxu0
    %v9264 = vadd.f32 %v9116, %v9263
    %9265 = vmatprep.mubr.bf16.mxu0 0
    %9266 = vmatmul.mubr.bf16.gmra.mxu0 %v9175
    %v9267 = vpop.f32.mrf.mxu0
    %v9268 = vadd.f32 %v9112, %v9267
    %v9269 = vpop.f32.mrf.mxu0
    %v9270 = vadd.f32 %v9116, %v9269
    %v9271 = vpop.f32.mrf.mxu0
    %v9272 = vadd.f32 %v9112, %v9271
    %v9273 = vpop.f32.mrf.mxu0
    %v9274 = vadd.f32 %v9116, %v9273
    %9275 = vmatprep.mubr.bf16.mxu0 0
    %9276 = vmatmul.mubr.bf16.gmra.mxu0 %v9178
    %v9277 = vpop.f32.mrf.mxu0
    %v9278 = vadd.f32 %v9112, %v9277
    %v9279 = vpop.f32.mrf.mxu0
    %v9280 = vadd.f32 %v9116, %v9279
    %v9281 = vpop.f32.mrf.mxu0
    %v9282 = vadd.f32 %v9112, %v9281
    %v9283 = vpop.f32.mrf.mxu0
    %v9284 = vadd.f32 %v9116, %v9283
    %9285 = vmatprep.mubr.bf16.mxu0 0
    %9286 = vmatmul.mubr.bf16.gmra.mxu0 %v9181
    %v9287 = vpop.f32.mrf.mxu0
    %v9288 = vadd.f32 %v9112, %v9287
    %v9289 = vpop.f32.mrf.mxu0
    %v9290 = vadd.f32 %v9116, %v9289
    %v9291 = vpop.f32.mrf.mxu0
    %v9292 = vadd.f32 %v9112, %v9291
    %v9293 = vpop.f32.mrf.mxu0
    %v9294 = vadd.f32 %v9116, %v9293
    %9295 = vdwg.mxu0
    %v9296 = vld [vmem:[%s5852] sm:$0xfe]
    %v9297 = vld [vmem:[%s5852 + $0x8] sm:$0xfe]
    %v9298 = vld [vmem:[%s5852 + $0x10] sm:$0x1]
    %v9299 = vld [vmem:[%s5852 + $0x18] sm:$0x1]
    %v9300 = vld [vmem:[%s5852 + $0x20] sm:$0xfe]
    %v9301 = vld [vmem:[%s5852 + $0x28] sm:$0xfe]
    %v9302 = vld [vmem:[%s5852 + $0x30] sm:$0x1]
    %v9303 = vld [vmem:[%s5852 + $0x38] sm:$0x1]
    %v9304 = vld [vmem:[%s5852 + $0x40] sm:$0xfe]
    %v9305 = vld [vmem:[%s5852 + $0x48] sm:$0xfe]
    %v9306 = vld [vmem:[%s5852 + $0x50] sm:$0x1]
    %v9307 = vld [vmem:[%s5852 + $0x58] sm:$0x1]
    %v9308 = vld [vmem:[%s5852 + $0x60] sm:$0xfe]
    %v9309 = vld [vmem:[%s5852 + $0x68] sm:$0xfe]
    %v9310 = vld [vmem:[%s5852 + $0x70] sm:$0x1]
    %v9311 = vld [vmem:[%s5852 + $0x78] sm:$0x1]
    %v9312 = vld [vmem:[%s5852 + $0x80] sm:$0xfe]
    %v9313 = vld [vmem:[%s5852 + $0x88] sm:$0xfe]
    %v9314 = vld [vmem:[%s5852 + $0x90] sm:$0x1]
    %v9315 = vld [vmem:[%s5852 + $0x98] sm:$0x1]
    %v9316 = vld [vmem:[%s5852 + $0xa0] sm:$0xfe]
    %v9317 = vld [vmem:[%s5852 + $0xa8] sm:$0xfe]
    %v9318 = vld [vmem:[%s5852 + $0xb0] sm:$0x1]
    %v9319 = vld [vmem:[%s5852 + $0xb8] sm:$0x1]
    %v9320 = vld [vmem:[%s5852 + $0xc0] sm:$0xfe]
    %v9321 = vld [vmem:[%s5852 + $0xc8] sm:$0xfe]
    %v9322 = vld [vmem:[%s5852 + $0xd0] sm:$0x1]
    %v9323 = vld [vmem:[%s5852 + $0xd8] sm:$0x1]
    %v9324 = vld [vmem:[%s5852 + $0xe0] sm:$0xfe]
    %v9325 = vld [vmem:[%s5852 + $0xe8] sm:$0xfe]
    %v9326 = vld [vmem:[%s5852 + $0xf0] sm:$0x1]
    %v9327 = vld [vmem:[%s5852 + $0xf8] sm:$0x1]
    %v9328 = vld [vmem:[%s5852 + $0x140] sm:$0xfe]
    %v9329 = vld [vmem:[%s5852 + $0x148] sm:$0xfe]
    %v9330 = vld [vmem:[%s5852 + $0x150] sm:$0x1]
    %v9331 = vld [vmem:[%s5852 + $0x158] sm:$0x1]
    %v9332 = vld [vmem:[%s5852 + $0x160] sm:$0xfe]
    %v9333 = vld [vmem:[%s5852 + $0x168] sm:$0xfe]
    %v9334 = vld [vmem:[%s5852 + $0x170] sm:$0x1]
    %v9335 = vld [vmem:[%s5852 + $0x178] sm:$0x1]
    %v9336 = vld [vmem:[%s5852 + $0x180] sm:$0xfe]
    %v9337 = vld [vmem:[%s5852 + $0x188] sm:$0xfe]
    %v9338 = vld [vmem:[%s5852 + $0x190] sm:$0x1]
    %v9339 = vld [vmem:[%s5852 + $0x198] sm:$0x1]
    %v9340 = vld [vmem:[%s5852 + $0x1a0] sm:$0xfe]
    %v9341 = vld [vmem:[%s5852 + $0x1a8] sm:$0xfe]
    %v9342 = vld [vmem:[%s5852 + $0x1b0] sm:$0x1]
    %v9343 = vld [vmem:[%s5852 + $0x1b8] sm:$0x1]
    %v9344 = vld [vmem:[%s5852 + $0x1c0] sm:$0xfe]
    %v9345 = vld [vmem:[%s5852 + $0x1c8] sm:$0xfe]
    %v9346 = vld [vmem:[%s5852 + $0x1d0] sm:$0x1]
    %v9347 = vld [vmem:[%s5852 + $0x1d8] sm:$0x1]
    %v9348 = vld [vmem:[%s5852 + $0x1e0] sm:$0xfe]
    %v9349 = vld [vmem:[%s5852 + $0x1e8] sm:$0xfe]
    %v9350 = vld [vmem:[%s5852 + $0x1f0] sm:$0x1]
    %v9351 = vld [vmem:[%s5852 + $0x1f8] sm:$0x1]
    %v9352 = vld [vmem:[%s5852 + $0x200] sm:$0xfe]
    %v9353 = vld [vmem:[%s5852 + $0x208] sm:$0xfe]
    %v9354 = vld [vmem:[%s5852 + $0x210] sm:$0x1]
    %v9355 = vld [vmem:[%s5852 + $0x218] sm:$0x1]
    %v9356 = vld [vmem:[%s5852 + $0x220] sm:$0xfe]
    %v9357 = vld [vmem:[%s5852 + $0x228] sm:$0xfe]
    %v9358 = vld [vmem:[%s5852 + $0x230] sm:$0x1]
    %v9359 = vld [vmem:[%s5852 + $0x238] sm:$0x1]
    %v9424 = vrot.slane %v9296, 1
    %v9425 = vrot.slane %v9298, 1
    %v9426 = vsel %vm2366, %v9424, %v9425
    %v9427 = vrot.slane %v9297, 1
    %v9428 = vrot.slane %v9299, 1
    %v9429 = vsel %vm2366, %v9427, %v9428
    %v9430 = vrot.slane %v9300, 1
    %v9431 = vrot.slane %v9302, 1
    %v9432 = vsel %vm2366, %v9430, %v9431
    %v9433 = vrot.slane %v9301, 1
    %v9434 = vrot.slane %v9303, 1
    %v9435 = vsel %vm2366, %v9433, %v9434
    %v9436 = vrot.slane %v9304, 1
    %v9437 = vrot.slane %v9306, 1
    %v9438 = vsel %vm2366, %v9436, %v9437
    %v9439 = vrot.slane %v9305, 1
    %v9440 = vrot.slane %v9307, 1
    %v9441 = vsel %vm2366, %v9439, %v9440
    %v9442 = vrot.slane %v9308, 1
    %v9443 = vrot.slane %v9310, 1
    %v9444 = vsel %vm2366, %v9442, %v9443
    %v9445 = vrot.slane %v9309, 1
    %v9446 = vrot.slane %v9311, 1
    %v9447 = vsel %vm2366, %v9445, %v9446
    %v9448 = vrot.slane %v9312, 1
    %v9449 = vrot.slane %v9314, 1
    %v9450 = vsel %vm2366, %v9448, %v9449
    %v9451 = vrot.slane %v9313, 1
    %v9452 = vrot.slane %v9315, 1
    %v9453 = vsel %vm2366, %v9451, %v9452
    %v9454 = vrot.slane %v9316, 1
    %v9455 = vrot.slane %v9318, 1
    %v9456 = vsel %vm2366, %v9454, %v9455
    %v9457 = vrot.slane %v9317, 1
    %v9458 = vrot.slane %v9319, 1
    %v9459 = vsel %vm2366, %v9457, %v9458
    %v9460 = vrot.slane %v9320, 1
    %v9461 = vrot.slane %v9322, 1
    %v9462 = vsel %vm2366, %v9460, %v9461
    %v9463 = vrot.slane %v9321, 1
    %v9464 = vrot.slane %v9323, 1
    %v9465 = vsel %vm2366, %v9463, %v9464
    %v9466 = vrot.slane %v9324, 1
    %v9467 = vrot.slane %v9326, 1
    %v9468 = vsel %vm2366, %v9466, %v9467
    %v9469 = vrot.slane %v9325, 1
    %v9470 = vrot.slane %v9327, 1
    %v9471 = vsel %vm2366, %v9469, %v9470
    %v9472 = vrot.slane %v9328, 1
    %v9473 = vrot.slane %v9330, 1
    %v9474 = vsel %vm2366, %v9472, %v9473
    %v9475 = vrot.slane %v9329, 1
    %v9476 = vrot.slane %v9331, 1
    %v9477 = vsel %vm2366, %v9475, %v9476
    %v9478 = vrot.slane %v9332, 1
    %v9479 = vrot.slane %v9334, 1
    %v9480 = vsel %vm2366, %v9478, %v9479
    %v9481 = vrot.slane %v9333, 1
    %v9482 = vrot.slane %v9335, 1
    %v9483 = vsel %vm2366, %v9481, %v9482
    %v9484 = vrot.slane %v9336, 1
    %v9485 = vrot.slane %v9338, 1
    %v9486 = vsel %vm2366, %v9484, %v9485
    %v9487 = vrot.slane %v9337, 1
    %v9488 = vrot.slane %v9339, 1
    %v9489 = vsel %vm2366, %v9487, %v9488
    %v9490 = vrot.slane %v9340, 1
    %v9491 = vrot.slane %v9342, 1
    %v9492 = vsel %vm2366, %v9490, %v9491
    %v9493 = vrot.slane %v9341, 1
    %v9494 = vrot.slane %v9343, 1
    %v9495 = vsel %vm2366, %v9493, %v9494
    %v9496 = vrot.slane %v9344, 1
    %v9497 = vrot.slane %v9346, 1
    %v9498 = vsel %vm2366, %v9496, %v9497
    %v9499 = vrot.slane %v9345, 1
    %v9500 = vrot.slane %v9347, 1
    %v9501 = vsel %vm2366, %v9499, %v9500
    %v9502 = vrot.slane %v9348, 1
    %v9503 = vrot.slane %v9350, 1
    %v9504 = vsel %vm2366, %v9502, %v9503
    %v9505 = vrot.slane %v9349, 1
    %v9506 = vrot.slane %v9351, 1
    %v9507 = vsel %vm2366, %v9505, %v9506
    %v9508 = vrot.slane %v9352, 1
    %v9509 = vrot.slane %v9354, 1
    %v9510 = vsel %vm2366, %v9508, %v9509
    %v9511 = vrot.slane %v9353, 1
    %v9512 = vrot.slane %v9355, 1
    %v9513 = vsel %vm2366, %v9511, %v9512
    %v9514 = vrot.slane %v9356, 1
    %v9515 = vrot.slane %v9358, 1
    %v9516 = vsel %vm2366, %v9514, %v9515
    %v9517 = vrot.slane %v9357, 1
    %v9518 = vrot.slane %v9359, 1
    %v9519 = vsel %vm2366, %v9517, %v9518
    %v9552 = vadd.f32 %v9218, %v9426
    %v9553 = vadd.f32 %v9220, %v9429
    %v9554 = vadd.f32 %v9222, %v9432
    %v9555 = vadd.f32 %v9224, %v9435
    %v9556 = vadd.f32 %v9228, %v9438
    %v9557 = vadd.f32 %v9230, %v9441
    %v9558 = vadd.f32 %v9232, %v9444
    %v9559 = vadd.f32 %v9234, %v9447
    %v9560 = vadd.f32 %v9238, %v9450
    %v9561 = vadd.f32 %v9240, %v9453
    %v9562 = vadd.f32 %v9242, %v9456
    %v9563 = vadd.f32 %v9244, %v9459
    %v9564 = vadd.f32 %v9248, %v9462
    %v9565 = vadd.f32 %v9250, %v9465
    %v9566 = vadd.f32 %v9252, %v9468
    %v9567 = vadd.f32 %v9254, %v9471
    %v9568 = vadd.f32 %v9258, %v9474
    %v9569 = vadd.f32 %v9260, %v9477
    %v9570 = vadd.f32 %v9262, %v9480
    %v9571 = vadd.f32 %v9264, %v9483
    %v9572 = vadd.f32 %v9268, %v9486
    %v9573 = vadd.f32 %v9270, %v9489
    %v9574 = vadd.f32 %v9272, %v9492
    %v9575 = vadd.f32 %v9274, %v9495
    %v9576 = vadd.f32 %v9278, %v9498
    %v9577 = vadd.f32 %v9280, %v9501
    %v9578 = vadd.f32 %v9282, %v9504
    %v9579 = vadd.f32 %v9284, %v9507
    %v9580 = vadd.f32 %v9288, %v9510
    %v9581 = vadd.f32 %v9290, %v9513
    %v9582 = vadd.f32 %v9292, %v9516
    %v9583 = vadd.f32 %v9294, %v9519
    %v9584 = vmax.f32 %v9552, 0.0
    %v9585 = vmax.f32 %v9553, 0.0
    %v9586 = vmax.f32 %v9554, 0.0
    %v9587 = vmax.f32 %v9555, 0.0
    %v9588 = vmax.f32 %v9556, 0.0
    %v9589 = vmax.f32 %v9557, 0.0
    %v9590 = vmax.f32 %v9558, 0.0
    %v9591 = vmax.f32 %v9559, 0.0
    %v9592 = vmax.f32 %v9560, 0.0
    %v9593 = vmax.f32 %v9561, 0.0
    %v9594 = vmax.f32 %v9562, 0.0
    %v9595 = vmax.f32 %v9563, 0.0
    %v9596 = vmax.f32 %v9564, 0.0
    %v9597 = vmax.f32 %v9565, 0.0
    %v9598 = vmax.f32 %v9566, 0.0
    %v9599 = vmax.f32 %v9567, 0.0
    %v9600 = vmax.f32 %v9568, 0.0
    %v9601 = vmax.f32 %v9569, 0.0
    %v9602 = vmax.f32 %v9570, 0.0
    %v9603 = vmax.f32 %v9571, 0.0
    %v9604 = vmax.f32 %v9572, 0.0
    %v9605 = vmax.f32 %v9573, 0.0
    %v9606 = vmax.f32 %v9574, 0.0
    %v9607 = vmax.f32 %v9575, 0.0
    %v9608 = vmax.f32 %v9576, 0.0
    %v9609 = vmax.f32 %v9577, 0.0
    %v9610 = vmax.f32 %v9578, 0.0
    %v9611 = vmax.f32 %v9579, 0.0
    %v9612 = vmax.f32 %v9580, 0.0
    %v9613 = vmax.f32 %v9581, 0.0
    %v9614 = vmax.f32 %v9582, 0.0
    %v9615 = vmax.f32 %v9583, 0.0
    %9616 = vst [vmem:[#allocation8] sm:$0xff] %v9584
    %9617 = vst [vmem:[#allocation8 + $0x8] sm:$0xff] %v9585
    %9618 = vst [vmem:[#allocation8 + $0x10] sm:$0xff] %v9586
    %9619 = vst [vmem:[#allocation8 + $0x18] sm:$0xff] %v9587
    %9620 = vst [vmem:[#allocation8 + $0x20] sm:$0xff] %v9588
    %9621 = vst [vmem:[#allocation8 + $0x28] sm:$0xff] %v9589
    %9622 = vst [vmem:[#allocation8 + $0x30] sm:$0xff] %v9590
    %9623 = vst [vmem:[#allocation8 + $0x38] sm:$0xff] %v9591
    %9624 = vst [vmem:[#allocation8 + $0x40] sm:$0xff] %v9592
    %9625 = vst [vmem:[#allocation8 + $0x48] sm:$0xff] %v9593
    %9626 = vst [vmem:[#allocation8 + $0x50] sm:$0xff] %v9594
    %9627 = vst [vmem:[#allocation8 + $0x58] sm:$0xff] %v9595
    %9628 = vst [vmem:[#allocation8 + $0x60] sm:$0xff] %v9596
    %9629 = vst [vmem:[#allocation8 + $0x68] sm:$0xff] %v9597
    %9630 = vst [vmem:[#allocation8 + $0x70] sm:$0xff] %v9598
    %9631 = vst [vmem:[#allocation8 + $0x78] sm:$0xff] %v9599
    %9632 = vst [vmem:[#allocation8 + $0x80] sm:$0xff] %v9600
    %9633 = vst [vmem:[#allocation8 + $0x88] sm:$0xff] %v9601
    %9634 = vst [vmem:[#allocation8 + $0x90] sm:$0xff] %v9602
    %9635 = vst [vmem:[#allocation8 + $0x98] sm:$0xff] %v9603
    %9636 = vst [vmem:[#allocation8 + $0xa0] sm:$0xff] %v9604
    %9637 = vst [vmem:[#allocation8 + $0xa8] sm:$0xff] %v9605
    %9638 = vst [vmem:[#allocation8 + $0xb0] sm:$0xff] %v9606
    %9639 = vst [vmem:[#allocation8 + $0xb8] sm:$0xff] %v9607
    %9640 = vst [vmem:[#allocation8 + $0xc0] sm:$0xff] %v9608
    %9641 = vst [vmem:[#allocation8 + $0xc8] sm:$0xff] %v9609
    %9642 = vst [vmem:[#allocation8 + $0xd0] sm:$0xff] %v9610
    %9643 = vst [vmem:[#allocation8 + $0xd8] sm:$0xff] %v9611
    %9644 = vst [vmem:[#allocation8 + $0xe0] sm:$0xff] %v9612
    %9645 = vst [vmem:[#allocation8 + $0xe8] sm:$0xff] %v9613
    %9646 = vst [vmem:[#allocation8 + $0xf0] sm:$0xff] %v9614
    %9647 = vst [vmem:[#allocation8 + $0xf8] sm:$0xff] %v9615
    // Predicated region
    $region22: #{backbone3.1} parent=1 // pred_check
      _
    $region23: #{backbone3.1} parent=1 // pred_check_branch
      %9649 = sbr.rel (0) target = $region25
    $region24: #{backbone3.1} parent=1 // pred_region
      %s9651 = ssub.s32 4096, 4096
      %9652 = vsyncadd [#allocation9], %s9651
      %s9653 = sshll.u32 [#allocation8], 4
      %s9654 = int_to_ptr.vmem [resolvable:$true] %s9653
      %9659 = dma.vmem_to_hbm [thread:$0]  %s9654, 4096, %s5, [#allocation9], 256, 256, 16
    $region25: #{backbone3.1} parent=1 // pred_fallthru
      _
    // Predicated region
    $region26: #{backbone3.1} parent=1 // pred_check
      _
    $region27: #{backbone3.1} parent=1 // pred_check_branch
      %9661 = sbr.rel (0) target = $region29
    $region28: #{backbone3.1} parent=1 // pred_region
      %9662 = dma.done [#allocation9], 4096
    $region29: #{backbone3.1} parent=1 // pred_fallthru
      _
    %9663 = vsyncpa [#allocation9], 1

</llo_original>
